<compile_context>
chip_gen: v7x
topology: tpu7x:2x2x1
jax: 0.10.0
libtpu: 0.0.40
codegen_flags: <defaults>
</compile_context>

<pallas_src>
import functools

import jax
import jax.numpy as jnp
from jax.experimental import pallas as pl
from jax.experimental.pallas import tpu as pltpu

LANES = 128                     # lane-dense channel padding for kernel outputs
CONV_CH = 16                    # conv output channels (fixed by the module)
_VMEM_LIMIT = 32 * 1024 * 1024  # comfortably above the ~14 MB worst-case need


# ----------------------------- Pallas kernels -----------------------------

def _conv_bn_relu_kernel(cols_ref, w_ref, g_ref, beta_ref, o_ref, *, m_true, eps):
    """Fused Conv2d (as one im2col matmul) + BatchNorm2d (batch stats) + ReLU.

    cols_ref: (Mp, K)   im2col rows (rows beyond m_true are exact zeros)
    w_ref:    (K, 128)  conv weight in im2col layout, out-channels zero-padded
    g_ref / beta_ref: (1, 128) BN gamma / beta, zero-padded
    o_ref:    (Mp, 128) lane-dense output
    """
    conv = jnp.dot(cols_ref[...], w_ref[...], preferred_element_type=jnp.float32)
    inv_m = 1.0 / m_true
    mean = jnp.sum(conv, axis=0, keepdims=True) * inv_m
    var = jnp.sum(conv * conv, axis=0, keepdims=True) * inv_m - mean * mean
    var = jnp.maximum(var, 0.0)                       # guard tiny fp negatives
    scale = g_ref[...] * jax.lax.rsqrt(var + eps)     # padded channels: gamma=0 -> 0
    shift = beta_ref[...] - mean * scale
    o_ref[...] = jnp.maximum(conv * scale + shift, 0.0).astype(o_ref.dtype)


def _fc_kernel(x_ref, w1_ref, b1_ref, w2_ref, b2_ref, o_ref):
    """Fused fc1 (+ReLU) and fc2; full-K single-step matmuls, hidden stays in-kernel."""
    h = jnp.dot(x_ref[...], w1_ref[...], preferred_element_type=jnp.float32) + b1_ref[...]
    h = jnp.maximum(h, 0.0)
    o_ref[...] = (jnp.dot(h, w2_ref[...], preferred_element_type=jnp.float32)
                  + b2_ref[...]).astype(o_ref.dtype)


# ------------------------------ wrappers ----------------------------------

def _full_block(shape):
    """Whole-array block (block_shape == array dims satisfies the (8,128) rule)."""
    return pl.BlockSpec(shape, lambda i: (0,) * len(shape))


def _im2col_2x2_nhwc(x, pad):
    """2x2 / stride-1 patches of an NHWC tensor -> ((N*Ho*Wo, 4*C), (N, Ho, Wo))."""
    if pad:
        x = jnp.pad(x, ((0, 0), (pad, pad), (pad, pad), (0, 0)))
    N, H, W, C = x.shape
    Ho, Wo = H - 1, W - 1
    taps = [x[:, dy:dy + Ho, dx:dx + Wo, :] for dy in (0, 1) for dx in (0, 1)]
    cols = jnp.concatenate(taps, axis=-1).reshape(N * Ho * Wo, 4 * C)
    return cols, (N, Ho, Wo)


def conv_bn_relu_layer(x_nhwc, w_col, gamma, beta, *, pad, eps=1e-5):
    """Conv2d(k=2,s=1,p=pad) -> BatchNorm2d(train-mode batch stats) -> ReLU. NHWC in/out."""
    cols, (N, Ho, Wo) = _im2col_2x2_nhwc(x_nhwc, pad)
    M, K = cols.shape
    Mp = ((M + 7) // 8) * 8          # keep the BN row-reduction sublane-aligned
    if Mp != M:                      # a handful of exact-zero rows: no effect on stats
        cols = jnp.pad(cols, ((0, Mp - M), (0, 0)))
    C = w_col.shape[1]

    y = pl.pallas_call(
        functools.partial(_conv_bn_relu_kernel, m_true=M, eps=eps),
        out_shape=jax.ShapeDtypeStruct((Mp, C), jnp.float32),
        grid=(1,),                   # entire layer is one VMEM-resident block
        in_specs=[_full_block((Mp, K)),
                  _full_block((K, C)),
                  _full_block((1, C)),
                  _full_block((1, C))],
        out_specs=_full_block((Mp, C)),
        compiler_params=pltpu.CompilerParams(
            dimension_semantics=("arbitrary",),
            vmem_limit_bytes=_VMEM_LIMIT),
    )(cols, w_col, gamma, beta)

    return y[:M, :CONV_CH].reshape(N, Ho, Wo, CONV_CH)


def fc_fused(x_flat, w1, b1, w2, b2):
    M, K = x_flat.shape
    H = w1.shape[1]
    C = w2.shape[1]
    return pl.pallas_call(
        _fc_kernel,
        out_shape=jax.ShapeDtypeStruct((M, C), jnp.float32),
        grid=(1,),
        in_specs=[_full_block((M, K)),
                  _full_block((K, H)),
                  _full_block((1, H)),
                  _full_block((H, C)),
                  _full_block((1, C))],
        out_specs=_full_block((M, C)),
        compiler_params=pltpu.CompilerParams(
            dimension_semantics=("arbitrary",),
            vmem_limit_bytes=_VMEM_LIMIT),
    )(x_flat, w1, b1, w2, b2)


# ------------------------------- model ------------------------------------

def prepare_params(raw):
    """One-time (outside jit) weight re-layout: im2col conv weights, NHWC-permuted
    fc1 weight, pre-transposed fc weights, output-channel padding to 128 lanes."""
    def pad_cols(a, width):
        return jnp.pad(a, ((0, 0), (0, width - a.shape[1])))

    def row_vec(v, width=None):
        v = v.reshape(1, -1).astype(jnp.float32)
        return v if width is None else jnp.pad(v, ((0, 0), (0, width - v.shape[1])))

    def conv_w_col(w):               # (O, Cin, 2, 2) -> (kh*kw*Cin, 128)
        O = w.shape[0]
        return pad_cols(w.transpose(2, 3, 1, 0).reshape(-1, O), LANES)

    # fc1 weight: permute columns from torch's NCHW flatten (c*784 + h*28 + w)
    # to the NHWC flatten ((h*28 + w)*16 + c) used here; transpose once.
    O1 = raw["fw1"].shape[0]
    fw1_nhwc = raw["fw1"].reshape(O1, CONV_CH, 28, 28).transpose(0, 2, 3, 1).reshape(O1, -1)

    return dict(
        w1c=conv_w_col(raw["w1"]), g1=row_vec(raw["g1"], LANES), be1=row_vec(raw["be1"], LANES),
        w2c=conv_w_col(raw["w2"]), g2=row_vec(raw["g2"], LANES), be2=row_vec(raw["be2"], LANES),
        # conv biases b1/b2 are absorbed by the following train-mode BatchNorm and dropped.
        wf1=fw1_nhwc.T,                         # (12544, 16)
        bf1=row_vec(raw["fb1"]),                # (1, 16)
        wf2=pad_cols(raw["fw2"].T, LANES),      # (16, 128)
        bf2=row_vec(raw["fb2"], LANES),         # (1, 128)
    )


def net22_3_forward(x_nchw, p, *, num_classes):
    x = jnp.transpose(x_nchw, (0, 2, 3, 1))                         # NCHW -> NHWC, once
    x = conv_bn_relu_layer(x, p["w1c"], p["g1"], p["be1"], pad=0)   # (N, 27, 27, 16)
    x = conv_bn_relu_layer(x, p["w2c"], p["g2"], p["be2"], pad=1)   # (N, 28, 28, 16)
    x = x.reshape(x.shape[0], -1)              # NHWC flatten; wf1 columns pre-permuted
    out = fc_fused(x, p["wf1"], p["bf1"], p["wf2"], p["bf2"])       # (N, 128)
    return out[:, :num_classes]


# -------------------------------- main -------------------------------------

if __name__ == "__main__":
    in_channels, num_classes = 1, 10          # fc1 (16*28*28) forces 28x28 inputs
    batch = 2

    key = jax.random.PRNGKey(0)
    keys = jax.random.split(key, 13)

    def init(k, shape, scale=0.1):
        return jax.random.normal(k, shape, jnp.float32) * scale

    raw = dict(
        w1=init(keys[0], (16, in_channels, 2, 2)),
        b1=init(keys[1], (16,)),                 # absorbed by BN (see prepare_params)
        g1=1.0 + init(keys[2], (16,)),
        be1=init(keys[3], (16,)),
        w2=init(keys[4], (16, 16, 2, 2)),
        b2=init(keys[5], (16,)),                 # absorbed by BN
        g2=1.0 + init(keys[6], (16,)),
        be2=init(keys[7], (16,)),
        fw1=init(keys[8], (16, 16 * 28 * 28), 0.01),
        fb1=init(keys[9], (16,)),
        fw2=init(keys[10], (num_classes, 16)),
        fb2=init(keys[11], (num_classes,)),
    )
    params = prepare_params(raw)                 # one-time re-layout, outside jit

    x = jax.random.normal(keys[12], (batch, in_channels, 28, 28), jnp.float32)

    fwd = jax.jit(functools.partial(net22_3_forward, num_classes=num_classes))
    out = jax.block_until_ready(fwd(x, params))

    assert out.shape == (batch, num_classes)
    assert bool(jnp.all(jnp.isfinite(out)))
    print("KERNEL_OK")
</pallas_src>

<mosaic_0001>
module attributes {stable_mosaic.version = 11 : i64} {
  func.func @_conv_bn_relu_kernel(%arg0: i32, %arg1: memref<1464x4xf32, #tpu.memory_space<vmem>>, %arg2: memref<4x128xf32, #tpu.memory_space<vmem>>, %arg3: memref<1x128xf32, #tpu.memory_space<vmem>>, %arg4: memref<1x128xf32, #tpu.memory_space<vmem>>, %arg5: memref<1464x128xf32, #tpu.memory_space<vmem>>) attributes {dimension_semantics = [#tpu.dimension_semantics<arbitrary>], iteration_bounds = array<i64: 1>, scalar_prefetch = 0 : i64, scratch_operands = 0 : i64, tpu.core_type = #tpu.core_type<tc>, window_params = [{pipeline_mode = #tpu.pipeline_mode<synchronous>, transform_indices = @transform_0, window_bounds = array<i64: 1464, 4>}, {pipeline_mode = #tpu.pipeline_mode<synchronous>, transform_indices = @transform_1, window_bounds = array<i64: 4, 128>}, {pipeline_mode = #tpu.pipeline_mode<synchronous>, transform_indices = @transform_2, window_bounds = array<i64: 1, 128>}, {pipeline_mode = #tpu.pipeline_mode<synchronous>, transform_indices = @transform_3, window_bounds = array<i64: 1, 128>}, {pipeline_mode = #tpu.pipeline_mode<synchronous>, transform_indices = @transform_4, window_bounds = array<i64: 1464, 128>}]} {
    %c0 = arith.constant 0 : index
    %c0_0 = arith.constant 0 : index
    %0 = vector.load %arg1[%c0, %c0_0] : memref<1464x4xf32, #tpu.memory_space<vmem>>, vector<1464x4xf32>
    %c0_1 = arith.constant 0 : index
    %c0_2 = arith.constant 0 : index
    %1 = vector.load %arg2[%c0_1, %c0_2] : memref<4x128xf32, #tpu.memory_space<vmem>>, vector<4x128xf32>
    %cst = arith.constant dense<0.000000e+00> : vector<1464x128xf32>
    %2 = tpu.matmul %0, %1, %cst {dimension_numbers = #tpu.dot_dimension_numbers<[1], [0], [0], [1], [0, 0, 1, 1], [], []>} : vector<1464x4xf32>, vector<4x128xf32>, vector<1464x128xf32> -> vector<1464x128xf32>
    %cst_3 = arith.constant dense<0.000000e+00> : vector<128xf32>
    %3 = vector.multi_reduction <add>, %2, %cst_3 [0] : vector<1464x128xf32> to vector<128xf32>
    %4 = vector.shape_cast %3 : vector<128xf32> to vector<1x128xf32>
    %cst_4 = arith.constant 6.85871055E-4 : f32
    %5 = vector.broadcast %cst_4 : f32 to vector<1x128xf32>
    %6 = arith.mulf %4, %5 : vector<1x128xf32>
    %7 = arith.mulf %2, %2 : vector<1464x128xf32>
    %cst_5 = arith.constant dense<0.000000e+00> : vector<128xf32>
    %8 = vector.multi_reduction <add>, %7, %cst_5 [0] : vector<1464x128xf32> to vector<128xf32>
    %9 = vector.shape_cast %8 : vector<128xf32> to vector<1x128xf32>
    %cst_6 = arith.constant 6.85871055E-4 : f32
    %10 = vector.broadcast %cst_6 : f32 to vector<1x128xf32>
    %11 = arith.mulf %9, %10 : vector<1x128xf32>
    %12 = arith.mulf %6, %6 : vector<1x128xf32>
    %13 = arith.subf %11, %12 : vector<1x128xf32>
    %cst_7 = arith.constant 0.000000e+00 : f32
    %14 = vector.broadcast %cst_7 : f32 to vector<1x128xf32>
    %15 = arith.maximumf %13, %14 : vector<1x128xf32>
    %c0_8 = arith.constant 0 : index
    %c0_9 = arith.constant 0 : index
    %16 = vector.load %arg3[%c0_8, %c0_9] : memref<1x128xf32, #tpu.memory_space<vmem>>, vector<1x128xf32>
    %cst_10 = arith.constant 9.99999974E-6 : f32
    %17 = vector.broadcast %cst_10 : f32 to vector<1x128xf32>
    %18 = arith.addf %15, %17 : vector<1x128xf32>
    %19 = math.rsqrt %18 : vector<1x128xf32>
    %20 = arith.mulf %16, %19 : vector<1x128xf32>
    %c0_11 = arith.constant 0 : index
    %c0_12 = arith.constant 0 : index
    %21 = vector.load %arg4[%c0_11, %c0_12] : memref<1x128xf32, #tpu.memory_space<vmem>>, vector<1x128xf32>
    %22 = arith.mulf %6, %20 : vector<1x128xf32>
    %23 = arith.subf %21, %22 : vector<1x128xf32>
    %24 = vector.broadcast %20 : vector<1x128xf32> to vector<1464x128xf32>
    %25 = arith.mulf %2, %24 : vector<1464x128xf32>
    %26 = vector.broadcast %23 : vector<1x128xf32> to vector<1464x128xf32>
    %27 = arith.addf %25, %26 : vector<1464x128xf32>
    %cst_13 = arith.constant 0.000000e+00 : f32
    %28 = vector.broadcast %cst_13 : f32 to vector<1464x128xf32>
    %29 = arith.maximumf %27, %28 : vector<1464x128xf32>
    %c0_14 = arith.constant 0 : index
    %c0_15 = arith.constant 0 : index
    %30 = vector.load %arg5[%c0_14, %c0_15] : memref<1464x128xf32, #tpu.memory_space<vmem>>, vector<1464x128xf32>
    tpu.vector_store %arg5[%c0_14, %c0_15], %29 {strides = array<i32>} : memref<1464x128xf32, #tpu.memory_space<vmem>>, vector<1464x128xf32>,
    return
  }
  func.func @transform_0(%arg0: i32) -> (i32, i32) {
    %c0_i32 = arith.constant 0 : i32
    %c0_i32_0 = arith.constant 0 : i32
    %c0_i32_1 = arith.constant 0 : i32
    return %c0_i32, %c0_i32_0 : i32, i32
  }
  func.func @transform_1(%arg0: i32) -> (i32, i32) {
    %c0_i32 = arith.constant 0 : i32
    %c0_i32_0 = arith.constant 0 : i32
    %c0_i32_1 = arith.constant 0 : i32
    return %c0_i32, %c0_i32_0 : i32, i32
  }
  func.func @transform_2(%arg0: i32) -> (i32, i32) {
    %c0_i32 = arith.constant 0 : i32
    %c0_i32_0 = arith.constant 0 : i32
    %c0_i32_1 = arith.constant 0 : i32
    return %c0_i32, %c0_i32_0 : i32, i32
  }
  func.func @transform_3(%arg0: i32) -> (i32, i32) {
    %c0_i32 = arith.constant 0 : i32
    %c0_i32_0 = arith.constant 0 : i32
    %c0_i32_1 = arith.constant 0 : i32
    return %c0_i32, %c0_i32_0 : i32, i32
  }
  func.func @transform_4(%arg0: i32) -> (i32, i32) {
    %c0_i32 = arith.constant 0 : i32
    %c0_i32_0 = arith.constant 0 : i32
    %c0_i32_1 = arith.constant 0 : i32
    return %c0_i32, %c0_i32_0 : i32, i32
  }
}

module attributes {stable_mosaic.version = 11 : i64} {
  func.func @_conv_bn_relu_kernel(%arg0: i32, %arg1: memref<1568x64xf32, #tpu.memory_space<vmem>>, %arg2: memref<64x128xf32, #tpu.memory_space<vmem>>, %arg3: memref<1x128xf32, #tpu.memory_space<vmem>>, %arg4: memref<1x128xf32, #tpu.memory_space<vmem>>, %arg5: memref<1568x128xf32, #tpu.memory_space<vmem>>) attributes {dimension_semantics = [#tpu.dimension_semantics<arbitrary>], iteration_bounds = array<i64: 1>, scalar_prefetch = 0 : i64, scratch_operands = 0 : i64, tpu.core_type = #tpu.core_type<tc>, window_params = [{pipeline_mode = #tpu.pipeline_mode<synchronous>, transform_indices = @transform_0, window_bounds = array<i64: 1568, 64>}, {pipeline_mode = #tpu.pipeline_mode<synchronous>, transform_indices = @transform_1, window_bounds = array<i64: 64, 128>}, {pipeline_mode = #tpu.pipeline_mode<synchronous>, transform_indices = @transform_2, window_bounds = array<i64: 1, 128>}, {pipeline_mode = #tpu.pipeline_mode<synchronous>, transform_indices = @transform_3, window_bounds = array<i64: 1, 128>}, {pipeline_mode = #tpu.pipeline_mode<synchronous>, transform_indices = @transform_4, window_bounds = array<i64: 1568, 128>}]} {
    %c0 = arith.constant 0 : index
    %c0_0 = arith.constant 0 : index
    %0 = vector.load %arg1[%c0, %c0_0] : memref<1568x64xf32, #tpu.memory_space<vmem>>, vector<1568x64xf32>
    %c0_1 = arith.constant 0 : index
    %c0_2 = arith.constant 0 : index
    %1 = vector.load %arg2[%c0_1, %c0_2] : memref<64x128xf32, #tpu.memory_space<vmem>>, vector<64x128xf32>
    %cst = arith.constant dense<0.000000e+00> : vector<1568x128xf32>
    %2 = tpu.matmul %0, %1, %cst {dimension_numbers = #tpu.dot_dimension_numbers<[1], [0], [0], [1], [0, 0, 1, 1], [], []>} : vector<1568x64xf32>, vector<64x128xf32>, vector<1568x128xf32> -> vector<1568x128xf32>
    %cst_3 = arith.constant dense<0.000000e+00> : vector<128xf32>
    %3 = vector.multi_reduction <add>, %2, %cst_3 [0] : vector<1568x128xf32> to vector<128xf32>
    %4 = vector.shape_cast %3 : vector<128xf32> to vector<1x128xf32>
    %cst_4 = arith.constant 6.37755089E-4 : f32
    %5 = vector.broadcast %cst_4 : f32 to vector<1x128xf32>
    %6 = arith.mulf %4, %5 : vector<1x128xf32>
    %7 = arith.mulf %2, %2 : vector<1568x128xf32>
    %cst_5 = arith.constant dense<0.000000e+00> : vector<128xf32>
    %8 = vector.multi_reduction <add>, %7, %cst_5 [0] : vector<1568x128xf32> to vector<128xf32>
    %9 = vector.shape_cast %8 : vector<128xf32> to vector<1x128xf32>
    %cst_6 = arith.constant 6.37755089E-4 : f32
    %10 = vector.broadcast %cst_6 : f32 to vector<1x128xf32>
    %11 = arith.mulf %9, %10 : vector<1x128xf32>
    %12 = arith.mulf %6, %6 : vector<1x128xf32>
    %13 = arith.subf %11, %12 : vector<1x128xf32>
    %cst_7 = arith.constant 0.000000e+00 : f32
    %14 = vector.broadcast %cst_7 : f32 to vector<1x128xf32>
    %15 = arith.maximumf %13, %14 : vector<1x128xf32>
    %c0_8 = arith.constant 0 : index
    %c0_9 = arith.constant 0 : index
    %16 = vector.load %arg3[%c0_8, %c0_9] : memref<1x128xf32, #tpu.memory_space<vmem>>, vector<1x128xf32>
    %cst_10 = arith.constant 9.99999974E-6 : f32
    %17 = vector.broadcast %cst_10 : f32 to vector<1x128xf32>
    %18 = arith.addf %15, %17 : vector<1x128xf32>
    %19 = math.rsqrt %18 : vector<1x128xf32>
    %20 = arith.mulf %16, %19 : vector<1x128xf32>
    %c0_11 = arith.constant 0 : index
    %c0_12 = arith.constant 0 : index
    %21 = vector.load %arg4[%c0_11, %c0_12] : memref<1x128xf32, #tpu.memory_space<vmem>>, vector<1x128xf32>
    %22 = arith.mulf %6, %20 : vector<1x128xf32>
    %23 = arith.subf %21, %22 : vector<1x128xf32>
    %24 = vector.broadcast %20 : vector<1x128xf32> to vector<1568x128xf32>
    %25 = arith.mulf %2, %24 : vector<1568x128xf32>
    %26 = vector.broadcast %23 : vector<1x128xf32> to vector<1568x128xf32>
    %27 = arith.addf %25, %26 : vector<1568x128xf32>
    %cst_13 = arith.constant 0.000000e+00 : f32
    %28 = vector.broadcast %cst_13 : f32 to vector<1568x128xf32>
    %29 = arith.maximumf %27, %28 : vector<1568x128xf32>
    %c0_14 = arith.constant 0 : index
    %c0_15 = arith.constant 0 : index
    %30 = vector.load %arg5[%c0_14, %c0_15] : memref<1568x128xf32, #tpu.memory_space<vmem>>, vector<1568x128xf32>
    tpu.vector_store %arg5[%c0_14, %c0_15], %29 {strides = array<i32>} : memref<1568x128xf32, #tpu.memory_space<vmem>>, vector<1568x128xf32>,
    return
  }
  func.func @transform_0(%arg0: i32) -> (i32, i32) {
    %c0_i32 = arith.constant 0 : i32
    %c0_i32_0 = arith.constant 0 : i32
    %c0_i32_1 = arith.constant 0 : i32
    return %c0_i32, %c0_i32_0 : i32, i32
  }
  func.func @transform_1(%arg0: i32) -> (i32, i32) {
    %c0_i32 = arith.constant 0 : i32
    %c0_i32_0 = arith.constant 0 : i32
    %c0_i32_1 = arith.constant 0 : i32
    return %c0_i32, %c0_i32_0 : i32, i32
  }
  func.func @transform_2(%arg0: i32) -> (i32, i32) {
    %c0_i32 = arith.constant 0 : i32
    %c0_i32_0 = arith.constant 0 : i32
    %c0_i32_1 = arith.constant 0 : i32
    return %c0_i32, %c0_i32_0 : i32, i32
  }
  func.func @transform_3(%arg0: i32) -> (i32, i32) {
    %c0_i32 = arith.constant 0 : i32
    %c0_i32_0 = arith.constant 0 : i32
    %c0_i32_1 = arith.constant 0 : i32
    return %c0_i32, %c0_i32_0 : i32, i32
  }
  func.func @transform_4(%arg0: i32) -> (i32, i32) {
    %c0_i32 = arith.constant 0 : i32
    %c0_i32_0 = arith.constant 0 : i32
    %c0_i32_1 = arith.constant 0 : i32
    return %c0_i32, %c0_i32_0 : i32, i32
  }
}

module attributes {stable_mosaic.version = 11 : i64} {
  func.func @_fc_kernel(%arg0: i32, %arg1: memref<2x12544xf32, #tpu.memory_space<vmem>>, %arg2: memref<12544x16xf32, #tpu.memory_space<vmem>>, %arg3: memref<1x16xf32, #tpu.memory_space<vmem>>, %arg4: memref<16x128xf32, #tpu.memory_space<vmem>>, %arg5: memref<1x128xf32, #tpu.memory_space<vmem>>, %arg6: memref<2x128xf32, #tpu.memory_space<vmem>>) attributes {dimension_semantics = [#tpu.dimension_semantics<arbitrary>], iteration_bounds = array<i64: 1>, scalar_prefetch = 0 : i64, scratch_operands = 0 : i64, tpu.core_type = #tpu.core_type<tc>, window_params = [{pipeline_mode = #tpu.pipeline_mode<synchronous>, transform_indices = @transform_0, window_bounds = array<i64: 2, 12544>}, {pipeline_mode = #tpu.pipeline_mode<synchronous>, transform_indices = @transform_1, window_bounds = array<i64: 12544, 16>}, {pipeline_mode = #tpu.pipeline_mode<synchronous>, transform_indices = @transform_2, window_bounds = array<i64: 1, 16>}, {pipeline_mode = #tpu.pipeline_mode<synchronous>, transform_indices = @transform_3, window_bounds = array<i64: 16, 128>}, {pipeline_mode = #tpu.pipeline_mode<synchronous>, transform_indices = @transform_4, window_bounds = array<i64: 1, 128>}, {pipeline_mode = #tpu.pipeline_mode<synchronous>, transform_indices = @transform_5, window_bounds = array<i64: 2, 128>}]} {
    %c0 = arith.constant 0 : index
    %c0_0 = arith.constant 0 : index
    %0 = vector.load %arg1[%c0, %c0_0] : memref<2x12544xf32, #tpu.memory_space<vmem>>, vector<2x12544xf32>
    %c0_1 = arith.constant 0 : index
    %c0_2 = arith.constant 0 : index
    %1 = vector.load %arg2[%c0_1, %c0_2] : memref<12544x16xf32, #tpu.memory_space<vmem>>, vector<12544x16xf32>
    %cst = arith.constant dense<0.000000e+00> : vector<2x16xf32>
    %2 = tpu.matmul %0, %1, %cst {dimension_numbers = #tpu.dot_dimension_numbers<[1], [0], [0], [1], [0, 0, 1, 1], [], []>} : vector<2x12544xf32>, vector<12544x16xf32>, vector<2x16xf32> -> vector<2x16xf32>
    %c0_3 = arith.constant 0 : index
    %c0_4 = arith.constant 0 : index
    %3 = vector.load %arg3[%c0_3, %c0_4] : memref<1x16xf32, #tpu.memory_space<vmem>>, vector<1x16xf32>
    %4 = vector.broadcast %3 : vector<1x16xf32> to vector<2x16xf32>
    %5 = arith.addf %2, %4 : vector<2x16xf32>
    %cst_5 = arith.constant 0.000000e+00 : f32
    %6 = vector.broadcast %cst_5 : f32 to vector<2x16xf32>
    %7 = arith.maximumf %5, %6 : vector<2x16xf32>
    %c0_6 = arith.constant 0 : index
    %c0_7 = arith.constant 0 : index
    %8 = vector.load %arg4[%c0_6, %c0_7] : memref<16x128xf32, #tpu.memory_space<vmem>>, vector<16x128xf32>
    %cst_8 = arith.constant dense<0.000000e+00> : vector<2x128xf32>
    %9 = tpu.matmul %7, %8, %cst_8 {dimension_numbers = #tpu.dot_dimension_numbers<[1], [0], [0], [1], [0, 0, 1, 1], [], []>} : vector<2x16xf32>, vector<16x128xf32>, vector<2x128xf32> -> vector<2x128xf32>
    %c0_9 = arith.constant 0 : index
    %c0_10 = arith.constant 0 : index
    %10 = vector.load %arg5[%c0_9, %c0_10] : memref<1x128xf32, #tpu.memory_space<vmem>>, vector<1x128xf32>
    %11 = vector.broadcast %10 : vector<1x128xf32> to vector<2x128xf32>
    %12 = arith.addf %9, %11 : vector<2x128xf32>
    %c0_11 = arith.constant 0 : index
    %c0_12 = arith.constant 0 : index
    %13 = vector.load %arg6[%c0_11, %c0_12] : memref<2x128xf32, #tpu.memory_space<vmem>>, vector<2x128xf32>
    tpu.vector_store %arg6[%c0_11, %c0_12], %12 {strides = array<i32>} : memref<2x128xf32, #tpu.memory_space<vmem>>, vector<2x128xf32>,
    return
  }
  func.func @transform_0(%arg0: i32) -> (i32, i32) {
    %c0_i32 = arith.constant 0 : i32
    %c0_i32_0 = arith.constant 0 : i32
    %c0_i32_1 = arith.constant 0 : i32
    return %c0_i32, %c0_i32_0 : i32, i32
  }
  func.func @transform_1(%arg0: i32) -> (i32, i32) {
    %c0_i32 = arith.constant 0 : i32
    %c0_i32_0 = arith.constant 0 : i32
    %c0_i32_1 = arith.constant 0 : i32
    return %c0_i32, %c0_i32_0 : i32, i32
  }
  func.func @transform_2(%arg0: i32) -> (i32, i32) {
    %c0_i32 = arith.constant 0 : i32
    %c0_i32_0 = arith.constant 0 : i32
    %c0_i32_1 = arith.constant 0 : i32
    return %c0_i32, %c0_i32_0 : i32, i32
  }
  func.func @transform_3(%arg0: i32) -> (i32, i32) {
    %c0_i32 = arith.constant 0 : i32
    %c0_i32_0 = arith.constant 0 : i32
    %c0_i32_1 = arith.constant 0 : i32
    return %c0_i32, %c0_i32_0 : i32, i32
  }
  func.func @transform_4(%arg0: i32) -> (i32, i32) {
    %c0_i32 = arith.constant 0 : i32
    %c0_i32_0 = arith.constant 0 : i32
    %c0_i32_1 = arith.constant 0 : i32
    return %c0_i32, %c0_i32_0 : i32, i32
  }
  func.func @transform_5(%arg0: i32) -> (i32, i32) {
    %c0_i32 = arith.constant 0 : i32
    %c0_i32_0 = arith.constant 0 : i32
    %c0_i32_1 = arith.constant 0 : i32
    return %c0_i32, %c0_i32_0 : i32, i32
  }
}

</mosaic_0001>

<llo_original>
// kernel: net22_3_forward.3
$region0: #{net22_3_forward.3}
  #allocation0 [shape = 'u32[]', space=smem, size = 0x4, offset = 0x4, fixed_abs, tag = 'smem constant byte address 0x4 - core index']
  #allocation1 [shape = 'u32[144,128]{1,0:T(1,128)}', space=vmem, size = 0x12000, scoped, tag = 'internal scratch']
  %s0 = inlined_call_operand.vmem [shape: f32[1464,4], index: 0, kind: input, shape index: {}]
  %s1 = inlined_call_operand.vmem [shape: f32[4,128], index: 1, kind: input, shape index: {}]
  %s2 = inlined_call_operand.vmem [shape: f32[1,128], index: 2, kind: input, shape index: {}]
  %s3 = inlined_call_operand.vmem [shape: f32[1,128], index: 3, kind: input, shape index: {}]
  %s4 = inlined_call_operand.vmem [shape: f32[1464,128], index: 4, kind: output, shape index: {}]
  %s5 = sld [smem:[#allocation0]]
  $region26: #{net22_3_forward.3} parent=0
    _
  %s7 = ssub.s32 1, %s5
  %s8 = scalar_select 0, %s7, %s5
  // Predicated region
  $region2: #{net22_3_forward.3} parent=0 // pred_check
    _
  $region3: #{net22_3_forward.3} parent=0 // pred_check_branch
    %10 = sbr.rel (0) target = $region5
  $region4: #{net22_3_forward.3} parent=0 // pred_region
    _
  $region5: #{net22_3_forward.3} parent=0 // pred_fallthru
    _
  // Predicated region
  $region6: #{net22_3_forward.3} parent=0 // pred_check
    _
  $region7: #{net22_3_forward.3} parent=0 // pred_check_branch
    %12 = sbr.rel (0) target = $region9
  $region8: #{net22_3_forward.3} parent=0 // pred_region
    _
  $region9: #{net22_3_forward.3} parent=0 // pred_fallthru
    _
  // Predicated region
  $region10: #{net22_3_forward.3} parent=0 // pred_check
    _
  $region11: #{net22_3_forward.3} parent=0 // pred_check_branch
    %14 = sbr.rel (0) target = $region13
  $region12: #{net22_3_forward.3} parent=0 // pred_region
    _
  $region13: #{net22_3_forward.3} parent=0 // pred_fallthru
    _
  // Predicated region
  $region14: #{net22_3_forward.3} parent=0 // pred_check
    _
  $region15: #{net22_3_forward.3} parent=0 // pred_check_branch
    %16 = sbr.rel (0) target = $region17
  $region16: #{net22_3_forward.3} parent=0 // pred_region
    _
  $region17: #{net22_3_forward.3} parent=0 // pred_fallthru
    _
  %v17 = vld [vmem:[%s0] sm:$0xff]
  %v18 = vld [vmem:[%s0 + $0x8] sm:$0xff]
  %v19 = vld [vmem:[%s0 + $0x10] sm:$0xff]
  %v20 = vld [vmem:[%s0 + $0x18] sm:$0xff]
  %v21 = vld [vmem:[%s0 + $0x20] sm:$0xff]
  %v22 = vld [vmem:[%s0 + $0x28] sm:$0xff]
  %v23 = vld [vmem:[%s0 + $0x30] sm:$0xff]
  %v24 = vld [vmem:[%s0 + $0x38] sm:$0xff]
  %v25 = vld [vmem:[%s0 + $0x40] sm:$0xff]
  %v26 = vld [vmem:[%s0 + $0x48] sm:$0xff]
  %v27 = vld [vmem:[%s0 + $0x50] sm:$0xff]
  %v28 = vld [vmem:[%s0 + $0x58] sm:$0xff]
  %v29 = vld [vmem:[%s0 + $0x60] sm:$0xff]
  %v30 = vld [vmem:[%s0 + $0x68] sm:$0xff]
  %v31 = vld [vmem:[%s0 + $0x70] sm:$0xff]
  %v32 = vld [vmem:[%s0 + $0x78] sm:$0xff]
  %v33 = vld [vmem:[%s0 + $0x80] sm:$0xff]
  %v34 = vld [vmem:[%s0 + $0x88] sm:$0xff]
  %v35 = vld [vmem:[%s0 + $0x90] sm:$0xff]
  %v36 = vld [vmem:[%s0 + $0x98] sm:$0xff]
  %v37 = vld [vmem:[%s0 + $0xa0] sm:$0xff]
  %v38 = vld [vmem:[%s0 + $0xa8] sm:$0xff]
  %v39 = vld [vmem:[%s0 + $0xb0] sm:$0xff]
  %v40 = vld [vmem:[%s0 + $0xb8] sm:$0xff]
  %v41 = vld [vmem:[%s0 + $0xc0] sm:$0xff]
  %v42 = vld [vmem:[%s0 + $0xc8] sm:$0xff]
  %v43 = vld [vmem:[%s0 + $0xd0] sm:$0xff]
  %v44 = vld [vmem:[%s0 + $0xd8] sm:$0xff]
  %v45 = vld [vmem:[%s0 + $0xe0] sm:$0xff]
  %v46 = vld [vmem:[%s0 + $0xe8] sm:$0xff]
  %v47 = vld [vmem:[%s0 + $0xf0] sm:$0xff]
  %v48 = vld [vmem:[%s0 + $0xf8] sm:$0xff]
  %v49 = vld [vmem:[%s0 + $0x100] sm:$0xff]
  %v50 = vld [vmem:[%s0 + $0x108] sm:$0xff]
  %v51 = vld [vmem:[%s0 + $0x110] sm:$0xff]
  %v52 = vld [vmem:[%s0 + $0x118] sm:$0xff]
  %v53 = vld [vmem:[%s0 + $0x120] sm:$0xff]
  %v54 = vld [vmem:[%s0 + $0x128] sm:$0xff]
  %v55 = vld [vmem:[%s0 + $0x130] sm:$0xff]
  %v56 = vld [vmem:[%s0 + $0x138] sm:$0xff]
  %v57 = vld [vmem:[%s0 + $0x140] sm:$0xff]
  %v58 = vld [vmem:[%s0 + $0x148] sm:$0xff]
  %v59 = vld [vmem:[%s0 + $0x150] sm:$0xff]
  %v60 = vld [vmem:[%s0 + $0x158] sm:$0xff]
  %v61 = vld [vmem:[%s0 + $0x160] sm:$0xff]
  %v62 = vld [vmem:[%s0 + $0x168] sm:$0xff]
  %v63 = vld [vmem:[%s0 + $0x170] sm:$0xff]
  %v64 = vld [vmem:[%s0 + $0x178] sm:$0xff]
  %v65 = vld [vmem:[%s0 + $0x180] sm:$0xff]
  %v66 = vld [vmem:[%s0 + $0x188] sm:$0xff]
  %v67 = vld [vmem:[%s0 + $0x190] sm:$0xff]
  %v68 = vld [vmem:[%s0 + $0x198] sm:$0xff]
  %v69 = vld [vmem:[%s0 + $0x1a0] sm:$0xff]
  %v70 = vld [vmem:[%s0 + $0x1a8] sm:$0xff]
  %v71 = vld [vmem:[%s0 + $0x1b0] sm:$0xff]
  %v72 = vld [vmem:[%s0 + $0x1b8] sm:$0xff]
  %v73 = vld [vmem:[%s0 + $0x1c0] sm:$0xff]
  %v74 = vld [vmem:[%s0 + $0x1c8] sm:$0xff]
  %v75 = vld [vmem:[%s0 + $0x1d0] sm:$0xff]
  %v76 = vld [vmem:[%s0 + $0x1d8] sm:$0xff]
  %v77 = vld [vmem:[%s0 + $0x1e0] sm:$0xff]
  %v78 = vld [vmem:[%s0 + $0x1e8] sm:$0xff]
  %v79 = vld [vmem:[%s0 + $0x1f0] sm:$0xff]
  %v80 = vld [vmem:[%s0 + $0x1f8] sm:$0xff]
  %v81 = vld [vmem:[%s0 + $0x200] sm:$0xff]
  %v82 = vld [vmem:[%s0 + $0x208] sm:$0xff]
  %v83 = vld [vmem:[%s0 + $0x210] sm:$0xff]
  %v84 = vld [vmem:[%s0 + $0x218] sm:$0xff]
  %v85 = vld [vmem:[%s0 + $0x220] sm:$0xff]
  %v86 = vld [vmem:[%s0 + $0x228] sm:$0xff]
  %v87 = vld [vmem:[%s0 + $0x230] sm:$0xff]
  %v88 = vld [vmem:[%s0 + $0x238] sm:$0xff]
  %v89 = vld [vmem:[%s0 + $0x240] sm:$0xff]
  %v90 = vld [vmem:[%s0 + $0x248] sm:$0xff]
  %v91 = vld [vmem:[%s0 + $0x250] sm:$0xff]
  %v92 = vld [vmem:[%s0 + $0x258] sm:$0xff]
  %v93 = vld [vmem:[%s0 + $0x260] sm:$0xff]
  %v94 = vld [vmem:[%s0 + $0x268] sm:$0xff]
  %v95 = vld [vmem:[%s0 + $0x270] sm:$0xff]
  %v96 = vld [vmem:[%s0 + $0x278] sm:$0xff]
  %v97 = vld [vmem:[%s0 + $0x280] sm:$0xff]
  %v98 = vld [vmem:[%s0 + $0x288] sm:$0xff]
  %v99 = vld [vmem:[%s0 + $0x290] sm:$0xff]
  %v100 = vld [vmem:[%s0 + $0x298] sm:$0xff]
  %v101 = vld [vmem:[%s0 + $0x2a0] sm:$0xff]
  %v102 = vld [vmem:[%s0 + $0x2a8] sm:$0xff]
  %v103 = vld [vmem:[%s0 + $0x2b0] sm:$0xff]
  %v104 = vld [vmem:[%s0 + $0x2b8] sm:$0xff]
  %v105 = vld [vmem:[%s0 + $0x2c0] sm:$0xff]
  %v106 = vld [vmem:[%s0 + $0x2c8] sm:$0xff]
  %v107 = vld [vmem:[%s0 + $0x2d0] sm:$0xff]
  %v108 = vld [vmem:[%s0 + $0x2d8] sm:$0xff]
  %v109 = vld [vmem:[%s0 + $0x2e0] sm:$0xff]
  %v110 = vld [vmem:[%s0 + $0x2e8] sm:$0xff]
  %v111 = vld [vmem:[%s0 + $0x2f0] sm:$0xff]
  %v112 = vld [vmem:[%s0 + $0x2f8] sm:$0xff]
  %v113 = vld [vmem:[%s0 + $0x300] sm:$0xff]
  %v114 = vld [vmem:[%s0 + $0x308] sm:$0xff]
  %v115 = vld [vmem:[%s0 + $0x310] sm:$0xff]
  %v116 = vld [vmem:[%s0 + $0x318] sm:$0xff]
  %v117 = vld [vmem:[%s0 + $0x320] sm:$0xff]
  %v118 = vld [vmem:[%s0 + $0x328] sm:$0xff]
  %v119 = vld [vmem:[%s0 + $0x330] sm:$0xff]
  %v120 = vld [vmem:[%s0 + $0x338] sm:$0xff]
  %v121 = vld [vmem:[%s0 + $0x340] sm:$0xff]
  %v122 = vld [vmem:[%s0 + $0x348] sm:$0xff]
  %v123 = vld [vmem:[%s0 + $0x350] sm:$0xff]
  %v124 = vld [vmem:[%s0 + $0x358] sm:$0xff]
  %v125 = vld [vmem:[%s0 + $0x360] sm:$0xff]
  %v126 = vld [vmem:[%s0 + $0x368] sm:$0xff]
  %v127 = vld [vmem:[%s0 + $0x370] sm:$0xff]
  %v128 = vld [vmem:[%s0 + $0x378] sm:$0xff]
  %v129 = vld [vmem:[%s0 + $0x380] sm:$0xff]
  %v130 = vld [vmem:[%s0 + $0x388] sm:$0xff]
  %v131 = vld [vmem:[%s0 + $0x390] sm:$0xff]
  %v132 = vld [vmem:[%s0 + $0x398] sm:$0xff]
  %v133 = vld [vmem:[%s0 + $0x3a0] sm:$0xff]
  %v134 = vld [vmem:[%s0 + $0x3a8] sm:$0xff]
  %v135 = vld [vmem:[%s0 + $0x3b0] sm:$0xff]
  %v136 = vld [vmem:[%s0 + $0x3b8] sm:$0xff]
  %v137 = vld [vmem:[%s0 + $0x3c0] sm:$0xff]
  %v138 = vld [vmem:[%s0 + $0x3c8] sm:$0xff]
  %v139 = vld [vmem:[%s0 + $0x3d0] sm:$0xff]
  %v140 = vld [vmem:[%s0 + $0x3d8] sm:$0xff]
  %v141 = vld [vmem:[%s0 + $0x3e0] sm:$0xff]
  %v142 = vld [vmem:[%s0 + $0x3e8] sm:$0xff]
  %v143 = vld [vmem:[%s0 + $0x3f0] sm:$0xff]
  %v144 = vld [vmem:[%s0 + $0x3f8] sm:$0xff]
  %v145 = vld [vmem:[%s0 + $0x400] sm:$0xff]
  %v146 = vld [vmem:[%s0 + $0x408] sm:$0xff]
  %v147 = vld [vmem:[%s0 + $0x410] sm:$0xff]
  %v148 = vld [vmem:[%s0 + $0x418] sm:$0xff]
  %v149 = vld [vmem:[%s0 + $0x420] sm:$0xff]
  %v150 = vld [vmem:[%s0 + $0x428] sm:$0xff]
  %v151 = vld [vmem:[%s0 + $0x430] sm:$0xff]
  %v152 = vld [vmem:[%s0 + $0x438] sm:$0xff]
  %v153 = vld [vmem:[%s0 + $0x440] sm:$0xff]
  %v154 = vld [vmem:[%s0 + $0x448] sm:$0xff]
  %v155 = vld [vmem:[%s0 + $0x450] sm:$0xff]
  %v156 = vld [vmem:[%s0 + $0x458] sm:$0xff]
  %v157 = vld [vmem:[%s0 + $0x460] sm:$0xff]
  %v158 = vld [vmem:[%s0 + $0x468] sm:$0xff]
  %v159 = vld [vmem:[%s0 + $0x470] sm:$0xff]
  %v160 = vld [vmem:[%s0 + $0x478] sm:$0xff]
  %v161 = vld [vmem:[%s0 + $0x480] sm:$0xff]
  %v162 = vld [vmem:[%s0 + $0x488] sm:$0xff]
  %v163 = vld [vmem:[%s0 + $0x490] sm:$0xff]
  %v164 = vld [vmem:[%s0 + $0x498] sm:$0xff]
  %v165 = vld [vmem:[%s0 + $0x4a0] sm:$0xff]
  %v166 = vld [vmem:[%s0 + $0x4a8] sm:$0xff]
  %v167 = vld [vmem:[%s0 + $0x4b0] sm:$0xff]
  %v168 = vld [vmem:[%s0 + $0x4b8] sm:$0xff]
  %v169 = vld [vmem:[%s0 + $0x4c0] sm:$0xff]
  %v170 = vld [vmem:[%s0 + $0x4c8] sm:$0xff]
  %v171 = vld [vmem:[%s0 + $0x4d0] sm:$0xff]
  %v172 = vld [vmem:[%s0 + $0x4d8] sm:$0xff]
  %v173 = vld [vmem:[%s0 + $0x4e0] sm:$0xff]
  %v174 = vld [vmem:[%s0 + $0x4e8] sm:$0xff]
  %v175 = vld [vmem:[%s0 + $0x4f0] sm:$0xff]
  %v176 = vld [vmem:[%s0 + $0x4f8] sm:$0xff]
  %v177 = vld [vmem:[%s0 + $0x500] sm:$0xff]
  %v178 = vld [vmem:[%s0 + $0x508] sm:$0xff]
  %v179 = vld [vmem:[%s0 + $0x510] sm:$0xff]
  %v180 = vld [vmem:[%s0 + $0x518] sm:$0xff]
  %v181 = vld [vmem:[%s0 + $0x520] sm:$0xff]
  %v182 = vld [vmem:[%s0 + $0x528] sm:$0xff]
  %v183 = vld [vmem:[%s0 + $0x530] sm:$0xff]
  %v184 = vld [vmem:[%s0 + $0x538] sm:$0xff]
  %v185 = vld [vmem:[%s0 + $0x540] sm:$0xff]
  %v186 = vld [vmem:[%s0 + $0x548] sm:$0xff]
  %v187 = vld [vmem:[%s0 + $0x550] sm:$0xff]
  %v188 = vld [vmem:[%s0 + $0x558] sm:$0xff]
  %v189 = vld [vmem:[%s0 + $0x560] sm:$0xff]
  %v190 = vld [vmem:[%s0 + $0x568] sm:$0xff]
  %v191 = vld [vmem:[%s0 + $0x570] sm:$0xff]
  %v192 = vld [vmem:[%s0 + $0x578] sm:$0xff]
  %v193 = vld [vmem:[%s0 + $0x580] sm:$0xff]
  %v194 = vld [vmem:[%s0 + $0x588] sm:$0xff]
  %v195 = vld [vmem:[%s0 + $0x590] sm:$0xff]
  %v196 = vld [vmem:[%s0 + $0x598] sm:$0xff]
  %v197 = vld [vmem:[%s0 + $0x5a0] sm:$0xff]
  %v198 = vld [vmem:[%s0 + $0x5a8] sm:$0xff]
  %v199 = vld [vmem:[%s0 + $0x5b0] sm:$0xff]
  %v200 = vld [vmem:[%s1] sm:$0xf]
  %vm201 = vcmask 31744
  %v203 = vsel %vm201, %v17, 0
  %v206 = vsel %vm201, %v18, 0
  %v209 = vsel %vm201, %v19, 0
  %v212 = vsel %vm201, %v20, 0
  %v215 = vsel %vm201, %v21, 0
  %v218 = vsel %vm201, %v22, 0
  %v221 = vsel %vm201, %v23, 0
  %v224 = vsel %vm201, %v24, 0
  %v227 = vsel %vm201, %v25, 0
  %v230 = vsel %vm201, %v26, 0
  %v233 = vsel %vm201, %v27, 0
  %v236 = vsel %vm201, %v28, 0
  %v239 = vsel %vm201, %v29, 0
  %v242 = vsel %vm201, %v30, 0
  %v245 = vsel %vm201, %v31, 0
  %v248 = vsel %vm201, %v32, 0
  %v251 = vsel %vm201, %v33, 0
  %v254 = vsel %vm201, %v34, 0
  %v257 = vsel %vm201, %v35, 0
  %v260 = vsel %vm201, %v36, 0
  %v263 = vsel %vm201, %v37, 0
  %v266 = vsel %vm201, %v38, 0
  %v269 = vsel %vm201, %v39, 0
  %v272 = vsel %vm201, %v40, 0
  %v275 = vsel %vm201, %v41, 0
  %v278 = vsel %vm201, %v42, 0
  %v281 = vsel %vm201, %v43, 0
  %v284 = vsel %vm201, %v44, 0
  %v287 = vsel %vm201, %v45, 0
  %v290 = vsel %vm201, %v46, 0
  %v293 = vsel %vm201, %v47, 0
  %v296 = vsel %vm201, %v48, 0
  %v299 = vsel %vm201, %v49, 0
  %v302 = vsel %vm201, %v50, 0
  %v305 = vsel %vm201, %v51, 0
  %v308 = vsel %vm201, %v52, 0
  %v311 = vsel %vm201, %v53, 0
  %v314 = vsel %vm201, %v54, 0
  %v317 = vsel %vm201, %v55, 0
  %v320 = vsel %vm201, %v56, 0
  %v323 = vsel %vm201, %v57, 0
  %v326 = vsel %vm201, %v58, 0
  %v329 = vsel %vm201, %v59, 0
  %v332 = vsel %vm201, %v60, 0
  %v335 = vsel %vm201, %v61, 0
  %v338 = vsel %vm201, %v62, 0
  %v341 = vsel %vm201, %v63, 0
  %v344 = vsel %vm201, %v64, 0
  %v347 = vsel %vm201, %v65, 0
  %v350 = vsel %vm201, %v66, 0
  %v353 = vsel %vm201, %v67, 0
  %v356 = vsel %vm201, %v68, 0
  %v359 = vsel %vm201, %v69, 0
  %v362 = vsel %vm201, %v70, 0
  %v365 = vsel %vm201, %v71, 0
  %v368 = vsel %vm201, %v72, 0
  %v371 = vsel %vm201, %v73, 0
  %v374 = vsel %vm201, %v74, 0
  %v377 = vsel %vm201, %v75, 0
  %v380 = vsel %vm201, %v76, 0
  %v383 = vsel %vm201, %v77, 0
  %v386 = vsel %vm201, %v78, 0
  %v389 = vsel %vm201, %v79, 0
  %v392 = vsel %vm201, %v80, 0
  %v395 = vsel %vm201, %v81, 0
  %v398 = vsel %vm201, %v82, 0
  %v401 = vsel %vm201, %v83, 0
  %v404 = vsel %vm201, %v84, 0
  %v407 = vsel %vm201, %v85, 0
  %v410 = vsel %vm201, %v86, 0
  %v413 = vsel %vm201, %v87, 0
  %v416 = vsel %vm201, %v88, 0
  %v419 = vsel %vm201, %v89, 0
  %v422 = vsel %vm201, %v90, 0
  %v425 = vsel %vm201, %v91, 0
  %v428 = vsel %vm201, %v92, 0
  %v431 = vsel %vm201, %v93, 0
  %v434 = vsel %vm201, %v94, 0
  %v437 = vsel %vm201, %v95, 0
  %v440 = vsel %vm201, %v96, 0
  %v443 = vsel %vm201, %v97, 0
  %v446 = vsel %vm201, %v98, 0
  %v449 = vsel %vm201, %v99, 0
  %v452 = vsel %vm201, %v100, 0
  %v455 = vsel %vm201, %v101, 0
  %v458 = vsel %vm201, %v102, 0
  %v461 = vsel %vm201, %v103, 0
  %v464 = vsel %vm201, %v104, 0
  %v467 = vsel %vm201, %v105, 0
  %v470 = vsel %vm201, %v106, 0
  %v473 = vsel %vm201, %v107, 0
  %v476 = vsel %vm201, %v108, 0
  %v479 = vsel %vm201, %v109, 0
  %v482 = vsel %vm201, %v110, 0
  %v485 = vsel %vm201, %v111, 0
  %v488 = vsel %vm201, %v112, 0
  %v491 = vsel %vm201, %v113, 0
  %v494 = vsel %vm201, %v114, 0
  %v497 = vsel %vm201, %v115, 0
  %v500 = vsel %vm201, %v116, 0
  %v503 = vsel %vm201, %v117, 0
  %v506 = vsel %vm201, %v118, 0
  %v509 = vsel %vm201, %v119, 0
  %v512 = vsel %vm201, %v120, 0
  %v515 = vsel %vm201, %v121, 0
  %v518 = vsel %vm201, %v122, 0
  %v521 = vsel %vm201, %v123, 0
  %v524 = vsel %vm201, %v124, 0
  %v527 = vsel %vm201, %v125, 0
  %v530 = vsel %vm201, %v126, 0
  %v533 = vsel %vm201, %v127, 0
  %v536 = vsel %vm201, %v128, 0
  %v539 = vsel %vm201, %v129, 0
  %v542 = vsel %vm201, %v130, 0
  %v545 = vsel %vm201, %v131, 0
  %v548 = vsel %vm201, %v132, 0
  %v551 = vsel %vm201, %v133, 0
  %v554 = vsel %vm201, %v134, 0
  %v557 = vsel %vm201, %v135, 0
  %v560 = vsel %vm201, %v136, 0
  %v563 = vsel %vm201, %v137, 0
  %v566 = vsel %vm201, %v138, 0
  %v569 = vsel %vm201, %v139, 0
  %v572 = vsel %vm201, %v140, 0
  %v575 = vsel %vm201, %v141, 0
  %v578 = vsel %vm201, %v142, 0
  %v581 = vsel %vm201, %v143, 0
  %v584 = vsel %vm201, %v144, 0
  %v587 = vsel %vm201, %v145, 0
  %v590 = vsel %vm201, %v146, 0
  %v593 = vsel %vm201, %v147, 0
  %v596 = vsel %vm201, %v148, 0
  %v599 = vsel %vm201, %v149, 0
  %v602 = vsel %vm201, %v150, 0
  %v605 = vsel %vm201, %v151, 0
  %v608 = vsel %vm201, %v152, 0
  %v611 = vsel %vm201, %v153, 0
  %v614 = vsel %vm201, %v154, 0
  %v617 = vsel %vm201, %v155, 0
  %v620 = vsel %vm201, %v156, 0
  %v623 = vsel %vm201, %v157, 0
  %v626 = vsel %vm201, %v158, 0
  %v629 = vsel %vm201, %v159, 0
  %v632 = vsel %vm201, %v160, 0
  %v635 = vsel %vm201, %v161, 0
  %v638 = vsel %vm201, %v162, 0
  %v641 = vsel %vm201, %v163, 0
  %v644 = vsel %vm201, %v164, 0
  %v647 = vsel %vm201, %v165, 0
  %v650 = vsel %vm201, %v166, 0
  %v653 = vsel %vm201, %v167, 0
  %v656 = vsel %vm201, %v168, 0
  %v659 = vsel %vm201, %v169, 0
  %v662 = vsel %vm201, %v170, 0
  %v665 = vsel %vm201, %v171, 0
  %v668 = vsel %vm201, %v172, 0
  %v671 = vsel %vm201, %v173, 0
  %v674 = vsel %vm201, %v174, 0
  %v677 = vsel %vm201, %v175, 0
  %v680 = vsel %vm201, %v176, 0
  %v683 = vsel %vm201, %v177, 0
  %v686 = vsel %vm201, %v178, 0
  %v689 = vsel %vm201, %v179, 0
  %v692 = vsel %vm201, %v180, 0
  %v695 = vsel %vm201, %v181, 0
  %v698 = vsel %vm201, %v182, 0
  %v701 = vsel %vm201, %v183, 0
  %v704 = vsel %vm201, %v184, 0
  %v707 = vsel %vm201, %v185, 0
  %v710 = vsel %vm201, %v186, 0
  %v713 = vsel %vm201, %v187, 0
  %v716 = vsel %vm201, %v188, 0
  %v719 = vsel %vm201, %v189, 0
  %v722 = vsel %vm201, %v190, 0
  %v725 = vsel %vm201, %v191, 0
  %v728 = vsel %vm201, %v192, 0
  %v731 = vsel %vm201, %v193, 0
  %v734 = vsel %vm201, %v194, 0
  %v737 = vsel %vm201, %v195, 0
  %v740 = vsel %vm201, %v196, 0
  %v743 = vsel %vm201, %v197, 0
  %v746 = vsel %vm201, %v198, 0
  %v749 = vsel %vm201, %v199, 0
  %vm751 = vcmask 1043456
  %v753 = vsel %vm751, %v200, 0
  %755 = vmatprep.subr.mxu0 0.0
  %756 = vmatpush1.msra.mxu0 %v753
  %757 = vmatprep.subr.mxu0 0.0
  %758 = vmatpush1.msra.mxu0 0.0
  %759 = vmatprep.subr.mxu0 0.0
  %760 = vmatpush1.msra.mxu0 0.0
  %761 = vmatprep.subr.mxu0 0.0
  %762 = vmatpush1.msra.mxu0 0.0
  %763 = vmatprep.subr.mxu0 0.0
  %764 = vmatpush1.msra.mxu0 0.0
  %765 = vmatprep.subr.mxu0 0.0
  %766 = vmatpush1.msra.mxu0 0.0
  %767 = vmatprep.subr.mxu0 0.0
  %768 = vmatpush1.msra.mxu0 0.0
  %769 = vmatprep.subr.mxu0 0.0
  %770 = vmatpush1.msra.mxu0 0.0
  %771 = vmatprep.subr.mxu0 0.0
  %772 = vmatpush1.msra.mxu0 0.0
  %773 = vmatprep.subr.mxu0 0.0
  %774 = vmatpush1.msra.mxu0 0.0
  %775 = vmatprep.subr.mxu0 0.0
  %776 = vmatpush1.msra.mxu0 0.0
  %777 = vmatprep.subr.mxu0 0.0
  %778 = vmatpush1.msra.mxu0 0.0
  %779 = vmatprep.subr.mxu0 0.0
  %780 = vmatpush1.msra.mxu0 0.0
  %781 = vmatprep.subr.mxu0 0.0
  %782 = vmatpush1.msra.mxu0 0.0
  %783 = vmatprep.subr.mxu0 0.0
  %784 = vmatpush1.msra.mxu0 0.0
  %785 = vmatprep.subr.mxu0 0.0
  %786 = vmatpush1.msra.mxu0 0.0
  %787 = vmatprep.subr.mxu0 0.0
  %788 = vmatpush1.msra.mxu0 0.0
  %789 = vmatprep.subr.mxu0 0.0
  %790 = vmatpush1.msra.mxu0 0.0
  %791 = vmatprep.subr.mxu0 0.0
  %792 = vmatpush1.msra.mxu0 0.0
  %793 = vmatprep.subr.mxu0 0.0
  %794 = vmatpush1.msra.mxu0 0.0
  %795 = vmatprep.subr.mxu0 0.0
  %796 = vmatpush1.msra.mxu0 0.0
  %797 = vmatprep.subr.mxu0 0.0
  %798 = vmatpush1.msra.mxu0 0.0
  %799 = vmatprep.subr.mxu0 0.0
  %800 = vmatpush1.msra.mxu0 0.0
  %801 = vmatprep.subr.mxu0 0.0
  %802 = vmatpush1.msra.mxu0 0.0
  %803 = vmatprep.subr.mxu0 0.0
  %804 = vmatpush1.msra.mxu0 0.0
  %805 = vmatprep.subr.mxu0 0.0
  %806 = vmatpush1.msra.mxu0 0.0
  %807 = vmatprep.subr.mxu0 0.0
  %808 = vmatpush1.msra.mxu0 0.0
  %809 = vmatprep.subr.mxu0 0.0
  %810 = vmatpush1.msra.mxu0 0.0
  %811 = vmatprep.subr.mxu0 0.0
  %812 = vmatpush1.msra.mxu0 0.0
  %813 = vmatprep.subr.mxu0 0.0
  %814 = vmatpush1.msra.mxu0 0.0
  %815 = vmatprep.subr.mxu0 0.0
  %816 = vmatpush1.msra.mxu0 0.0
  %817 = vmatprep.subr.mxu0 0.0
  %818 = vmatpush1.msra.mxu0 0.0
  %819 = vmatprep.mubr.f32.mxu0 0.0
  %820 = vmatmul.mubr.f32.gmra.mrb[0].mxu0 %v203
  %v821 = vpop.f32.mrb[0].mxu0
  %v822 = vadd.f32 0.0, %v821
  %v823 = vpop.f32.mrb[0].mxu0
  %824 = vmatprep.mubr.f32.mxu0 0.0
  %825 = vmatmul.mubr.f32.gmra.mrb[0].mxu0 %v206
  %v826 = vpop.f32.mrb[0].mxu0
  %v827 = vadd.f32 0.0, %v826
  %v828 = vpop.f32.mrb[0].mxu0
  %829 = vmatprep.mubr.f32.mxu0 0.0
  %830 = vmatmul.mubr.f32.gmra.mrb[0].mxu0 %v209
  %v831 = vpop.f32.mrb[0].mxu0
  %v832 = vadd.f32 0.0, %v831
  %v833 = vpop.f32.mrb[0].mxu0
  %834 = vmatprep.mubr.f32.mxu0 0.0
  %835 = vmatmul.mubr.f32.gmra.mrb[0].mxu0 %v212
  %v836 = vpop.f32.mrb[0].mxu0
  %v837 = vadd.f32 0.0, %v836
  %v838 = vpop.f32.mrb[0].mxu0
  %839 = vmatprep.mubr.f32.mxu0 0.0
  %840 = vmatmul.mubr.f32.gmra.mrb[0].mxu0 %v215
  %v841 = vpop.f32.mrb[0].mxu0
  %v842 = vadd.f32 0.0, %v841
  %v843 = vpop.f32.mrb[0].mxu0
  %844 = vmatprep.mubr.f32.mxu0 0.0
  %845 = vmatmul.mubr.f32.gmra.mrb[0].mxu0 %v218
  %v846 = vpop.f32.mrb[0].mxu0
  %v847 = vadd.f32 0.0, %v846
  %v848 = vpop.f32.mrb[0].mxu0
  %849 = vmatprep.mubr.f32.mxu0 0.0
  %850 = vmatmul.mubr.f32.gmra.mrb[0].mxu0 %v221
  %v851 = vpop.f32.mrb[0].mxu0
  %v852 = vadd.f32 0.0, %v851
  %v853 = vpop.f32.mrb[0].mxu0
  %854 = vmatprep.mubr.f32.mxu0 0.0
  %855 = vmatmul.mubr.f32.gmra.mrb[0].mxu0 %v224
  %v856 = vpop.f32.mrb[0].mxu0
  %v857 = vadd.f32 0.0, %v856
  %v858 = vpop.f32.mrb[0].mxu0
  %859 = vmatprep.mubr.f32.mxu0 0.0
  %860 = vmatmul.mubr.f32.gmra.mrb[0].mxu0 %v227
  %v861 = vpop.f32.mrb[0].mxu0
  %v862 = vadd.f32 0.0, %v861
  %v863 = vpop.f32.mrb[0].mxu0
  %864 = vmatprep.mubr.f32.mxu0 0.0
  %865 = vmatmul.mubr.f32.gmra.mrb[0].mxu0 %v230
  %v866 = vpop.f32.mrb[0].mxu0
  %v867 = vadd.f32 0.0, %v866
  %v868 = vpop.f32.mrb[0].mxu0
  %869 = vmatprep.mubr.f32.mxu0 0.0
  %870 = vmatmul.mubr.f32.gmra.mrb[0].mxu0 %v233
  %v871 = vpop.f32.mrb[0].mxu0
  %v872 = vadd.f32 0.0, %v871
  %v873 = vpop.f32.mrb[0].mxu0
  %874 = vmatprep.mubr.f32.mxu0 0.0
  %875 = vmatmul.mubr.f32.gmra.mrb[0].mxu0 %v236
  %v876 = vpop.f32.mrb[0].mxu0
  %v877 = vadd.f32 0.0, %v876
  %v878 = vpop.f32.mrb[0].mxu0
  %879 = vmatprep.mubr.f32.mxu0 0.0
  %880 = vmatmul.mubr.f32.gmra.mrb[0].mxu0 %v239
  %v881 = vpop.f32.mrb[0].mxu0
  %v882 = vadd.f32 0.0, %v881
  %v883 = vpop.f32.mrb[0].mxu0
  %884 = vmatprep.mubr.f32.mxu0 0.0
  %885 = vmatmul.mubr.f32.gmra.mrb[0].mxu0 %v242
  %v886 = vpop.f32.mrb[0].mxu0
  %v887 = vadd.f32 0.0, %v886
  %v888 = vpop.f32.mrb[0].mxu0
  %889 = vmatprep.mubr.f32.mxu0 0.0
  %890 = vmatmul.mubr.f32.gmra.mrb[0].mxu0 %v245
  %v891 = vpop.f32.mrb[0].mxu0
  %v892 = vadd.f32 0.0, %v891
  %v893 = vpop.f32.mrb[0].mxu0
  %894 = vmatprep.mubr.f32.mxu0 0.0
  %895 = vmatmul.mubr.f32.gmra.mrb[0].mxu0 %v248
  %v896 = vpop.f32.mrb[0].mxu0
  %v897 = vadd.f32 0.0, %v896
  %v898 = vpop.f32.mrb[0].mxu0
  %899 = vmatprep.mubr.f32.mxu0 0.0
  %900 = vmatmul.mubr.f32.gmra.mrb[0].mxu0 %v251
  %v901 = vpop.f32.mrb[0].mxu0
  %v902 = vadd.f32 0.0, %v901
  %v903 = vpop.f32.mrb[0].mxu0
  %904 = vmatprep.mubr.f32.mxu0 0.0
  %905 = vmatmul.mubr.f32.gmra.mrb[0].mxu0 %v254
  %v906 = vpop.f32.mrb[0].mxu0
  %v907 = vadd.f32 0.0, %v906
  %v908 = vpop.f32.mrb[0].mxu0
  %909 = vmatprep.mubr.f32.mxu0 0.0
  %910 = vmatmul.mubr.f32.gmra.mrb[0].mxu0 %v257
  %v911 = vpop.f32.mrb[0].mxu0
  %v912 = vadd.f32 0.0, %v911
  %v913 = vpop.f32.mrb[0].mxu0
  %914 = vmatprep.mubr.f32.mxu0 0.0
  %915 = vmatmul.mubr.f32.gmra.mrb[0].mxu0 %v260
  %v916 = vpop.f32.mrb[0].mxu0
  %v917 = vadd.f32 0.0, %v916
  %v918 = vpop.f32.mrb[0].mxu0
  %919 = vmatprep.mubr.f32.mxu0 0.0
  %920 = vmatmul.mubr.f32.gmra.mrb[0].mxu0 %v263
  %v921 = vpop.f32.mrb[0].mxu0
  %v922 = vadd.f32 0.0, %v921
  %v923 = vpop.f32.mrb[0].mxu0
  %924 = vmatprep.mubr.f32.mxu0 0.0
  %925 = vmatmul.mubr.f32.gmra.mrb[0].mxu0 %v266
  %v926 = vpop.f32.mrb[0].mxu0
  %v927 = vadd.f32 0.0, %v926
  %v928 = vpop.f32.mrb[0].mxu0
  %929 = vmatprep.mubr.f32.mxu0 0.0
  %930 = vmatmul.mubr.f32.gmra.mrb[0].mxu0 %v269
  %v931 = vpop.f32.mrb[0].mxu0
  %v932 = vadd.f32 0.0, %v931
  %v933 = vpop.f32.mrb[0].mxu0
  %934 = vmatprep.mubr.f32.mxu0 0.0
  %935 = vmatmul.mubr.f32.gmra.mrb[0].mxu0 %v272
  %v936 = vpop.f32.mrb[0].mxu0
  %v937 = vadd.f32 0.0, %v936
  %v938 = vpop.f32.mrb[0].mxu0
  %939 = vmatprep.mubr.f32.mxu0 0.0
  %940 = vmatmul.mubr.f32.gmra.mrb[0].mxu0 %v275
  %v941 = vpop.f32.mrb[0].mxu0
  %v942 = vadd.f32 0.0, %v941
  %v943 = vpop.f32.mrb[0].mxu0
  %944 = vmatprep.mubr.f32.mxu0 0.0
  %945 = vmatmul.mubr.f32.gmra.mrb[0].mxu0 %v278
  %v946 = vpop.f32.mrb[0].mxu0
  %v947 = vadd.f32 0.0, %v946
  %v948 = vpop.f32.mrb[0].mxu0
  %949 = vmatprep.mubr.f32.mxu0 0.0
  %950 = vmatmul.mubr.f32.gmra.mrb[0].mxu0 %v281
  %v951 = vpop.f32.mrb[0].mxu0
  %v952 = vadd.f32 0.0, %v951
  %v953 = vpop.f32.mrb[0].mxu0
  %954 = vmatprep.mubr.f32.mxu0 0.0
  %955 = vmatmul.mubr.f32.gmra.mrb[0].mxu0 %v284
  %v956 = vpop.f32.mrb[0].mxu0
  %v957 = vadd.f32 0.0, %v956
  %v958 = vpop.f32.mrb[0].mxu0
  %959 = vmatprep.mubr.f32.mxu0 0.0
  %960 = vmatmul.mubr.f32.gmra.mrb[0].mxu0 %v287
  %v961 = vpop.f32.mrb[0].mxu0
  %v962 = vadd.f32 0.0, %v961
  %v963 = vpop.f32.mrb[0].mxu0
  %964 = vmatprep.mubr.f32.mxu0 0.0
  %965 = vmatmul.mubr.f32.gmra.mrb[0].mxu0 %v290
  %v966 = vpop.f32.mrb[0].mxu0
  %v967 = vadd.f32 0.0, %v966
  %v968 = vpop.f32.mrb[0].mxu0
  %969 = vmatprep.mubr.f32.mxu0 0.0
  %970 = vmatmul.mubr.f32.gmra.mrb[0].mxu0 %v293
  %v971 = vpop.f32.mrb[0].mxu0
  %v972 = vadd.f32 0.0, %v971
  %v973 = vpop.f32.mrb[0].mxu0
  %974 = vmatprep.mubr.f32.mxu0 0.0
  %975 = vmatmul.mubr.f32.gmra.mrb[0].mxu0 %v296
  %v976 = vpop.f32.mrb[0].mxu0
  %v977 = vadd.f32 0.0, %v976
  %v978 = vpop.f32.mrb[0].mxu0
  %979 = vmatprep.mubr.f32.mxu0 0.0
  %980 = vmatmul.mubr.f32.gmra.mrb[0].mxu0 %v299
  %v981 = vpop.f32.mrb[0].mxu0
  %v982 = vadd.f32 0.0, %v981
  %v983 = vpop.f32.mrb[0].mxu0
  %984 = vmatprep.mubr.f32.mxu0 0.0
  %985 = vmatmul.mubr.f32.gmra.mrb[0].mxu0 %v302
  %v986 = vpop.f32.mrb[0].mxu0
  %v987 = vadd.f32 0.0, %v986
  %v988 = vpop.f32.mrb[0].mxu0
  %989 = vmatprep.mubr.f32.mxu0 0.0
  %990 = vmatmul.mubr.f32.gmra.mrb[0].mxu0 %v305
  %v991 = vpop.f32.mrb[0].mxu0
  %v992 = vadd.f32 0.0, %v991
  %v993 = vpop.f32.mrb[0].mxu0
  %994 = vmatprep.mubr.f32.mxu0 0.0
  %995 = vmatmul.mubr.f32.gmra.mrb[0].mxu0 %v308
  %v996 = vpop.f32.mrb[0].mxu0
  %v997 = vadd.f32 0.0, %v996
  %v998 = vpop.f32.mrb[0].mxu0
  %999 = vmatprep.mubr.f32.mxu0 0.0
  %1000 = vmatmul.mubr.f32.gmra.mrb[0].mxu0 %v311
  %v1001 = vpop.f32.mrb[0].mxu0
  %v1002 = vadd.f32 0.0, %v1001
  %v1003 = vpop.f32.mrb[0].mxu0
  %1004 = vmatprep.mubr.f32.mxu0 0.0
  %1005 = vmatmul.mubr.f32.gmra.mrb[0].mxu0 %v314
  %v1006 = vpop.f32.mrb[0].mxu0
  %v1007 = vadd.f32 0.0, %v1006
  %v1008 = vpop.f32.mrb[0].mxu0
  %1009 = vmatprep.mubr.f32.mxu0 0.0
  %1010 = vmatmul.mubr.f32.gmra.mrb[0].mxu0 %v317
  %v1011 = vpop.f32.mrb[0].mxu0
  %v1012 = vadd.f32 0.0, %v1011
  %v1013 = vpop.f32.mrb[0].mxu0
  %1014 = vmatprep.mubr.f32.mxu0 0.0
  %1015 = vmatmul.mubr.f32.gmra.mrb[0].mxu0 %v320
  %v1016 = vpop.f32.mrb[0].mxu0
  %v1017 = vadd.f32 0.0, %v1016
  %v1018 = vpop.f32.mrb[0].mxu0
  %1019 = vmatprep.mubr.f32.mxu0 0.0
  %1020 = vmatmul.mubr.f32.gmra.mrb[0].mxu0 %v323
  %v1021 = vpop.f32.mrb[0].mxu0
  %v1022 = vadd.f32 0.0, %v1021
  %v1023 = vpop.f32.mrb[0].mxu0
  %1024 = vmatprep.mubr.f32.mxu0 0.0
  %1025 = vmatmul.mubr.f32.gmra.mrb[0].mxu0 %v326
  %v1026 = vpop.f32.mrb[0].mxu0
  %v1027 = vadd.f32 0.0, %v1026
  %v1028 = vpop.f32.mrb[0].mxu0
  %1029 = vmatprep.mubr.f32.mxu0 0.0
  %1030 = vmatmul.mubr.f32.gmra.mrb[0].mxu0 %v329
  %v1031 = vpop.f32.mrb[0].mxu0
  %v1032 = vadd.f32 0.0, %v1031
  %v1033 = vpop.f32.mrb[0].mxu0
  %1034 = vmatprep.mubr.f32.mxu0 0.0
  %1035 = vmatmul.mubr.f32.gmra.mrb[0].mxu0 %v332
  %v1036 = vpop.f32.mrb[0].mxu0
  %v1037 = vadd.f32 0.0, %v1036
  %v1038 = vpop.f32.mrb[0].mxu0
  %1039 = vmatprep.mubr.f32.mxu0 0.0
  %1040 = vmatmul.mubr.f32.gmra.mrb[0].mxu0 %v335
  %v1041 = vpop.f32.mrb[0].mxu0
  %v1042 = vadd.f32 0.0, %v1041
  %v1043 = vpop.f32.mrb[0].mxu0
  %1044 = vmatprep.mubr.f32.mxu0 0.0
  %1045 = vmatmul.mubr.f32.gmra.mrb[0].mxu0 %v338
  %v1046 = vpop.f32.mrb[0].mxu0
  %v1047 = vadd.f32 0.0, %v1046
  %v1048 = vpop.f32.mrb[0].mxu0
  %1049 = vmatprep.mubr.f32.mxu0 0.0
  %1050 = vmatmul.mubr.f32.gmra.mrb[0].mxu0 %v341
  %v1051 = vpop.f32.mrb[0].mxu0
  %v1052 = vadd.f32 0.0, %v1051
  %v1053 = vpop.f32.mrb[0].mxu0
  %1054 = vmatprep.mubr.f32.mxu0 0.0
  %1055 = vmatmul.mubr.f32.gmra.mrb[0].mxu0 %v344
  %v1056 = vpop.f32.mrb[0].mxu0
  %v1057 = vadd.f32 0.0, %v1056
  %v1058 = vpop.f32.mrb[0].mxu0
  %1059 = vmatprep.mubr.f32.mxu0 0.0
  %1060 = vmatmul.mubr.f32.gmra.mrb[0].mxu0 %v347
  %v1061 = vpop.f32.mrb[0].mxu0
  %v1062 = vadd.f32 0.0, %v1061
  %v1063 = vpop.f32.mrb[0].mxu0
  %1064 = vmatprep.mubr.f32.mxu0 0.0
  %1065 = vmatmul.mubr.f32.gmra.mrb[0].mxu0 %v350
  %v1066 = vpop.f32.mrb[0].mxu0
  %v1067 = vadd.f32 0.0, %v1066
  %v1068 = vpop.f32.mrb[0].mxu0
  %1069 = vmatprep.mubr.f32.mxu0 0.0
  %1070 = vmatmul.mubr.f32.gmra.mrb[0].mxu0 %v353
  %v1071 = vpop.f32.mrb[0].mxu0
  %v1072 = vadd.f32 0.0, %v1071
  %v1073 = vpop.f32.mrb[0].mxu0
  %1074 = vmatprep.mubr.f32.mxu0 0.0
  %1075 = vmatmul.mubr.f32.gmra.mrb[0].mxu0 %v356
  %v1076 = vpop.f32.mrb[0].mxu0
  %v1077 = vadd.f32 0.0, %v1076
  %v1078 = vpop.f32.mrb[0].mxu0
  %1079 = vmatprep.mubr.f32.mxu0 0.0
  %1080 = vmatmul.mubr.f32.gmra.mrb[0].mxu0 %v359
  %v1081 = vpop.f32.mrb[0].mxu0
  %v1082 = vadd.f32 0.0, %v1081
  %v1083 = vpop.f32.mrb[0].mxu0
  %1084 = vmatprep.mubr.f32.mxu0 0.0
  %1085 = vmatmul.mubr.f32.gmra.mrb[0].mxu0 %v362
  %v1086 = vpop.f32.mrb[0].mxu0
  %v1087 = vadd.f32 0.0, %v1086
  %v1088 = vpop.f32.mrb[0].mxu0
  %1089 = vmatprep.mubr.f32.mxu0 0.0
  %1090 = vmatmul.mubr.f32.gmra.mrb[0].mxu0 %v365
  %v1091 = vpop.f32.mrb[0].mxu0
  %v1092 = vadd.f32 0.0, %v1091
  %v1093 = vpop.f32.mrb[0].mxu0
  %1094 = vmatprep.mubr.f32.mxu0 0.0
  %1095 = vmatmul.mubr.f32.gmra.mrb[0].mxu0 %v368
  %v1096 = vpop.f32.mrb[0].mxu0
  %v1097 = vadd.f32 0.0, %v1096
  %v1098 = vpop.f32.mrb[0].mxu0
  %1099 = vmatprep.mubr.f32.mxu0 0.0
  %1100 = vmatmul.mubr.f32.gmra.mrb[0].mxu0 %v371
  %v1101 = vpop.f32.mrb[0].mxu0
  %v1102 = vadd.f32 0.0, %v1101
  %v1103 = vpop.f32.mrb[0].mxu0
  %1104 = vmatprep.mubr.f32.mxu0 0.0
  %1105 = vmatmul.mubr.f32.gmra.mrb[0].mxu0 %v374
  %v1106 = vpop.f32.mrb[0].mxu0
  %v1107 = vadd.f32 0.0, %v1106
  %v1108 = vpop.f32.mrb[0].mxu0
  %1109 = vmatprep.mubr.f32.mxu0 0.0
  %1110 = vmatmul.mubr.f32.gmra.mrb[0].mxu0 %v377
  %v1111 = vpop.f32.mrb[0].mxu0
  %v1112 = vadd.f32 0.0, %v1111
  %v1113 = vpop.f32.mrb[0].mxu0
  %1114 = vmatprep.mubr.f32.mxu0 0.0
  %1115 = vmatmul.mubr.f32.gmra.mrb[0].mxu0 %v380
  %v1116 = vpop.f32.mrb[0].mxu0
  %v1117 = vadd.f32 0.0, %v1116
  %v1118 = vpop.f32.mrb[0].mxu0
  %1119 = vmatprep.mubr.f32.mxu0 0.0
  %1120 = vmatmul.mubr.f32.gmra.mrb[0].mxu0 %v383
  %v1121 = vpop.f32.mrb[0].mxu0
  %v1122 = vadd.f32 0.0, %v1121
  %v1123 = vpop.f32.mrb[0].mxu0
  %1124 = vmatprep.mubr.f32.mxu0 0.0
  %1125 = vmatmul.mubr.f32.gmra.mrb[0].mxu0 %v386
  %v1126 = vpop.f32.mrb[0].mxu0
  %v1127 = vadd.f32 0.0, %v1126
  %v1128 = vpop.f32.mrb[0].mxu0
  %1129 = vmatprep.mubr.f32.mxu0 0.0
  %1130 = vmatmul.mubr.f32.gmra.mrb[0].mxu0 %v389
  %v1131 = vpop.f32.mrb[0].mxu0
  %v1132 = vadd.f32 0.0, %v1131
  %v1133 = vpop.f32.mrb[0].mxu0
  %1134 = vmatprep.mubr.f32.mxu0 0.0
  %1135 = vmatmul.mubr.f32.gmra.mrb[0].mxu0 %v392
  %v1136 = vpop.f32.mrb[0].mxu0
  %v1137 = vadd.f32 0.0, %v1136
  %v1138 = vpop.f32.mrb[0].mxu0
  %1139 = vmatprep.mubr.f32.mxu0 0.0
  %1140 = vmatmul.mubr.f32.gmra.mrb[0].mxu0 %v395
  %v1141 = vpop.f32.mrb[0].mxu0
  %v1142 = vadd.f32 0.0, %v1141
  %v1143 = vpop.f32.mrb[0].mxu0
  %1144 = vmatprep.mubr.f32.mxu0 0.0
  %1145 = vmatmul.mubr.f32.gmra.mrb[0].mxu0 %v398
  %v1146 = vpop.f32.mrb[0].mxu0
  %v1147 = vadd.f32 0.0, %v1146
  %v1148 = vpop.f32.mrb[0].mxu0
  %1149 = vmatprep.mubr.f32.mxu0 0.0
  %1150 = vmatmul.mubr.f32.gmra.mrb[0].mxu0 %v401
  %v1151 = vpop.f32.mrb[0].mxu0
  %v1152 = vadd.f32 0.0, %v1151
  %v1153 = vpop.f32.mrb[0].mxu0
  %1154 = vmatprep.mubr.f32.mxu0 0.0
  %1155 = vmatmul.mubr.f32.gmra.mrb[0].mxu0 %v404
  %v1156 = vpop.f32.mrb[0].mxu0
  %v1157 = vadd.f32 0.0, %v1156
  %v1158 = vpop.f32.mrb[0].mxu0
  %1159 = vmatprep.mubr.f32.mxu0 0.0
  %1160 = vmatmul.mubr.f32.gmra.mrb[0].mxu0 %v407
  %v1161 = vpop.f32.mrb[0].mxu0
  %v1162 = vadd.f32 0.0, %v1161
  %v1163 = vpop.f32.mrb[0].mxu0
  %1164 = vmatprep.mubr.f32.mxu0 0.0
  %1165 = vmatmul.mubr.f32.gmra.mrb[0].mxu0 %v410
  %v1166 = vpop.f32.mrb[0].mxu0
  %v1167 = vadd.f32 0.0, %v1166
  %v1168 = vpop.f32.mrb[0].mxu0
  %1169 = vmatprep.mubr.f32.mxu0 0.0
  %1170 = vmatmul.mubr.f32.gmra.mrb[0].mxu0 %v413
  %v1171 = vpop.f32.mrb[0].mxu0
  %v1172 = vadd.f32 0.0, %v1171
  %v1173 = vpop.f32.mrb[0].mxu0
  %1174 = vmatprep.mubr.f32.mxu0 0.0
  %1175 = vmatmul.mubr.f32.gmra.mrb[0].mxu0 %v416
  %v1176 = vpop.f32.mrb[0].mxu0
  %v1177 = vadd.f32 0.0, %v1176
  %v1178 = vpop.f32.mrb[0].mxu0
  %1179 = vmatprep.mubr.f32.mxu0 0.0
  %1180 = vmatmul.mubr.f32.gmra.mrb[0].mxu0 %v419
  %v1181 = vpop.f32.mrb[0].mxu0
  %v1182 = vadd.f32 0.0, %v1181
  %v1183 = vpop.f32.mrb[0].mxu0
  %1184 = vmatprep.mubr.f32.mxu0 0.0
  %1185 = vmatmul.mubr.f32.gmra.mrb[0].mxu0 %v422
  %v1186 = vpop.f32.mrb[0].mxu0
  %v1187 = vadd.f32 0.0, %v1186
  %v1188 = vpop.f32.mrb[0].mxu0
  %1189 = vmatprep.mubr.f32.mxu0 0.0
  %1190 = vmatmul.mubr.f32.gmra.mrb[0].mxu0 %v425
  %v1191 = vpop.f32.mrb[0].mxu0
  %v1192 = vadd.f32 0.0, %v1191
  %v1193 = vpop.f32.mrb[0].mxu0
  %1194 = vmatprep.mubr.f32.mxu0 0.0
  %1195 = vmatmul.mubr.f32.gmra.mrb[0].mxu0 %v428
  %v1196 = vpop.f32.mrb[0].mxu0
  %v1197 = vadd.f32 0.0, %v1196
  %v1198 = vpop.f32.mrb[0].mxu0
  %1199 = vmatprep.mubr.f32.mxu0 0.0
  %1200 = vmatmul.mubr.f32.gmra.mrb[0].mxu0 %v431
  %v1201 = vpop.f32.mrb[0].mxu0
  %v1202 = vadd.f32 0.0, %v1201
  %v1203 = vpop.f32.mrb[0].mxu0
  %1204 = vmatprep.mubr.f32.mxu0 0.0
  %1205 = vmatmul.mubr.f32.gmra.mrb[0].mxu0 %v434
  %v1206 = vpop.f32.mrb[0].mxu0
  %v1207 = vadd.f32 0.0, %v1206
  %v1208 = vpop.f32.mrb[0].mxu0
  %1209 = vmatprep.mubr.f32.mxu0 0.0
  %1210 = vmatmul.mubr.f32.gmra.mrb[0].mxu0 %v437
  %v1211 = vpop.f32.mrb[0].mxu0
  %v1212 = vadd.f32 0.0, %v1211
  %v1213 = vpop.f32.mrb[0].mxu0
  %1214 = vmatprep.mubr.f32.mxu0 0.0
  %1215 = vmatmul.mubr.f32.gmra.mrb[0].mxu0 %v440
  %v1216 = vpop.f32.mrb[0].mxu0
  %v1217 = vadd.f32 0.0, %v1216
  %v1218 = vpop.f32.mrb[0].mxu0
  %1219 = vmatprep.mubr.f32.mxu0 0.0
  %1220 = vmatmul.mubr.f32.gmra.mrb[0].mxu0 %v443
  %v1221 = vpop.f32.mrb[0].mxu0
  %v1222 = vadd.f32 0.0, %v1221
  %v1223 = vpop.f32.mrb[0].mxu0
  %1224 = vmatprep.mubr.f32.mxu0 0.0
  %1225 = vmatmul.mubr.f32.gmra.mrb[0].mxu0 %v446
  %v1226 = vpop.f32.mrb[0].mxu0
  %v1227 = vadd.f32 0.0, %v1226
  %v1228 = vpop.f32.mrb[0].mxu0
  %1229 = vmatprep.mubr.f32.mxu0 0.0
  %1230 = vmatmul.mubr.f32.gmra.mrb[0].mxu0 %v449
  %v1231 = vpop.f32.mrb[0].mxu0
  %v1232 = vadd.f32 0.0, %v1231
  %v1233 = vpop.f32.mrb[0].mxu0
  %1234 = vmatprep.mubr.f32.mxu0 0.0
  %1235 = vmatmul.mubr.f32.gmra.mrb[0].mxu0 %v452
  %v1236 = vpop.f32.mrb[0].mxu0
  %v1237 = vadd.f32 0.0, %v1236
  %v1238 = vpop.f32.mrb[0].mxu0
  %1239 = vmatprep.mubr.f32.mxu0 0.0
  %1240 = vmatmul.mubr.f32.gmra.mrb[0].mxu0 %v455
  %v1241 = vpop.f32.mrb[0].mxu0
  %v1242 = vadd.f32 0.0, %v1241
  %v1243 = vpop.f32.mrb[0].mxu0
  %1244 = vmatprep.mubr.f32.mxu0 0.0
  %1245 = vmatmul.mubr.f32.gmra.mrb[0].mxu0 %v458
  %v1246 = vpop.f32.mrb[0].mxu0
  %v1247 = vadd.f32 0.0, %v1246
  %v1248 = vpop.f32.mrb[0].mxu0
  %1249 = vmatprep.mubr.f32.mxu0 0.0
  %1250 = vmatmul.mubr.f32.gmra.mrb[0].mxu0 %v461
  %v1251 = vpop.f32.mrb[0].mxu0
  %v1252 = vadd.f32 0.0, %v1251
  %v1253 = vpop.f32.mrb[0].mxu0
  %1254 = vmatprep.mubr.f32.mxu0 0.0
  %1255 = vmatmul.mubr.f32.gmra.mrb[0].mxu0 %v464
  %v1256 = vpop.f32.mrb[0].mxu0
  %v1257 = vadd.f32 0.0, %v1256
  %v1258 = vpop.f32.mrb[0].mxu0
  %1259 = vmatprep.mubr.f32.mxu0 0.0
  %1260 = vmatmul.mubr.f32.gmra.mrb[0].mxu0 %v467
  %v1261 = vpop.f32.mrb[0].mxu0
  %v1262 = vadd.f32 0.0, %v1261
  %v1263 = vpop.f32.mrb[0].mxu0
  %1264 = vmatprep.mubr.f32.mxu0 0.0
  %1265 = vmatmul.mubr.f32.gmra.mrb[0].mxu0 %v470
  %v1266 = vpop.f32.mrb[0].mxu0
  %v1267 = vadd.f32 0.0, %v1266
  %v1268 = vpop.f32.mrb[0].mxu0
  %1269 = vmatprep.mubr.f32.mxu0 0.0
  %1270 = vmatmul.mubr.f32.gmra.mrb[0].mxu0 %v473
  %v1271 = vpop.f32.mrb[0].mxu0
  %v1272 = vadd.f32 0.0, %v1271
  %v1273 = vpop.f32.mrb[0].mxu0
  %1274 = vmatprep.mubr.f32.mxu0 0.0
  %1275 = vmatmul.mubr.f32.gmra.mrb[0].mxu0 %v476
  %v1276 = vpop.f32.mrb[0].mxu0
  %v1277 = vadd.f32 0.0, %v1276
  %v1278 = vpop.f32.mrb[0].mxu0
  %1279 = vmatprep.mubr.f32.mxu0 0.0
  %1280 = vmatmul.mubr.f32.gmra.mrb[0].mxu0 %v479
  %v1281 = vpop.f32.mrb[0].mxu0
  %v1282 = vadd.f32 0.0, %v1281
  %v1283 = vpop.f32.mrb[0].mxu0
  %1284 = vmatprep.mubr.f32.mxu0 0.0
  %1285 = vmatmul.mubr.f32.gmra.mrb[0].mxu0 %v482
  %v1286 = vpop.f32.mrb[0].mxu0
  %v1287 = vadd.f32 0.0, %v1286
  %v1288 = vpop.f32.mrb[0].mxu0
  %1289 = vmatprep.mubr.f32.mxu0 0.0
  %1290 = vmatmul.mubr.f32.gmra.mrb[0].mxu0 %v485
  %v1291 = vpop.f32.mrb[0].mxu0
  %v1292 = vadd.f32 0.0, %v1291
  %v1293 = vpop.f32.mrb[0].mxu0
  %1294 = vmatprep.mubr.f32.mxu0 0.0
  %1295 = vmatmul.mubr.f32.gmra.mrb[0].mxu0 %v488
  %v1296 = vpop.f32.mrb[0].mxu0
  %v1297 = vadd.f32 0.0, %v1296
  %v1298 = vpop.f32.mrb[0].mxu0
  %1299 = vmatprep.mubr.f32.mxu0 0.0
  %1300 = vmatmul.mubr.f32.gmra.mrb[0].mxu0 %v491
  %v1301 = vpop.f32.mrb[0].mxu0
  %v1302 = vadd.f32 0.0, %v1301
  %v1303 = vpop.f32.mrb[0].mxu0
  %1304 = vmatprep.mubr.f32.mxu0 0.0
  %1305 = vmatmul.mubr.f32.gmra.mrb[0].mxu0 %v494
  %v1306 = vpop.f32.mrb[0].mxu0
  %v1307 = vadd.f32 0.0, %v1306
  %v1308 = vpop.f32.mrb[0].mxu0
  %1309 = vmatprep.mubr.f32.mxu0 0.0
  %1310 = vmatmul.mubr.f32.gmra.mrb[0].mxu0 %v497
  %v1311 = vpop.f32.mrb[0].mxu0
  %v1312 = vadd.f32 0.0, %v1311
  %v1313 = vpop.f32.mrb[0].mxu0
  %1314 = vmatprep.mubr.f32.mxu0 0.0
  %1315 = vmatmul.mubr.f32.gmra.mrb[0].mxu0 %v500
  %v1316 = vpop.f32.mrb[0].mxu0
  %v1317 = vadd.f32 0.0, %v1316
  %v1318 = vpop.f32.mrb[0].mxu0
  %1319 = vmatprep.mubr.f32.mxu0 0.0
  %1320 = vmatmul.mubr.f32.gmra.mrb[0].mxu0 %v503
  %v1321 = vpop.f32.mrb[0].mxu0
  %v1322 = vadd.f32 0.0, %v1321
  %v1323 = vpop.f32.mrb[0].mxu0
  %1324 = vmatprep.mubr.f32.mxu0 0.0
  %1325 = vmatmul.mubr.f32.gmra.mrb[0].mxu0 %v506
  %v1326 = vpop.f32.mrb[0].mxu0
  %v1327 = vadd.f32 0.0, %v1326
  %v1328 = vpop.f32.mrb[0].mxu0
  %1329 = vmatprep.mubr.f32.mxu0 0.0
  %1330 = vmatmul.mubr.f32.gmra.mrb[0].mxu0 %v509
  %v1331 = vpop.f32.mrb[0].mxu0
  %v1332 = vadd.f32 0.0, %v1331
  %v1333 = vpop.f32.mrb[0].mxu0
  %1334 = vmatprep.mubr.f32.mxu0 0.0
  %1335 = vmatmul.mubr.f32.gmra.mrb[0].mxu0 %v512
  %v1336 = vpop.f32.mrb[0].mxu0
  %v1337 = vadd.f32 0.0, %v1336
  %v1338 = vpop.f32.mrb[0].mxu0
  %1339 = vmatprep.mubr.f32.mxu0 0.0
  %1340 = vmatmul.mubr.f32.gmra.mrb[0].mxu0 %v515
  %v1341 = vpop.f32.mrb[0].mxu0
  %v1342 = vadd.f32 0.0, %v1341
  %v1343 = vpop.f32.mrb[0].mxu0
  %1344 = vmatprep.mubr.f32.mxu0 0.0
  %1345 = vmatmul.mubr.f32.gmra.mrb[0].mxu0 %v518
  %v1346 = vpop.f32.mrb[0].mxu0
  %v1347 = vadd.f32 0.0, %v1346
  %v1348 = vpop.f32.mrb[0].mxu0
  %1349 = vmatprep.mubr.f32.mxu0 0.0
  %1350 = vmatmul.mubr.f32.gmra.mrb[0].mxu0 %v521
  %v1351 = vpop.f32.mrb[0].mxu0
  %v1352 = vadd.f32 0.0, %v1351
  %v1353 = vpop.f32.mrb[0].mxu0
  %1354 = vmatprep.mubr.f32.mxu0 0.0
  %1355 = vmatmul.mubr.f32.gmra.mrb[0].mxu0 %v524
  %v1356 = vpop.f32.mrb[0].mxu0
  %v1357 = vadd.f32 0.0, %v1356
  %v1358 = vpop.f32.mrb[0].mxu0
  %1359 = vmatprep.mubr.f32.mxu0 0.0
  %1360 = vmatmul.mubr.f32.gmra.mrb[0].mxu0 %v527
  %v1361 = vpop.f32.mrb[0].mxu0
  %v1362 = vadd.f32 0.0, %v1361
  %v1363 = vpop.f32.mrb[0].mxu0
  %1364 = vmatprep.mubr.f32.mxu0 0.0
  %1365 = vmatmul.mubr.f32.gmra.mrb[0].mxu0 %v530
  %v1366 = vpop.f32.mrb[0].mxu0
  %v1367 = vadd.f32 0.0, %v1366
  %v1368 = vpop.f32.mrb[0].mxu0
  %1369 = vmatprep.mubr.f32.mxu0 0.0
  %1370 = vmatmul.mubr.f32.gmra.mrb[0].mxu0 %v533
  %v1371 = vpop.f32.mrb[0].mxu0
  %v1372 = vadd.f32 0.0, %v1371
  %v1373 = vpop.f32.mrb[0].mxu0
  %1374 = vmatprep.mubr.f32.mxu0 0.0
  %1375 = vmatmul.mubr.f32.gmra.mrb[0].mxu0 %v536
  %v1376 = vpop.f32.mrb[0].mxu0
  %v1377 = vadd.f32 0.0, %v1376
  %v1378 = vpop.f32.mrb[0].mxu0
  %1379 = vmatprep.mubr.f32.mxu0 0.0
  %1380 = vmatmul.mubr.f32.gmra.mrb[0].mxu0 %v539
  %v1381 = vpop.f32.mrb[0].mxu0
  %v1382 = vadd.f32 0.0, %v1381
  %v1383 = vpop.f32.mrb[0].mxu0
  %1384 = vmatprep.mubr.f32.mxu0 0.0
  %1385 = vmatmul.mubr.f32.gmra.mrb[0].mxu0 %v542
  %v1386 = vpop.f32.mrb[0].mxu0
  %v1387 = vadd.f32 0.0, %v1386
  %v1388 = vpop.f32.mrb[0].mxu0
  %1389 = vmatprep.mubr.f32.mxu0 0.0
  %1390 = vmatmul.mubr.f32.gmra.mrb[0].mxu0 %v545
  %v1391 = vpop.f32.mrb[0].mxu0
  %v1392 = vadd.f32 0.0, %v1391
  %v1393 = vpop.f32.mrb[0].mxu0
  %1394 = vmatprep.mubr.f32.mxu0 0.0
  %1395 = vmatmul.mubr.f32.gmra.mrb[0].mxu0 %v548
  %v1396 = vpop.f32.mrb[0].mxu0
  %v1397 = vadd.f32 0.0, %v1396
  %v1398 = vpop.f32.mrb[0].mxu0
  %1399 = vmatprep.mubr.f32.mxu0 0.0
  %1400 = vmatmul.mubr.f32.gmra.mrb[0].mxu0 %v551
  %v1401 = vpop.f32.mrb[0].mxu0
  %v1402 = vadd.f32 0.0, %v1401
  %v1403 = vpop.f32.mrb[0].mxu0
  %1404 = vmatprep.mubr.f32.mxu0 0.0
  %1405 = vmatmul.mubr.f32.gmra.mrb[0].mxu0 %v554
  %v1406 = vpop.f32.mrb[0].mxu0
  %v1407 = vadd.f32 0.0, %v1406
  %v1408 = vpop.f32.mrb[0].mxu0
  %1409 = vmatprep.mubr.f32.mxu0 0.0
  %1410 = vmatmul.mubr.f32.gmra.mrb[0].mxu0 %v557
  %v1411 = vpop.f32.mrb[0].mxu0
  %v1412 = vadd.f32 0.0, %v1411
  %v1413 = vpop.f32.mrb[0].mxu0
  %1414 = vmatprep.mubr.f32.mxu0 0.0
  %1415 = vmatmul.mubr.f32.gmra.mrb[0].mxu0 %v560
  %v1416 = vpop.f32.mrb[0].mxu0
  %v1417 = vadd.f32 0.0, %v1416
  %v1418 = vpop.f32.mrb[0].mxu0
  %1419 = vmatprep.mubr.f32.mxu0 0.0
  %1420 = vmatmul.mubr.f32.gmra.mrb[0].mxu0 %v563
  %v1421 = vpop.f32.mrb[0].mxu0
  %v1422 = vadd.f32 0.0, %v1421
  %v1423 = vpop.f32.mrb[0].mxu0
  %1424 = vmatprep.mubr.f32.mxu0 0.0
  %1425 = vmatmul.mubr.f32.gmra.mrb[0].mxu0 %v566
  %v1426 = vpop.f32.mrb[0].mxu0
  %v1427 = vadd.f32 0.0, %v1426
  %v1428 = vpop.f32.mrb[0].mxu0
  %1429 = vmatprep.mubr.f32.mxu0 0.0
  %1430 = vmatmul.mubr.f32.gmra.mrb[0].mxu0 %v569
  %v1431 = vpop.f32.mrb[0].mxu0
  %v1432 = vadd.f32 0.0, %v1431
  %v1433 = vpop.f32.mrb[0].mxu0
  %1434 = vmatprep.mubr.f32.mxu0 0.0
  %1435 = vmatmul.mubr.f32.gmra.mrb[0].mxu0 %v572
  %v1436 = vpop.f32.mrb[0].mxu0
  %v1437 = vadd.f32 0.0, %v1436
  %v1438 = vpop.f32.mrb[0].mxu0
  %1439 = vmatprep.mubr.f32.mxu0 0.0
  %1440 = vmatmul.mubr.f32.gmra.mrb[0].mxu0 %v575
  %v1441 = vpop.f32.mrb[0].mxu0
  %v1442 = vadd.f32 0.0, %v1441
  %v1443 = vpop.f32.mrb[0].mxu0
  %1444 = vmatprep.mubr.f32.mxu0 0.0
  %1445 = vmatmul.mubr.f32.gmra.mrb[0].mxu0 %v578
  %v1446 = vpop.f32.mrb[0].mxu0
  %v1447 = vadd.f32 0.0, %v1446
  %v1448 = vpop.f32.mrb[0].mxu0
  %1449 = vmatprep.mubr.f32.mxu0 0.0
  %1450 = vmatmul.mubr.f32.gmra.mrb[0].mxu0 %v581
  %v1451 = vpop.f32.mrb[0].mxu0
  %v1452 = vadd.f32 0.0, %v1451
  %v1453 = vpop.f32.mrb[0].mxu0
  %1454 = vmatprep.mubr.f32.mxu0 0.0
  %1455 = vmatmul.mubr.f32.gmra.mrb[0].mxu0 %v584
  %v1456 = vpop.f32.mrb[0].mxu0
  %v1457 = vadd.f32 0.0, %v1456
  %v1458 = vpop.f32.mrb[0].mxu0
  %1459 = vmatprep.mubr.f32.mxu0 0.0
  %1460 = vmatmul.mubr.f32.gmra.mrb[0].mxu0 %v587
  %v1461 = vpop.f32.mrb[0].mxu0
  %v1462 = vadd.f32 0.0, %v1461
  %v1463 = vpop.f32.mrb[0].mxu0
  %1464 = vmatprep.mubr.f32.mxu0 0.0
  %1465 = vmatmul.mubr.f32.gmra.mrb[0].mxu0 %v590
  %v1466 = vpop.f32.mrb[0].mxu0
  %v1467 = vadd.f32 0.0, %v1466
  %v1468 = vpop.f32.mrb[0].mxu0
  %1469 = vmatprep.mubr.f32.mxu0 0.0
  %1470 = vmatmul.mubr.f32.gmra.mrb[0].mxu0 %v593
  %v1471 = vpop.f32.mrb[0].mxu0
  %v1472 = vadd.f32 0.0, %v1471
  %v1473 = vpop.f32.mrb[0].mxu0
  %1474 = vmatprep.mubr.f32.mxu0 0.0
  %1475 = vmatmul.mubr.f32.gmra.mrb[0].mxu0 %v596
  %v1476 = vpop.f32.mrb[0].mxu0
  %v1477 = vadd.f32 0.0, %v1476
  %v1478 = vpop.f32.mrb[0].mxu0
  %1479 = vmatprep.mubr.f32.mxu0 0.0
  %1480 = vmatmul.mubr.f32.gmra.mrb[0].mxu0 %v599
  %v1481 = vpop.f32.mrb[0].mxu0
  %v1482 = vadd.f32 0.0, %v1481
  %v1483 = vpop.f32.mrb[0].mxu0
  %1484 = vmatprep.mubr.f32.mxu0 0.0
  %1485 = vmatmul.mubr.f32.gmra.mrb[0].mxu0 %v602
  %v1486 = vpop.f32.mrb[0].mxu0
  %v1487 = vadd.f32 0.0, %v1486
  %v1488 = vpop.f32.mrb[0].mxu0
  %1489 = vmatprep.mubr.f32.mxu0 0.0
  %1490 = vmatmul.mubr.f32.gmra.mrb[0].mxu0 %v605
  %v1491 = vpop.f32.mrb[0].mxu0
  %v1492 = vadd.f32 0.0, %v1491
  %v1493 = vpop.f32.mrb[0].mxu0
  %1494 = vmatprep.mubr.f32.mxu0 0.0
  %1495 = vmatmul.mubr.f32.gmra.mrb[0].mxu0 %v608
  %v1496 = vpop.f32.mrb[0].mxu0
  %v1497 = vadd.f32 0.0, %v1496
  %v1498 = vpop.f32.mrb[0].mxu0
  %1499 = vmatprep.mubr.f32.mxu0 0.0
  %1500 = vmatmul.mubr.f32.gmra.mrb[0].mxu0 %v611
  %v1501 = vpop.f32.mrb[0].mxu0
  %v1502 = vadd.f32 0.0, %v1501
  %v1503 = vpop.f32.mrb[0].mxu0
  %1504 = vmatprep.mubr.f32.mxu0 0.0
  %1505 = vmatmul.mubr.f32.gmra.mrb[0].mxu0 %v614
  %v1506 = vpop.f32.mrb[0].mxu0
  %v1507 = vadd.f32 0.0, %v1506
  %v1508 = vpop.f32.mrb[0].mxu0
  %1509 = vmatprep.mubr.f32.mxu0 0.0
  %1510 = vmatmul.mubr.f32.gmra.mrb[0].mxu0 %v617
  %v1511 = vpop.f32.mrb[0].mxu0
  %v1512 = vadd.f32 0.0, %v1511
  %v1513 = vpop.f32.mrb[0].mxu0
  %1514 = vmatprep.mubr.f32.mxu0 0.0
  %1515 = vmatmul.mubr.f32.gmra.mrb[0].mxu0 %v620
  %v1516 = vpop.f32.mrb[0].mxu0
  %v1517 = vadd.f32 0.0, %v1516
  %v1518 = vpop.f32.mrb[0].mxu0
  %1519 = vmatprep.mubr.f32.mxu0 0.0
  %1520 = vmatmul.mubr.f32.gmra.mrb[0].mxu0 %v623
  %v1521 = vpop.f32.mrb[0].mxu0
  %v1522 = vadd.f32 0.0, %v1521
  %v1523 = vpop.f32.mrb[0].mxu0
  %1524 = vmatprep.mubr.f32.mxu0 0.0
  %1525 = vmatmul.mubr.f32.gmra.mrb[0].mxu0 %v626
  %v1526 = vpop.f32.mrb[0].mxu0
  %v1527 = vadd.f32 0.0, %v1526
  %v1528 = vpop.f32.mrb[0].mxu0
  %1529 = vmatprep.mubr.f32.mxu0 0.0
  %1530 = vmatmul.mubr.f32.gmra.mrb[0].mxu0 %v629
  %v1531 = vpop.f32.mrb[0].mxu0
  %v1532 = vadd.f32 0.0, %v1531
  %v1533 = vpop.f32.mrb[0].mxu0
  %1534 = vmatprep.mubr.f32.mxu0 0.0
  %1535 = vmatmul.mubr.f32.gmra.mrb[0].mxu0 %v632
  %v1536 = vpop.f32.mrb[0].mxu0
  %v1537 = vadd.f32 0.0, %v1536
  %v1538 = vpop.f32.mrb[0].mxu0
  %1539 = vmatprep.mubr.f32.mxu0 0.0
  %1540 = vmatmul.mubr.f32.gmra.mrb[0].mxu0 %v635
  %v1541 = vpop.f32.mrb[0].mxu0
  %v1542 = vadd.f32 0.0, %v1541
  %v1543 = vpop.f32.mrb[0].mxu0
  %1544 = vmatprep.mubr.f32.mxu0 0.0
  %1545 = vmatmul.mubr.f32.gmra.mrb[0].mxu0 %v638
  %v1546 = vpop.f32.mrb[0].mxu0
  %v1547 = vadd.f32 0.0, %v1546
  %v1548 = vpop.f32.mrb[0].mxu0
  %1549 = vmatprep.mubr.f32.mxu0 0.0
  %1550 = vmatmul.mubr.f32.gmra.mrb[0].mxu0 %v641
  %v1551 = vpop.f32.mrb[0].mxu0
  %v1552 = vadd.f32 0.0, %v1551
  %v1553 = vpop.f32.mrb[0].mxu0
  %1554 = vmatprep.mubr.f32.mxu0 0.0
  %1555 = vmatmul.mubr.f32.gmra.mrb[0].mxu0 %v644
  %v1556 = vpop.f32.mrb[0].mxu0
  %v1557 = vadd.f32 0.0, %v1556
  %v1558 = vpop.f32.mrb[0].mxu0
  %1559 = vmatprep.mubr.f32.mxu0 0.0
  %1560 = vmatmul.mubr.f32.gmra.mrb[0].mxu0 %v647
  %v1561 = vpop.f32.mrb[0].mxu0
  %v1562 = vadd.f32 0.0, %v1561
  %v1563 = vpop.f32.mrb[0].mxu0
  %1564 = vmatprep.mubr.f32.mxu0 0.0
  %1565 = vmatmul.mubr.f32.gmra.mrb[0].mxu0 %v650
  %v1566 = vpop.f32.mrb[0].mxu0
  %v1567 = vadd.f32 0.0, %v1566
  %v1568 = vpop.f32.mrb[0].mxu0
  %1569 = vmatprep.mubr.f32.mxu0 0.0
  %1570 = vmatmul.mubr.f32.gmra.mrb[0].mxu0 %v653
  %v1571 = vpop.f32.mrb[0].mxu0
  %v1572 = vadd.f32 0.0, %v1571
  %v1573 = vpop.f32.mrb[0].mxu0
  %1574 = vmatprep.mubr.f32.mxu0 0.0
  %1575 = vmatmul.mubr.f32.gmra.mrb[0].mxu0 %v656
  %v1576 = vpop.f32.mrb[0].mxu0
  %v1577 = vadd.f32 0.0, %v1576
  %v1578 = vpop.f32.mrb[0].mxu0
  %1579 = vmatprep.mubr.f32.mxu0 0.0
  %1580 = vmatmul.mubr.f32.gmra.mrb[0].mxu0 %v659
  %v1581 = vpop.f32.mrb[0].mxu0
  %v1582 = vadd.f32 0.0, %v1581
  %v1583 = vpop.f32.mrb[0].mxu0
  %1584 = vmatprep.mubr.f32.mxu0 0.0
  %1585 = vmatmul.mubr.f32.gmra.mrb[0].mxu0 %v662
  %v1586 = vpop.f32.mrb[0].mxu0
  %v1587 = vadd.f32 0.0, %v1586
  %v1588 = vpop.f32.mrb[0].mxu0
  %1589 = vmatprep.mubr.f32.mxu0 0.0
  %1590 = vmatmul.mubr.f32.gmra.mrb[0].mxu0 %v665
  %v1591 = vpop.f32.mrb[0].mxu0
  %v1592 = vadd.f32 0.0, %v1591
  %v1593 = vpop.f32.mrb[0].mxu0
  %1594 = vmatprep.mubr.f32.mxu0 0.0
  %1595 = vmatmul.mubr.f32.gmra.mrb[0].mxu0 %v668
  %v1596 = vpop.f32.mrb[0].mxu0
  %v1597 = vadd.f32 0.0, %v1596
  %v1598 = vpop.f32.mrb[0].mxu0
  %1599 = vmatprep.mubr.f32.mxu0 0.0
  %1600 = vmatmul.mubr.f32.gmra.mrb[0].mxu0 %v671
  %v1601 = vpop.f32.mrb[0].mxu0
  %v1602 = vadd.f32 0.0, %v1601
  %v1603 = vpop.f32.mrb[0].mxu0
  %1604 = vmatprep.mubr.f32.mxu0 0.0
  %1605 = vmatmul.mubr.f32.gmra.mrb[0].mxu0 %v674
  %v1606 = vpop.f32.mrb[0].mxu0
  %v1607 = vadd.f32 0.0, %v1606
  %v1608 = vpop.f32.mrb[0].mxu0
  %1609 = vmatprep.mubr.f32.mxu0 0.0
  %1610 = vmatmul.mubr.f32.gmra.mrb[0].mxu0 %v677
  %v1611 = vpop.f32.mrb[0].mxu0
  %v1612 = vadd.f32 0.0, %v1611
  %v1613 = vpop.f32.mrb[0].mxu0
  %1614 = vmatprep.mubr.f32.mxu0 0.0
  %1615 = vmatmul.mubr.f32.gmra.mrb[0].mxu0 %v680
  %v1616 = vpop.f32.mrb[0].mxu0
  %v1617 = vadd.f32 0.0, %v1616
  %v1618 = vpop.f32.mrb[0].mxu0
  %1619 = vmatprep.mubr.f32.mxu0 0.0
  %1620 = vmatmul.mubr.f32.gmra.mrb[0].mxu0 %v683
  %v1621 = vpop.f32.mrb[0].mxu0
  %v1622 = vadd.f32 0.0, %v1621
  %v1623 = vpop.f32.mrb[0].mxu0
  %1624 = vmatprep.mubr.f32.mxu0 0.0
  %1625 = vmatmul.mubr.f32.gmra.mrb[0].mxu0 %v686
  %v1626 = vpop.f32.mrb[0].mxu0
  %v1627 = vadd.f32 0.0, %v1626
  %v1628 = vpop.f32.mrb[0].mxu0
  %1629 = vmatprep.mubr.f32.mxu0 0.0
  %1630 = vmatmul.mubr.f32.gmra.mrb[0].mxu0 %v689
  %v1631 = vpop.f32.mrb[0].mxu0
  %v1632 = vadd.f32 0.0, %v1631
  %v1633 = vpop.f32.mrb[0].mxu0
  %1634 = vmatprep.mubr.f32.mxu0 0.0
  %1635 = vmatmul.mubr.f32.gmra.mrb[0].mxu0 %v692
  %v1636 = vpop.f32.mrb[0].mxu0
  %v1637 = vadd.f32 0.0, %v1636
  %v1638 = vpop.f32.mrb[0].mxu0
  %1639 = vmatprep.mubr.f32.mxu0 0.0
  %1640 = vmatmul.mubr.f32.gmra.mrb[0].mxu0 %v695
  %v1641 = vpop.f32.mrb[0].mxu0
  %v1642 = vadd.f32 0.0, %v1641
  %v1643 = vpop.f32.mrb[0].mxu0
  %1644 = vmatprep.mubr.f32.mxu0 0.0
  %1645 = vmatmul.mubr.f32.gmra.mrb[0].mxu0 %v698
  %v1646 = vpop.f32.mrb[0].mxu0
  %v1647 = vadd.f32 0.0, %v1646
  %v1648 = vpop.f32.mrb[0].mxu0
  %1649 = vmatprep.mubr.f32.mxu0 0.0
  %1650 = vmatmul.mubr.f32.gmra.mrb[0].mxu0 %v701
  %v1651 = vpop.f32.mrb[0].mxu0
  %v1652 = vadd.f32 0.0, %v1651
  %v1653 = vpop.f32.mrb[0].mxu0
  %1654 = vmatprep.mubr.f32.mxu0 0.0
  %1655 = vmatmul.mubr.f32.gmra.mrb[0].mxu0 %v704
  %v1656 = vpop.f32.mrb[0].mxu0
  %v1657 = vadd.f32 0.0, %v1656
  %v1658 = vpop.f32.mrb[0].mxu0
  %1659 = vmatprep.mubr.f32.mxu0 0.0
  %1660 = vmatmul.mubr.f32.gmra.mrb[0].mxu0 %v707
  %v1661 = vpop.f32.mrb[0].mxu0
  %v1662 = vadd.f32 0.0, %v1661
  %v1663 = vpop.f32.mrb[0].mxu0
  %1664 = vmatprep.mubr.f32.mxu0 0.0
  %1665 = vmatmul.mubr.f32.gmra.mrb[0].mxu0 %v710
  %v1666 = vpop.f32.mrb[0].mxu0
  %v1667 = vadd.f32 0.0, %v1666
  %v1668 = vpop.f32.mrb[0].mxu0
  %1669 = vmatprep.mubr.f32.mxu0 0.0
  %1670 = vmatmul.mubr.f32.gmra.mrb[0].mxu0 %v713
  %v1671 = vpop.f32.mrb[0].mxu0
  %v1672 = vadd.f32 0.0, %v1671
  %v1673 = vpop.f32.mrb[0].mxu0
  %1674 = vmatprep.mubr.f32.mxu0 0.0
  %1675 = vmatmul.mubr.f32.gmra.mrb[0].mxu0 %v716
  %v1676 = vpop.f32.mrb[0].mxu0
  %v1677 = vadd.f32 0.0, %v1676
  %v1678 = vpop.f32.mrb[0].mxu0
  %1679 = vmatprep.mubr.f32.mxu0 0.0
  %1680 = vmatmul.mubr.f32.gmra.mrb[0].mxu0 %v719
  %v1681 = vpop.f32.mrb[0].mxu0
  %v1682 = vadd.f32 0.0, %v1681
  %v1683 = vpop.f32.mrb[0].mxu0
  %1684 = vmatprep.mubr.f32.mxu0 0.0
  %1685 = vmatmul.mubr.f32.gmra.mrb[0].mxu0 %v722
  %v1686 = vpop.f32.mrb[0].mxu0
  %v1687 = vadd.f32 0.0, %v1686
  %v1688 = vpop.f32.mrb[0].mxu0
  %1689 = vmatprep.mubr.f32.mxu0 0.0
  %1690 = vmatmul.mubr.f32.gmra.mrb[0].mxu0 %v725
  %v1691 = vpop.f32.mrb[0].mxu0
  %v1692 = vadd.f32 0.0, %v1691
  %v1693 = vpop.f32.mrb[0].mxu0
  %1694 = vmatprep.mubr.f32.mxu0 0.0
  %1695 = vmatmul.mubr.f32.gmra.mrb[0].mxu0 %v728
  %v1696 = vpop.f32.mrb[0].mxu0
  %v1697 = vadd.f32 0.0, %v1696
  %v1698 = vpop.f32.mrb[0].mxu0
  %1699 = vmatprep.mubr.f32.mxu0 0.0
  %1700 = vmatmul.mubr.f32.gmra.mrb[0].mxu0 %v731
  %v1701 = vpop.f32.mrb[0].mxu0
  %v1702 = vadd.f32 0.0, %v1701
  %v1703 = vpop.f32.mrb[0].mxu0
  %1704 = vmatprep.mubr.f32.mxu0 0.0
  %1705 = vmatmul.mubr.f32.gmra.mrb[0].mxu0 %v734
  %v1706 = vpop.f32.mrb[0].mxu0
  %v1707 = vadd.f32 0.0, %v1706
  %v1708 = vpop.f32.mrb[0].mxu0
  %1709 = vmatprep.mubr.f32.mxu0 0.0
  %1710 = vmatmul.mubr.f32.gmra.mrb[0].mxu0 %v737
  %v1711 = vpop.f32.mrb[0].mxu0
  %v1712 = vadd.f32 0.0, %v1711
  %v1713 = vpop.f32.mrb[0].mxu0
  %1714 = vmatprep.mubr.f32.mxu0 0.0
  %1715 = vmatmul.mubr.f32.gmra.mrb[0].mxu0 %v740
  %v1716 = vpop.f32.mrb[0].mxu0
  %v1717 = vadd.f32 0.0, %v1716
  %v1718 = vpop.f32.mrb[0].mxu0
  %1719 = vmatprep.mubr.f32.mxu0 0.0
  %1720 = vmatmul.mubr.f32.gmra.mrb[0].mxu0 %v743
  %v1721 = vpop.f32.mrb[0].mxu0
  %v1722 = vadd.f32 0.0, %v1721
  %v1723 = vpop.f32.mrb[0].mxu0
  %1724 = vmatprep.mubr.f32.mxu0 0.0
  %1725 = vmatmul.mubr.f32.gmra.mrb[0].mxu0 %v746
  %v1726 = vpop.f32.mrb[0].mxu0
  %v1727 = vadd.f32 0.0, %v1726
  %v1728 = vpop.f32.mrb[0].mxu0
  %1729 = vmatprep.mubr.f32.mxu0 0.0
  %1730 = vmatmul.mubr.f32.gmra.mrb[0].mxu0 %v749
  %v1731 = vpop.f32.mrb[0].mxu0
  %v1732 = vadd.f32 0.0, %v1731
  %v1733 = vpop.f32.mrb[0].mxu0
  %1734 = vdwg.mxu0
  %v1735 = vadd.f32 %v822, %v827
  %v1736 = vadd.f32 %v1735, %v832
  %v1737 = vadd.f32 %v1736, %v837
  %v1738 = vadd.f32 %v1737, %v842
  %v1739 = vadd.f32 %v1738, %v847
  %v1740 = vadd.f32 %v1739, %v852
  %v1741 = vadd.f32 %v1740, %v857
  %v1742 = vadd.f32 %v1741, %v862
  %v1743 = vadd.f32 %v1742, %v867
  %v1744 = vadd.f32 %v1743, %v872
  %v1745 = vadd.f32 %v1744, %v877
  %v1746 = vadd.f32 %v1745, %v882
  %v1747 = vadd.f32 %v1746, %v887
  %v1748 = vadd.f32 %v1747, %v892
  %v1749 = vadd.f32 %v1748, %v897
  %v1750 = vadd.f32 %v1749, %v902
  %v1751 = vadd.f32 %v1750, %v907
  %v1752 = vadd.f32 %v1751, %v912
  %v1753 = vadd.f32 %v1752, %v917
  %v1754 = vadd.f32 %v1753, %v922
  %v1755 = vadd.f32 %v1754, %v927
  %v1756 = vadd.f32 %v1755, %v932
  %v1757 = vadd.f32 %v1756, %v937
  %v1758 = vadd.f32 %v1757, %v942
  %v1759 = vadd.f32 %v1758, %v947
  %v1760 = vadd.f32 %v1759, %v952
  %v1761 = vadd.f32 %v1760, %v957
  %v1762 = vadd.f32 %v1761, %v962
  %v1763 = vadd.f32 %v1762, %v967
  %v1764 = vadd.f32 %v1763, %v972
  %v1765 = vadd.f32 %v1764, %v977
  %v1766 = vadd.f32 %v1765, %v982
  %v1767 = vadd.f32 %v1766, %v987
  %v1768 = vadd.f32 %v1767, %v992
  %v1769 = vadd.f32 %v1768, %v997
  %v1770 = vadd.f32 %v1769, %v1002
  %v1771 = vadd.f32 %v1770, %v1007
  %v1772 = vadd.f32 %v1771, %v1012
  %v1773 = vadd.f32 %v1772, %v1017
  %v1774 = vadd.f32 %v1773, %v1022
  %v1775 = vadd.f32 %v1774, %v1027
  %v1776 = vadd.f32 %v1775, %v1032
  %v1777 = vadd.f32 %v1776, %v1037
  %v1778 = vadd.f32 %v1777, %v1042
  %v1779 = vadd.f32 %v1778, %v1047
  %v1780 = vadd.f32 %v1779, %v1052
  %v1781 = vadd.f32 %v1780, %v1057
  %v1782 = vadd.f32 %v1781, %v1062
  %v1783 = vadd.f32 %v1782, %v1067
  %v1784 = vadd.f32 %v1783, %v1072
  %v1785 = vadd.f32 %v1784, %v1077
  %v1786 = vadd.f32 %v1785, %v1082
  %v1787 = vadd.f32 %v1786, %v1087
  %v1788 = vadd.f32 %v1787, %v1092
  %v1789 = vadd.f32 %v1788, %v1097
  %v1790 = vadd.f32 %v1789, %v1102
  %v1791 = vadd.f32 %v1790, %v1107
  %v1792 = vadd.f32 %v1791, %v1112
  %v1793 = vadd.f32 %v1792, %v1117
  %v1794 = vadd.f32 %v1793, %v1122
  %v1795 = vadd.f32 %v1794, %v1127
  %v1796 = vadd.f32 %v1795, %v1132
  %v1797 = vadd.f32 %v1796, %v1137
  %v1798 = vadd.f32 %v1797, %v1142
  %v1799 = vadd.f32 %v1798, %v1147
  %v1800 = vadd.f32 %v1799, %v1152
  %v1801 = vadd.f32 %v1800, %v1157
  %v1802 = vadd.f32 %v1801, %v1162
  %v1803 = vadd.f32 %v1802, %v1167
  %v1804 = vadd.f32 %v1803, %v1172
  %v1805 = vadd.f32 %v1804, %v1177
  %v1806 = vadd.f32 %v1805, %v1182
  %v1807 = vadd.f32 %v1806, %v1187
  %v1808 = vadd.f32 %v1807, %v1192
  %v1809 = vadd.f32 %v1808, %v1197
  %v1810 = vadd.f32 %v1809, %v1202
  %v1811 = vadd.f32 %v1810, %v1207
  %v1812 = vadd.f32 %v1811, %v1212
  %v1813 = vadd.f32 %v1812, %v1217
  %v1814 = vadd.f32 %v1813, %v1222
  %v1815 = vadd.f32 %v1814, %v1227
  %v1816 = vadd.f32 %v1815, %v1232
  %v1817 = vadd.f32 %v1816, %v1237
  %v1818 = vadd.f32 %v1817, %v1242
  %v1819 = vadd.f32 %v1818, %v1247
  %v1820 = vadd.f32 %v1819, %v1252
  %v1821 = vadd.f32 %v1820, %v1257
  %v1822 = vadd.f32 %v1821, %v1262
  %v1823 = vadd.f32 %v1822, %v1267
  %v1824 = vadd.f32 %v1823, %v1272
  %v1825 = vadd.f32 %v1824, %v1277
  %v1826 = vadd.f32 %v1825, %v1282
  %v1827 = vadd.f32 %v1826, %v1287
  %v1828 = vadd.f32 %v1827, %v1292
  %v1829 = vadd.f32 %v1828, %v1297
  %v1830 = vadd.f32 %v1829, %v1302
  %v1831 = vadd.f32 %v1830, %v1307
  %v1832 = vadd.f32 %v1831, %v1312
  %v1833 = vadd.f32 %v1832, %v1317
  %v1834 = vadd.f32 %v1833, %v1322
  %v1835 = vadd.f32 %v1834, %v1327
  %v1836 = vadd.f32 %v1835, %v1332
  %v1837 = vadd.f32 %v1836, %v1337
  %v1838 = vadd.f32 %v1837, %v1342
  %v1839 = vadd.f32 %v1838, %v1347
  %v1840 = vadd.f32 %v1839, %v1352
  %v1841 = vadd.f32 %v1840, %v1357
  %v1842 = vadd.f32 %v1841, %v1362
  %v1843 = vadd.f32 %v1842, %v1367
  %v1844 = vadd.f32 %v1843, %v1372
  %v1845 = vadd.f32 %v1844, %v1377
  %v1846 = vadd.f32 %v1845, %v1382
  %v1847 = vadd.f32 %v1846, %v1387
  %v1848 = vadd.f32 %v1847, %v1392
  %v1849 = vadd.f32 %v1848, %v1397
  %v1850 = vadd.f32 %v1849, %v1402
  %v1851 = vadd.f32 %v1850, %v1407
  %v1852 = vadd.f32 %v1851, %v1412
  %v1853 = vadd.f32 %v1852, %v1417
  %v1854 = vadd.f32 %v1853, %v1422
  %v1855 = vadd.f32 %v1854, %v1427
  %v1856 = vadd.f32 %v1855, %v1432
  %v1857 = vadd.f32 %v1856, %v1437
  %v1858 = vadd.f32 %v1857, %v1442
  %v1859 = vadd.f32 %v1858, %v1447
  %v1860 = vadd.f32 %v1859, %v1452
  %v1861 = vadd.f32 %v1860, %v1457
  %v1862 = vadd.f32 %v1861, %v1462
  %v1863 = vadd.f32 %v1862, %v1467
  %v1864 = vadd.f32 %v1863, %v1472
  %v1865 = vadd.f32 %v1864, %v1477
  %v1866 = vadd.f32 %v1865, %v1482
  %v1867 = vadd.f32 %v1866, %v1487
  %v1868 = vadd.f32 %v1867, %v1492
  %v1869 = vadd.f32 %v1868, %v1497
  %v1870 = vadd.f32 %v1869, %v1502
  %v1871 = vadd.f32 %v1870, %v1507
  %v1872 = vadd.f32 %v1871, %v1512
  %v1873 = vadd.f32 %v1872, %v1517
  %v1874 = vadd.f32 %v1873, %v1522
  %v1875 = vadd.f32 %v1874, %v1527
  %v1876 = vadd.f32 %v1875, %v1532
  %v1877 = vadd.f32 %v1876, %v1537
  %v1878 = vadd.f32 %v1877, %v1542
  %v1879 = vadd.f32 %v1878, %v1547
  %v1880 = vadd.f32 %v1879, %v1552
  %v1881 = vadd.f32 %v1880, %v1557
  %v1882 = vadd.f32 %v1881, %v1562
  %v1883 = vadd.f32 %v1882, %v1567
  %v1884 = vadd.f32 %v1883, %v1572
  %v1885 = vadd.f32 %v1884, %v1577
  %v1886 = vadd.f32 %v1885, %v1582
  %v1887 = vadd.f32 %v1886, %v1587
  %v1888 = vadd.f32 %v1887, %v1592
  %v1889 = vadd.f32 %v1888, %v1597
  %v1890 = vadd.f32 %v1889, %v1602
  %v1891 = vadd.f32 %v1890, %v1607
  %v1892 = vadd.f32 %v1891, %v1612
  %v1893 = vadd.f32 %v1892, %v1617
  %v1894 = vadd.f32 %v1893, %v1622
  %v1895 = vadd.f32 %v1894, %v1627
  %v1896 = vadd.f32 %v1895, %v1632
  %v1897 = vadd.f32 %v1896, %v1637
  %v1898 = vadd.f32 %v1897, %v1642
  %v1899 = vadd.f32 %v1898, %v1647
  %v1900 = vadd.f32 %v1899, %v1652
  %v1901 = vadd.f32 %v1900, %v1657
  %v1902 = vadd.f32 %v1901, %v1662
  %v1903 = vadd.f32 %v1902, %v1667
  %v1904 = vadd.f32 %v1903, %v1672
  %v1905 = vadd.f32 %v1904, %v1677
  %v1906 = vadd.f32 %v1905, %v1682
  %v1907 = vadd.f32 %v1906, %v1687
  %v1908 = vadd.f32 %v1907, %v1692
  %v1909 = vadd.f32 %v1908, %v1697
  %v1910 = vadd.f32 %v1909, %v1702
  %v1911 = vadd.f32 %v1910, %v1707
  %v1912 = vadd.f32 %v1911, %v1712
  %v1913 = vadd.f32 %v1912, %v1717
  %v1914 = vadd.f32 %v1913, %v1722
  %v1915 = vadd.f32 %v1914, %v1727
  %v1916 = vadd.f32 %v1915, %v1732
  %v1917 = vrot.slane %v1916, 4
  %v1918 = vadd.f32 %v1916, %v1917
  %v1919 = vrot.slane %v1918, 2
  %v1920 = vadd.f32 %v1918, %v1919
  %v1921 = vrot.slane %v1920, 1
  %v1922 = vadd.f32 %v1920, %v1921
  %v1923 = vmul.f32 %v1922, 0.00068587105
  %v1924 = vmul.f32 %v822, %v822
  %v1925 = vmul.f32 %v827, %v827
  %v1926 = vmul.f32 %v832, %v832
  %v1927 = vmul.f32 %v837, %v837
  %v1928 = vmul.f32 %v842, %v842
  %v1929 = vmul.f32 %v847, %v847
  %v1930 = vmul.f32 %v852, %v852
  %v1931 = vmul.f32 %v857, %v857
  %v1932 = vmul.f32 %v862, %v862
  %v1933 = vmul.f32 %v867, %v867
  %v1934 = vmul.f32 %v872, %v872
  %v1935 = vmul.f32 %v877, %v877
  %v1936 = vmul.f32 %v882, %v882
  %v1937 = vmul.f32 %v887, %v887
  %v1938 = vmul.f32 %v892, %v892
  %v1939 = vmul.f32 %v897, %v897
  %v1940 = vmul.f32 %v902, %v902
  %v1941 = vmul.f32 %v907, %v907
  %v1942 = vmul.f32 %v912, %v912
  %v1943 = vmul.f32 %v917, %v917
  %v1944 = vmul.f32 %v922, %v922
  %v1945 = vmul.f32 %v927, %v927
  %v1946 = vmul.f32 %v932, %v932
  %v1947 = vmul.f32 %v937, %v937
  %v1948 = vmul.f32 %v942, %v942
  %v1949 = vmul.f32 %v947, %v947
  %v1950 = vmul.f32 %v952, %v952
  %v1951 = vmul.f32 %v957, %v957
  %v1952 = vmul.f32 %v962, %v962
  %v1953 = vmul.f32 %v967, %v967
  %v1954 = vmul.f32 %v972, %v972
  %v1955 = vmul.f32 %v977, %v977
  %v1956 = vmul.f32 %v982, %v982
  %v1957 = vmul.f32 %v987, %v987
  %v1958 = vmul.f32 %v992, %v992
  %v1959 = vmul.f32 %v997, %v997
  %v1960 = vmul.f32 %v1002, %v1002
  %v1961 = vmul.f32 %v1007, %v1007
  %v1962 = vmul.f32 %v1012, %v1012
  %v1963 = vmul.f32 %v1017, %v1017
  %v1964 = vmul.f32 %v1022, %v1022
  %v1965 = vmul.f32 %v1027, %v1027
  %v1966 = vmul.f32 %v1032, %v1032
  %v1967 = vmul.f32 %v1037, %v1037
  %v1968 = vmul.f32 %v1042, %v1042
  %v1969 = vmul.f32 %v1047, %v1047
  %v1970 = vmul.f32 %v1052, %v1052
  %v1971 = vmul.f32 %v1057, %v1057
  %v1972 = vmul.f32 %v1062, %v1062
  %v1973 = vmul.f32 %v1067, %v1067
  %v1974 = vmul.f32 %v1072, %v1072
  %v1975 = vmul.f32 %v1077, %v1077
  %v1976 = vmul.f32 %v1082, %v1082
  %v1977 = vmul.f32 %v1087, %v1087
  %v1978 = vmul.f32 %v1092, %v1092
  %v1979 = vmul.f32 %v1097, %v1097
  %v1980 = vmul.f32 %v1102, %v1102
  %v1981 = vmul.f32 %v1107, %v1107
  %v1982 = vmul.f32 %v1112, %v1112
  %v1983 = vmul.f32 %v1117, %v1117
  %v1984 = vmul.f32 %v1122, %v1122
  %v1985 = vmul.f32 %v1127, %v1127
  %v1986 = vmul.f32 %v1132, %v1132
  %v1987 = vmul.f32 %v1137, %v1137
  %v1988 = vmul.f32 %v1142, %v1142
  %v1989 = vmul.f32 %v1147, %v1147
  %v1990 = vmul.f32 %v1152, %v1152
  %v1991 = vmul.f32 %v1157, %v1157
  %v1992 = vmul.f32 %v1162, %v1162
  %v1993 = vmul.f32 %v1167, %v1167
  %v1994 = vmul.f32 %v1172, %v1172
  %v1995 = vmul.f32 %v1177, %v1177
  %v1996 = vmul.f32 %v1182, %v1182
  %v1997 = vmul.f32 %v1187, %v1187
  %v1998 = vmul.f32 %v1192, %v1192
  %v1999 = vmul.f32 %v1197, %v1197
  %v2000 = vmul.f32 %v1202, %v1202
  %v2001 = vmul.f32 %v1207, %v1207
  %v2002 = vmul.f32 %v1212, %v1212
  %v2003 = vmul.f32 %v1217, %v1217
  %v2004 = vmul.f32 %v1222, %v1222
  %v2005 = vmul.f32 %v1227, %v1227
  %v2006 = vmul.f32 %v1232, %v1232
  %v2007 = vmul.f32 %v1237, %v1237
  %v2008 = vmul.f32 %v1242, %v1242
  %v2009 = vmul.f32 %v1247, %v1247
  %v2010 = vmul.f32 %v1252, %v1252
  %v2011 = vmul.f32 %v1257, %v1257
  %v2012 = vmul.f32 %v1262, %v1262
  %v2013 = vmul.f32 %v1267, %v1267
  %v2014 = vmul.f32 %v1272, %v1272
  %v2015 = vmul.f32 %v1277, %v1277
  %v2016 = vmul.f32 %v1282, %v1282
  %v2017 = vmul.f32 %v1287, %v1287
  %v2018 = vmul.f32 %v1292, %v1292
  %v2019 = vmul.f32 %v1297, %v1297
  %v2020 = vmul.f32 %v1302, %v1302
  %v2021 = vmul.f32 %v1307, %v1307
  %v2022 = vmul.f32 %v1312, %v1312
  %v2023 = vmul.f32 %v1317, %v1317
  %v2024 = vmul.f32 %v1322, %v1322
  %v2025 = vmul.f32 %v1327, %v1327
  %v2026 = vmul.f32 %v1332, %v1332
  %v2027 = vmul.f32 %v1337, %v1337
  %v2028 = vmul.f32 %v1342, %v1342
  %v2029 = vmul.f32 %v1347, %v1347
  %v2030 = vmul.f32 %v1352, %v1352
  %v2031 = vmul.f32 %v1357, %v1357
  %v2032 = vmul.f32 %v1362, %v1362
  %v2033 = vmul.f32 %v1367, %v1367
  %v2034 = vmul.f32 %v1372, %v1372
  %v2035 = vmul.f32 %v1377, %v1377
  %v2036 = vmul.f32 %v1382, %v1382
  %v2037 = vmul.f32 %v1387, %v1387
  %v2038 = vmul.f32 %v1392, %v1392
  %v2039 = vmul.f32 %v1397, %v1397
  %v2040 = vmul.f32 %v1402, %v1402
  %v2041 = vmul.f32 %v1407, %v1407
  %v2042 = vmul.f32 %v1412, %v1412
  %v2043 = vmul.f32 %v1417, %v1417
  %v2044 = vmul.f32 %v1422, %v1422
  %v2045 = vmul.f32 %v1427, %v1427
  %v2046 = vmul.f32 %v1432, %v1432
  %v2047 = vmul.f32 %v1437, %v1437
  %v2048 = vmul.f32 %v1442, %v1442
  %v2049 = vmul.f32 %v1447, %v1447
  %v2050 = vmul.f32 %v1452, %v1452
  %v2051 = vmul.f32 %v1457, %v1457
  %v2052 = vmul.f32 %v1462, %v1462
  %v2053 = vmul.f32 %v1467, %v1467
  %v2054 = vmul.f32 %v1472, %v1472
  %v2055 = vmul.f32 %v1477, %v1477
  %v2056 = vmul.f32 %v1482, %v1482
  %v2057 = vmul.f32 %v1487, %v1487
  %v2058 = vmul.f32 %v1492, %v1492
  %v2059 = vmul.f32 %v1497, %v1497
  %v2060 = vmul.f32 %v1502, %v1502
  %v2061 = vmul.f32 %v1507, %v1507
  %v2062 = vmul.f32 %v1512, %v1512
  %v2063 = vmul.f32 %v1517, %v1517
  %v2064 = vmul.f32 %v1522, %v1522
  %v2065 = vmul.f32 %v1527, %v1527
  %v2066 = vmul.f32 %v1532, %v1532
  %v2067 = vmul.f32 %v1537, %v1537
  %v2068 = vmul.f32 %v1542, %v1542
  %v2069 = vmul.f32 %v1547, %v1547
  %v2070 = vmul.f32 %v1552, %v1552
  %v2071 = vmul.f32 %v1557, %v1557
  %v2072 = vmul.f32 %v1562, %v1562
  %v2073 = vmul.f32 %v1567, %v1567
  %v2074 = vmul.f32 %v1572, %v1572
  %v2075 = vmul.f32 %v1577, %v1577
  %v2076 = vmul.f32 %v1582, %v1582
  %v2077 = vmul.f32 %v1587, %v1587
  %v2078 = vmul.f32 %v1592, %v1592
  %v2079 = vmul.f32 %v1597, %v1597
  %v2080 = vmul.f32 %v1602, %v1602
  %v2081 = vmul.f32 %v1607, %v1607
  %v2082 = vmul.f32 %v1612, %v1612
  %v2083 = vmul.f32 %v1617, %v1617
  %v2084 = vmul.f32 %v1622, %v1622
  %v2085 = vmul.f32 %v1627, %v1627
  %v2086 = vmul.f32 %v1632, %v1632
  %v2087 = vmul.f32 %v1637, %v1637
  %v2088 = vmul.f32 %v1642, %v1642
  %v2089 = vmul.f32 %v1647, %v1647
  %v2090 = vmul.f32 %v1652, %v1652
  %v2091 = vmul.f32 %v1657, %v1657
  %v2092 = vmul.f32 %v1662, %v1662
  %v2093 = vmul.f32 %v1667, %v1667
  %v2094 = vmul.f32 %v1672, %v1672
  %v2095 = vmul.f32 %v1677, %v1677
  %v2096 = vmul.f32 %v1682, %v1682
  %v2097 = vmul.f32 %v1687, %v1687
  %v2098 = vmul.f32 %v1692, %v1692
  %v2099 = vmul.f32 %v1697, %v1697
  %v2100 = vmul.f32 %v1702, %v1702
  %v2101 = vmul.f32 %v1707, %v1707
  %v2102 = vmul.f32 %v1712, %v1712
  %v2103 = vmul.f32 %v1717, %v1717
  %v2104 = vmul.f32 %v1722, %v1722
  %v2105 = vmul.f32 %v1727, %v1727
  %v2106 = vmul.f32 %v1732, %v1732
  %v2107 = vadd.f32 %v1924, %v1925
  %v2108 = vadd.f32 %v2107, %v1926
  %v2109 = vadd.f32 %v2108, %v1927
  %v2110 = vadd.f32 %v2109, %v1928
  %v2111 = vadd.f32 %v2110, %v1929
  %v2112 = vadd.f32 %v2111, %v1930
  %v2113 = vadd.f32 %v2112, %v1931
  %v2114 = vadd.f32 %v2113, %v1932
  %v2115 = vadd.f32 %v2114, %v1933
  %v2116 = vadd.f32 %v2115, %v1934
  %v2117 = vadd.f32 %v2116, %v1935
  %v2118 = vadd.f32 %v2117, %v1936
  %v2119 = vadd.f32 %v2118, %v1937
  %v2120 = vadd.f32 %v2119, %v1938
  %v2121 = vadd.f32 %v2120, %v1939
  %v2122 = vadd.f32 %v2121, %v1940
  %v2123 = vadd.f32 %v2122, %v1941
  %v2124 = vadd.f32 %v2123, %v1942
  %v2125 = vadd.f32 %v2124, %v1943
  %v2126 = vadd.f32 %v2125, %v1944
  %v2127 = vadd.f32 %v2126, %v1945
  %v2128 = vadd.f32 %v2127, %v1946
  %v2129 = vadd.f32 %v2128, %v1947
  %v2130 = vadd.f32 %v2129, %v1948
  %v2131 = vadd.f32 %v2130, %v1949
  %v2132 = vadd.f32 %v2131, %v1950
  %v2133 = vadd.f32 %v2132, %v1951
  %v2134 = vadd.f32 %v2133, %v1952
  %v2135 = vadd.f32 %v2134, %v1953
  %v2136 = vadd.f32 %v2135, %v1954
  %v2137 = vadd.f32 %v2136, %v1955
  %v2138 = vadd.f32 %v2137, %v1956
  %v2139 = vadd.f32 %v2138, %v1957
  %v2140 = vadd.f32 %v2139, %v1958
  %v2141 = vadd.f32 %v2140, %v1959
  %v2142 = vadd.f32 %v2141, %v1960
  %v2143 = vadd.f32 %v2142, %v1961
  %v2144 = vadd.f32 %v2143, %v1962
  %v2145 = vadd.f32 %v2144, %v1963
  %v2146 = vadd.f32 %v2145, %v1964
  %v2147 = vadd.f32 %v2146, %v1965
  %v2148 = vadd.f32 %v2147, %v1966
  %v2149 = vadd.f32 %v2148, %v1967
  %v2150 = vadd.f32 %v2149, %v1968
  %v2151 = vadd.f32 %v2150, %v1969
  %v2152 = vadd.f32 %v2151, %v1970
  %v2153 = vadd.f32 %v2152, %v1971
  %v2154 = vadd.f32 %v2153, %v1972
  %v2155 = vadd.f32 %v2154, %v1973
  %v2156 = vadd.f32 %v2155, %v1974
  %v2157 = vadd.f32 %v2156, %v1975
  %v2158 = vadd.f32 %v2157, %v1976
  %v2159 = vadd.f32 %v2158, %v1977
  %v2160 = vadd.f32 %v2159, %v1978
  %v2161 = vadd.f32 %v2160, %v1979
  %v2162 = vadd.f32 %v2161, %v1980
  %v2163 = vadd.f32 %v2162, %v1981
  %v2164 = vadd.f32 %v2163, %v1982
  %v2165 = vadd.f32 %v2164, %v1983
  %v2166 = vadd.f32 %v2165, %v1984
  %v2167 = vadd.f32 %v2166, %v1985
  %v2168 = vadd.f32 %v2167, %v1986
  %v2169 = vadd.f32 %v2168, %v1987
  %v2170 = vadd.f32 %v2169, %v1988
  %v2171 = vadd.f32 %v2170, %v1989
  %v2172 = vadd.f32 %v2171, %v1990
  %v2173 = vadd.f32 %v2172, %v1991
  %v2174 = vadd.f32 %v2173, %v1992
  %v2175 = vadd.f32 %v2174, %v1993
  %v2176 = vadd.f32 %v2175, %v1994
  %v2177 = vadd.f32 %v2176, %v1995
  %v2178 = vadd.f32 %v2177, %v1996
  %v2179 = vadd.f32 %v2178, %v1997
  %v2180 = vadd.f32 %v2179, %v1998
  %v2181 = vadd.f32 %v2180, %v1999
  %v2182 = vadd.f32 %v2181, %v2000
  %v2183 = vadd.f32 %v2182, %v2001
  %v2184 = vadd.f32 %v2183, %v2002
  %v2185 = vadd.f32 %v2184, %v2003
  %v2186 = vadd.f32 %v2185, %v2004
  %v2187 = vadd.f32 %v2186, %v2005
  %v2188 = vadd.f32 %v2187, %v2006
  %v2189 = vadd.f32 %v2188, %v2007
  %v2190 = vadd.f32 %v2189, %v2008
  %v2191 = vadd.f32 %v2190, %v2009
  %v2192 = vadd.f32 %v2191, %v2010
  %v2193 = vadd.f32 %v2192, %v2011
  %v2194 = vadd.f32 %v2193, %v2012
  %v2195 = vadd.f32 %v2194, %v2013
  %v2196 = vadd.f32 %v2195, %v2014
  %v2197 = vadd.f32 %v2196, %v2015
  %v2198 = vadd.f32 %v2197, %v2016
  %v2199 = vadd.f32 %v2198, %v2017
  %v2200 = vadd.f32 %v2199, %v2018
  %v2201 = vadd.f32 %v2200, %v2019
  %v2202 = vadd.f32 %v2201, %v2020
  %v2203 = vadd.f32 %v2202, %v2021
  %v2204 = vadd.f32 %v2203, %v2022
  %v2205 = vadd.f32 %v2204, %v2023
  %v2206 = vadd.f32 %v2205, %v2024
  %v2207 = vadd.f32 %v2206, %v2025
  %v2208 = vadd.f32 %v2207, %v2026
  %v2209 = vadd.f32 %v2208, %v2027
  %v2210 = vadd.f32 %v2209, %v2028
  %v2211 = vadd.f32 %v2210, %v2029
  %v2212 = vadd.f32 %v2211, %v2030
  %v2213 = vadd.f32 %v2212, %v2031
  %v2214 = vadd.f32 %v2213, %v2032
  %v2215 = vadd.f32 %v2214, %v2033
  %v2216 = vadd.f32 %v2215, %v2034
  %v2217 = vadd.f32 %v2216, %v2035
  %v2218 = vadd.f32 %v2217, %v2036
  %v2219 = vadd.f32 %v2218, %v2037
  %v2220 = vadd.f32 %v2219, %v2038
  %v2221 = vadd.f32 %v2220, %v2039
  %v2222 = vadd.f32 %v2221, %v2040
  %v2223 = vadd.f32 %v2222, %v2041
  %v2224 = vadd.f32 %v2223, %v2042
  %v2225 = vadd.f32 %v2224, %v2043
  %v2226 = vadd.f32 %v2225, %v2044
  %v2227 = vadd.f32 %v2226, %v2045
  %v2228 = vadd.f32 %v2227, %v2046
  %v2229 = vadd.f32 %v2228, %v2047
  %v2230 = vadd.f32 %v2229, %v2048
  %v2231 = vadd.f32 %v2230, %v2049
  %v2232 = vadd.f32 %v2231, %v2050
  %v2233 = vadd.f32 %v2232, %v2051
  %v2234 = vadd.f32 %v2233, %v2052
  %v2235 = vadd.f32 %v2234, %v2053
  %v2236 = vadd.f32 %v2235, %v2054
  %v2237 = vadd.f32 %v2236, %v2055
  %v2238 = vadd.f32 %v2237, %v2056
  %v2239 = vadd.f32 %v2238, %v2057
  %v2240 = vadd.f32 %v2239, %v2058
  %v2241 = vadd.f32 %v2240, %v2059
  %v2242 = vadd.f32 %v2241, %v2060
  %v2243 = vadd.f32 %v2242, %v2061
  %v2244 = vadd.f32 %v2243, %v2062
  %v2245 = vadd.f32 %v2244, %v2063
  %v2246 = vadd.f32 %v2245, %v2064
  %v2247 = vadd.f32 %v2246, %v2065
  %v2248 = vadd.f32 %v2247, %v2066
  %v2249 = vadd.f32 %v2248, %v2067
  %v2250 = vadd.f32 %v2249, %v2068
  %v2251 = vadd.f32 %v2250, %v2069
  %v2252 = vadd.f32 %v2251, %v2070
  %v2253 = vadd.f32 %v2252, %v2071
  %v2254 = vadd.f32 %v2253, %v2072
  %v2255 = vadd.f32 %v2254, %v2073
  %v2256 = vadd.f32 %v2255, %v2074
  %v2257 = vadd.f32 %v2256, %v2075
  %v2258 = vadd.f32 %v2257, %v2076
  %v2259 = vadd.f32 %v2258, %v2077
  %v2260 = vadd.f32 %v2259, %v2078
  %v2261 = vadd.f32 %v2260, %v2079
  %v2262 = vadd.f32 %v2261, %v2080
  %v2263 = vadd.f32 %v2262, %v2081
  %v2264 = vadd.f32 %v2263, %v2082
  %v2265 = vadd.f32 %v2264, %v2083
  %v2266 = vadd.f32 %v2265, %v2084
  %v2267 = vadd.f32 %v2266, %v2085
  %v2268 = vadd.f32 %v2267, %v2086
  %v2269 = vadd.f32 %v2268, %v2087
  %v2270 = vadd.f32 %v2269, %v2088
  %v2271 = vadd.f32 %v2270, %v2089
  %v2272 = vadd.f32 %v2271, %v2090
  %v2273 = vadd.f32 %v2272, %v2091
  %v2274 = vadd.f32 %v2273, %v2092
  %v2275 = vadd.f32 %v2274, %v2093
  %v2276 = vadd.f32 %v2275, %v2094
  %v2277 = vadd.f32 %v2276, %v2095
  %v2278 = vadd.f32 %v2277, %v2096
  %v2279 = vadd.f32 %v2278, %v2097
  %v2280 = vadd.f32 %v2279, %v2098
  %v2281 = vadd.f32 %v2280, %v2099
  %v2282 = vadd.f32 %v2281, %v2100
  %v2283 = vadd.f32 %v2282, %v2101
  %v2284 = vadd.f32 %v2283, %v2102
  %v2285 = vadd.f32 %v2284, %v2103
  %v2286 = vadd.f32 %v2285, %v2104
  %v2287 = vadd.f32 %v2286, %v2105
  %v2288 = vadd.f32 %v2287, %v2106
  %v2289 = vrot.slane %v2288, 4
  %v2290 = vadd.f32 %v2288, %v2289
  %v2291 = vrot.slane %v2290, 2
  %v2292 = vadd.f32 %v2290, %v2291
  %v2293 = vrot.slane %v2292, 1
  %v2294 = vadd.f32 %v2292, %v2293
  %v2295 = vmul.f32 %v2294, 0.00068587105
  %v2296 = vmul.f32 %v1923, %v1923
  %v2297 = vsub.f32 %v2295, %v2296
  %v2298 = vmax.f32 %v2297, 0.0
  %v2299 = vld [vmem:[%s2] sm:$0x1]
  %v2300 = vadd.f32 %v2298, 1e-05
  %v2301 = vrsqrt.pop %v2300
  %v2302 = vmul.f32 %v2299, %v2301
  %v2303 = vld [vmem:[%s3] sm:$0x1]
  %v2304 = vmul.f32 %v1923, %v2302
  %v2305 = vsub.f32 %v2303, %v2304
  %v2307 = vlaneseq
  %v2308 = vshrl.u32 %v2307, 7
  %v2309 = vsub.s32 0, %v2308
  %v2310 = vrot.slane %v2302, %v2309
  %v2312 = vmul.f32 %v822, %v2310
  %v2313 = vmul.f32 %v827, %v2310
  %v2314 = vmul.f32 %v832, %v2310
  %v2315 = vmul.f32 %v837, %v2310
  %v2316 = vmul.f32 %v842, %v2310
  %v2317 = vmul.f32 %v847, %v2310
  %v2318 = vmul.f32 %v852, %v2310
  %v2319 = vmul.f32 %v857, %v2310
  %v2320 = vmul.f32 %v862, %v2310
  %v2321 = vmul.f32 %v867, %v2310
  %v2322 = vmul.f32 %v872, %v2310
  %v2323 = vmul.f32 %v877, %v2310
  %v2324 = vmul.f32 %v882, %v2310
  %v2325 = vmul.f32 %v887, %v2310
  %v2326 = vmul.f32 %v892, %v2310
  %v2327 = vmul.f32 %v897, %v2310
  %v2328 = vmul.f32 %v902, %v2310
  %v2329 = vmul.f32 %v907, %v2310
  %v2330 = vmul.f32 %v912, %v2310
  %v2331 = vmul.f32 %v917, %v2310
  %v2332 = vmul.f32 %v922, %v2310
  %v2333 = vmul.f32 %v927, %v2310
  %v2334 = vmul.f32 %v932, %v2310
  %v2335 = vmul.f32 %v937, %v2310
  %v2336 = vmul.f32 %v942, %v2310
  %v2337 = vmul.f32 %v947, %v2310
  %v2338 = vmul.f32 %v952, %v2310
  %v2339 = vmul.f32 %v957, %v2310
  %v2340 = vmul.f32 %v962, %v2310
  %v2341 = vmul.f32 %v967, %v2310
  %v2342 = vmul.f32 %v972, %v2310
  %v2343 = vmul.f32 %v977, %v2310
  %v2344 = vmul.f32 %v982, %v2310
  %v2345 = vmul.f32 %v987, %v2310
  %v2346 = vmul.f32 %v992, %v2310
  %v2347 = vmul.f32 %v997, %v2310
  %v2348 = vmul.f32 %v1002, %v2310
  %v2349 = vmul.f32 %v1007, %v2310
  %v2350 = vmul.f32 %v1012, %v2310
  %v2351 = vmul.f32 %v1017, %v2310
  %v2352 = vmul.f32 %v1022, %v2310
  %v2353 = vmul.f32 %v1027, %v2310
  %v2354 = vmul.f32 %v1032, %v2310
  %v2355 = vmul.f32 %v1037, %v2310
  %v2356 = vmul.f32 %v1042, %v2310
  %v2357 = vmul.f32 %v1047, %v2310
  %v2358 = vmul.f32 %v1052, %v2310
  %v2359 = vmul.f32 %v1057, %v2310
  %v2360 = vmul.f32 %v1062, %v2310
  %v2361 = vmul.f32 %v1067, %v2310
  %v2362 = vmul.f32 %v1072, %v2310
  %v2363 = vmul.f32 %v1077, %v2310
  %v2364 = vmul.f32 %v1082, %v2310
  %v2365 = vmul.f32 %v1087, %v2310
  %v2366 = vmul.f32 %v1092, %v2310
  %v2367 = vmul.f32 %v1097, %v2310
  %v2368 = vmul.f32 %v1102, %v2310
  %v2369 = vmul.f32 %v1107, %v2310
  %v2370 = vmul.f32 %v1112, %v2310
  %v2371 = vmul.f32 %v1117, %v2310
  %v2372 = vmul.f32 %v1122, %v2310
  %v2373 = vmul.f32 %v1127, %v2310
  %v2374 = vmul.f32 %v1132, %v2310
  %v2375 = vmul.f32 %v1137, %v2310
  %v2376 = vmul.f32 %v1142, %v2310
  %v2377 = vmul.f32 %v1147, %v2310
  %v2378 = vmul.f32 %v1152, %v2310
  %v2379 = vmul.f32 %v1157, %v2310
  %v2380 = vmul.f32 %v1162, %v2310
  %v2381 = vmul.f32 %v1167, %v2310
  %v2382 = vmul.f32 %v1172, %v2310
  %v2383 = vmul.f32 %v1177, %v2310
  %v2384 = vmul.f32 %v1182, %v2310
  %v2385 = vmul.f32 %v1187, %v2310
  %v2386 = vmul.f32 %v1192, %v2310
  %v2387 = vmul.f32 %v1197, %v2310
  %v2388 = vmul.f32 %v1202, %v2310
  %v2389 = vmul.f32 %v1207, %v2310
  %v2390 = vmul.f32 %v1212, %v2310
  %v2391 = vmul.f32 %v1217, %v2310
  %v2392 = vmul.f32 %v1222, %v2310
  %v2393 = vmul.f32 %v1227, %v2310
  %v2394 = vmul.f32 %v1232, %v2310
  %v2395 = vmul.f32 %v1237, %v2310
  %v2396 = vmul.f32 %v1242, %v2310
  %v2397 = vmul.f32 %v1247, %v2310
  %v2398 = vmul.f32 %v1252, %v2310
  %v2399 = vmul.f32 %v1257, %v2310
  %v2400 = vmul.f32 %v1262, %v2310
  %v2401 = vmul.f32 %v1267, %v2310
  %v2402 = vmul.f32 %v1272, %v2310
  %v2403 = vmul.f32 %v1277, %v2310
  %v2404 = vmul.f32 %v1282, %v2310
  %v2405 = vmul.f32 %v1287, %v2310
  %v2406 = vmul.f32 %v1292, %v2310
  %v2407 = vmul.f32 %v1297, %v2310
  %v2408 = vmul.f32 %v1302, %v2310
  %v2409 = vmul.f32 %v1307, %v2310
  %v2410 = vmul.f32 %v1312, %v2310
  %v2411 = vmul.f32 %v1317, %v2310
  %v2412 = vmul.f32 %v1322, %v2310
  %v2413 = vmul.f32 %v1327, %v2310
  %v2414 = vmul.f32 %v1332, %v2310
  %v2415 = vmul.f32 %v1337, %v2310
  %v2416 = vmul.f32 %v1342, %v2310
  %v2417 = vmul.f32 %v1347, %v2310
  %v2418 = vmul.f32 %v1352, %v2310
  %v2419 = vmul.f32 %v1357, %v2310
  %v2420 = vmul.f32 %v1362, %v2310
  %v2421 = vmul.f32 %v1367, %v2310
  %v2422 = vmul.f32 %v1372, %v2310
  %v2423 = vmul.f32 %v1377, %v2310
  %v2424 = vmul.f32 %v1382, %v2310
  %v2425 = vmul.f32 %v1387, %v2310
  %v2426 = vmul.f32 %v1392, %v2310
  %v2427 = vmul.f32 %v1397, %v2310
  %v2428 = vmul.f32 %v1402, %v2310
  %v2429 = vmul.f32 %v1407, %v2310
  %v2430 = vmul.f32 %v1412, %v2310
  %v2431 = vmul.f32 %v1417, %v2310
  %v2432 = vmul.f32 %v1422, %v2310
  %v2433 = vmul.f32 %v1427, %v2310
  %v2434 = vmul.f32 %v1432, %v2310
  %v2435 = vmul.f32 %v1437, %v2310
  %v2436 = vmul.f32 %v1442, %v2310
  %v2437 = vmul.f32 %v1447, %v2310
  %v2438 = vmul.f32 %v1452, %v2310
  %v2439 = vmul.f32 %v1457, %v2310
  %v2440 = vmul.f32 %v1462, %v2310
  %v2441 = vmul.f32 %v1467, %v2310
  %v2442 = vmul.f32 %v1472, %v2310
  %v2443 = vmul.f32 %v1477, %v2310
  %v2444 = vmul.f32 %v1482, %v2310
  %v2445 = vmul.f32 %v1487, %v2310
  %v2446 = vmul.f32 %v1492, %v2310
  %v2447 = vmul.f32 %v1497, %v2310
  %v2448 = vmul.f32 %v1502, %v2310
  %v2449 = vmul.f32 %v1507, %v2310
  %v2450 = vmul.f32 %v1512, %v2310
  %v2451 = vmul.f32 %v1517, %v2310
  %v2452 = vmul.f32 %v1522, %v2310
  %v2453 = vmul.f32 %v1527, %v2310
  %v2454 = vmul.f32 %v1532, %v2310
  %v2455 = vmul.f32 %v1537, %v2310
  %v2456 = vmul.f32 %v1542, %v2310
  %v2457 = vmul.f32 %v1547, %v2310
  %v2458 = vmul.f32 %v1552, %v2310
  %v2459 = vmul.f32 %v1557, %v2310
  %v2460 = vmul.f32 %v1562, %v2310
  %v2461 = vmul.f32 %v1567, %v2310
  %v2462 = vmul.f32 %v1572, %v2310
  %v2463 = vmul.f32 %v1577, %v2310
  %v2464 = vmul.f32 %v1582, %v2310
  %v2465 = vmul.f32 %v1587, %v2310
  %v2466 = vmul.f32 %v1592, %v2310
  %v2467 = vmul.f32 %v1597, %v2310
  %v2468 = vmul.f32 %v1602, %v2310
  %v2469 = vmul.f32 %v1607, %v2310
  %v2470 = vmul.f32 %v1612, %v2310
  %v2471 = vmul.f32 %v1617, %v2310
  %v2472 = vmul.f32 %v1622, %v2310
  %v2473 = vmul.f32 %v1627, %v2310
  %v2474 = vmul.f32 %v1632, %v2310
  %v2475 = vmul.f32 %v1637, %v2310
  %v2476 = vmul.f32 %v1642, %v2310
  %v2477 = vmul.f32 %v1647, %v2310
  %v2478 = vmul.f32 %v1652, %v2310
  %v2479 = vmul.f32 %v1657, %v2310
  %v2480 = vmul.f32 %v1662, %v2310
  %v2481 = vmul.f32 %v1667, %v2310
  %v2482 = vmul.f32 %v1672, %v2310
  %v2483 = vmul.f32 %v1677, %v2310
  %v2484 = vmul.f32 %v1682, %v2310
  %v2485 = vmul.f32 %v1687, %v2310
  %v2486 = vmul.f32 %v1692, %v2310
  %v2487 = vmul.f32 %v1697, %v2310
  %v2488 = vmul.f32 %v1702, %v2310
  %v2489 = vmul.f32 %v1707, %v2310
  %v2490 = vmul.f32 %v1712, %v2310
  %v2491 = vmul.f32 %v1717, %v2310
  %v2492 = vmul.f32 %v1722, %v2310
  %v2493 = vmul.f32 %v1727, %v2310
  %v2494 = vmul.f32 %v1732, %v2310
  %v2496 = vlaneseq
  %v2497 = vshrl.u32 %v2496, 7
  %v2498 = vsub.s32 0, %v2497
  %v2499 = vrot.slane %v2305, %v2498
  %v2501 = vadd.f32 %v2312, %v2499
  %v2502 = vadd.f32 %v2313, %v2499
  %v2503 = vadd.f32 %v2314, %v2499
  %v2504 = vadd.f32 %v2315, %v2499
  %v2505 = vadd.f32 %v2316, %v2499
  %v2506 = vadd.f32 %v2317, %v2499
  %v2507 = vadd.f32 %v2318, %v2499
  %v2508 = vadd.f32 %v2319, %v2499
  %v2509 = vadd.f32 %v2320, %v2499
  %v2510 = vadd.f32 %v2321, %v2499
  %v2511 = vadd.f32 %v2322, %v2499
  %v2512 = vadd.f32 %v2323, %v2499
  %v2513 = vadd.f32 %v2324, %v2499
  %v2514 = vadd.f32 %v2325, %v2499
  %v2515 = vadd.f32 %v2326, %v2499
  %v2516 = vadd.f32 %v2327, %v2499
  %v2517 = vadd.f32 %v2328, %v2499
  %v2518 = vadd.f32 %v2329, %v2499
  %v2519 = vadd.f32 %v2330, %v2499
  %v2520 = vadd.f32 %v2331, %v2499
  %v2521 = vadd.f32 %v2332, %v2499
  %v2522 = vadd.f32 %v2333, %v2499
  %v2523 = vadd.f32 %v2334, %v2499
  %v2524 = vadd.f32 %v2335, %v2499
  %v2525 = vadd.f32 %v2336, %v2499
  %v2526 = vadd.f32 %v2337, %v2499
  %v2527 = vadd.f32 %v2338, %v2499
  %v2528 = vadd.f32 %v2339, %v2499
  %v2529 = vadd.f32 %v2340, %v2499
  %v2530 = vadd.f32 %v2341, %v2499
  %v2531 = vadd.f32 %v2342, %v2499
  %v2532 = vadd.f32 %v2343, %v2499
  %v2533 = vadd.f32 %v2344, %v2499
  %v2534 = vadd.f32 %v2345, %v2499
  %v2535 = vadd.f32 %v2346, %v2499
  %v2536 = vadd.f32 %v2347, %v2499
  %v2537 = vadd.f32 %v2348, %v2499
  %v2538 = vadd.f32 %v2349, %v2499
  %v2539 = vadd.f32 %v2350, %v2499
  %v2540 = vadd.f32 %v2351, %v2499
  %v2541 = vadd.f32 %v2352, %v2499
  %v2542 = vadd.f32 %v2353, %v2499
  %v2543 = vadd.f32 %v2354, %v2499
  %v2544 = vadd.f32 %v2355, %v2499
  %v2545 = vadd.f32 %v2356, %v2499
  %v2546 = vadd.f32 %v2357, %v2499
  %v2547 = vadd.f32 %v2358, %v2499
  %v2548 = vadd.f32 %v2359, %v2499
  %v2549 = vadd.f32 %v2360, %v2499
  %v2550 = vadd.f32 %v2361, %v2499
  %v2551 = vadd.f32 %v2362, %v2499
  %v2552 = vadd.f32 %v2363, %v2499
  %v2553 = vadd.f32 %v2364, %v2499
  %v2554 = vadd.f32 %v2365, %v2499
  %v2555 = vadd.f32 %v2366, %v2499
  %v2556 = vadd.f32 %v2367, %v2499
  %v2557 = vadd.f32 %v2368, %v2499
  %v2558 = vadd.f32 %v2369, %v2499
  %v2559 = vadd.f32 %v2370, %v2499
  %v2560 = vadd.f32 %v2371, %v2499
  %v2561 = vadd.f32 %v2372, %v2499
  %v2562 = vadd.f32 %v2373, %v2499
  %v2563 = vadd.f32 %v2374, %v2499
  %v2564 = vadd.f32 %v2375, %v2499
  %v2565 = vadd.f32 %v2376, %v2499
  %v2566 = vadd.f32 %v2377, %v2499
  %v2567 = vadd.f32 %v2378, %v2499
  %v2568 = vadd.f32 %v2379, %v2499
  %v2569 = vadd.f32 %v2380, %v2499
  %v2570 = vadd.f32 %v2381, %v2499
  %v2571 = vadd.f32 %v2382, %v2499
  %v2572 = vadd.f32 %v2383, %v2499
  %v2573 = vadd.f32 %v2384, %v2499
  %v2574 = vadd.f32 %v2385, %v2499
  %v2575 = vadd.f32 %v2386, %v2499
  %v2576 = vadd.f32 %v2387, %v2499
  %v2577 = vadd.f32 %v2388, %v2499
  %v2578 = vadd.f32 %v2389, %v2499
  %v2579 = vadd.f32 %v2390, %v2499
  %v2580 = vadd.f32 %v2391, %v2499
  %v2581 = vadd.f32 %v2392, %v2499
  %v2582 = vadd.f32 %v2393, %v2499
  %v2583 = vadd.f32 %v2394, %v2499
  %v2584 = vadd.f32 %v2395, %v2499
  %v2585 = vadd.f32 %v2396, %v2499
  %v2586 = vadd.f32 %v2397, %v2499
  %v2587 = vadd.f32 %v2398, %v2499
  %v2588 = vadd.f32 %v2399, %v2499
  %v2589 = vadd.f32 %v2400, %v2499
  %v2590 = vadd.f32 %v2401, %v2499
  %v2591 = vadd.f32 %v2402, %v2499
  %v2592 = vadd.f32 %v2403, %v2499
  %v2593 = vadd.f32 %v2404, %v2499
  %v2594 = vadd.f32 %v2405, %v2499
  %v2595 = vadd.f32 %v2406, %v2499
  %v2596 = vadd.f32 %v2407, %v2499
  %v2597 = vadd.f32 %v2408, %v2499
  %v2598 = vadd.f32 %v2409, %v2499
  %v2599 = vadd.f32 %v2410, %v2499
  %v2600 = vadd.f32 %v2411, %v2499
  %v2601 = vadd.f32 %v2412, %v2499
  %v2602 = vadd.f32 %v2413, %v2499
  %v2603 = vadd.f32 %v2414, %v2499
  %v2604 = vadd.f32 %v2415, %v2499
  %v2605 = vadd.f32 %v2416, %v2499
  %v2606 = vadd.f32 %v2417, %v2499
  %v2607 = vadd.f32 %v2418, %v2499
  %v2608 = vadd.f32 %v2419, %v2499
  %v2609 = vadd.f32 %v2420, %v2499
  %v2610 = vadd.f32 %v2421, %v2499
  %v2611 = vadd.f32 %v2422, %v2499
  %v2612 = vadd.f32 %v2423, %v2499
  %v2613 = vadd.f32 %v2424, %v2499
  %v2614 = vadd.f32 %v2425, %v2499
  %v2615 = vadd.f32 %v2426, %v2499
  %v2616 = vadd.f32 %v2427, %v2499
  %v2617 = vadd.f32 %v2428, %v2499
  %v2618 = vadd.f32 %v2429, %v2499
  %v2619 = vadd.f32 %v2430, %v2499
  %v2620 = vadd.f32 %v2431, %v2499
  %v2621 = vadd.f32 %v2432, %v2499
  %v2622 = vadd.f32 %v2433, %v2499
  %v2623 = vadd.f32 %v2434, %v2499
  %v2624 = vadd.f32 %v2435, %v2499
  %v2625 = vadd.f32 %v2436, %v2499
  %v2626 = vadd.f32 %v2437, %v2499
  %v2627 = vadd.f32 %v2438, %v2499
  %v2628 = vadd.f32 %v2439, %v2499
  %v2629 = vadd.f32 %v2440, %v2499
  %v2630 = vadd.f32 %v2441, %v2499
  %v2631 = vadd.f32 %v2442, %v2499
  %v2632 = vadd.f32 %v2443, %v2499
  %v2633 = vadd.f32 %v2444, %v2499
  %v2634 = vadd.f32 %v2445, %v2499
  %v2635 = vadd.f32 %v2446, %v2499
  %v2636 = vadd.f32 %v2447, %v2499
  %v2637 = vadd.f32 %v2448, %v2499
  %v2638 = vadd.f32 %v2449, %v2499
  %v2639 = vadd.f32 %v2450, %v2499
  %v2640 = vadd.f32 %v2451, %v2499
  %v2641 = vadd.f32 %v2452, %v2499
  %v2642 = vadd.f32 %v2453, %v2499
  %v2643 = vadd.f32 %v2454, %v2499
  %v2644 = vadd.f32 %v2455, %v2499
  %v2645 = vadd.f32 %v2456, %v2499
  %v2646 = vadd.f32 %v2457, %v2499
  %v2647 = vadd.f32 %v2458, %v2499
  %v2648 = vadd.f32 %v2459, %v2499
  %v2649 = vadd.f32 %v2460, %v2499
  %v2650 = vadd.f32 %v2461, %v2499
  %v2651 = vadd.f32 %v2462, %v2499
  %v2652 = vadd.f32 %v2463, %v2499
  %v2653 = vadd.f32 %v2464, %v2499
  %v2654 = vadd.f32 %v2465, %v2499
  %v2655 = vadd.f32 %v2466, %v2499
  %v2656 = vadd.f32 %v2467, %v2499
  %v2657 = vadd.f32 %v2468, %v2499
  %v2658 = vadd.f32 %v2469, %v2499
  %v2659 = vadd.f32 %v2470, %v2499
  %v2660 = vadd.f32 %v2471, %v2499
  %v2661 = vadd.f32 %v2472, %v2499
  %v2662 = vadd.f32 %v2473, %v2499
  %v2663 = vadd.f32 %v2474, %v2499
  %v2664 = vadd.f32 %v2475, %v2499
  %v2665 = vadd.f32 %v2476, %v2499
  %v2666 = vadd.f32 %v2477, %v2499
  %v2667 = vadd.f32 %v2478, %v2499
  %v2668 = vadd.f32 %v2479, %v2499
  %v2669 = vadd.f32 %v2480, %v2499
  %v2670 = vadd.f32 %v2481, %v2499
  %v2671 = vadd.f32 %v2482, %v2499
  %v2672 = vadd.f32 %v2483, %v2499
  %v2673 = vadd.f32 %v2484, %v2499
  %v2674 = vadd.f32 %v2485, %v2499
  %v2675 = vadd.f32 %v2486, %v2499
  %v2676 = vadd.f32 %v2487, %v2499
  %v2677 = vadd.f32 %v2488, %v2499
  %v2678 = vadd.f32 %v2489, %v2499
  %v2679 = vadd.f32 %v2490, %v2499
  %v2680 = vadd.f32 %v2491, %v2499
  %v2681 = vadd.f32 %v2492, %v2499
  %v2682 = vadd.f32 %v2493, %v2499
  %v2683 = vadd.f32 %v2494, %v2499
  %v2684 = vmax.f32 %v2501, 0.0
  %v2685 = vmax.f32 %v2502, 0.0
  %v2686 = vmax.f32 %v2503, 0.0
  %v2687 = vmax.f32 %v2504, 0.0
  %v2688 = vmax.f32 %v2505, 0.0
  %v2689 = vmax.f32 %v2506, 0.0
  %v2690 = vmax.f32 %v2507, 0.0
  %v2691 = vmax.f32 %v2508, 0.0
  %v2692 = vmax.f32 %v2509, 0.0
  %v2693 = vmax.f32 %v2510, 0.0
  %v2694 = vmax.f32 %v2511, 0.0
  %v2695 = vmax.f32 %v2512, 0.0
  %v2696 = vmax.f32 %v2513, 0.0
  %v2697 = vmax.f32 %v2514, 0.0
  %v2698 = vmax.f32 %v2515, 0.0
  %v2699 = vmax.f32 %v2516, 0.0
  %v2700 = vmax.f32 %v2517, 0.0
  %v2701 = vmax.f32 %v2518, 0.0
  %v2702 = vmax.f32 %v2519, 0.0
  %v2703 = vmax.f32 %v2520, 0.0
  %v2704 = vmax.f32 %v2521, 0.0
  %v2705 = vmax.f32 %v2522, 0.0
  %v2706 = vmax.f32 %v2523, 0.0
  %v2707 = vmax.f32 %v2524, 0.0
  %v2708 = vmax.f32 %v2525, 0.0
  %v2709 = vmax.f32 %v2526, 0.0
  %v2710 = vmax.f32 %v2527, 0.0
  %v2711 = vmax.f32 %v2528, 0.0
  %v2712 = vmax.f32 %v2529, 0.0
  %v2713 = vmax.f32 %v2530, 0.0
  %v2714 = vmax.f32 %v2531, 0.0
  %v2715 = vmax.f32 %v2532, 0.0
  %v2716 = vmax.f32 %v2533, 0.0
  %v2717 = vmax.f32 %v2534, 0.0
  %v2718 = vmax.f32 %v2535, 0.0
  %v2719 = vmax.f32 %v2536, 0.0
  %v2720 = vmax.f32 %v2537, 0.0
  %v2721 = vmax.f32 %v2538, 0.0
  %v2722 = vmax.f32 %v2539, 0.0
  %v2723 = vmax.f32 %v2540, 0.0
  %v2724 = vmax.f32 %v2541, 0.0
  %v2725 = vmax.f32 %v2542, 0.0
  %v2726 = vmax.f32 %v2543, 0.0
  %v2727 = vmax.f32 %v2544, 0.0
  %v2728 = vmax.f32 %v2545, 0.0
  %v2729 = vmax.f32 %v2546, 0.0
  %v2730 = vmax.f32 %v2547, 0.0
  %v2731 = vmax.f32 %v2548, 0.0
  %v2732 = vmax.f32 %v2549, 0.0
  %v2733 = vmax.f32 %v2550, 0.0
  %v2734 = vmax.f32 %v2551, 0.0
  %v2735 = vmax.f32 %v2552, 0.0
  %v2736 = vmax.f32 %v2553, 0.0
  %v2737 = vmax.f32 %v2554, 0.0
  %v2738 = vmax.f32 %v2555, 0.0
  %v2739 = vmax.f32 %v2556, 0.0
  %v2740 = vmax.f32 %v2557, 0.0
  %v2741 = vmax.f32 %v2558, 0.0
  %v2742 = vmax.f32 %v2559, 0.0
  %v2743 = vmax.f32 %v2560, 0.0
  %v2744 = vmax.f32 %v2561, 0.0
  %v2745 = vmax.f32 %v2562, 0.0
  %v2746 = vmax.f32 %v2563, 0.0
  %v2747 = vmax.f32 %v2564, 0.0
  %v2748 = vmax.f32 %v2565, 0.0
  %v2749 = vmax.f32 %v2566, 0.0
  %v2750 = vmax.f32 %v2567, 0.0
  %v2751 = vmax.f32 %v2568, 0.0
  %v2752 = vmax.f32 %v2569, 0.0
  %v2753 = vmax.f32 %v2570, 0.0
  %v2754 = vmax.f32 %v2571, 0.0
  %v2755 = vmax.f32 %v2572, 0.0
  %v2756 = vmax.f32 %v2573, 0.0
  %v2757 = vmax.f32 %v2574, 0.0
  %v2758 = vmax.f32 %v2575, 0.0
  %v2759 = vmax.f32 %v2576, 0.0
  %v2760 = vmax.f32 %v2577, 0.0
  %v2761 = vmax.f32 %v2578, 0.0
  %v2762 = vmax.f32 %v2579, 0.0
  %v2763 = vmax.f32 %v2580, 0.0
  %v2764 = vmax.f32 %v2581, 0.0
  %v2765 = vmax.f32 %v2582, 0.0
  %v2766 = vmax.f32 %v2583, 0.0
  %v2767 = vmax.f32 %v2584, 0.0
  %v2768 = vmax.f32 %v2585, 0.0
  %v2769 = vmax.f32 %v2586, 0.0
  %v2770 = vmax.f32 %v2587, 0.0
  %v2771 = vmax.f32 %v2588, 0.0
  %v2772 = vmax.f32 %v2589, 0.0
  %v2773 = vmax.f32 %v2590, 0.0
  %v2774 = vmax.f32 %v2591, 0.0
  %v2775 = vmax.f32 %v2592, 0.0
  %v2776 = vmax.f32 %v2593, 0.0
  %v2777 = vmax.f32 %v2594, 0.0
  %v2778 = vmax.f32 %v2595, 0.0
  %v2779 = vmax.f32 %v2596, 0.0
  %v2780 = vmax.f32 %v2597, 0.0
  %v2781 = vmax.f32 %v2598, 0.0
  %v2782 = vmax.f32 %v2599, 0.0
  %v2783 = vmax.f32 %v2600, 0.0
  %v2784 = vmax.f32 %v2601, 0.0
  %v2785 = vmax.f32 %v2602, 0.0
  %v2786 = vmax.f32 %v2603, 0.0
  %v2787 = vmax.f32 %v2604, 0.0
  %v2788 = vmax.f32 %v2605, 0.0
  %v2789 = vmax.f32 %v2606, 0.0
  %v2790 = vmax.f32 %v2607, 0.0
  %v2791 = vmax.f32 %v2608, 0.0
  %v2792 = vmax.f32 %v2609, 0.0
  %v2793 = vmax.f32 %v2610, 0.0
  %v2794 = vmax.f32 %v2611, 0.0
  %v2795 = vmax.f32 %v2612, 0.0
  %v2796 = vmax.f32 %v2613, 0.0
  %v2797 = vmax.f32 %v2614, 0.0
  %v2798 = vmax.f32 %v2615, 0.0
  %v2799 = vmax.f32 %v2616, 0.0
  %v2800 = vmax.f32 %v2617, 0.0
  %v2801 = vmax.f32 %v2618, 0.0
  %v2802 = vmax.f32 %v2619, 0.0
  %v2803 = vmax.f32 %v2620, 0.0
  %v2804 = vmax.f32 %v2621, 0.0
  %v2805 = vmax.f32 %v2622, 0.0
  %v2806 = vmax.f32 %v2623, 0.0
  %v2807 = vmax.f32 %v2624, 0.0
  %v2808 = vmax.f32 %v2625, 0.0
  %v2809 = vmax.f32 %v2626, 0.0
  %v2810 = vmax.f32 %v2627, 0.0
  %v2811 = vmax.f32 %v2628, 0.0
  %v2812 = vmax.f32 %v2629, 0.0
  %v2813 = vmax.f32 %v2630, 0.0
  %v2814 = vmax.f32 %v2631, 0.0
  %v2815 = vmax.f32 %v2632, 0.0
  %v2816 = vmax.f32 %v2633, 0.0
  %v2817 = vmax.f32 %v2634, 0.0
  %v2818 = vmax.f32 %v2635, 0.0
  %v2819 = vmax.f32 %v2636, 0.0
  %v2820 = vmax.f32 %v2637, 0.0
  %v2821 = vmax.f32 %v2638, 0.0
  %v2822 = vmax.f32 %v2639, 0.0
  %v2823 = vmax.f32 %v2640, 0.0
  %v2824 = vmax.f32 %v2641, 0.0
  %v2825 = vmax.f32 %v2642, 0.0
  %v2826 = vmax.f32 %v2643, 0.0
  %v2827 = vmax.f32 %v2644, 0.0
  %v2828 = vmax.f32 %v2645, 0.0
  %v2829 = vmax.f32 %v2646, 0.0
  %v2830 = vmax.f32 %v2647, 0.0
  %v2831 = vmax.f32 %v2648, 0.0
  %v2832 = vmax.f32 %v2649, 0.0
  %v2833 = vmax.f32 %v2650, 0.0
  %v2834 = vmax.f32 %v2651, 0.0
  %v2835 = vmax.f32 %v2652, 0.0
  %v2836 = vmax.f32 %v2653, 0.0
  %v2837 = vmax.f32 %v2654, 0.0
  %v2838 = vmax.f32 %v2655, 0.0
  %v2839 = vmax.f32 %v2656, 0.0
  %v2840 = vmax.f32 %v2657, 0.0
  %v2841 = vmax.f32 %v2658, 0.0
  %v2842 = vmax.f32 %v2659, 0.0
  %v2843 = vmax.f32 %v2660, 0.0
  %v2844 = vmax.f32 %v2661, 0.0
  %v2845 = vmax.f32 %v2662, 0.0
  %v2846 = vmax.f32 %v2663, 0.0
  %v2847 = vmax.f32 %v2664, 0.0
  %v2848 = vmax.f32 %v2665, 0.0
  %v2849 = vmax.f32 %v2666, 0.0
  %v2850 = vmax.f32 %v2667, 0.0
  %v2851 = vmax.f32 %v2668, 0.0
  %v2852 = vmax.f32 %v2669, 0.0
  %v2853 = vmax.f32 %v2670, 0.0
  %v2854 = vmax.f32 %v2671, 0.0
  %v2855 = vmax.f32 %v2672, 0.0
  %v2856 = vmax.f32 %v2673, 0.0
  %v2857 = vmax.f32 %v2674, 0.0
  %v2858 = vmax.f32 %v2675, 0.0
  %v2859 = vmax.f32 %v2676, 0.0
  %v2860 = vmax.f32 %v2677, 0.0
  %v2861 = vmax.f32 %v2678, 0.0
  %v2862 = vmax.f32 %v2679, 0.0
  %v2863 = vmax.f32 %v2680, 0.0
  %v2864 = vmax.f32 %v2681, 0.0
  %v2865 = vmax.f32 %v2682, 0.0
  %v2866 = vmax.f32 %v2683, 0.0
  %2867 = vst [vmem:[%s4] sm:$0xff] %v2684
  %2868 = vst [vmem:[%s4 + $0x8] sm:$0xff] %v2685
  %2869 = vst [vmem:[%s4 + $0x10] sm:$0xff] %v2686
  %2870 = vst [vmem:[%s4 + $0x18] sm:$0xff] %v2687
  %2871 = vst [vmem:[%s4 + $0x20] sm:$0xff] %v2688
  %2872 = vst [vmem:[%s4 + $0x28] sm:$0xff] %v2689
  %2873 = vst [vmem:[%s4 + $0x30] sm:$0xff] %v2690
  %2874 = vst [vmem:[%s4 + $0x38] sm:$0xff] %v2691
  %2875 = vst [vmem:[%s4 + $0x40] sm:$0xff] %v2692
  %2876 = vst [vmem:[%s4 + $0x48] sm:$0xff] %v2693
  %2877 = vst [vmem:[%s4 + $0x50] sm:$0xff] %v2694
  %2878 = vst [vmem:[%s4 + $0x58] sm:$0xff] %v2695
  %2879 = vst [vmem:[%s4 + $0x60] sm:$0xff] %v2696
  %2880 = vst [vmem:[%s4 + $0x68] sm:$0xff] %v2697
  %2881 = vst [vmem:[%s4 + $0x70] sm:$0xff] %v2698
  %2882 = vst [vmem:[%s4 + $0x78] sm:$0xff] %v2699
  %2883 = vst [vmem:[%s4 + $0x80] sm:$0xff] %v2700
  %2884 = vst [vmem:[%s4 + $0x88] sm:$0xff] %v2701
  %2885 = vst [vmem:[%s4 + $0x90] sm:$0xff] %v2702
  %2886 = vst [vmem:[%s4 + $0x98] sm:$0xff] %v2703
  %2887 = vst [vmem:[%s4 + $0xa0] sm:$0xff] %v2704
  %2888 = vst [vmem:[%s4 + $0xa8] sm:$0xff] %v2705
  %2889 = vst [vmem:[%s4 + $0xb0] sm:$0xff] %v2706
  %2890 = vst [vmem:[%s4 + $0xb8] sm:$0xff] %v2707
  %2891 = vst [vmem:[%s4 + $0xc0] sm:$0xff] %v2708
  %2892 = vst [vmem:[%s4 + $0xc8] sm:$0xff] %v2709
  %2893 = vst [vmem:[%s4 + $0xd0] sm:$0xff] %v2710
  %2894 = vst [vmem:[%s4 + $0xd8] sm:$0xff] %v2711
  %2895 = vst [vmem:[%s4 + $0xe0] sm:$0xff] %v2712
  %2896 = vst [vmem:[%s4 + $0xe8] sm:$0xff] %v2713
  %2897 = vst [vmem:[%s4 + $0xf0] sm:$0xff] %v2714
  %2898 = vst [vmem:[%s4 + $0xf8] sm:$0xff] %v2715
  %2899 = vst [vmem:[%s4 + $0x100] sm:$0xff] %v2716
  %2900 = vst [vmem:[%s4 + $0x108] sm:$0xff] %v2717
  %2901 = vst [vmem:[%s4 + $0x110] sm:$0xff] %v2718
  %2902 = vst [vmem:[%s4 + $0x118] sm:$0xff] %v2719
  %2903 = vst [vmem:[%s4 + $0x120] sm:$0xff] %v2720
  %2904 = vst [vmem:[%s4 + $0x128] sm:$0xff] %v2721
  %2905 = vst [vmem:[%s4 + $0x130] sm:$0xff] %v2722
  %2906 = vst [vmem:[%s4 + $0x138] sm:$0xff] %v2723
  %2907 = vst [vmem:[%s4 + $0x140] sm:$0xff] %v2724
  %2908 = vst [vmem:[%s4 + $0x148] sm:$0xff] %v2725
  %2909 = vst [vmem:[%s4 + $0x150] sm:$0xff] %v2726
  %2910 = vst [vmem:[%s4 + $0x158] sm:$0xff] %v2727
  %2911 = vst [vmem:[%s4 + $0x160] sm:$0xff] %v2728
  %2912 = vst [vmem:[%s4 + $0x168] sm:$0xff] %v2729
  %2913 = vst [vmem:[%s4 + $0x170] sm:$0xff] %v2730
  %2914 = vst [vmem:[%s4 + $0x178] sm:$0xff] %v2731
  %2915 = vst [vmem:[%s4 + $0x180] sm:$0xff] %v2732
  %2916 = vst [vmem:[%s4 + $0x188] sm:$0xff] %v2733
  %2917 = vst [vmem:[%s4 + $0x190] sm:$0xff] %v2734
  %2918 = vst [vmem:[%s4 + $0x198] sm:$0xff] %v2735
  %2919 = vst [vmem:[%s4 + $0x1a0] sm:$0xff] %v2736
  %2920 = vst [vmem:[%s4 + $0x1a8] sm:$0xff] %v2737
  %2921 = vst [vmem:[%s4 + $0x1b0] sm:$0xff] %v2738
  %2922 = vst [vmem:[%s4 + $0x1b8] sm:$0xff] %v2739
  %2923 = vst [vmem:[%s4 + $0x1c0] sm:$0xff] %v2740
  %2924 = vst [vmem:[%s4 + $0x1c8] sm:$0xff] %v2741
  %2925 = vst [vmem:[%s4 + $0x1d0] sm:$0xff] %v2742
  %2926 = vst [vmem:[%s4 + $0x1d8] sm:$0xff] %v2743
  %2927 = vst [vmem:[%s4 + $0x1e0] sm:$0xff] %v2744
  %2928 = vst [vmem:[%s4 + $0x1e8] sm:$0xff] %v2745
  %2929 = vst [vmem:[%s4 + $0x1f0] sm:$0xff] %v2746
  %2930 = vst [vmem:[%s4 + $0x1f8] sm:$0xff] %v2747
  %2931 = vst [vmem:[%s4 + $0x200] sm:$0xff] %v2748
  %2932 = vst [vmem:[%s4 + $0x208] sm:$0xff] %v2749
  %2933 = vst [vmem:[%s4 + $0x210] sm:$0xff] %v2750
  %2934 = vst [vmem:[%s4 + $0x218] sm:$0xff] %v2751
  %2935 = vst [vmem:[%s4 + $0x220] sm:$0xff] %v2752
  %2936 = vst [vmem:[%s4 + $0x228] sm:$0xff] %v2753
  %2937 = vst [vmem:[%s4 + $0x230] sm:$0xff] %v2754
  %2938 = vst [vmem:[%s4 + $0x238] sm:$0xff] %v2755
  %2939 = vst [vmem:[%s4 + $0x240] sm:$0xff] %v2756
  %2940 = vst [vmem:[%s4 + $0x248] sm:$0xff] %v2757
  %2941 = vst [vmem:[%s4 + $0x250] sm:$0xff] %v2758
  %2942 = vst [vmem:[%s4 + $0x258] sm:$0xff] %v2759
  %2943 = vst [vmem:[%s4 + $0x260] sm:$0xff] %v2760
  %2944 = vst [vmem:[%s4 + $0x268] sm:$0xff] %v2761
  %2945 = vst [vmem:[%s4 + $0x270] sm:$0xff] %v2762
  %2946 = vst [vmem:[%s4 + $0x278] sm:$0xff] %v2763
  %2947 = vst [vmem:[%s4 + $0x280] sm:$0xff] %v2764
  %2948 = vst [vmem:[%s4 + $0x288] sm:$0xff] %v2765
  %2949 = vst [vmem:[%s4 + $0x290] sm:$0xff] %v2766
  %2950 = vst [vmem:[%s4 + $0x298] sm:$0xff] %v2767
  %2951 = vst [vmem:[%s4 + $0x2a0] sm:$0xff] %v2768
  %2952 = vst [vmem:[%s4 + $0x2a8] sm:$0xff] %v2769
  %2953 = vst [vmem:[%s4 + $0x2b0] sm:$0xff] %v2770
  %2954 = vst [vmem:[%s4 + $0x2b8] sm:$0xff] %v2771
  %2955 = vst [vmem:[%s4 + $0x2c0] sm:$0xff] %v2772
  %2956 = vst [vmem:[%s4 + $0x2c8] sm:$0xff] %v2773
  %2957 = vst [vmem:[%s4 + $0x2d0] sm:$0xff] %v2774
  %2958 = vst [vmem:[%s4 + $0x2d8] sm:$0xff] %v2775
  %2959 = vst [vmem:[%s4 + $0x2e0] sm:$0xff] %v2776
  %2960 = vst [vmem:[%s4 + $0x2e8] sm:$0xff] %v2777
  %2961 = vst [vmem:[%s4 + $0x2f0] sm:$0xff] %v2778
  %2962 = vst [vmem:[%s4 + $0x2f8] sm:$0xff] %v2779
  %2963 = vst [vmem:[%s4 + $0x300] sm:$0xff] %v2780
  %2964 = vst [vmem:[%s4 + $0x308] sm:$0xff] %v2781
  %2965 = vst [vmem:[%s4 + $0x310] sm:$0xff] %v2782
  %2966 = vst [vmem:[%s4 + $0x318] sm:$0xff] %v2783
  %2967 = vst [vmem:[%s4 + $0x320] sm:$0xff] %v2784
  %2968 = vst [vmem:[%s4 + $0x328] sm:$0xff] %v2785
  %2969 = vst [vmem:[%s4 + $0x330] sm:$0xff] %v2786
  %2970 = vst [vmem:[%s4 + $0x338] sm:$0xff] %v2787
  %2971 = vst [vmem:[%s4 + $0x340] sm:$0xff] %v2788
  %2972 = vst [vmem:[%s4 + $0x348] sm:$0xff] %v2789
  %2973 = vst [vmem:[%s4 + $0x350] sm:$0xff] %v2790
  %2974 = vst [vmem:[%s4 + $0x358] sm:$0xff] %v2791
  %2975 = vst [vmem:[%s4 + $0x360] sm:$0xff] %v2792
  %2976 = vst [vmem:[%s4 + $0x368] sm:$0xff] %v2793
  %2977 = vst [vmem:[%s4 + $0x370] sm:$0xff] %v2794
  %2978 = vst [vmem:[%s4 + $0x378] sm:$0xff] %v2795
  %2979 = vst [vmem:[%s4 + $0x380] sm:$0xff] %v2796
  %2980 = vst [vmem:[%s4 + $0x388] sm:$0xff] %v2797
  %2981 = vst [vmem:[%s4 + $0x390] sm:$0xff] %v2798
  %2982 = vst [vmem:[%s4 + $0x398] sm:$0xff] %v2799
  %2983 = vst [vmem:[%s4 + $0x3a0] sm:$0xff] %v2800
  %2984 = vst [vmem:[%s4 + $0x3a8] sm:$0xff] %v2801
  %2985 = vst [vmem:[%s4 + $0x3b0] sm:$0xff] %v2802
  %2986 = vst [vmem:[%s4 + $0x3b8] sm:$0xff] %v2803
  %2987 = vst [vmem:[%s4 + $0x3c0] sm:$0xff] %v2804
  %2988 = vst [vmem:[%s4 + $0x3c8] sm:$0xff] %v2805
  %2989 = vst [vmem:[%s4 + $0x3d0] sm:$0xff] %v2806
  %2990 = vst [vmem:[%s4 + $0x3d8] sm:$0xff] %v2807
  %2991 = vst [vmem:[%s4 + $0x3e0] sm:$0xff] %v2808
  %2992 = vst [vmem:[%s4 + $0x3e8] sm:$0xff] %v2809
  %2993 = vst [vmem:[%s4 + $0x3f0] sm:$0xff] %v2810
  %2994 = vst [vmem:[%s4 + $0x3f8] sm:$0xff] %v2811
  %2995 = vst [vmem:[%s4 + $0x400] sm:$0xff] %v2812
  %2996 = vst [vmem:[%s4 + $0x408] sm:$0xff] %v2813
  %2997 = vst [vmem:[%s4 + $0x410] sm:$0xff] %v2814
  %2998 = vst [vmem:[%s4 + $0x418] sm:$0xff] %v2815
  %2999 = vst [vmem:[%s4 + $0x420] sm:$0xff] %v2816
  %3000 = vst [vmem:[%s4 + $0x428] sm:$0xff] %v2817
  %3001 = vst [vmem:[%s4 + $0x430] sm:$0xff] %v2818
  %3002 = vst [vmem:[%s4 + $0x438] sm:$0xff] %v2819
  %3003 = vst [vmem:[%s4 + $0x440] sm:$0xff] %v2820
  %3004 = vst [vmem:[%s4 + $0x448] sm:$0xff] %v2821
  %3005 = vst [vmem:[%s4 + $0x450] sm:$0xff] %v2822
  %3006 = vst [vmem:[%s4 + $0x458] sm:$0xff] %v2823
  %3007 = vst [vmem:[%s4 + $0x460] sm:$0xff] %v2824
  %3008 = vst [vmem:[%s4 + $0x468] sm:$0xff] %v2825
  %3009 = vst [vmem:[%s4 + $0x470] sm:$0xff] %v2826
  %3010 = vst [vmem:[%s4 + $0x478] sm:$0xff] %v2827
  %3011 = vst [vmem:[%s4 + $0x480] sm:$0xff] %v2828
  %3012 = vst [vmem:[%s4 + $0x488] sm:$0xff] %v2829
  %3013 = vst [vmem:[%s4 + $0x490] sm:$0xff] %v2830
  %3014 = vst [vmem:[%s4 + $0x498] sm:$0xff] %v2831
  %3015 = vst [vmem:[%s4 + $0x4a0] sm:$0xff] %v2832
  %3016 = vst [vmem:[%s4 + $0x4a8] sm:$0xff] %v2833
  %3017 = vst [vmem:[%s4 + $0x4b0] sm:$0xff] %v2834
  %3018 = vst [vmem:[%s4 + $0x4b8] sm:$0xff] %v2835
  %3019 = vst [vmem:[%s4 + $0x4c0] sm:$0xff] %v2836
  %3020 = vst [vmem:[%s4 + $0x4c8] sm:$0xff] %v2837
  %3021 = vst [vmem:[%s4 + $0x4d0] sm:$0xff] %v2838
  %3022 = vst [vmem:[%s4 + $0x4d8] sm:$0xff] %v2839
  %3023 = vst [vmem:[%s4 + $0x4e0] sm:$0xff] %v2840
  %3024 = vst [vmem:[%s4 + $0x4e8] sm:$0xff] %v2841
  %3025 = vst [vmem:[%s4 + $0x4f0] sm:$0xff] %v2842
  %3026 = vst [vmem:[%s4 + $0x4f8] sm:$0xff] %v2843
  %3027 = vst [vmem:[%s4 + $0x500] sm:$0xff] %v2844
  %3028 = vst [vmem:[%s4 + $0x508] sm:$0xff] %v2845
  %3029 = vst [vmem:[%s4 + $0x510] sm:$0xff] %v2846
  %3030 = vst [vmem:[%s4 + $0x518] sm:$0xff] %v2847
  %3031 = vst [vmem:[%s4 + $0x520] sm:$0xff] %v2848
  %3032 = vst [vmem:[%s4 + $0x528] sm:$0xff] %v2849
  %3033 = vst [vmem:[%s4 + $0x530] sm:$0xff] %v2850
  %3034 = vst [vmem:[%s4 + $0x538] sm:$0xff] %v2851
  %3035 = vst [vmem:[%s4 + $0x540] sm:$0xff] %v2852
  %3036 = vst [vmem:[%s4 + $0x548] sm:$0xff] %v2853
  %3037 = vst [vmem:[%s4 + $0x550] sm:$0xff] %v2854
  %3038 = vst [vmem:[%s4 + $0x558] sm:$0xff] %v2855
  %3039 = vst [vmem:[%s4 + $0x560] sm:$0xff] %v2856
  %3040 = vst [vmem:[%s4 + $0x568] sm:$0xff] %v2857
  %3041 = vst [vmem:[%s4 + $0x570] sm:$0xff] %v2858
  %3042 = vst [vmem:[%s4 + $0x578] sm:$0xff] %v2859
  %3043 = vst [vmem:[%s4 + $0x580] sm:$0xff] %v2860
  %3044 = vst [vmem:[%s4 + $0x588] sm:$0xff] %v2861
  %3045 = vst [vmem:[%s4 + $0x590] sm:$0xff] %v2862
  %3046 = vst [vmem:[%s4 + $0x598] sm:$0xff] %v2863
  %3047 = vst [vmem:[%s4 + $0x5a0] sm:$0xff] %v2864
  %3048 = vst [vmem:[%s4 + $0x5a8] sm:$0xff] %v2865
  %3049 = vst [vmem:[%s4 + $0x5b0] sm:$0xff] %v2866
  // Predicated region
  $region18: #{net22_3_forward.3} parent=0 // pred_check
    _
  $region19: #{net22_3_forward.3} parent=0 // pred_check_branch
    %3051 = sbr.rel (0) target = $region21
  $region20: #{net22_3_forward.3} parent=0 // pred_region
    _
  $region21: #{net22_3_forward.3} parent=0 // pred_fallthru
    _
  // Predicated region
  $region22: #{net22_3_forward.3} parent=0 // pred_check
    _
  $region23: #{net22_3_forward.3} parent=0 // pred_check_branch
    %3053 = sbr.rel (0) target = $region25
  $region24: #{net22_3_forward.3} parent=0 // pred_region
    _
  $region25: #{net22_3_forward.3} parent=0 // pred_fallthru
    _

// kernel: net22_3_forward.4
$region0: #{net22_3_forward.4}
  #allocation0 [shape = 'u32[]', space=smem, size = 0x4, offset = 0x4, fixed_abs, tag = 'smem constant byte address 0x4 - core index']
  #allocation1 [shape = 'u32[144,128]{1,0:T(1,128)}', space=vmem, size = 0x12000, scoped, tag = 'internal scratch']
  %s0 = inlined_call_operand.vmem [shape: f32[1568,64], index: 0, kind: input, shape index: {}]
  %s1 = inlined_call_operand.vmem [shape: f32[64,128], index: 1, kind: input, shape index: {}]
  %s2 = inlined_call_operand.vmem [shape: f32[1,128], index: 2, kind: input, shape index: {}]
  %s3 = inlined_call_operand.vmem [shape: f32[1,128], index: 3, kind: input, shape index: {}]
  %s4 = inlined_call_operand.vmem [shape: f32[1568,128], index: 4, kind: output, shape index: {}]
  %s5 = sld [smem:[#allocation0]]
  $region26: #{net22_3_forward.4} parent=0
    _
  %s7 = ssub.s32 1, %s5
  %s8 = scalar_select 0, %s7, %s5
  // Predicated region
  $region2: #{net22_3_forward.4} parent=0 // pred_check
    _
  $region3: #{net22_3_forward.4} parent=0 // pred_check_branch
    %10 = sbr.rel (0) target = $region5
  $region4: #{net22_3_forward.4} parent=0 // pred_region
    _
  $region5: #{net22_3_forward.4} parent=0 // pred_fallthru
    _
  // Predicated region
  $region6: #{net22_3_forward.4} parent=0 // pred_check
    _
  $region7: #{net22_3_forward.4} parent=0 // pred_check_branch
    %12 = sbr.rel (0) target = $region9
  $region8: #{net22_3_forward.4} parent=0 // pred_region
    _
  $region9: #{net22_3_forward.4} parent=0 // pred_fallthru
    _
  // Predicated region
  $region10: #{net22_3_forward.4} parent=0 // pred_check
    _
  $region11: #{net22_3_forward.4} parent=0 // pred_check_branch
    %14 = sbr.rel (0) target = $region13
  $region12: #{net22_3_forward.4} parent=0 // pred_region
    _
  $region13: #{net22_3_forward.4} parent=0 // pred_fallthru
    _
  // Predicated region
  $region14: #{net22_3_forward.4} parent=0 // pred_check
    _
  $region15: #{net22_3_forward.4} parent=0 // pred_check_branch
    %16 = sbr.rel (0) target = $region17
  $region16: #{net22_3_forward.4} parent=0 // pred_region
    _
  $region17: #{net22_3_forward.4} parent=0 // pred_fallthru
    _
  %v17 = vld [vmem:[%s0] sm:$0xff]
  %v18 = vld [vmem:[%s0 + $0x8] sm:$0xff]
  %v19 = vld [vmem:[%s0 + $0x10] sm:$0xff]
  %v20 = vld [vmem:[%s0 + $0x18] sm:$0xff]
  %v21 = vld [vmem:[%s0 + $0x20] sm:$0xff]
  %v22 = vld [vmem:[%s0 + $0x28] sm:$0xff]
  %v23 = vld [vmem:[%s0 + $0x30] sm:$0xff]
  %v24 = vld [vmem:[%s0 + $0x38] sm:$0xff]
  %v25 = vld [vmem:[%s0 + $0x40] sm:$0xff]
  %v26 = vld [vmem:[%s0 + $0x48] sm:$0xff]
  %v27 = vld [vmem:[%s0 + $0x50] sm:$0xff]
  %v28 = vld [vmem:[%s0 + $0x58] sm:$0xff]
  %v29 = vld [vmem:[%s0 + $0x60] sm:$0xff]
  %v30 = vld [vmem:[%s0 + $0x68] sm:$0xff]
  %v31 = vld [vmem:[%s0 + $0x70] sm:$0xff]
  %v32 = vld [vmem:[%s0 + $0x78] sm:$0xff]
  %v33 = vld [vmem:[%s0 + $0x80] sm:$0xff]
  %v34 = vld [vmem:[%s0 + $0x88] sm:$0xff]
  %v35 = vld [vmem:[%s0 + $0x90] sm:$0xff]
  %v36 = vld [vmem:[%s0 + $0x98] sm:$0xff]
  %v37 = vld [vmem:[%s0 + $0xa0] sm:$0xff]
  %v38 = vld [vmem:[%s0 + $0xa8] sm:$0xff]
  %v39 = vld [vmem:[%s0 + $0xb0] sm:$0xff]
  %v40 = vld [vmem:[%s0 + $0xb8] sm:$0xff]
  %v41 = vld [vmem:[%s0 + $0xc0] sm:$0xff]
  %v42 = vld [vmem:[%s0 + $0xc8] sm:$0xff]
  %v43 = vld [vmem:[%s0 + $0xd0] sm:$0xff]
  %v44 = vld [vmem:[%s0 + $0xd8] sm:$0xff]
  %v45 = vld [vmem:[%s0 + $0xe0] sm:$0xff]
  %v46 = vld [vmem:[%s0 + $0xe8] sm:$0xff]
  %v47 = vld [vmem:[%s0 + $0xf0] sm:$0xff]
  %v48 = vld [vmem:[%s0 + $0xf8] sm:$0xff]
  %v49 = vld [vmem:[%s0 + $0x100] sm:$0xff]
  %v50 = vld [vmem:[%s0 + $0x108] sm:$0xff]
  %v51 = vld [vmem:[%s0 + $0x110] sm:$0xff]
  %v52 = vld [vmem:[%s0 + $0x118] sm:$0xff]
  %v53 = vld [vmem:[%s0 + $0x120] sm:$0xff]
  %v54 = vld [vmem:[%s0 + $0x128] sm:$0xff]
  %v55 = vld [vmem:[%s0 + $0x130] sm:$0xff]
  %v56 = vld [vmem:[%s0 + $0x138] sm:$0xff]
  %v57 = vld [vmem:[%s0 + $0x140] sm:$0xff]
  %v58 = vld [vmem:[%s0 + $0x148] sm:$0xff]
  %v59 = vld [vmem:[%s0 + $0x150] sm:$0xff]
  %v60 = vld [vmem:[%s0 + $0x158] sm:$0xff]
  %v61 = vld [vmem:[%s0 + $0x160] sm:$0xff]
  %v62 = vld [vmem:[%s0 + $0x168] sm:$0xff]
  %v63 = vld [vmem:[%s0 + $0x170] sm:$0xff]
  %v64 = vld [vmem:[%s0 + $0x178] sm:$0xff]
  %v65 = vld [vmem:[%s0 + $0x180] sm:$0xff]
  %v66 = vld [vmem:[%s0 + $0x188] sm:$0xff]
  %v67 = vld [vmem:[%s0 + $0x190] sm:$0xff]
  %v68 = vld [vmem:[%s0 + $0x198] sm:$0xff]
  %v69 = vld [vmem:[%s0 + $0x1a0] sm:$0xff]
  %v70 = vld [vmem:[%s0 + $0x1a8] sm:$0xff]
  %v71 = vld [vmem:[%s0 + $0x1b0] sm:$0xff]
  %v72 = vld [vmem:[%s0 + $0x1b8] sm:$0xff]
  %v73 = vld [vmem:[%s0 + $0x1c0] sm:$0xff]
  %v74 = vld [vmem:[%s0 + $0x1c8] sm:$0xff]
  %v75 = vld [vmem:[%s0 + $0x1d0] sm:$0xff]
  %v76 = vld [vmem:[%s0 + $0x1d8] sm:$0xff]
  %v77 = vld [vmem:[%s0 + $0x1e0] sm:$0xff]
  %v78 = vld [vmem:[%s0 + $0x1e8] sm:$0xff]
  %v79 = vld [vmem:[%s0 + $0x1f0] sm:$0xff]
  %v80 = vld [vmem:[%s0 + $0x1f8] sm:$0xff]
  %v81 = vld [vmem:[%s0 + $0x200] sm:$0xff]
  %v82 = vld [vmem:[%s0 + $0x208] sm:$0xff]
  %v83 = vld [vmem:[%s0 + $0x210] sm:$0xff]
  %v84 = vld [vmem:[%s0 + $0x218] sm:$0xff]
  %v85 = vld [vmem:[%s0 + $0x220] sm:$0xff]
  %v86 = vld [vmem:[%s0 + $0x228] sm:$0xff]
  %v87 = vld [vmem:[%s0 + $0x230] sm:$0xff]
  %v88 = vld [vmem:[%s0 + $0x238] sm:$0xff]
  %v89 = vld [vmem:[%s0 + $0x240] sm:$0xff]
  %v90 = vld [vmem:[%s0 + $0x248] sm:$0xff]
  %v91 = vld [vmem:[%s0 + $0x250] sm:$0xff]
  %v92 = vld [vmem:[%s0 + $0x258] sm:$0xff]
  %v93 = vld [vmem:[%s0 + $0x260] sm:$0xff]
  %v94 = vld [vmem:[%s0 + $0x268] sm:$0xff]
  %v95 = vld [vmem:[%s0 + $0x270] sm:$0xff]
  %v96 = vld [vmem:[%s0 + $0x278] sm:$0xff]
  %v97 = vld [vmem:[%s0 + $0x280] sm:$0xff]
  %v98 = vld [vmem:[%s0 + $0x288] sm:$0xff]
  %v99 = vld [vmem:[%s0 + $0x290] sm:$0xff]
  %v100 = vld [vmem:[%s0 + $0x298] sm:$0xff]
  %v101 = vld [vmem:[%s0 + $0x2a0] sm:$0xff]
  %v102 = vld [vmem:[%s0 + $0x2a8] sm:$0xff]
  %v103 = vld [vmem:[%s0 + $0x2b0] sm:$0xff]
  %v104 = vld [vmem:[%s0 + $0x2b8] sm:$0xff]
  %v105 = vld [vmem:[%s0 + $0x2c0] sm:$0xff]
  %v106 = vld [vmem:[%s0 + $0x2c8] sm:$0xff]
  %v107 = vld [vmem:[%s0 + $0x2d0] sm:$0xff]
  %v108 = vld [vmem:[%s0 + $0x2d8] sm:$0xff]
  %v109 = vld [vmem:[%s0 + $0x2e0] sm:$0xff]
  %v110 = vld [vmem:[%s0 + $0x2e8] sm:$0xff]
  %v111 = vld [vmem:[%s0 + $0x2f0] sm:$0xff]
  %v112 = vld [vmem:[%s0 + $0x2f8] sm:$0xff]
  %v113 = vld [vmem:[%s0 + $0x300] sm:$0xff]
  %v114 = vld [vmem:[%s0 + $0x308] sm:$0xff]
  %v115 = vld [vmem:[%s0 + $0x310] sm:$0xff]
  %v116 = vld [vmem:[%s0 + $0x318] sm:$0xff]
  %v117 = vld [vmem:[%s0 + $0x320] sm:$0xff]
  %v118 = vld [vmem:[%s0 + $0x328] sm:$0xff]
  %v119 = vld [vmem:[%s0 + $0x330] sm:$0xff]
  %v120 = vld [vmem:[%s0 + $0x338] sm:$0xff]
  %v121 = vld [vmem:[%s0 + $0x340] sm:$0xff]
  %v122 = vld [vmem:[%s0 + $0x348] sm:$0xff]
  %v123 = vld [vmem:[%s0 + $0x350] sm:$0xff]
  %v124 = vld [vmem:[%s0 + $0x358] sm:$0xff]
  %v125 = vld [vmem:[%s0 + $0x360] sm:$0xff]
  %v126 = vld [vmem:[%s0 + $0x368] sm:$0xff]
  %v127 = vld [vmem:[%s0 + $0x370] sm:$0xff]
  %v128 = vld [vmem:[%s0 + $0x378] sm:$0xff]
  %v129 = vld [vmem:[%s0 + $0x380] sm:$0xff]
  %v130 = vld [vmem:[%s0 + $0x388] sm:$0xff]
  %v131 = vld [vmem:[%s0 + $0x390] sm:$0xff]
  %v132 = vld [vmem:[%s0 + $0x398] sm:$0xff]
  %v133 = vld [vmem:[%s0 + $0x3a0] sm:$0xff]
  %v134 = vld [vmem:[%s0 + $0x3a8] sm:$0xff]
  %v135 = vld [vmem:[%s0 + $0x3b0] sm:$0xff]
  %v136 = vld [vmem:[%s0 + $0x3b8] sm:$0xff]
  %v137 = vld [vmem:[%s0 + $0x3c0] sm:$0xff]
  %v138 = vld [vmem:[%s0 + $0x3c8] sm:$0xff]
  %v139 = vld [vmem:[%s0 + $0x3d0] sm:$0xff]
  %v140 = vld [vmem:[%s0 + $0x3d8] sm:$0xff]
  %v141 = vld [vmem:[%s0 + $0x3e0] sm:$0xff]
  %v142 = vld [vmem:[%s0 + $0x3e8] sm:$0xff]
  %v143 = vld [vmem:[%s0 + $0x3f0] sm:$0xff]
  %v144 = vld [vmem:[%s0 + $0x3f8] sm:$0xff]
  %v145 = vld [vmem:[%s0 + $0x400] sm:$0xff]
  %v146 = vld [vmem:[%s0 + $0x408] sm:$0xff]
  %v147 = vld [vmem:[%s0 + $0x410] sm:$0xff]
  %v148 = vld [vmem:[%s0 + $0x418] sm:$0xff]
  %v149 = vld [vmem:[%s0 + $0x420] sm:$0xff]
  %v150 = vld [vmem:[%s0 + $0x428] sm:$0xff]
  %v151 = vld [vmem:[%s0 + $0x430] sm:$0xff]
  %v152 = vld [vmem:[%s0 + $0x438] sm:$0xff]
  %v153 = vld [vmem:[%s0 + $0x440] sm:$0xff]
  %v154 = vld [vmem:[%s0 + $0x448] sm:$0xff]
  %v155 = vld [vmem:[%s0 + $0x450] sm:$0xff]
  %v156 = vld [vmem:[%s0 + $0x458] sm:$0xff]
  %v157 = vld [vmem:[%s0 + $0x460] sm:$0xff]
  %v158 = vld [vmem:[%s0 + $0x468] sm:$0xff]
  %v159 = vld [vmem:[%s0 + $0x470] sm:$0xff]
  %v160 = vld [vmem:[%s0 + $0x478] sm:$0xff]
  %v161 = vld [vmem:[%s0 + $0x480] sm:$0xff]
  %v162 = vld [vmem:[%s0 + $0x488] sm:$0xff]
  %v163 = vld [vmem:[%s0 + $0x490] sm:$0xff]
  %v164 = vld [vmem:[%s0 + $0x498] sm:$0xff]
  %v165 = vld [vmem:[%s0 + $0x4a0] sm:$0xff]
  %v166 = vld [vmem:[%s0 + $0x4a8] sm:$0xff]
  %v167 = vld [vmem:[%s0 + $0x4b0] sm:$0xff]
  %v168 = vld [vmem:[%s0 + $0x4b8] sm:$0xff]
  %v169 = vld [vmem:[%s0 + $0x4c0] sm:$0xff]
  %v170 = vld [vmem:[%s0 + $0x4c8] sm:$0xff]
  %v171 = vld [vmem:[%s0 + $0x4d0] sm:$0xff]
  %v172 = vld [vmem:[%s0 + $0x4d8] sm:$0xff]
  %v173 = vld [vmem:[%s0 + $0x4e0] sm:$0xff]
  %v174 = vld [vmem:[%s0 + $0x4e8] sm:$0xff]
  %v175 = vld [vmem:[%s0 + $0x4f0] sm:$0xff]
  %v176 = vld [vmem:[%s0 + $0x4f8] sm:$0xff]
  %v177 = vld [vmem:[%s0 + $0x500] sm:$0xff]
  %v178 = vld [vmem:[%s0 + $0x508] sm:$0xff]
  %v179 = vld [vmem:[%s0 + $0x510] sm:$0xff]
  %v180 = vld [vmem:[%s0 + $0x518] sm:$0xff]
  %v181 = vld [vmem:[%s0 + $0x520] sm:$0xff]
  %v182 = vld [vmem:[%s0 + $0x528] sm:$0xff]
  %v183 = vld [vmem:[%s0 + $0x530] sm:$0xff]
  %v184 = vld [vmem:[%s0 + $0x538] sm:$0xff]
  %v185 = vld [vmem:[%s0 + $0x540] sm:$0xff]
  %v186 = vld [vmem:[%s0 + $0x548] sm:$0xff]
  %v187 = vld [vmem:[%s0 + $0x550] sm:$0xff]
  %v188 = vld [vmem:[%s0 + $0x558] sm:$0xff]
  %v189 = vld [vmem:[%s0 + $0x560] sm:$0xff]
  %v190 = vld [vmem:[%s0 + $0x568] sm:$0xff]
  %v191 = vld [vmem:[%s0 + $0x570] sm:$0xff]
  %v192 = vld [vmem:[%s0 + $0x578] sm:$0xff]
  %v193 = vld [vmem:[%s0 + $0x580] sm:$0xff]
  %v194 = vld [vmem:[%s0 + $0x588] sm:$0xff]
  %v195 = vld [vmem:[%s0 + $0x590] sm:$0xff]
  %v196 = vld [vmem:[%s0 + $0x598] sm:$0xff]
  %v197 = vld [vmem:[%s0 + $0x5a0] sm:$0xff]
  %v198 = vld [vmem:[%s0 + $0x5a8] sm:$0xff]
  %v199 = vld [vmem:[%s0 + $0x5b0] sm:$0xff]
  %v200 = vld [vmem:[%s0 + $0x5b8] sm:$0xff]
  %v201 = vld [vmem:[%s0 + $0x5c0] sm:$0xff]
  %v202 = vld [vmem:[%s0 + $0x5c8] sm:$0xff]
  %v203 = vld [vmem:[%s0 + $0x5d0] sm:$0xff]
  %v204 = vld [vmem:[%s0 + $0x5d8] sm:$0xff]
  %v205 = vld [vmem:[%s0 + $0x5e0] sm:$0xff]
  %v206 = vld [vmem:[%s0 + $0x5e8] sm:$0xff]
  %v207 = vld [vmem:[%s0 + $0x5f0] sm:$0xff]
  %v208 = vld [vmem:[%s0 + $0x5f8] sm:$0xff]
  %v209 = vld [vmem:[%s0 + $0x600] sm:$0xff]
  %v210 = vld [vmem:[%s0 + $0x608] sm:$0xff]
  %v211 = vld [vmem:[%s0 + $0x610] sm:$0xff]
  %v212 = vld [vmem:[%s0 + $0x618] sm:$0xff]
  %v213 = vld [vmem:[%s1] sm:$0xff]
  %v214 = vld [vmem:[%s1 + $0x8] sm:$0xff]
  %v215 = vld [vmem:[%s1 + $0x10] sm:$0xff]
  %v216 = vld [vmem:[%s1 + $0x18] sm:$0xff]
  %v217 = vld [vmem:[%s1 + $0x20] sm:$0xff]
  %v218 = vld [vmem:[%s1 + $0x28] sm:$0xff]
  %v219 = vld [vmem:[%s1 + $0x30] sm:$0xff]
  %v220 = vld [vmem:[%s1 + $0x38] sm:$0xff]
  %vm221 = vcmask 523264
  %v223 = vsel %vm221, %v17, 0
  %v226 = vsel %vm221, %v18, 0
  %v229 = vsel %vm221, %v19, 0
  %v232 = vsel %vm221, %v20, 0
  %v235 = vsel %vm221, %v21, 0
  %v238 = vsel %vm221, %v22, 0
  %v241 = vsel %vm221, %v23, 0
  %v244 = vsel %vm221, %v24, 0
  %v247 = vsel %vm221, %v25, 0
  %v250 = vsel %vm221, %v26, 0
  %v253 = vsel %vm221, %v27, 0
  %v256 = vsel %vm221, %v28, 0
  %v259 = vsel %vm221, %v29, 0
  %v262 = vsel %vm221, %v30, 0
  %v265 = vsel %vm221, %v31, 0
  %v268 = vsel %vm221, %v32, 0
  %v271 = vsel %vm221, %v33, 0
  %v274 = vsel %vm221, %v34, 0
  %v277 = vsel %vm221, %v35, 0
  %v280 = vsel %vm221, %v36, 0
  %v283 = vsel %vm221, %v37, 0
  %v286 = vsel %vm221, %v38, 0
  %v289 = vsel %vm221, %v39, 0
  %v292 = vsel %vm221, %v40, 0
  %v295 = vsel %vm221, %v41, 0
  %v298 = vsel %vm221, %v42, 0
  %v301 = vsel %vm221, %v43, 0
  %v304 = vsel %vm221, %v44, 0
  %v307 = vsel %vm221, %v45, 0
  %v310 = vsel %vm221, %v46, 0
  %v313 = vsel %vm221, %v47, 0
  %v316 = vsel %vm221, %v48, 0
  %v319 = vsel %vm221, %v49, 0
  %v322 = vsel %vm221, %v50, 0
  %v325 = vsel %vm221, %v51, 0
  %v328 = vsel %vm221, %v52, 0
  %v331 = vsel %vm221, %v53, 0
  %v334 = vsel %vm221, %v54, 0
  %v337 = vsel %vm221, %v55, 0
  %v340 = vsel %vm221, %v56, 0
  %v343 = vsel %vm221, %v57, 0
  %v346 = vsel %vm221, %v58, 0
  %v349 = vsel %vm221, %v59, 0
  %v352 = vsel %vm221, %v60, 0
  %v355 = vsel %vm221, %v61, 0
  %v358 = vsel %vm221, %v62, 0
  %v361 = vsel %vm221, %v63, 0
  %v364 = vsel %vm221, %v64, 0
  %v367 = vsel %vm221, %v65, 0
  %v370 = vsel %vm221, %v66, 0
  %v373 = vsel %vm221, %v67, 0
  %v376 = vsel %vm221, %v68, 0
  %v379 = vsel %vm221, %v69, 0
  %v382 = vsel %vm221, %v70, 0
  %v385 = vsel %vm221, %v71, 0
  %v388 = vsel %vm221, %v72, 0
  %v391 = vsel %vm221, %v73, 0
  %v394 = vsel %vm221, %v74, 0
  %v397 = vsel %vm221, %v75, 0
  %v400 = vsel %vm221, %v76, 0
  %v403 = vsel %vm221, %v77, 0
  %v406 = vsel %vm221, %v78, 0
  %v409 = vsel %vm221, %v79, 0
  %v412 = vsel %vm221, %v80, 0
  %v415 = vsel %vm221, %v81, 0
  %v418 = vsel %vm221, %v82, 0
  %v421 = vsel %vm221, %v83, 0
  %v424 = vsel %vm221, %v84, 0
  %v427 = vsel %vm221, %v85, 0
  %v430 = vsel %vm221, %v86, 0
  %v433 = vsel %vm221, %v87, 0
  %v436 = vsel %vm221, %v88, 0
  %v439 = vsel %vm221, %v89, 0
  %v442 = vsel %vm221, %v90, 0
  %v445 = vsel %vm221, %v91, 0
  %v448 = vsel %vm221, %v92, 0
  %v451 = vsel %vm221, %v93, 0
  %v454 = vsel %vm221, %v94, 0
  %v457 = vsel %vm221, %v95, 0
  %v460 = vsel %vm221, %v96, 0
  %v463 = vsel %vm221, %v97, 0
  %v466 = vsel %vm221, %v98, 0
  %v469 = vsel %vm221, %v99, 0
  %v472 = vsel %vm221, %v100, 0
  %v475 = vsel %vm221, %v101, 0
  %v478 = vsel %vm221, %v102, 0
  %v481 = vsel %vm221, %v103, 0
  %v484 = vsel %vm221, %v104, 0
  %v487 = vsel %vm221, %v105, 0
  %v490 = vsel %vm221, %v106, 0
  %v493 = vsel %vm221, %v107, 0
  %v496 = vsel %vm221, %v108, 0
  %v499 = vsel %vm221, %v109, 0
  %v502 = vsel %vm221, %v110, 0
  %v505 = vsel %vm221, %v111, 0
  %v508 = vsel %vm221, %v112, 0
  %v511 = vsel %vm221, %v113, 0
  %v514 = vsel %vm221, %v114, 0
  %v517 = vsel %vm221, %v115, 0
  %v520 = vsel %vm221, %v116, 0
  %v523 = vsel %vm221, %v117, 0
  %v526 = vsel %vm221, %v118, 0
  %v529 = vsel %vm221, %v119, 0
  %v532 = vsel %vm221, %v120, 0
  %v535 = vsel %vm221, %v121, 0
  %v538 = vsel %vm221, %v122, 0
  %v541 = vsel %vm221, %v123, 0
  %v544 = vsel %vm221, %v124, 0
  %v547 = vsel %vm221, %v125, 0
  %v550 = vsel %vm221, %v126, 0
  %v553 = vsel %vm221, %v127, 0
  %v556 = vsel %vm221, %v128, 0
  %v559 = vsel %vm221, %v129, 0
  %v562 = vsel %vm221, %v130, 0
  %v565 = vsel %vm221, %v131, 0
  %v568 = vsel %vm221, %v132, 0
  %v571 = vsel %vm221, %v133, 0
  %v574 = vsel %vm221, %v134, 0
  %v577 = vsel %vm221, %v135, 0
  %v580 = vsel %vm221, %v136, 0
  %v583 = vsel %vm221, %v137, 0
  %v586 = vsel %vm221, %v138, 0
  %v589 = vsel %vm221, %v139, 0
  %v592 = vsel %vm221, %v140, 0
  %v595 = vsel %vm221, %v141, 0
  %v598 = vsel %vm221, %v142, 0
  %v601 = vsel %vm221, %v143, 0
  %v604 = vsel %vm221, %v144, 0
  %v607 = vsel %vm221, %v145, 0
  %v610 = vsel %vm221, %v146, 0
  %v613 = vsel %vm221, %v147, 0
  %v616 = vsel %vm221, %v148, 0
  %v619 = vsel %vm221, %v149, 0
  %v622 = vsel %vm221, %v150, 0
  %v625 = vsel %vm221, %v151, 0
  %v628 = vsel %vm221, %v152, 0
  %v631 = vsel %vm221, %v153, 0
  %v634 = vsel %vm221, %v154, 0
  %v637 = vsel %vm221, %v155, 0
  %v640 = vsel %vm221, %v156, 0
  %v643 = vsel %vm221, %v157, 0
  %v646 = vsel %vm221, %v158, 0
  %v649 = vsel %vm221, %v159, 0
  %v652 = vsel %vm221, %v160, 0
  %v655 = vsel %vm221, %v161, 0
  %v658 = vsel %vm221, %v162, 0
  %v661 = vsel %vm221, %v163, 0
  %v664 = vsel %vm221, %v164, 0
  %v667 = vsel %vm221, %v165, 0
  %v670 = vsel %vm221, %v166, 0
  %v673 = vsel %vm221, %v167, 0
  %v676 = vsel %vm221, %v168, 0
  %v679 = vsel %vm221, %v169, 0
  %v682 = vsel %vm221, %v170, 0
  %v685 = vsel %vm221, %v171, 0
  %v688 = vsel %vm221, %v172, 0
  %v691 = vsel %vm221, %v173, 0
  %v694 = vsel %vm221, %v174, 0
  %v697 = vsel %vm221, %v175, 0
  %v700 = vsel %vm221, %v176, 0
  %v703 = vsel %vm221, %v177, 0
  %v706 = vsel %vm221, %v178, 0
  %v709 = vsel %vm221, %v179, 0
  %v712 = vsel %vm221, %v180, 0
  %v715 = vsel %vm221, %v181, 0
  %v718 = vsel %vm221, %v182, 0
  %v721 = vsel %vm221, %v183, 0
  %v724 = vsel %vm221, %v184, 0
  %v727 = vsel %vm221, %v185, 0
  %v730 = vsel %vm221, %v186, 0
  %v733 = vsel %vm221, %v187, 0
  %v736 = vsel %vm221, %v188, 0
  %v739 = vsel %vm221, %v189, 0
  %v742 = vsel %vm221, %v190, 0
  %v745 = vsel %vm221, %v191, 0
  %v748 = vsel %vm221, %v192, 0
  %v751 = vsel %vm221, %v193, 0
  %v754 = vsel %vm221, %v194, 0
  %v757 = vsel %vm221, %v195, 0
  %v760 = vsel %vm221, %v196, 0
  %v763 = vsel %vm221, %v197, 0
  %v766 = vsel %vm221, %v198, 0
  %v769 = vsel %vm221, %v199, 0
  %v772 = vsel %vm221, %v200, 0
  %v775 = vsel %vm221, %v201, 0
  %v778 = vsel %vm221, %v202, 0
  %v781 = vsel %vm221, %v203, 0
  %v784 = vsel %vm221, %v204, 0
  %v787 = vsel %vm221, %v205, 0
  %v790 = vsel %vm221, %v206, 0
  %v793 = vsel %vm221, %v207, 0
  %v796 = vsel %vm221, %v208, 0
  %v799 = vsel %vm221, %v209, 0
  %v802 = vsel %vm221, %v210, 0
  %v805 = vsel %vm221, %v211, 0
  %v808 = vsel %vm221, %v212, 0
  %810 = vmatprep.subr.mxu0 0.0
  %811 = vmatpush1.msra.mxu0 %v213
  %812 = vmatprep.subr.mxu0 0.0
  %813 = vmatpush1.msra.mxu0 %v214
  %814 = vmatprep.subr.mxu0 0.0
  %815 = vmatpush1.msra.mxu0 %v215
  %816 = vmatprep.subr.mxu0 0.0
  %817 = vmatpush1.msra.mxu0 %v216
  %818 = vmatprep.subr.mxu0 0.0
  %819 = vmatpush1.msra.mxu0 %v217
  %820 = vmatprep.subr.mxu0 0.0
  %821 = vmatpush1.msra.mxu0 %v218
  %822 = vmatprep.subr.mxu0 0.0
  %823 = vmatpush1.msra.mxu0 %v219
  %824 = vmatprep.subr.mxu0 0.0
  %825 = vmatpush1.msra.mxu0 %v220
  %826 = vmatprep.subr.mxu0 0.0
  %827 = vmatpush1.msra.mxu0 0.0
  %828 = vmatprep.subr.mxu0 0.0
  %829 = vmatpush1.msra.mxu0 0.0
  %830 = vmatprep.subr.mxu0 0.0
  %831 = vmatpush1.msra.mxu0 0.0
  %832 = vmatprep.subr.mxu0 0.0
  %833 = vmatpush1.msra.mxu0 0.0
  %834 = vmatprep.subr.mxu0 0.0
  %835 = vmatpush1.msra.mxu0 0.0
  %836 = vmatprep.subr.mxu0 0.0
  %837 = vmatpush1.msra.mxu0 0.0
  %838 = vmatprep.subr.mxu0 0.0
  %839 = vmatpush1.msra.mxu0 0.0
  %840 = vmatprep.subr.mxu0 0.0
  %841 = vmatpush1.msra.mxu0 0.0
  %842 = vmatprep.subr.mxu0 0.0
  %843 = vmatpush1.msra.mxu0 0.0
  %844 = vmatprep.subr.mxu0 0.0
  %845 = vmatpush1.msra.mxu0 0.0
  %846 = vmatprep.subr.mxu0 0.0
  %847 = vmatpush1.msra.mxu0 0.0
  %848 = vmatprep.subr.mxu0 0.0
  %849 = vmatpush1.msra.mxu0 0.0
  %850 = vmatprep.subr.mxu0 0.0
  %851 = vmatpush1.msra.mxu0 0.0
  %852 = vmatprep.subr.mxu0 0.0
  %853 = vmatpush1.msra.mxu0 0.0
  %854 = vmatprep.subr.mxu0 0.0
  %855 = vmatpush1.msra.mxu0 0.0
  %856 = vmatprep.subr.mxu0 0.0
  %857 = vmatpush1.msra.mxu0 0.0
  %858 = vmatprep.subr.mxu0 0.0
  %859 = vmatpush1.msra.mxu0 0.0
  %860 = vmatprep.subr.mxu0 0.0
  %861 = vmatpush1.msra.mxu0 0.0
  %862 = vmatprep.subr.mxu0 0.0
  %863 = vmatpush1.msra.mxu0 0.0
  %864 = vmatprep.subr.mxu0 0.0
  %865 = vmatpush1.msra.mxu0 0.0
  %866 = vmatprep.subr.mxu0 0.0
  %867 = vmatpush1.msra.mxu0 0.0
  %868 = vmatprep.subr.mxu0 0.0
  %869 = vmatpush1.msra.mxu0 0.0
  %870 = vmatprep.subr.mxu0 0.0
  %871 = vmatpush1.msra.mxu0 0.0
  %872 = vmatprep.subr.mxu0 0.0
  %873 = vmatpush1.msra.mxu0 0.0
  %874 = vmatprep.mubr.f32.mxu0 0.0
  %875 = vmatmul.mubr.f32.gmra.mrb[0].mxu0 %v223
  %v876 = vpop.f32.mrb[0].mxu0
  %v877 = vadd.f32 0.0, %v876
  %v878 = vpop.f32.mrb[0].mxu0
  %879 = vmatprep.mubr.f32.mxu0 0.0
  %880 = vmatmul.mubr.f32.gmra.mrb[0].mxu0 %v226
  %v881 = vpop.f32.mrb[0].mxu0
  %v882 = vadd.f32 0.0, %v881
  %v883 = vpop.f32.mrb[0].mxu0
  %884 = vmatprep.mubr.f32.mxu0 0.0
  %885 = vmatmul.mubr.f32.gmra.mrb[0].mxu0 %v229
  %v886 = vpop.f32.mrb[0].mxu0
  %v887 = vadd.f32 0.0, %v886
  %v888 = vpop.f32.mrb[0].mxu0
  %889 = vmatprep.mubr.f32.mxu0 0.0
  %890 = vmatmul.mubr.f32.gmra.mrb[0].mxu0 %v232
  %v891 = vpop.f32.mrb[0].mxu0
  %v892 = vadd.f32 0.0, %v891
  %v893 = vpop.f32.mrb[0].mxu0
  %894 = vmatprep.mubr.f32.mxu0 0.0
  %895 = vmatmul.mubr.f32.gmra.mrb[0].mxu0 %v235
  %v896 = vpop.f32.mrb[0].mxu0
  %v897 = vadd.f32 0.0, %v896
  %v898 = vpop.f32.mrb[0].mxu0
  %899 = vmatprep.mubr.f32.mxu0 0.0
  %900 = vmatmul.mubr.f32.gmra.mrb[0].mxu0 %v238
  %v901 = vpop.f32.mrb[0].mxu0
  %v902 = vadd.f32 0.0, %v901
  %v903 = vpop.f32.mrb[0].mxu0
  %904 = vmatprep.mubr.f32.mxu0 0.0
  %905 = vmatmul.mubr.f32.gmra.mrb[0].mxu0 %v241
  %v906 = vpop.f32.mrb[0].mxu0
  %v907 = vadd.f32 0.0, %v906
  %v908 = vpop.f32.mrb[0].mxu0
  %909 = vmatprep.mubr.f32.mxu0 0.0
  %910 = vmatmul.mubr.f32.gmra.mrb[0].mxu0 %v244
  %v911 = vpop.f32.mrb[0].mxu0
  %v912 = vadd.f32 0.0, %v911
  %v913 = vpop.f32.mrb[0].mxu0
  %914 = vmatprep.mubr.f32.mxu0 0.0
  %915 = vmatmul.mubr.f32.gmra.mrb[0].mxu0 %v247
  %v916 = vpop.f32.mrb[0].mxu0
  %v917 = vadd.f32 0.0, %v916
  %v918 = vpop.f32.mrb[0].mxu0
  %919 = vmatprep.mubr.f32.mxu0 0.0
  %920 = vmatmul.mubr.f32.gmra.mrb[0].mxu0 %v250
  %v921 = vpop.f32.mrb[0].mxu0
  %v922 = vadd.f32 0.0, %v921
  %v923 = vpop.f32.mrb[0].mxu0
  %924 = vmatprep.mubr.f32.mxu0 0.0
  %925 = vmatmul.mubr.f32.gmra.mrb[0].mxu0 %v253
  %v926 = vpop.f32.mrb[0].mxu0
  %v927 = vadd.f32 0.0, %v926
  %v928 = vpop.f32.mrb[0].mxu0
  %929 = vmatprep.mubr.f32.mxu0 0.0
  %930 = vmatmul.mubr.f32.gmra.mrb[0].mxu0 %v256
  %v931 = vpop.f32.mrb[0].mxu0
  %v932 = vadd.f32 0.0, %v931
  %v933 = vpop.f32.mrb[0].mxu0
  %934 = vmatprep.mubr.f32.mxu0 0.0
  %935 = vmatmul.mubr.f32.gmra.mrb[0].mxu0 %v259
  %v936 = vpop.f32.mrb[0].mxu0
  %v937 = vadd.f32 0.0, %v936
  %v938 = vpop.f32.mrb[0].mxu0
  %939 = vmatprep.mubr.f32.mxu0 0.0
  %940 = vmatmul.mubr.f32.gmra.mrb[0].mxu0 %v262
  %v941 = vpop.f32.mrb[0].mxu0
  %v942 = vadd.f32 0.0, %v941
  %v943 = vpop.f32.mrb[0].mxu0
  %944 = vmatprep.mubr.f32.mxu0 0.0
  %945 = vmatmul.mubr.f32.gmra.mrb[0].mxu0 %v265
  %v946 = vpop.f32.mrb[0].mxu0
  %v947 = vadd.f32 0.0, %v946
  %v948 = vpop.f32.mrb[0].mxu0
  %949 = vmatprep.mubr.f32.mxu0 0.0
  %950 = vmatmul.mubr.f32.gmra.mrb[0].mxu0 %v268
  %v951 = vpop.f32.mrb[0].mxu0
  %v952 = vadd.f32 0.0, %v951
  %v953 = vpop.f32.mrb[0].mxu0
  %954 = vmatprep.mubr.f32.mxu0 0.0
  %955 = vmatmul.mubr.f32.gmra.mrb[0].mxu0 %v271
  %v956 = vpop.f32.mrb[0].mxu0
  %v957 = vadd.f32 0.0, %v956
  %v958 = vpop.f32.mrb[0].mxu0
  %959 = vmatprep.mubr.f32.mxu0 0.0
  %960 = vmatmul.mubr.f32.gmra.mrb[0].mxu0 %v274
  %v961 = vpop.f32.mrb[0].mxu0
  %v962 = vadd.f32 0.0, %v961
  %v963 = vpop.f32.mrb[0].mxu0
  %964 = vmatprep.mubr.f32.mxu0 0.0
  %965 = vmatmul.mubr.f32.gmra.mrb[0].mxu0 %v277
  %v966 = vpop.f32.mrb[0].mxu0
  %v967 = vadd.f32 0.0, %v966
  %v968 = vpop.f32.mrb[0].mxu0
  %969 = vmatprep.mubr.f32.mxu0 0.0
  %970 = vmatmul.mubr.f32.gmra.mrb[0].mxu0 %v280
  %v971 = vpop.f32.mrb[0].mxu0
  %v972 = vadd.f32 0.0, %v971
  %v973 = vpop.f32.mrb[0].mxu0
  %974 = vmatprep.mubr.f32.mxu0 0.0
  %975 = vmatmul.mubr.f32.gmra.mrb[0].mxu0 %v283
  %v976 = vpop.f32.mrb[0].mxu0
  %v977 = vadd.f32 0.0, %v976
  %v978 = vpop.f32.mrb[0].mxu0
  %979 = vmatprep.mubr.f32.mxu0 0.0
  %980 = vmatmul.mubr.f32.gmra.mrb[0].mxu0 %v286
  %v981 = vpop.f32.mrb[0].mxu0
  %v982 = vadd.f32 0.0, %v981
  %v983 = vpop.f32.mrb[0].mxu0
  %984 = vmatprep.mubr.f32.mxu0 0.0
  %985 = vmatmul.mubr.f32.gmra.mrb[0].mxu0 %v289
  %v986 = vpop.f32.mrb[0].mxu0
  %v987 = vadd.f32 0.0, %v986
  %v988 = vpop.f32.mrb[0].mxu0
  %989 = vmatprep.mubr.f32.mxu0 0.0
  %990 = vmatmul.mubr.f32.gmra.mrb[0].mxu0 %v292
  %v991 = vpop.f32.mrb[0].mxu0
  %v992 = vadd.f32 0.0, %v991
  %v993 = vpop.f32.mrb[0].mxu0
  %994 = vmatprep.mubr.f32.mxu0 0.0
  %995 = vmatmul.mubr.f32.gmra.mrb[0].mxu0 %v295
  %v996 = vpop.f32.mrb[0].mxu0
  %v997 = vadd.f32 0.0, %v996
  %v998 = vpop.f32.mrb[0].mxu0
  %999 = vmatprep.mubr.f32.mxu0 0.0
  %1000 = vmatmul.mubr.f32.gmra.mrb[0].mxu0 %v298
  %v1001 = vpop.f32.mrb[0].mxu0
  %v1002 = vadd.f32 0.0, %v1001
  %v1003 = vpop.f32.mrb[0].mxu0
  %1004 = vmatprep.mubr.f32.mxu0 0.0
  %1005 = vmatmul.mubr.f32.gmra.mrb[0].mxu0 %v301
  %v1006 = vpop.f32.mrb[0].mxu0
  %v1007 = vadd.f32 0.0, %v1006
  %v1008 = vpop.f32.mrb[0].mxu0
  %1009 = vmatprep.mubr.f32.mxu0 0.0
  %1010 = vmatmul.mubr.f32.gmra.mrb[0].mxu0 %v304
  %v1011 = vpop.f32.mrb[0].mxu0
  %v1012 = vadd.f32 0.0, %v1011
  %v1013 = vpop.f32.mrb[0].mxu0
  %1014 = vmatprep.mubr.f32.mxu0 0.0
  %1015 = vmatmul.mubr.f32.gmra.mrb[0].mxu0 %v307
  %v1016 = vpop.f32.mrb[0].mxu0
  %v1017 = vadd.f32 0.0, %v1016
  %v1018 = vpop.f32.mrb[0].mxu0
  %1019 = vmatprep.mubr.f32.mxu0 0.0
  %1020 = vmatmul.mubr.f32.gmra.mrb[0].mxu0 %v310
  %v1021 = vpop.f32.mrb[0].mxu0
  %v1022 = vadd.f32 0.0, %v1021
  %v1023 = vpop.f32.mrb[0].mxu0
  %1024 = vmatprep.mubr.f32.mxu0 0.0
  %1025 = vmatmul.mubr.f32.gmra.mrb[0].mxu0 %v313
  %v1026 = vpop.f32.mrb[0].mxu0
  %v1027 = vadd.f32 0.0, %v1026
  %v1028 = vpop.f32.mrb[0].mxu0
  %1029 = vmatprep.mubr.f32.mxu0 0.0
  %1030 = vmatmul.mubr.f32.gmra.mrb[0].mxu0 %v316
  %v1031 = vpop.f32.mrb[0].mxu0
  %v1032 = vadd.f32 0.0, %v1031
  %v1033 = vpop.f32.mrb[0].mxu0
  %1034 = vmatprep.mubr.f32.mxu0 0.0
  %1035 = vmatmul.mubr.f32.gmra.mrb[0].mxu0 %v319
  %v1036 = vpop.f32.mrb[0].mxu0
  %v1037 = vadd.f32 0.0, %v1036
  %v1038 = vpop.f32.mrb[0].mxu0
  %1039 = vmatprep.mubr.f32.mxu0 0.0
  %1040 = vmatmul.mubr.f32.gmra.mrb[0].mxu0 %v322
  %v1041 = vpop.f32.mrb[0].mxu0
  %v1042 = vadd.f32 0.0, %v1041
  %v1043 = vpop.f32.mrb[0].mxu0
  %1044 = vmatprep.mubr.f32.mxu0 0.0
  %1045 = vmatmul.mubr.f32.gmra.mrb[0].mxu0 %v325
  %v1046 = vpop.f32.mrb[0].mxu0
  %v1047 = vadd.f32 0.0, %v1046
  %v1048 = vpop.f32.mrb[0].mxu0
  %1049 = vmatprep.mubr.f32.mxu0 0.0
  %1050 = vmatmul.mubr.f32.gmra.mrb[0].mxu0 %v328
  %v1051 = vpop.f32.mrb[0].mxu0
  %v1052 = vadd.f32 0.0, %v1051
  %v1053 = vpop.f32.mrb[0].mxu0
  %1054 = vmatprep.mubr.f32.mxu0 0.0
  %1055 = vmatmul.mubr.f32.gmra.mrb[0].mxu0 %v331
  %v1056 = vpop.f32.mrb[0].mxu0
  %v1057 = vadd.f32 0.0, %v1056
  %v1058 = vpop.f32.mrb[0].mxu0
  %1059 = vmatprep.mubr.f32.mxu0 0.0
  %1060 = vmatmul.mubr.f32.gmra.mrb[0].mxu0 %v334
  %v1061 = vpop.f32.mrb[0].mxu0
  %v1062 = vadd.f32 0.0, %v1061
  %v1063 = vpop.f32.mrb[0].mxu0
  %1064 = vmatprep.mubr.f32.mxu0 0.0
  %1065 = vmatmul.mubr.f32.gmra.mrb[0].mxu0 %v337
  %v1066 = vpop.f32.mrb[0].mxu0
  %v1067 = vadd.f32 0.0, %v1066
  %v1068 = vpop.f32.mrb[0].mxu0
  %1069 = vmatprep.mubr.f32.mxu0 0.0
  %1070 = vmatmul.mubr.f32.gmra.mrb[0].mxu0 %v340
  %v1071 = vpop.f32.mrb[0].mxu0
  %v1072 = vadd.f32 0.0, %v1071
  %v1073 = vpop.f32.mrb[0].mxu0
  %1074 = vmatprep.mubr.f32.mxu0 0.0
  %1075 = vmatmul.mubr.f32.gmra.mrb[0].mxu0 %v343
  %v1076 = vpop.f32.mrb[0].mxu0
  %v1077 = vadd.f32 0.0, %v1076
  %v1078 = vpop.f32.mrb[0].mxu0
  %1079 = vmatprep.mubr.f32.mxu0 0.0
  %1080 = vmatmul.mubr.f32.gmra.mrb[0].mxu0 %v346
  %v1081 = vpop.f32.mrb[0].mxu0
  %v1082 = vadd.f32 0.0, %v1081
  %v1083 = vpop.f32.mrb[0].mxu0
  %1084 = vmatprep.mubr.f32.mxu0 0.0
  %1085 = vmatmul.mubr.f32.gmra.mrb[0].mxu0 %v349
  %v1086 = vpop.f32.mrb[0].mxu0
  %v1087 = vadd.f32 0.0, %v1086
  %v1088 = vpop.f32.mrb[0].mxu0
  %1089 = vmatprep.mubr.f32.mxu0 0.0
  %1090 = vmatmul.mubr.f32.gmra.mrb[0].mxu0 %v352
  %v1091 = vpop.f32.mrb[0].mxu0
  %v1092 = vadd.f32 0.0, %v1091
  %v1093 = vpop.f32.mrb[0].mxu0
  %1094 = vmatprep.mubr.f32.mxu0 0.0
  %1095 = vmatmul.mubr.f32.gmra.mrb[0].mxu0 %v355
  %v1096 = vpop.f32.mrb[0].mxu0
  %v1097 = vadd.f32 0.0, %v1096
  %v1098 = vpop.f32.mrb[0].mxu0
  %1099 = vmatprep.mubr.f32.mxu0 0.0
  %1100 = vmatmul.mubr.f32.gmra.mrb[0].mxu0 %v358
  %v1101 = vpop.f32.mrb[0].mxu0
  %v1102 = vadd.f32 0.0, %v1101
  %v1103 = vpop.f32.mrb[0].mxu0
  %1104 = vmatprep.mubr.f32.mxu0 0.0
  %1105 = vmatmul.mubr.f32.gmra.mrb[0].mxu0 %v361
  %v1106 = vpop.f32.mrb[0].mxu0
  %v1107 = vadd.f32 0.0, %v1106
  %v1108 = vpop.f32.mrb[0].mxu0
  %1109 = vmatprep.mubr.f32.mxu0 0.0
  %1110 = vmatmul.mubr.f32.gmra.mrb[0].mxu0 %v364
  %v1111 = vpop.f32.mrb[0].mxu0
  %v1112 = vadd.f32 0.0, %v1111
  %v1113 = vpop.f32.mrb[0].mxu0
  %1114 = vmatprep.mubr.f32.mxu0 0.0
  %1115 = vmatmul.mubr.f32.gmra.mrb[0].mxu0 %v367
  %v1116 = vpop.f32.mrb[0].mxu0
  %v1117 = vadd.f32 0.0, %v1116
  %v1118 = vpop.f32.mrb[0].mxu0
  %1119 = vmatprep.mubr.f32.mxu0 0.0
  %1120 = vmatmul.mubr.f32.gmra.mrb[0].mxu0 %v370
  %v1121 = vpop.f32.mrb[0].mxu0
  %v1122 = vadd.f32 0.0, %v1121
  %v1123 = vpop.f32.mrb[0].mxu0
  %1124 = vmatprep.mubr.f32.mxu0 0.0
  %1125 = vmatmul.mubr.f32.gmra.mrb[0].mxu0 %v373
  %v1126 = vpop.f32.mrb[0].mxu0
  %v1127 = vadd.f32 0.0, %v1126
  %v1128 = vpop.f32.mrb[0].mxu0
  %1129 = vmatprep.mubr.f32.mxu0 0.0
  %1130 = vmatmul.mubr.f32.gmra.mrb[0].mxu0 %v376
  %v1131 = vpop.f32.mrb[0].mxu0
  %v1132 = vadd.f32 0.0, %v1131
  %v1133 = vpop.f32.mrb[0].mxu0
  %1134 = vmatprep.mubr.f32.mxu0 0.0
  %1135 = vmatmul.mubr.f32.gmra.mrb[0].mxu0 %v379
  %v1136 = vpop.f32.mrb[0].mxu0
  %v1137 = vadd.f32 0.0, %v1136
  %v1138 = vpop.f32.mrb[0].mxu0
  %1139 = vmatprep.mubr.f32.mxu0 0.0
  %1140 = vmatmul.mubr.f32.gmra.mrb[0].mxu0 %v382
  %v1141 = vpop.f32.mrb[0].mxu0
  %v1142 = vadd.f32 0.0, %v1141
  %v1143 = vpop.f32.mrb[0].mxu0
  %1144 = vmatprep.mubr.f32.mxu0 0.0
  %1145 = vmatmul.mubr.f32.gmra.mrb[0].mxu0 %v385
  %v1146 = vpop.f32.mrb[0].mxu0
  %v1147 = vadd.f32 0.0, %v1146
  %v1148 = vpop.f32.mrb[0].mxu0
  %1149 = vmatprep.mubr.f32.mxu0 0.0
  %1150 = vmatmul.mubr.f32.gmra.mrb[0].mxu0 %v388
  %v1151 = vpop.f32.mrb[0].mxu0
  %v1152 = vadd.f32 0.0, %v1151
  %v1153 = vpop.f32.mrb[0].mxu0
  %1154 = vmatprep.mubr.f32.mxu0 0.0
  %1155 = vmatmul.mubr.f32.gmra.mrb[0].mxu0 %v391
  %v1156 = vpop.f32.mrb[0].mxu0
  %v1157 = vadd.f32 0.0, %v1156
  %v1158 = vpop.f32.mrb[0].mxu0
  %1159 = vmatprep.mubr.f32.mxu0 0.0
  %1160 = vmatmul.mubr.f32.gmra.mrb[0].mxu0 %v394
  %v1161 = vpop.f32.mrb[0].mxu0
  %v1162 = vadd.f32 0.0, %v1161
  %v1163 = vpop.f32.mrb[0].mxu0
  %1164 = vmatprep.mubr.f32.mxu0 0.0
  %1165 = vmatmul.mubr.f32.gmra.mrb[0].mxu0 %v397
  %v1166 = vpop.f32.mrb[0].mxu0
  %v1167 = vadd.f32 0.0, %v1166
  %v1168 = vpop.f32.mrb[0].mxu0
  %1169 = vmatprep.mubr.f32.mxu0 0.0
  %1170 = vmatmul.mubr.f32.gmra.mrb[0].mxu0 %v400
  %v1171 = vpop.f32.mrb[0].mxu0
  %v1172 = vadd.f32 0.0, %v1171
  %v1173 = vpop.f32.mrb[0].mxu0
  %1174 = vmatprep.mubr.f32.mxu0 0.0
  %1175 = vmatmul.mubr.f32.gmra.mrb[0].mxu0 %v403
  %v1176 = vpop.f32.mrb[0].mxu0
  %v1177 = vadd.f32 0.0, %v1176
  %v1178 = vpop.f32.mrb[0].mxu0
  %1179 = vmatprep.mubr.f32.mxu0 0.0
  %1180 = vmatmul.mubr.f32.gmra.mrb[0].mxu0 %v406
  %v1181 = vpop.f32.mrb[0].mxu0
  %v1182 = vadd.f32 0.0, %v1181
  %v1183 = vpop.f32.mrb[0].mxu0
  %1184 = vmatprep.mubr.f32.mxu0 0.0
  %1185 = vmatmul.mubr.f32.gmra.mrb[0].mxu0 %v409
  %v1186 = vpop.f32.mrb[0].mxu0
  %v1187 = vadd.f32 0.0, %v1186
  %v1188 = vpop.f32.mrb[0].mxu0
  %1189 = vmatprep.mubr.f32.mxu0 0.0
  %1190 = vmatmul.mubr.f32.gmra.mrb[0].mxu0 %v412
  %v1191 = vpop.f32.mrb[0].mxu0
  %v1192 = vadd.f32 0.0, %v1191
  %v1193 = vpop.f32.mrb[0].mxu0
  %1194 = vmatprep.mubr.f32.mxu0 0.0
  %1195 = vmatmul.mubr.f32.gmra.mrb[0].mxu0 %v415
  %v1196 = vpop.f32.mrb[0].mxu0
  %v1197 = vadd.f32 0.0, %v1196
  %v1198 = vpop.f32.mrb[0].mxu0
  %1199 = vmatprep.mubr.f32.mxu0 0.0
  %1200 = vmatmul.mubr.f32.gmra.mrb[0].mxu0 %v418
  %v1201 = vpop.f32.mrb[0].mxu0
  %v1202 = vadd.f32 0.0, %v1201
  %v1203 = vpop.f32.mrb[0].mxu0
  %1204 = vmatprep.mubr.f32.mxu0 0.0
  %1205 = vmatmul.mubr.f32.gmra.mrb[0].mxu0 %v421
  %v1206 = vpop.f32.mrb[0].mxu0
  %v1207 = vadd.f32 0.0, %v1206
  %v1208 = vpop.f32.mrb[0].mxu0
  %1209 = vmatprep.mubr.f32.mxu0 0.0
  %1210 = vmatmul.mubr.f32.gmra.mrb[0].mxu0 %v424
  %v1211 = vpop.f32.mrb[0].mxu0
  %v1212 = vadd.f32 0.0, %v1211
  %v1213 = vpop.f32.mrb[0].mxu0
  %1214 = vmatprep.mubr.f32.mxu0 0.0
  %1215 = vmatmul.mubr.f32.gmra.mrb[0].mxu0 %v427
  %v1216 = vpop.f32.mrb[0].mxu0
  %v1217 = vadd.f32 0.0, %v1216
  %v1218 = vpop.f32.mrb[0].mxu0
  %1219 = vmatprep.mubr.f32.mxu0 0.0
  %1220 = vmatmul.mubr.f32.gmra.mrb[0].mxu0 %v430
  %v1221 = vpop.f32.mrb[0].mxu0
  %v1222 = vadd.f32 0.0, %v1221
  %v1223 = vpop.f32.mrb[0].mxu0
  %1224 = vmatprep.mubr.f32.mxu0 0.0
  %1225 = vmatmul.mubr.f32.gmra.mrb[0].mxu0 %v433
  %v1226 = vpop.f32.mrb[0].mxu0
  %v1227 = vadd.f32 0.0, %v1226
  %v1228 = vpop.f32.mrb[0].mxu0
  %1229 = vmatprep.mubr.f32.mxu0 0.0
  %1230 = vmatmul.mubr.f32.gmra.mrb[0].mxu0 %v436
  %v1231 = vpop.f32.mrb[0].mxu0
  %v1232 = vadd.f32 0.0, %v1231
  %v1233 = vpop.f32.mrb[0].mxu0
  %1234 = vmatprep.mubr.f32.mxu0 0.0
  %1235 = vmatmul.mubr.f32.gmra.mrb[0].mxu0 %v439
  %v1236 = vpop.f32.mrb[0].mxu0
  %v1237 = vadd.f32 0.0, %v1236
  %v1238 = vpop.f32.mrb[0].mxu0
  %1239 = vmatprep.mubr.f32.mxu0 0.0
  %1240 = vmatmul.mubr.f32.gmra.mrb[0].mxu0 %v442
  %v1241 = vpop.f32.mrb[0].mxu0
  %v1242 = vadd.f32 0.0, %v1241
  %v1243 = vpop.f32.mrb[0].mxu0
  %1244 = vmatprep.mubr.f32.mxu0 0.0
  %1245 = vmatmul.mubr.f32.gmra.mrb[0].mxu0 %v445
  %v1246 = vpop.f32.mrb[0].mxu0
  %v1247 = vadd.f32 0.0, %v1246
  %v1248 = vpop.f32.mrb[0].mxu0
  %1249 = vmatprep.mubr.f32.mxu0 0.0
  %1250 = vmatmul.mubr.f32.gmra.mrb[0].mxu0 %v448
  %v1251 = vpop.f32.mrb[0].mxu0
  %v1252 = vadd.f32 0.0, %v1251
  %v1253 = vpop.f32.mrb[0].mxu0
  %1254 = vmatprep.mubr.f32.mxu0 0.0
  %1255 = vmatmul.mubr.f32.gmra.mrb[0].mxu0 %v451
  %v1256 = vpop.f32.mrb[0].mxu0
  %v1257 = vadd.f32 0.0, %v1256
  %v1258 = vpop.f32.mrb[0].mxu0
  %1259 = vmatprep.mubr.f32.mxu0 0.0
  %1260 = vmatmul.mubr.f32.gmra.mrb[0].mxu0 %v454
  %v1261 = vpop.f32.mrb[0].mxu0
  %v1262 = vadd.f32 0.0, %v1261
  %v1263 = vpop.f32.mrb[0].mxu0
  %1264 = vmatprep.mubr.f32.mxu0 0.0
  %1265 = vmatmul.mubr.f32.gmra.mrb[0].mxu0 %v457
  %v1266 = vpop.f32.mrb[0].mxu0
  %v1267 = vadd.f32 0.0, %v1266
  %v1268 = vpop.f32.mrb[0].mxu0
  %1269 = vmatprep.mubr.f32.mxu0 0.0
  %1270 = vmatmul.mubr.f32.gmra.mrb[0].mxu0 %v460
  %v1271 = vpop.f32.mrb[0].mxu0
  %v1272 = vadd.f32 0.0, %v1271
  %v1273 = vpop.f32.mrb[0].mxu0
  %1274 = vmatprep.mubr.f32.mxu0 0.0
  %1275 = vmatmul.mubr.f32.gmra.mrb[0].mxu0 %v463
  %v1276 = vpop.f32.mrb[0].mxu0
  %v1277 = vadd.f32 0.0, %v1276
  %v1278 = vpop.f32.mrb[0].mxu0
  %1279 = vmatprep.mubr.f32.mxu0 0.0
  %1280 = vmatmul.mubr.f32.gmra.mrb[0].mxu0 %v466
  %v1281 = vpop.f32.mrb[0].mxu0
  %v1282 = vadd.f32 0.0, %v1281
  %v1283 = vpop.f32.mrb[0].mxu0
  %1284 = vmatprep.mubr.f32.mxu0 0.0
  %1285 = vmatmul.mubr.f32.gmra.mrb[0].mxu0 %v469
  %v1286 = vpop.f32.mrb[0].mxu0
  %v1287 = vadd.f32 0.0, %v1286
  %v1288 = vpop.f32.mrb[0].mxu0
  %1289 = vmatprep.mubr.f32.mxu0 0.0
  %1290 = vmatmul.mubr.f32.gmra.mrb[0].mxu0 %v472
  %v1291 = vpop.f32.mrb[0].mxu0
  %v1292 = vadd.f32 0.0, %v1291
  %v1293 = vpop.f32.mrb[0].mxu0
  %1294 = vmatprep.mubr.f32.mxu0 0.0
  %1295 = vmatmul.mubr.f32.gmra.mrb[0].mxu0 %v475
  %v1296 = vpop.f32.mrb[0].mxu0
  %v1297 = vadd.f32 0.0, %v1296
  %v1298 = vpop.f32.mrb[0].mxu0
  %1299 = vmatprep.mubr.f32.mxu0 0.0
  %1300 = vmatmul.mubr.f32.gmra.mrb[0].mxu0 %v478
  %v1301 = vpop.f32.mrb[0].mxu0
  %v1302 = vadd.f32 0.0, %v1301
  %v1303 = vpop.f32.mrb[0].mxu0
  %1304 = vmatprep.mubr.f32.mxu0 0.0
  %1305 = vmatmul.mubr.f32.gmra.mrb[0].mxu0 %v481
  %v1306 = vpop.f32.mrb[0].mxu0
  %v1307 = vadd.f32 0.0, %v1306
  %v1308 = vpop.f32.mrb[0].mxu0
  %1309 = vmatprep.mubr.f32.mxu0 0.0
  %1310 = vmatmul.mubr.f32.gmra.mrb[0].mxu0 %v484
  %v1311 = vpop.f32.mrb[0].mxu0
  %v1312 = vadd.f32 0.0, %v1311
  %v1313 = vpop.f32.mrb[0].mxu0
  %1314 = vmatprep.mubr.f32.mxu0 0.0
  %1315 = vmatmul.mubr.f32.gmra.mrb[0].mxu0 %v487
  %v1316 = vpop.f32.mrb[0].mxu0
  %v1317 = vadd.f32 0.0, %v1316
  %v1318 = vpop.f32.mrb[0].mxu0
  %1319 = vmatprep.mubr.f32.mxu0 0.0
  %1320 = vmatmul.mubr.f32.gmra.mrb[0].mxu0 %v490
  %v1321 = vpop.f32.mrb[0].mxu0
  %v1322 = vadd.f32 0.0, %v1321
  %v1323 = vpop.f32.mrb[0].mxu0
  %1324 = vmatprep.mubr.f32.mxu0 0.0
  %1325 = vmatmul.mubr.f32.gmra.mrb[0].mxu0 %v493
  %v1326 = vpop.f32.mrb[0].mxu0
  %v1327 = vadd.f32 0.0, %v1326
  %v1328 = vpop.f32.mrb[0].mxu0
  %1329 = vmatprep.mubr.f32.mxu0 0.0
  %1330 = vmatmul.mubr.f32.gmra.mrb[0].mxu0 %v496
  %v1331 = vpop.f32.mrb[0].mxu0
  %v1332 = vadd.f32 0.0, %v1331
  %v1333 = vpop.f32.mrb[0].mxu0
  %1334 = vmatprep.mubr.f32.mxu0 0.0
  %1335 = vmatmul.mubr.f32.gmra.mrb[0].mxu0 %v499
  %v1336 = vpop.f32.mrb[0].mxu0
  %v1337 = vadd.f32 0.0, %v1336
  %v1338 = vpop.f32.mrb[0].mxu0
  %1339 = vmatprep.mubr.f32.mxu0 0.0
  %1340 = vmatmul.mubr.f32.gmra.mrb[0].mxu0 %v502
  %v1341 = vpop.f32.mrb[0].mxu0
  %v1342 = vadd.f32 0.0, %v1341
  %v1343 = vpop.f32.mrb[0].mxu0
  %1344 = vmatprep.mubr.f32.mxu0 0.0
  %1345 = vmatmul.mubr.f32.gmra.mrb[0].mxu0 %v505
  %v1346 = vpop.f32.mrb[0].mxu0
  %v1347 = vadd.f32 0.0, %v1346
  %v1348 = vpop.f32.mrb[0].mxu0
  %1349 = vmatprep.mubr.f32.mxu0 0.0
  %1350 = vmatmul.mubr.f32.gmra.mrb[0].mxu0 %v508
  %v1351 = vpop.f32.mrb[0].mxu0
  %v1352 = vadd.f32 0.0, %v1351
  %v1353 = vpop.f32.mrb[0].mxu0
  %1354 = vmatprep.mubr.f32.mxu0 0.0
  %1355 = vmatmul.mubr.f32.gmra.mrb[0].mxu0 %v511
  %v1356 = vpop.f32.mrb[0].mxu0
  %v1357 = vadd.f32 0.0, %v1356
  %v1358 = vpop.f32.mrb[0].mxu0
  %1359 = vmatprep.mubr.f32.mxu0 0.0
  %1360 = vmatmul.mubr.f32.gmra.mrb[0].mxu0 %v514
  %v1361 = vpop.f32.mrb[0].mxu0
  %v1362 = vadd.f32 0.0, %v1361
  %v1363 = vpop.f32.mrb[0].mxu0
  %1364 = vmatprep.mubr.f32.mxu0 0.0
  %1365 = vmatmul.mubr.f32.gmra.mrb[0].mxu0 %v517
  %v1366 = vpop.f32.mrb[0].mxu0
  %v1367 = vadd.f32 0.0, %v1366
  %v1368 = vpop.f32.mrb[0].mxu0
  %1369 = vmatprep.mubr.f32.mxu0 0.0
  %1370 = vmatmul.mubr.f32.gmra.mrb[0].mxu0 %v520
  %v1371 = vpop.f32.mrb[0].mxu0
  %v1372 = vadd.f32 0.0, %v1371
  %v1373 = vpop.f32.mrb[0].mxu0
  %1374 = vmatprep.mubr.f32.mxu0 0.0
  %1375 = vmatmul.mubr.f32.gmra.mrb[0].mxu0 %v523
  %v1376 = vpop.f32.mrb[0].mxu0
  %v1377 = vadd.f32 0.0, %v1376
  %v1378 = vpop.f32.mrb[0].mxu0
  %1379 = vmatprep.mubr.f32.mxu0 0.0
  %1380 = vmatmul.mubr.f32.gmra.mrb[0].mxu0 %v526
  %v1381 = vpop.f32.mrb[0].mxu0
  %v1382 = vadd.f32 0.0, %v1381
  %v1383 = vpop.f32.mrb[0].mxu0
  %1384 = vmatprep.mubr.f32.mxu0 0.0
  %1385 = vmatmul.mubr.f32.gmra.mrb[0].mxu0 %v529
  %v1386 = vpop.f32.mrb[0].mxu0
  %v1387 = vadd.f32 0.0, %v1386
  %v1388 = vpop.f32.mrb[0].mxu0
  %1389 = vmatprep.mubr.f32.mxu0 0.0
  %1390 = vmatmul.mubr.f32.gmra.mrb[0].mxu0 %v532
  %v1391 = vpop.f32.mrb[0].mxu0
  %v1392 = vadd.f32 0.0, %v1391
  %v1393 = vpop.f32.mrb[0].mxu0
  %1394 = vmatprep.mubr.f32.mxu0 0.0
  %1395 = vmatmul.mubr.f32.gmra.mrb[0].mxu0 %v535
  %v1396 = vpop.f32.mrb[0].mxu0
  %v1397 = vadd.f32 0.0, %v1396
  %v1398 = vpop.f32.mrb[0].mxu0
  %1399 = vmatprep.mubr.f32.mxu0 0.0
  %1400 = vmatmul.mubr.f32.gmra.mrb[0].mxu0 %v538
  %v1401 = vpop.f32.mrb[0].mxu0
  %v1402 = vadd.f32 0.0, %v1401
  %v1403 = vpop.f32.mrb[0].mxu0
  %1404 = vmatprep.mubr.f32.mxu0 0.0
  %1405 = vmatmul.mubr.f32.gmra.mrb[0].mxu0 %v541
  %v1406 = vpop.f32.mrb[0].mxu0
  %v1407 = vadd.f32 0.0, %v1406
  %v1408 = vpop.f32.mrb[0].mxu0
  %1409 = vmatprep.mubr.f32.mxu0 0.0
  %1410 = vmatmul.mubr.f32.gmra.mrb[0].mxu0 %v544
  %v1411 = vpop.f32.mrb[0].mxu0
  %v1412 = vadd.f32 0.0, %v1411
  %v1413 = vpop.f32.mrb[0].mxu0
  %1414 = vmatprep.mubr.f32.mxu0 0.0
  %1415 = vmatmul.mubr.f32.gmra.mrb[0].mxu0 %v547
  %v1416 = vpop.f32.mrb[0].mxu0
  %v1417 = vadd.f32 0.0, %v1416
  %v1418 = vpop.f32.mrb[0].mxu0
  %1419 = vmatprep.mubr.f32.mxu0 0.0
  %1420 = vmatmul.mubr.f32.gmra.mrb[0].mxu0 %v550
  %v1421 = vpop.f32.mrb[0].mxu0
  %v1422 = vadd.f32 0.0, %v1421
  %v1423 = vpop.f32.mrb[0].mxu0
  %1424 = vmatprep.mubr.f32.mxu0 0.0
  %1425 = vmatmul.mubr.f32.gmra.mrb[0].mxu0 %v553
  %v1426 = vpop.f32.mrb[0].mxu0
  %v1427 = vadd.f32 0.0, %v1426
  %v1428 = vpop.f32.mrb[0].mxu0
  %1429 = vmatprep.mubr.f32.mxu0 0.0
  %1430 = vmatmul.mubr.f32.gmra.mrb[0].mxu0 %v556
  %v1431 = vpop.f32.mrb[0].mxu0
  %v1432 = vadd.f32 0.0, %v1431
  %v1433 = vpop.f32.mrb[0].mxu0
  %1434 = vmatprep.mubr.f32.mxu0 0.0
  %1435 = vmatmul.mubr.f32.gmra.mrb[0].mxu0 %v559
  %v1436 = vpop.f32.mrb[0].mxu0
  %v1437 = vadd.f32 0.0, %v1436
  %v1438 = vpop.f32.mrb[0].mxu0
  %1439 = vmatprep.mubr.f32.mxu0 0.0
  %1440 = vmatmul.mubr.f32.gmra.mrb[0].mxu0 %v562
  %v1441 = vpop.f32.mrb[0].mxu0
  %v1442 = vadd.f32 0.0, %v1441
  %v1443 = vpop.f32.mrb[0].mxu0
  %1444 = vmatprep.mubr.f32.mxu0 0.0
  %1445 = vmatmul.mubr.f32.gmra.mrb[0].mxu0 %v565
  %v1446 = vpop.f32.mrb[0].mxu0
  %v1447 = vadd.f32 0.0, %v1446
  %v1448 = vpop.f32.mrb[0].mxu0
  %1449 = vmatprep.mubr.f32.mxu0 0.0
  %1450 = vmatmul.mubr.f32.gmra.mrb[0].mxu0 %v568
  %v1451 = vpop.f32.mrb[0].mxu0
  %v1452 = vadd.f32 0.0, %v1451
  %v1453 = vpop.f32.mrb[0].mxu0
  %1454 = vmatprep.mubr.f32.mxu0 0.0
  %1455 = vmatmul.mubr.f32.gmra.mrb[0].mxu0 %v571
  %v1456 = vpop.f32.mrb[0].mxu0
  %v1457 = vadd.f32 0.0, %v1456
  %v1458 = vpop.f32.mrb[0].mxu0
  %1459 = vmatprep.mubr.f32.mxu0 0.0
  %1460 = vmatmul.mubr.f32.gmra.mrb[0].mxu0 %v574
  %v1461 = vpop.f32.mrb[0].mxu0
  %v1462 = vadd.f32 0.0, %v1461
  %v1463 = vpop.f32.mrb[0].mxu0
  %1464 = vmatprep.mubr.f32.mxu0 0.0
  %1465 = vmatmul.mubr.f32.gmra.mrb[0].mxu0 %v577
  %v1466 = vpop.f32.mrb[0].mxu0
  %v1467 = vadd.f32 0.0, %v1466
  %v1468 = vpop.f32.mrb[0].mxu0
  %1469 = vmatprep.mubr.f32.mxu0 0.0
  %1470 = vmatmul.mubr.f32.gmra.mrb[0].mxu0 %v580
  %v1471 = vpop.f32.mrb[0].mxu0
  %v1472 = vadd.f32 0.0, %v1471
  %v1473 = vpop.f32.mrb[0].mxu0
  %1474 = vmatprep.mubr.f32.mxu0 0.0
  %1475 = vmatmul.mubr.f32.gmra.mrb[0].mxu0 %v583
  %v1476 = vpop.f32.mrb[0].mxu0
  %v1477 = vadd.f32 0.0, %v1476
  %v1478 = vpop.f32.mrb[0].mxu0
  %1479 = vmatprep.mubr.f32.mxu0 0.0
  %1480 = vmatmul.mubr.f32.gmra.mrb[0].mxu0 %v586
  %v1481 = vpop.f32.mrb[0].mxu0
  %v1482 = vadd.f32 0.0, %v1481
  %v1483 = vpop.f32.mrb[0].mxu0
  %1484 = vmatprep.mubr.f32.mxu0 0.0
  %1485 = vmatmul.mubr.f32.gmra.mrb[0].mxu0 %v589
  %v1486 = vpop.f32.mrb[0].mxu0
  %v1487 = vadd.f32 0.0, %v1486
  %v1488 = vpop.f32.mrb[0].mxu0
  %1489 = vmatprep.mubr.f32.mxu0 0.0
  %1490 = vmatmul.mubr.f32.gmra.mrb[0].mxu0 %v592
  %v1491 = vpop.f32.mrb[0].mxu0
  %v1492 = vadd.f32 0.0, %v1491
  %v1493 = vpop.f32.mrb[0].mxu0
  %1494 = vmatprep.mubr.f32.mxu0 0.0
  %1495 = vmatmul.mubr.f32.gmra.mrb[0].mxu0 %v595
  %v1496 = vpop.f32.mrb[0].mxu0
  %v1497 = vadd.f32 0.0, %v1496
  %v1498 = vpop.f32.mrb[0].mxu0
  %1499 = vmatprep.mubr.f32.mxu0 0.0
  %1500 = vmatmul.mubr.f32.gmra.mrb[0].mxu0 %v598
  %v1501 = vpop.f32.mrb[0].mxu0
  %v1502 = vadd.f32 0.0, %v1501
  %v1503 = vpop.f32.mrb[0].mxu0
  %1504 = vmatprep.mubr.f32.mxu0 0.0
  %1505 = vmatmul.mubr.f32.gmra.mrb[0].mxu0 %v601
  %v1506 = vpop.f32.mrb[0].mxu0
  %v1507 = vadd.f32 0.0, %v1506
  %v1508 = vpop.f32.mrb[0].mxu0
  %1509 = vmatprep.mubr.f32.mxu0 0.0
  %1510 = vmatmul.mubr.f32.gmra.mrb[0].mxu0 %v604
  %v1511 = vpop.f32.mrb[0].mxu0
  %v1512 = vadd.f32 0.0, %v1511
  %v1513 = vpop.f32.mrb[0].mxu0
  %1514 = vmatprep.mubr.f32.mxu0 0.0
  %1515 = vmatmul.mubr.f32.gmra.mrb[0].mxu0 %v607
  %v1516 = vpop.f32.mrb[0].mxu0
  %v1517 = vadd.f32 0.0, %v1516
  %v1518 = vpop.f32.mrb[0].mxu0
  %1519 = vmatprep.mubr.f32.mxu0 0.0
  %1520 = vmatmul.mubr.f32.gmra.mrb[0].mxu0 %v610
  %v1521 = vpop.f32.mrb[0].mxu0
  %v1522 = vadd.f32 0.0, %v1521
  %v1523 = vpop.f32.mrb[0].mxu0
  %1524 = vmatprep.mubr.f32.mxu0 0.0
  %1525 = vmatmul.mubr.f32.gmra.mrb[0].mxu0 %v613
  %v1526 = vpop.f32.mrb[0].mxu0
  %v1527 = vadd.f32 0.0, %v1526
  %v1528 = vpop.f32.mrb[0].mxu0
  %1529 = vmatprep.mubr.f32.mxu0 0.0
  %1530 = vmatmul.mubr.f32.gmra.mrb[0].mxu0 %v616
  %v1531 = vpop.f32.mrb[0].mxu0
  %v1532 = vadd.f32 0.0, %v1531
  %v1533 = vpop.f32.mrb[0].mxu0
  %1534 = vmatprep.mubr.f32.mxu0 0.0
  %1535 = vmatmul.mubr.f32.gmra.mrb[0].mxu0 %v619
  %v1536 = vpop.f32.mrb[0].mxu0
  %v1537 = vadd.f32 0.0, %v1536
  %v1538 = vpop.f32.mrb[0].mxu0
  %1539 = vmatprep.mubr.f32.mxu0 0.0
  %1540 = vmatmul.mubr.f32.gmra.mrb[0].mxu0 %v622
  %v1541 = vpop.f32.mrb[0].mxu0
  %v1542 = vadd.f32 0.0, %v1541
  %v1543 = vpop.f32.mrb[0].mxu0
  %1544 = vmatprep.mubr.f32.mxu0 0.0
  %1545 = vmatmul.mubr.f32.gmra.mrb[0].mxu0 %v625
  %v1546 = vpop.f32.mrb[0].mxu0
  %v1547 = vadd.f32 0.0, %v1546
  %v1548 = vpop.f32.mrb[0].mxu0
  %1549 = vmatprep.mubr.f32.mxu0 0.0
  %1550 = vmatmul.mubr.f32.gmra.mrb[0].mxu0 %v628
  %v1551 = vpop.f32.mrb[0].mxu0
  %v1552 = vadd.f32 0.0, %v1551
  %v1553 = vpop.f32.mrb[0].mxu0
  %1554 = vmatprep.mubr.f32.mxu0 0.0
  %1555 = vmatmul.mubr.f32.gmra.mrb[0].mxu0 %v631
  %v1556 = vpop.f32.mrb[0].mxu0
  %v1557 = vadd.f32 0.0, %v1556
  %v1558 = vpop.f32.mrb[0].mxu0
  %1559 = vmatprep.mubr.f32.mxu0 0.0
  %1560 = vmatmul.mubr.f32.gmra.mrb[0].mxu0 %v634
  %v1561 = vpop.f32.mrb[0].mxu0
  %v1562 = vadd.f32 0.0, %v1561
  %v1563 = vpop.f32.mrb[0].mxu0
  %1564 = vmatprep.mubr.f32.mxu0 0.0
  %1565 = vmatmul.mubr.f32.gmra.mrb[0].mxu0 %v637
  %v1566 = vpop.f32.mrb[0].mxu0
  %v1567 = vadd.f32 0.0, %v1566
  %v1568 = vpop.f32.mrb[0].mxu0
  %1569 = vmatprep.mubr.f32.mxu0 0.0
  %1570 = vmatmul.mubr.f32.gmra.mrb[0].mxu0 %v640
  %v1571 = vpop.f32.mrb[0].mxu0
  %v1572 = vadd.f32 0.0, %v1571
  %v1573 = vpop.f32.mrb[0].mxu0
  %1574 = vmatprep.mubr.f32.mxu0 0.0
  %1575 = vmatmul.mubr.f32.gmra.mrb[0].mxu0 %v643
  %v1576 = vpop.f32.mrb[0].mxu0
  %v1577 = vadd.f32 0.0, %v1576
  %v1578 = vpop.f32.mrb[0].mxu0
  %1579 = vmatprep.mubr.f32.mxu0 0.0
  %1580 = vmatmul.mubr.f32.gmra.mrb[0].mxu0 %v646
  %v1581 = vpop.f32.mrb[0].mxu0
  %v1582 = vadd.f32 0.0, %v1581
  %v1583 = vpop.f32.mrb[0].mxu0
  %1584 = vmatprep.mubr.f32.mxu0 0.0
  %1585 = vmatmul.mubr.f32.gmra.mrb[0].mxu0 %v649
  %v1586 = vpop.f32.mrb[0].mxu0
  %v1587 = vadd.f32 0.0, %v1586
  %v1588 = vpop.f32.mrb[0].mxu0
  %1589 = vmatprep.mubr.f32.mxu0 0.0
  %1590 = vmatmul.mubr.f32.gmra.mrb[0].mxu0 %v652
  %v1591 = vpop.f32.mrb[0].mxu0
  %v1592 = vadd.f32 0.0, %v1591
  %v1593 = vpop.f32.mrb[0].mxu0
  %1594 = vmatprep.mubr.f32.mxu0 0.0
  %1595 = vmatmul.mubr.f32.gmra.mrb[0].mxu0 %v655
  %v1596 = vpop.f32.mrb[0].mxu0
  %v1597 = vadd.f32 0.0, %v1596
  %v1598 = vpop.f32.mrb[0].mxu0
  %1599 = vmatprep.mubr.f32.mxu0 0.0
  %1600 = vmatmul.mubr.f32.gmra.mrb[0].mxu0 %v658
  %v1601 = vpop.f32.mrb[0].mxu0
  %v1602 = vadd.f32 0.0, %v1601
  %v1603 = vpop.f32.mrb[0].mxu0
  %1604 = vmatprep.mubr.f32.mxu0 0.0
  %1605 = vmatmul.mubr.f32.gmra.mrb[0].mxu0 %v661
  %v1606 = vpop.f32.mrb[0].mxu0
  %v1607 = vadd.f32 0.0, %v1606
  %v1608 = vpop.f32.mrb[0].mxu0
  %1609 = vmatprep.mubr.f32.mxu0 0.0
  %1610 = vmatmul.mubr.f32.gmra.mrb[0].mxu0 %v664
  %v1611 = vpop.f32.mrb[0].mxu0
  %v1612 = vadd.f32 0.0, %v1611
  %v1613 = vpop.f32.mrb[0].mxu0
  %1614 = vmatprep.mubr.f32.mxu0 0.0
  %1615 = vmatmul.mubr.f32.gmra.mrb[0].mxu0 %v667
  %v1616 = vpop.f32.mrb[0].mxu0
  %v1617 = vadd.f32 0.0, %v1616
  %v1618 = vpop.f32.mrb[0].mxu0
  %1619 = vmatprep.mubr.f32.mxu0 0.0
  %1620 = vmatmul.mubr.f32.gmra.mrb[0].mxu0 %v670
  %v1621 = vpop.f32.mrb[0].mxu0
  %v1622 = vadd.f32 0.0, %v1621
  %v1623 = vpop.f32.mrb[0].mxu0
  %1624 = vmatprep.mubr.f32.mxu0 0.0
  %1625 = vmatmul.mubr.f32.gmra.mrb[0].mxu0 %v673
  %v1626 = vpop.f32.mrb[0].mxu0
  %v1627 = vadd.f32 0.0, %v1626
  %v1628 = vpop.f32.mrb[0].mxu0
  %1629 = vmatprep.mubr.f32.mxu0 0.0
  %1630 = vmatmul.mubr.f32.gmra.mrb[0].mxu0 %v676
  %v1631 = vpop.f32.mrb[0].mxu0
  %v1632 = vadd.f32 0.0, %v1631
  %v1633 = vpop.f32.mrb[0].mxu0
  %1634 = vmatprep.mubr.f32.mxu0 0.0
  %1635 = vmatmul.mubr.f32.gmra.mrb[0].mxu0 %v679
  %v1636 = vpop.f32.mrb[0].mxu0
  %v1637 = vadd.f32 0.0, %v1636
  %v1638 = vpop.f32.mrb[0].mxu0
  %1639 = vmatprep.mubr.f32.mxu0 0.0
  %1640 = vmatmul.mubr.f32.gmra.mrb[0].mxu0 %v682
  %v1641 = vpop.f32.mrb[0].mxu0
  %v1642 = vadd.f32 0.0, %v1641
  %v1643 = vpop.f32.mrb[0].mxu0
  %1644 = vmatprep.mubr.f32.mxu0 0.0
  %1645 = vmatmul.mubr.f32.gmra.mrb[0].mxu0 %v685
  %v1646 = vpop.f32.mrb[0].mxu0
  %v1647 = vadd.f32 0.0, %v1646
  %v1648 = vpop.f32.mrb[0].mxu0
  %1649 = vmatprep.mubr.f32.mxu0 0.0
  %1650 = vmatmul.mubr.f32.gmra.mrb[0].mxu0 %v688
  %v1651 = vpop.f32.mrb[0].mxu0
  %v1652 = vadd.f32 0.0, %v1651
  %v1653 = vpop.f32.mrb[0].mxu0
  %1654 = vmatprep.mubr.f32.mxu0 0.0
  %1655 = vmatmul.mubr.f32.gmra.mrb[0].mxu0 %v691
  %v1656 = vpop.f32.mrb[0].mxu0
  %v1657 = vadd.f32 0.0, %v1656
  %v1658 = vpop.f32.mrb[0].mxu0
  %1659 = vmatprep.mubr.f32.mxu0 0.0
  %1660 = vmatmul.mubr.f32.gmra.mrb[0].mxu0 %v694
  %v1661 = vpop.f32.mrb[0].mxu0
  %v1662 = vadd.f32 0.0, %v1661
  %v1663 = vpop.f32.mrb[0].mxu0
  %1664 = vmatprep.mubr.f32.mxu0 0.0
  %1665 = vmatmul.mubr.f32.gmra.mrb[0].mxu0 %v697
  %v1666 = vpop.f32.mrb[0].mxu0
  %v1667 = vadd.f32 0.0, %v1666
  %v1668 = vpop.f32.mrb[0].mxu0
  %1669 = vmatprep.mubr.f32.mxu0 0.0
  %1670 = vmatmul.mubr.f32.gmra.mrb[0].mxu0 %v700
  %v1671 = vpop.f32.mrb[0].mxu0
  %v1672 = vadd.f32 0.0, %v1671
  %v1673 = vpop.f32.mrb[0].mxu0
  %1674 = vmatprep.mubr.f32.mxu0 0.0
  %1675 = vmatmul.mubr.f32.gmra.mrb[0].mxu0 %v703
  %v1676 = vpop.f32.mrb[0].mxu0
  %v1677 = vadd.f32 0.0, %v1676
  %v1678 = vpop.f32.mrb[0].mxu0
  %1679 = vmatprep.mubr.f32.mxu0 0.0
  %1680 = vmatmul.mubr.f32.gmra.mrb[0].mxu0 %v706
  %v1681 = vpop.f32.mrb[0].mxu0
  %v1682 = vadd.f32 0.0, %v1681
  %v1683 = vpop.f32.mrb[0].mxu0
  %1684 = vmatprep.mubr.f32.mxu0 0.0
  %1685 = vmatmul.mubr.f32.gmra.mrb[0].mxu0 %v709
  %v1686 = vpop.f32.mrb[0].mxu0
  %v1687 = vadd.f32 0.0, %v1686
  %v1688 = vpop.f32.mrb[0].mxu0
  %1689 = vmatprep.mubr.f32.mxu0 0.0
  %1690 = vmatmul.mubr.f32.gmra.mrb[0].mxu0 %v712
  %v1691 = vpop.f32.mrb[0].mxu0
  %v1692 = vadd.f32 0.0, %v1691
  %v1693 = vpop.f32.mrb[0].mxu0
  %1694 = vmatprep.mubr.f32.mxu0 0.0
  %1695 = vmatmul.mubr.f32.gmra.mrb[0].mxu0 %v715
  %v1696 = vpop.f32.mrb[0].mxu0
  %v1697 = vadd.f32 0.0, %v1696
  %v1698 = vpop.f32.mrb[0].mxu0
  %1699 = vmatprep.mubr.f32.mxu0 0.0
  %1700 = vmatmul.mubr.f32.gmra.mrb[0].mxu0 %v718
  %v1701 = vpop.f32.mrb[0].mxu0
  %v1702 = vadd.f32 0.0, %v1701
  %v1703 = vpop.f32.mrb[0].mxu0
  %1704 = vmatprep.mubr.f32.mxu0 0.0
  %1705 = vmatmul.mubr.f32.gmra.mrb[0].mxu0 %v721
  %v1706 = vpop.f32.mrb[0].mxu0
  %v1707 = vadd.f32 0.0, %v1706
  %v1708 = vpop.f32.mrb[0].mxu0
  %1709 = vmatprep.mubr.f32.mxu0 0.0
  %1710 = vmatmul.mubr.f32.gmra.mrb[0].mxu0 %v724
  %v1711 = vpop.f32.mrb[0].mxu0
  %v1712 = vadd.f32 0.0, %v1711
  %v1713 = vpop.f32.mrb[0].mxu0
  %1714 = vmatprep.mubr.f32.mxu0 0.0
  %1715 = vmatmul.mubr.f32.gmra.mrb[0].mxu0 %v727
  %v1716 = vpop.f32.mrb[0].mxu0
  %v1717 = vadd.f32 0.0, %v1716
  %v1718 = vpop.f32.mrb[0].mxu0
  %1719 = vmatprep.mubr.f32.mxu0 0.0
  %1720 = vmatmul.mubr.f32.gmra.mrb[0].mxu0 %v730
  %v1721 = vpop.f32.mrb[0].mxu0
  %v1722 = vadd.f32 0.0, %v1721
  %v1723 = vpop.f32.mrb[0].mxu0
  %1724 = vmatprep.mubr.f32.mxu0 0.0
  %1725 = vmatmul.mubr.f32.gmra.mrb[0].mxu0 %v733
  %v1726 = vpop.f32.mrb[0].mxu0
  %v1727 = vadd.f32 0.0, %v1726
  %v1728 = vpop.f32.mrb[0].mxu0
  %1729 = vmatprep.mubr.f32.mxu0 0.0
  %1730 = vmatmul.mubr.f32.gmra.mrb[0].mxu0 %v736
  %v1731 = vpop.f32.mrb[0].mxu0
  %v1732 = vadd.f32 0.0, %v1731
  %v1733 = vpop.f32.mrb[0].mxu0
  %1734 = vmatprep.mubr.f32.mxu0 0.0
  %1735 = vmatmul.mubr.f32.gmra.mrb[0].mxu0 %v739
  %v1736 = vpop.f32.mrb[0].mxu0
  %v1737 = vadd.f32 0.0, %v1736
  %v1738 = vpop.f32.mrb[0].mxu0
  %1739 = vmatprep.mubr.f32.mxu0 0.0
  %1740 = vmatmul.mubr.f32.gmra.mrb[0].mxu0 %v742
  %v1741 = vpop.f32.mrb[0].mxu0
  %v1742 = vadd.f32 0.0, %v1741
  %v1743 = vpop.f32.mrb[0].mxu0
  %1744 = vmatprep.mubr.f32.mxu0 0.0
  %1745 = vmatmul.mubr.f32.gmra.mrb[0].mxu0 %v745
  %v1746 = vpop.f32.mrb[0].mxu0
  %v1747 = vadd.f32 0.0, %v1746
  %v1748 = vpop.f32.mrb[0].mxu0
  %1749 = vmatprep.mubr.f32.mxu0 0.0
  %1750 = vmatmul.mubr.f32.gmra.mrb[0].mxu0 %v748
  %v1751 = vpop.f32.mrb[0].mxu0
  %v1752 = vadd.f32 0.0, %v1751
  %v1753 = vpop.f32.mrb[0].mxu0
  %1754 = vmatprep.mubr.f32.mxu0 0.0
  %1755 = vmatmul.mubr.f32.gmra.mrb[0].mxu0 %v751
  %v1756 = vpop.f32.mrb[0].mxu0
  %v1757 = vadd.f32 0.0, %v1756
  %v1758 = vpop.f32.mrb[0].mxu0
  %1759 = vmatprep.mubr.f32.mxu0 0.0
  %1760 = vmatmul.mubr.f32.gmra.mrb[0].mxu0 %v754
  %v1761 = vpop.f32.mrb[0].mxu0
  %v1762 = vadd.f32 0.0, %v1761
  %v1763 = vpop.f32.mrb[0].mxu0
  %1764 = vmatprep.mubr.f32.mxu0 0.0
  %1765 = vmatmul.mubr.f32.gmra.mrb[0].mxu0 %v757
  %v1766 = vpop.f32.mrb[0].mxu0
  %v1767 = vadd.f32 0.0, %v1766
  %v1768 = vpop.f32.mrb[0].mxu0
  %1769 = vmatprep.mubr.f32.mxu0 0.0
  %1770 = vmatmul.mubr.f32.gmra.mrb[0].mxu0 %v760
  %v1771 = vpop.f32.mrb[0].mxu0
  %v1772 = vadd.f32 0.0, %v1771
  %v1773 = vpop.f32.mrb[0].mxu0
  %1774 = vmatprep.mubr.f32.mxu0 0.0
  %1775 = vmatmul.mubr.f32.gmra.mrb[0].mxu0 %v763
  %v1776 = vpop.f32.mrb[0].mxu0
  %v1777 = vadd.f32 0.0, %v1776
  %v1778 = vpop.f32.mrb[0].mxu0
  %1779 = vmatprep.mubr.f32.mxu0 0.0
  %1780 = vmatmul.mubr.f32.gmra.mrb[0].mxu0 %v766
  %v1781 = vpop.f32.mrb[0].mxu0
  %v1782 = vadd.f32 0.0, %v1781
  %v1783 = vpop.f32.mrb[0].mxu0
  %1784 = vmatprep.mubr.f32.mxu0 0.0
  %1785 = vmatmul.mubr.f32.gmra.mrb[0].mxu0 %v769
  %v1786 = vpop.f32.mrb[0].mxu0
  %v1787 = vadd.f32 0.0, %v1786
  %v1788 = vpop.f32.mrb[0].mxu0
  %1789 = vmatprep.mubr.f32.mxu0 0.0
  %1790 = vmatmul.mubr.f32.gmra.mrb[0].mxu0 %v772
  %v1791 = vpop.f32.mrb[0].mxu0
  %v1792 = vadd.f32 0.0, %v1791
  %v1793 = vpop.f32.mrb[0].mxu0
  %1794 = vmatprep.mubr.f32.mxu0 0.0
  %1795 = vmatmul.mubr.f32.gmra.mrb[0].mxu0 %v775
  %v1796 = vpop.f32.mrb[0].mxu0
  %v1797 = vadd.f32 0.0, %v1796
  %v1798 = vpop.f32.mrb[0].mxu0
  %1799 = vmatprep.mubr.f32.mxu0 0.0
  %1800 = vmatmul.mubr.f32.gmra.mrb[0].mxu0 %v778
  %v1801 = vpop.f32.mrb[0].mxu0
  %v1802 = vadd.f32 0.0, %v1801
  %v1803 = vpop.f32.mrb[0].mxu0
  %1804 = vmatprep.mubr.f32.mxu0 0.0
  %1805 = vmatmul.mubr.f32.gmra.mrb[0].mxu0 %v781
  %v1806 = vpop.f32.mrb[0].mxu0
  %v1807 = vadd.f32 0.0, %v1806
  %v1808 = vpop.f32.mrb[0].mxu0
  %1809 = vmatprep.mubr.f32.mxu0 0.0
  %1810 = vmatmul.mubr.f32.gmra.mrb[0].mxu0 %v784
  %v1811 = vpop.f32.mrb[0].mxu0
  %v1812 = vadd.f32 0.0, %v1811
  %v1813 = vpop.f32.mrb[0].mxu0
  %1814 = vmatprep.mubr.f32.mxu0 0.0
  %1815 = vmatmul.mubr.f32.gmra.mrb[0].mxu0 %v787
  %v1816 = vpop.f32.mrb[0].mxu0
  %v1817 = vadd.f32 0.0, %v1816
  %v1818 = vpop.f32.mrb[0].mxu0
  %1819 = vmatprep.mubr.f32.mxu0 0.0
  %1820 = vmatmul.mubr.f32.gmra.mrb[0].mxu0 %v790
  %v1821 = vpop.f32.mrb[0].mxu0
  %v1822 = vadd.f32 0.0, %v1821
  %v1823 = vpop.f32.mrb[0].mxu0
  %1824 = vmatprep.mubr.f32.mxu0 0.0
  %1825 = vmatmul.mubr.f32.gmra.mrb[0].mxu0 %v793
  %v1826 = vpop.f32.mrb[0].mxu0
  %v1827 = vadd.f32 0.0, %v1826
  %v1828 = vpop.f32.mrb[0].mxu0
  %1829 = vmatprep.mubr.f32.mxu0 0.0
  %1830 = vmatmul.mubr.f32.gmra.mrb[0].mxu0 %v796
  %v1831 = vpop.f32.mrb[0].mxu0
  %v1832 = vadd.f32 0.0, %v1831
  %v1833 = vpop.f32.mrb[0].mxu0
  %1834 = vmatprep.mubr.f32.mxu0 0.0
  %1835 = vmatmul.mubr.f32.gmra.mrb[0].mxu0 %v799
  %v1836 = vpop.f32.mrb[0].mxu0
  %v1837 = vadd.f32 0.0, %v1836
  %v1838 = vpop.f32.mrb[0].mxu0
  %1839 = vmatprep.mubr.f32.mxu0 0.0
  %1840 = vmatmul.mubr.f32.gmra.mrb[0].mxu0 %v802
  %v1841 = vpop.f32.mrb[0].mxu0
  %v1842 = vadd.f32 0.0, %v1841
  %v1843 = vpop.f32.mrb[0].mxu0
  %1844 = vmatprep.mubr.f32.mxu0 0.0
  %1845 = vmatmul.mubr.f32.gmra.mrb[0].mxu0 %v805
  %v1846 = vpop.f32.mrb[0].mxu0
  %v1847 = vadd.f32 0.0, %v1846
  %v1848 = vpop.f32.mrb[0].mxu0
  %1849 = vmatprep.mubr.f32.mxu0 0.0
  %1850 = vmatmul.mubr.f32.gmra.mrb[0].mxu0 %v808
  %v1851 = vpop.f32.mrb[0].mxu0
  %v1852 = vadd.f32 0.0, %v1851
  %v1853 = vpop.f32.mrb[0].mxu0
  %1854 = vdwg.mxu0
  %v1855 = vadd.f32 %v877, %v882
  %v1856 = vadd.f32 %v1855, %v887
  %v1857 = vadd.f32 %v1856, %v892
  %v1858 = vadd.f32 %v1857, %v897
  %v1859 = vadd.f32 %v1858, %v902
  %v1860 = vadd.f32 %v1859, %v907
  %v1861 = vadd.f32 %v1860, %v912
  %v1862 = vadd.f32 %v1861, %v917
  %v1863 = vadd.f32 %v1862, %v922
  %v1864 = vadd.f32 %v1863, %v927
  %v1865 = vadd.f32 %v1864, %v932
  %v1866 = vadd.f32 %v1865, %v937
  %v1867 = vadd.f32 %v1866, %v942
  %v1868 = vadd.f32 %v1867, %v947
  %v1869 = vadd.f32 %v1868, %v952
  %v1870 = vadd.f32 %v1869, %v957
  %v1871 = vadd.f32 %v1870, %v962
  %v1872 = vadd.f32 %v1871, %v967
  %v1873 = vadd.f32 %v1872, %v972
  %v1874 = vadd.f32 %v1873, %v977
  %v1875 = vadd.f32 %v1874, %v982
  %v1876 = vadd.f32 %v1875, %v987
  %v1877 = vadd.f32 %v1876, %v992
  %v1878 = vadd.f32 %v1877, %v997
  %v1879 = vadd.f32 %v1878, %v1002
  %v1880 = vadd.f32 %v1879, %v1007
  %v1881 = vadd.f32 %v1880, %v1012
  %v1882 = vadd.f32 %v1881, %v1017
  %v1883 = vadd.f32 %v1882, %v1022
  %v1884 = vadd.f32 %v1883, %v1027
  %v1885 = vadd.f32 %v1884, %v1032
  %v1886 = vadd.f32 %v1885, %v1037
  %v1887 = vadd.f32 %v1886, %v1042
  %v1888 = vadd.f32 %v1887, %v1047
  %v1889 = vadd.f32 %v1888, %v1052
  %v1890 = vadd.f32 %v1889, %v1057
  %v1891 = vadd.f32 %v1890, %v1062
  %v1892 = vadd.f32 %v1891, %v1067
  %v1893 = vadd.f32 %v1892, %v1072
  %v1894 = vadd.f32 %v1893, %v1077
  %v1895 = vadd.f32 %v1894, %v1082
  %v1896 = vadd.f32 %v1895, %v1087
  %v1897 = vadd.f32 %v1896, %v1092
  %v1898 = vadd.f32 %v1897, %v1097
  %v1899 = vadd.f32 %v1898, %v1102
  %v1900 = vadd.f32 %v1899, %v1107
  %v1901 = vadd.f32 %v1900, %v1112
  %v1902 = vadd.f32 %v1901, %v1117
  %v1903 = vadd.f32 %v1902, %v1122
  %v1904 = vadd.f32 %v1903, %v1127
  %v1905 = vadd.f32 %v1904, %v1132
  %v1906 = vadd.f32 %v1905, %v1137
  %v1907 = vadd.f32 %v1906, %v1142
  %v1908 = vadd.f32 %v1907, %v1147
  %v1909 = vadd.f32 %v1908, %v1152
  %v1910 = vadd.f32 %v1909, %v1157
  %v1911 = vadd.f32 %v1910, %v1162
  %v1912 = vadd.f32 %v1911, %v1167
  %v1913 = vadd.f32 %v1912, %v1172
  %v1914 = vadd.f32 %v1913, %v1177
  %v1915 = vadd.f32 %v1914, %v1182
  %v1916 = vadd.f32 %v1915, %v1187
  %v1917 = vadd.f32 %v1916, %v1192
  %v1918 = vadd.f32 %v1917, %v1197
  %v1919 = vadd.f32 %v1918, %v1202
  %v1920 = vadd.f32 %v1919, %v1207
  %v1921 = vadd.f32 %v1920, %v1212
  %v1922 = vadd.f32 %v1921, %v1217
  %v1923 = vadd.f32 %v1922, %v1222
  %v1924 = vadd.f32 %v1923, %v1227
  %v1925 = vadd.f32 %v1924, %v1232
  %v1926 = vadd.f32 %v1925, %v1237
  %v1927 = vadd.f32 %v1926, %v1242
  %v1928 = vadd.f32 %v1927, %v1247
  %v1929 = vadd.f32 %v1928, %v1252
  %v1930 = vadd.f32 %v1929, %v1257
  %v1931 = vadd.f32 %v1930, %v1262
  %v1932 = vadd.f32 %v1931, %v1267
  %v1933 = vadd.f32 %v1932, %v1272
  %v1934 = vadd.f32 %v1933, %v1277
  %v1935 = vadd.f32 %v1934, %v1282
  %v1936 = vadd.f32 %v1935, %v1287
  %v1937 = vadd.f32 %v1936, %v1292
  %v1938 = vadd.f32 %v1937, %v1297
  %v1939 = vadd.f32 %v1938, %v1302
  %v1940 = vadd.f32 %v1939, %v1307
  %v1941 = vadd.f32 %v1940, %v1312
  %v1942 = vadd.f32 %v1941, %v1317
  %v1943 = vadd.f32 %v1942, %v1322
  %v1944 = vadd.f32 %v1943, %v1327
  %v1945 = vadd.f32 %v1944, %v1332
  %v1946 = vadd.f32 %v1945, %v1337
  %v1947 = vadd.f32 %v1946, %v1342
  %v1948 = vadd.f32 %v1947, %v1347
  %v1949 = vadd.f32 %v1948, %v1352
  %v1950 = vadd.f32 %v1949, %v1357
  %v1951 = vadd.f32 %v1950, %v1362
  %v1952 = vadd.f32 %v1951, %v1367
  %v1953 = vadd.f32 %v1952, %v1372
  %v1954 = vadd.f32 %v1953, %v1377
  %v1955 = vadd.f32 %v1954, %v1382
  %v1956 = vadd.f32 %v1955, %v1387
  %v1957 = vadd.f32 %v1956, %v1392
  %v1958 = vadd.f32 %v1957, %v1397
  %v1959 = vadd.f32 %v1958, %v1402
  %v1960 = vadd.f32 %v1959, %v1407
  %v1961 = vadd.f32 %v1960, %v1412
  %v1962 = vadd.f32 %v1961, %v1417
  %v1963 = vadd.f32 %v1962, %v1422
  %v1964 = vadd.f32 %v1963, %v1427
  %v1965 = vadd.f32 %v1964, %v1432
  %v1966 = vadd.f32 %v1965, %v1437
  %v1967 = vadd.f32 %v1966, %v1442
  %v1968 = vadd.f32 %v1967, %v1447
  %v1969 = vadd.f32 %v1968, %v1452
  %v1970 = vadd.f32 %v1969, %v1457
  %v1971 = vadd.f32 %v1970, %v1462
  %v1972 = vadd.f32 %v1971, %v1467
  %v1973 = vadd.f32 %v1972, %v1472
  %v1974 = vadd.f32 %v1973, %v1477
  %v1975 = vadd.f32 %v1974, %v1482
  %v1976 = vadd.f32 %v1975, %v1487
  %v1977 = vadd.f32 %v1976, %v1492
  %v1978 = vadd.f32 %v1977, %v1497
  %v1979 = vadd.f32 %v1978, %v1502
  %v1980 = vadd.f32 %v1979, %v1507
  %v1981 = vadd.f32 %v1980, %v1512
  %v1982 = vadd.f32 %v1981, %v1517
  %v1983 = vadd.f32 %v1982, %v1522
  %v1984 = vadd.f32 %v1983, %v1527
  %v1985 = vadd.f32 %v1984, %v1532
  %v1986 = vadd.f32 %v1985, %v1537
  %v1987 = vadd.f32 %v1986, %v1542
  %v1988 = vadd.f32 %v1987, %v1547
  %v1989 = vadd.f32 %v1988, %v1552
  %v1990 = vadd.f32 %v1989, %v1557
  %v1991 = vadd.f32 %v1990, %v1562
  %v1992 = vadd.f32 %v1991, %v1567
  %v1993 = vadd.f32 %v1992, %v1572
  %v1994 = vadd.f32 %v1993, %v1577
  %v1995 = vadd.f32 %v1994, %v1582
  %v1996 = vadd.f32 %v1995, %v1587
  %v1997 = vadd.f32 %v1996, %v1592
  %v1998 = vadd.f32 %v1997, %v1597
  %v1999 = vadd.f32 %v1998, %v1602
  %v2000 = vadd.f32 %v1999, %v1607
  %v2001 = vadd.f32 %v2000, %v1612
  %v2002 = vadd.f32 %v2001, %v1617
  %v2003 = vadd.f32 %v2002, %v1622
  %v2004 = vadd.f32 %v2003, %v1627
  %v2005 = vadd.f32 %v2004, %v1632
  %v2006 = vadd.f32 %v2005, %v1637
  %v2007 = vadd.f32 %v2006, %v1642
  %v2008 = vadd.f32 %v2007, %v1647
  %v2009 = vadd.f32 %v2008, %v1652
  %v2010 = vadd.f32 %v2009, %v1657
  %v2011 = vadd.f32 %v2010, %v1662
  %v2012 = vadd.f32 %v2011, %v1667
  %v2013 = vadd.f32 %v2012, %v1672
  %v2014 = vadd.f32 %v2013, %v1677
  %v2015 = vadd.f32 %v2014, %v1682
  %v2016 = vadd.f32 %v2015, %v1687
  %v2017 = vadd.f32 %v2016, %v1692
  %v2018 = vadd.f32 %v2017, %v1697
  %v2019 = vadd.f32 %v2018, %v1702
  %v2020 = vadd.f32 %v2019, %v1707
  %v2021 = vadd.f32 %v2020, %v1712
  %v2022 = vadd.f32 %v2021, %v1717
  %v2023 = vadd.f32 %v2022, %v1722
  %v2024 = vadd.f32 %v2023, %v1727
  %v2025 = vadd.f32 %v2024, %v1732
  %v2026 = vadd.f32 %v2025, %v1737
  %v2027 = vadd.f32 %v2026, %v1742
  %v2028 = vadd.f32 %v2027, %v1747
  %v2029 = vadd.f32 %v2028, %v1752
  %v2030 = vadd.f32 %v2029, %v1757
  %v2031 = vadd.f32 %v2030, %v1762
  %v2032 = vadd.f32 %v2031, %v1767
  %v2033 = vadd.f32 %v2032, %v1772
  %v2034 = vadd.f32 %v2033, %v1777
  %v2035 = vadd.f32 %v2034, %v1782
  %v2036 = vadd.f32 %v2035, %v1787
  %v2037 = vadd.f32 %v2036, %v1792
  %v2038 = vadd.f32 %v2037, %v1797
  %v2039 = vadd.f32 %v2038, %v1802
  %v2040 = vadd.f32 %v2039, %v1807
  %v2041 = vadd.f32 %v2040, %v1812
  %v2042 = vadd.f32 %v2041, %v1817
  %v2043 = vadd.f32 %v2042, %v1822
  %v2044 = vadd.f32 %v2043, %v1827
  %v2045 = vadd.f32 %v2044, %v1832
  %v2046 = vadd.f32 %v2045, %v1837
  %v2047 = vadd.f32 %v2046, %v1842
  %v2048 = vadd.f32 %v2047, %v1847
  %v2049 = vadd.f32 %v2048, %v1852
  %v2050 = vrot.slane %v2049, 4
  %v2051 = vadd.f32 %v2049, %v2050
  %v2052 = vrot.slane %v2051, 2
  %v2053 = vadd.f32 %v2051, %v2052
  %v2054 = vrot.slane %v2053, 1
  %v2055 = vadd.f32 %v2053, %v2054
  %v2056 = vmul.f32 %v2055, 0.0006377551
  %v2057 = vmul.f32 %v877, %v877
  %v2058 = vmul.f32 %v882, %v882
  %v2059 = vmul.f32 %v887, %v887
  %v2060 = vmul.f32 %v892, %v892
  %v2061 = vmul.f32 %v897, %v897
  %v2062 = vmul.f32 %v902, %v902
  %v2063 = vmul.f32 %v907, %v907
  %v2064 = vmul.f32 %v912, %v912
  %v2065 = vmul.f32 %v917, %v917
  %v2066 = vmul.f32 %v922, %v922
  %v2067 = vmul.f32 %v927, %v927
  %v2068 = vmul.f32 %v932, %v932
  %v2069 = vmul.f32 %v937, %v937
  %v2070 = vmul.f32 %v942, %v942
  %v2071 = vmul.f32 %v947, %v947
  %v2072 = vmul.f32 %v952, %v952
  %v2073 = vmul.f32 %v957, %v957
  %v2074 = vmul.f32 %v962, %v962
  %v2075 = vmul.f32 %v967, %v967
  %v2076 = vmul.f32 %v972, %v972
  %v2077 = vmul.f32 %v977, %v977
  %v2078 = vmul.f32 %v982, %v982
  %v2079 = vmul.f32 %v987, %v987
  %v2080 = vmul.f32 %v992, %v992
  %v2081 = vmul.f32 %v997, %v997
  %v2082 = vmul.f32 %v1002, %v1002
  %v2083 = vmul.f32 %v1007, %v1007
  %v2084 = vmul.f32 %v1012, %v1012
  %v2085 = vmul.f32 %v1017, %v1017
  %v2086 = vmul.f32 %v1022, %v1022
  %v2087 = vmul.f32 %v1027, %v1027
  %v2088 = vmul.f32 %v1032, %v1032
  %v2089 = vmul.f32 %v1037, %v1037
  %v2090 = vmul.f32 %v1042, %v1042
  %v2091 = vmul.f32 %v1047, %v1047
  %v2092 = vmul.f32 %v1052, %v1052
  %v2093 = vmul.f32 %v1057, %v1057
  %v2094 = vmul.f32 %v1062, %v1062
  %v2095 = vmul.f32 %v1067, %v1067
  %v2096 = vmul.f32 %v1072, %v1072
  %v2097 = vmul.f32 %v1077, %v1077
  %v2098 = vmul.f32 %v1082, %v1082
  %v2099 = vmul.f32 %v1087, %v1087
  %v2100 = vmul.f32 %v1092, %v1092
  %v2101 = vmul.f32 %v1097, %v1097
  %v2102 = vmul.f32 %v1102, %v1102
  %v2103 = vmul.f32 %v1107, %v1107
  %v2104 = vmul.f32 %v1112, %v1112
  %v2105 = vmul.f32 %v1117, %v1117
  %v2106 = vmul.f32 %v1122, %v1122
  %v2107 = vmul.f32 %v1127, %v1127
  %v2108 = vmul.f32 %v1132, %v1132
  %v2109 = vmul.f32 %v1137, %v1137
  %v2110 = vmul.f32 %v1142, %v1142
  %v2111 = vmul.f32 %v1147, %v1147
  %v2112 = vmul.f32 %v1152, %v1152
  %v2113 = vmul.f32 %v1157, %v1157
  %v2114 = vmul.f32 %v1162, %v1162
  %v2115 = vmul.f32 %v1167, %v1167
  %v2116 = vmul.f32 %v1172, %v1172
  %v2117 = vmul.f32 %v1177, %v1177
  %v2118 = vmul.f32 %v1182, %v1182
  %v2119 = vmul.f32 %v1187, %v1187
  %v2120 = vmul.f32 %v1192, %v1192
  %v2121 = vmul.f32 %v1197, %v1197
  %v2122 = vmul.f32 %v1202, %v1202
  %v2123 = vmul.f32 %v1207, %v1207
  %v2124 = vmul.f32 %v1212, %v1212
  %v2125 = vmul.f32 %v1217, %v1217
  %v2126 = vmul.f32 %v1222, %v1222
  %v2127 = vmul.f32 %v1227, %v1227
  %v2128 = vmul.f32 %v1232, %v1232
  %v2129 = vmul.f32 %v1237, %v1237
  %v2130 = vmul.f32 %v1242, %v1242
  %v2131 = vmul.f32 %v1247, %v1247
  %v2132 = vmul.f32 %v1252, %v1252
  %v2133 = vmul.f32 %v1257, %v1257
  %v2134 = vmul.f32 %v1262, %v1262
  %v2135 = vmul.f32 %v1267, %v1267
  %v2136 = vmul.f32 %v1272, %v1272
  %v2137 = vmul.f32 %v1277, %v1277
  %v2138 = vmul.f32 %v1282, %v1282
  %v2139 = vmul.f32 %v1287, %v1287
  %v2140 = vmul.f32 %v1292, %v1292
  %v2141 = vmul.f32 %v1297, %v1297
  %v2142 = vmul.f32 %v1302, %v1302
  %v2143 = vmul.f32 %v1307, %v1307
  %v2144 = vmul.f32 %v1312, %v1312
  %v2145 = vmul.f32 %v1317, %v1317
  %v2146 = vmul.f32 %v1322, %v1322
  %v2147 = vmul.f32 %v1327, %v1327
  %v2148 = vmul.f32 %v1332, %v1332
  %v2149 = vmul.f32 %v1337, %v1337
  %v2150 = vmul.f32 %v1342, %v1342
  %v2151 = vmul.f32 %v1347, %v1347
  %v2152 = vmul.f32 %v1352, %v1352
  %v2153 = vmul.f32 %v1357, %v1357
  %v2154 = vmul.f32 %v1362, %v1362
  %v2155 = vmul.f32 %v1367, %v1367
  %v2156 = vmul.f32 %v1372, %v1372
  %v2157 = vmul.f32 %v1377, %v1377
  %v2158 = vmul.f32 %v1382, %v1382
  %v2159 = vmul.f32 %v1387, %v1387
  %v2160 = vmul.f32 %v1392, %v1392
  %v2161 = vmul.f32 %v1397, %v1397
  %v2162 = vmul.f32 %v1402, %v1402
  %v2163 = vmul.f32 %v1407, %v1407
  %v2164 = vmul.f32 %v1412, %v1412
  %v2165 = vmul.f32 %v1417, %v1417
  %v2166 = vmul.f32 %v1422, %v1422
  %v2167 = vmul.f32 %v1427, %v1427
  %v2168 = vmul.f32 %v1432, %v1432
  %v2169 = vmul.f32 %v1437, %v1437
  %v2170 = vmul.f32 %v1442, %v1442
  %v2171 = vmul.f32 %v1447, %v1447
  %v2172 = vmul.f32 %v1452, %v1452
  %v2173 = vmul.f32 %v1457, %v1457
  %v2174 = vmul.f32 %v1462, %v1462
  %v2175 = vmul.f32 %v1467, %v1467
  %v2176 = vmul.f32 %v1472, %v1472
  %v2177 = vmul.f32 %v1477, %v1477
  %v2178 = vmul.f32 %v1482, %v1482
  %v2179 = vmul.f32 %v1487, %v1487
  %v2180 = vmul.f32 %v1492, %v1492
  %v2181 = vmul.f32 %v1497, %v1497
  %v2182 = vmul.f32 %v1502, %v1502
  %v2183 = vmul.f32 %v1507, %v1507
  %v2184 = vmul.f32 %v1512, %v1512
  %v2185 = vmul.f32 %v1517, %v1517
  %v2186 = vmul.f32 %v1522, %v1522
  %v2187 = vmul.f32 %v1527, %v1527
  %v2188 = vmul.f32 %v1532, %v1532
  %v2189 = vmul.f32 %v1537, %v1537
  %v2190 = vmul.f32 %v1542, %v1542
  %v2191 = vmul.f32 %v1547, %v1547
  %v2192 = vmul.f32 %v1552, %v1552
  %v2193 = vmul.f32 %v1557, %v1557
  %v2194 = vmul.f32 %v1562, %v1562
  %v2195 = vmul.f32 %v1567, %v1567
  %v2196 = vmul.f32 %v1572, %v1572
  %v2197 = vmul.f32 %v1577, %v1577
  %v2198 = vmul.f32 %v1582, %v1582
  %v2199 = vmul.f32 %v1587, %v1587
  %v2200 = vmul.f32 %v1592, %v1592
  %v2201 = vmul.f32 %v1597, %v1597
  %v2202 = vmul.f32 %v1602, %v1602
  %v2203 = vmul.f32 %v1607, %v1607
  %v2204 = vmul.f32 %v1612, %v1612
  %v2205 = vmul.f32 %v1617, %v1617
  %v2206 = vmul.f32 %v1622, %v1622
  %v2207 = vmul.f32 %v1627, %v1627
  %v2208 = vmul.f32 %v1632, %v1632
  %v2209 = vmul.f32 %v1637, %v1637
  %v2210 = vmul.f32 %v1642, %v1642
  %v2211 = vmul.f32 %v1647, %v1647
  %v2212 = vmul.f32 %v1652, %v1652
  %v2213 = vmul.f32 %v1657, %v1657
  %v2214 = vmul.f32 %v1662, %v1662
  %v2215 = vmul.f32 %v1667, %v1667
  %v2216 = vmul.f32 %v1672, %v1672
  %v2217 = vmul.f32 %v1677, %v1677
  %v2218 = vmul.f32 %v1682, %v1682
  %v2219 = vmul.f32 %v1687, %v1687
  %v2220 = vmul.f32 %v1692, %v1692
  %v2221 = vmul.f32 %v1697, %v1697
  %v2222 = vmul.f32 %v1702, %v1702
  %v2223 = vmul.f32 %v1707, %v1707
  %v2224 = vmul.f32 %v1712, %v1712
  %v2225 = vmul.f32 %v1717, %v1717
  %v2226 = vmul.f32 %v1722, %v1722
  %v2227 = vmul.f32 %v1727, %v1727
  %v2228 = vmul.f32 %v1732, %v1732
  %v2229 = vmul.f32 %v1737, %v1737
  %v2230 = vmul.f32 %v1742, %v1742
  %v2231 = vmul.f32 %v1747, %v1747
  %v2232 = vmul.f32 %v1752, %v1752
  %v2233 = vmul.f32 %v1757, %v1757
  %v2234 = vmul.f32 %v1762, %v1762
  %v2235 = vmul.f32 %v1767, %v1767
  %v2236 = vmul.f32 %v1772, %v1772
  %v2237 = vmul.f32 %v1777, %v1777
  %v2238 = vmul.f32 %v1782, %v1782
  %v2239 = vmul.f32 %v1787, %v1787
  %v2240 = vmul.f32 %v1792, %v1792
  %v2241 = vmul.f32 %v1797, %v1797
  %v2242 = vmul.f32 %v1802, %v1802
  %v2243 = vmul.f32 %v1807, %v1807
  %v2244 = vmul.f32 %v1812, %v1812
  %v2245 = vmul.f32 %v1817, %v1817
  %v2246 = vmul.f32 %v1822, %v1822
  %v2247 = vmul.f32 %v1827, %v1827
  %v2248 = vmul.f32 %v1832, %v1832
  %v2249 = vmul.f32 %v1837, %v1837
  %v2250 = vmul.f32 %v1842, %v1842
  %v2251 = vmul.f32 %v1847, %v1847
  %v2252 = vmul.f32 %v1852, %v1852
  %v2253 = vadd.f32 %v2057, %v2058
  %v2254 = vadd.f32 %v2253, %v2059
  %v2255 = vadd.f32 %v2254, %v2060
  %v2256 = vadd.f32 %v2255, %v2061
  %v2257 = vadd.f32 %v2256, %v2062
  %v2258 = vadd.f32 %v2257, %v2063
  %v2259 = vadd.f32 %v2258, %v2064
  %v2260 = vadd.f32 %v2259, %v2065
  %v2261 = vadd.f32 %v2260, %v2066
  %v2262 = vadd.f32 %v2261, %v2067
  %v2263 = vadd.f32 %v2262, %v2068
  %v2264 = vadd.f32 %v2263, %v2069
  %v2265 = vadd.f32 %v2264, %v2070
  %v2266 = vadd.f32 %v2265, %v2071
  %v2267 = vadd.f32 %v2266, %v2072
  %v2268 = vadd.f32 %v2267, %v2073
  %v2269 = vadd.f32 %v2268, %v2074
  %v2270 = vadd.f32 %v2269, %v2075
  %v2271 = vadd.f32 %v2270, %v2076
  %v2272 = vadd.f32 %v2271, %v2077
  %v2273 = vadd.f32 %v2272, %v2078
  %v2274 = vadd.f32 %v2273, %v2079
  %v2275 = vadd.f32 %v2274, %v2080
  %v2276 = vadd.f32 %v2275, %v2081
  %v2277 = vadd.f32 %v2276, %v2082
  %v2278 = vadd.f32 %v2277, %v2083
  %v2279 = vadd.f32 %v2278, %v2084
  %v2280 = vadd.f32 %v2279, %v2085
  %v2281 = vadd.f32 %v2280, %v2086
  %v2282 = vadd.f32 %v2281, %v2087
  %v2283 = vadd.f32 %v2282, %v2088
  %v2284 = vadd.f32 %v2283, %v2089
  %v2285 = vadd.f32 %v2284, %v2090
  %v2286 = vadd.f32 %v2285, %v2091
  %v2287 = vadd.f32 %v2286, %v2092
  %v2288 = vadd.f32 %v2287, %v2093
  %v2289 = vadd.f32 %v2288, %v2094
  %v2290 = vadd.f32 %v2289, %v2095
  %v2291 = vadd.f32 %v2290, %v2096
  %v2292 = vadd.f32 %v2291, %v2097
  %v2293 = vadd.f32 %v2292, %v2098
  %v2294 = vadd.f32 %v2293, %v2099
  %v2295 = vadd.f32 %v2294, %v2100
  %v2296 = vadd.f32 %v2295, %v2101
  %v2297 = vadd.f32 %v2296, %v2102
  %v2298 = vadd.f32 %v2297, %v2103
  %v2299 = vadd.f32 %v2298, %v2104
  %v2300 = vadd.f32 %v2299, %v2105
  %v2301 = vadd.f32 %v2300, %v2106
  %v2302 = vadd.f32 %v2301, %v2107
  %v2303 = vadd.f32 %v2302, %v2108
  %v2304 = vadd.f32 %v2303, %v2109
  %v2305 = vadd.f32 %v2304, %v2110
  %v2306 = vadd.f32 %v2305, %v2111
  %v2307 = vadd.f32 %v2306, %v2112
  %v2308 = vadd.f32 %v2307, %v2113
  %v2309 = vadd.f32 %v2308, %v2114
  %v2310 = vadd.f32 %v2309, %v2115
  %v2311 = vadd.f32 %v2310, %v2116
  %v2312 = vadd.f32 %v2311, %v2117
  %v2313 = vadd.f32 %v2312, %v2118
  %v2314 = vadd.f32 %v2313, %v2119
  %v2315 = vadd.f32 %v2314, %v2120
  %v2316 = vadd.f32 %v2315, %v2121
  %v2317 = vadd.f32 %v2316, %v2122
  %v2318 = vadd.f32 %v2317, %v2123
  %v2319 = vadd.f32 %v2318, %v2124
  %v2320 = vadd.f32 %v2319, %v2125
  %v2321 = vadd.f32 %v2320, %v2126
  %v2322 = vadd.f32 %v2321, %v2127
  %v2323 = vadd.f32 %v2322, %v2128
  %v2324 = vadd.f32 %v2323, %v2129
  %v2325 = vadd.f32 %v2324, %v2130
  %v2326 = vadd.f32 %v2325, %v2131
  %v2327 = vadd.f32 %v2326, %v2132
  %v2328 = vadd.f32 %v2327, %v2133
  %v2329 = vadd.f32 %v2328, %v2134
  %v2330 = vadd.f32 %v2329, %v2135
  %v2331 = vadd.f32 %v2330, %v2136
  %v2332 = vadd.f32 %v2331, %v2137
  %v2333 = vadd.f32 %v2332, %v2138
  %v2334 = vadd.f32 %v2333, %v2139
  %v2335 = vadd.f32 %v2334, %v2140
  %v2336 = vadd.f32 %v2335, %v2141
  %v2337 = vadd.f32 %v2336, %v2142
  %v2338 = vadd.f32 %v2337, %v2143
  %v2339 = vadd.f32 %v2338, %v2144
  %v2340 = vadd.f32 %v2339, %v2145
  %v2341 = vadd.f32 %v2340, %v2146
  %v2342 = vadd.f32 %v2341, %v2147
  %v2343 = vadd.f32 %v2342, %v2148
  %v2344 = vadd.f32 %v2343, %v2149
  %v2345 = vadd.f32 %v2344, %v2150
  %v2346 = vadd.f32 %v2345, %v2151
  %v2347 = vadd.f32 %v2346, %v2152
  %v2348 = vadd.f32 %v2347, %v2153
  %v2349 = vadd.f32 %v2348, %v2154
  %v2350 = vadd.f32 %v2349, %v2155
  %v2351 = vadd.f32 %v2350, %v2156
  %v2352 = vadd.f32 %v2351, %v2157
  %v2353 = vadd.f32 %v2352, %v2158
  %v2354 = vadd.f32 %v2353, %v2159
  %v2355 = vadd.f32 %v2354, %v2160
  %v2356 = vadd.f32 %v2355, %v2161
  %v2357 = vadd.f32 %v2356, %v2162
  %v2358 = vadd.f32 %v2357, %v2163
  %v2359 = vadd.f32 %v2358, %v2164
  %v2360 = vadd.f32 %v2359, %v2165
  %v2361 = vadd.f32 %v2360, %v2166
  %v2362 = vadd.f32 %v2361, %v2167
  %v2363 = vadd.f32 %v2362, %v2168
  %v2364 = vadd.f32 %v2363, %v2169
  %v2365 = vadd.f32 %v2364, %v2170
  %v2366 = vadd.f32 %v2365, %v2171
  %v2367 = vadd.f32 %v2366, %v2172
  %v2368 = vadd.f32 %v2367, %v2173
  %v2369 = vadd.f32 %v2368, %v2174
  %v2370 = vadd.f32 %v2369, %v2175
  %v2371 = vadd.f32 %v2370, %v2176
  %v2372 = vadd.f32 %v2371, %v2177
  %v2373 = vadd.f32 %v2372, %v2178
  %v2374 = vadd.f32 %v2373, %v2179
  %v2375 = vadd.f32 %v2374, %v2180
  %v2376 = vadd.f32 %v2375, %v2181
  %v2377 = vadd.f32 %v2376, %v2182
  %v2378 = vadd.f32 %v2377, %v2183
  %v2379 = vadd.f32 %v2378, %v2184
  %v2380 = vadd.f32 %v2379, %v2185
  %v2381 = vadd.f32 %v2380, %v2186
  %v2382 = vadd.f32 %v2381, %v2187
  %v2383 = vadd.f32 %v2382, %v2188
  %v2384 = vadd.f32 %v2383, %v2189
  %v2385 = vadd.f32 %v2384, %v2190
  %v2386 = vadd.f32 %v2385, %v2191
  %v2387 = vadd.f32 %v2386, %v2192
  %v2388 = vadd.f32 %v2387, %v2193
  %v2389 = vadd.f32 %v2388, %v2194
  %v2390 = vadd.f32 %v2389, %v2195
  %v2391 = vadd.f32 %v2390, %v2196
  %v2392 = vadd.f32 %v2391, %v2197
  %v2393 = vadd.f32 %v2392, %v2198
  %v2394 = vadd.f32 %v2393, %v2199
  %v2395 = vadd.f32 %v2394, %v2200
  %v2396 = vadd.f32 %v2395, %v2201
  %v2397 = vadd.f32 %v2396, %v2202
  %v2398 = vadd.f32 %v2397, %v2203
  %v2399 = vadd.f32 %v2398, %v2204
  %v2400 = vadd.f32 %v2399, %v2205
  %v2401 = vadd.f32 %v2400, %v2206
  %v2402 = vadd.f32 %v2401, %v2207
  %v2403 = vadd.f32 %v2402, %v2208
  %v2404 = vadd.f32 %v2403, %v2209
  %v2405 = vadd.f32 %v2404, %v2210
  %v2406 = vadd.f32 %v2405, %v2211
  %v2407 = vadd.f32 %v2406, %v2212
  %v2408 = vadd.f32 %v2407, %v2213
  %v2409 = vadd.f32 %v2408, %v2214
  %v2410 = vadd.f32 %v2409, %v2215
  %v2411 = vadd.f32 %v2410, %v2216
  %v2412 = vadd.f32 %v2411, %v2217
  %v2413 = vadd.f32 %v2412, %v2218
  %v2414 = vadd.f32 %v2413, %v2219
  %v2415 = vadd.f32 %v2414, %v2220
  %v2416 = vadd.f32 %v2415, %v2221
  %v2417 = vadd.f32 %v2416, %v2222
  %v2418 = vadd.f32 %v2417, %v2223
  %v2419 = vadd.f32 %v2418, %v2224
  %v2420 = vadd.f32 %v2419, %v2225
  %v2421 = vadd.f32 %v2420, %v2226
  %v2422 = vadd.f32 %v2421, %v2227
  %v2423 = vadd.f32 %v2422, %v2228
  %v2424 = vadd.f32 %v2423, %v2229
  %v2425 = vadd.f32 %v2424, %v2230
  %v2426 = vadd.f32 %v2425, %v2231
  %v2427 = vadd.f32 %v2426, %v2232
  %v2428 = vadd.f32 %v2427, %v2233
  %v2429 = vadd.f32 %v2428, %v2234
  %v2430 = vadd.f32 %v2429, %v2235
  %v2431 = vadd.f32 %v2430, %v2236
  %v2432 = vadd.f32 %v2431, %v2237
  %v2433 = vadd.f32 %v2432, %v2238
  %v2434 = vadd.f32 %v2433, %v2239
  %v2435 = vadd.f32 %v2434, %v2240
  %v2436 = vadd.f32 %v2435, %v2241
  %v2437 = vadd.f32 %v2436, %v2242
  %v2438 = vadd.f32 %v2437, %v2243
  %v2439 = vadd.f32 %v2438, %v2244
  %v2440 = vadd.f32 %v2439, %v2245
  %v2441 = vadd.f32 %v2440, %v2246
  %v2442 = vadd.f32 %v2441, %v2247
  %v2443 = vadd.f32 %v2442, %v2248
  %v2444 = vadd.f32 %v2443, %v2249
  %v2445 = vadd.f32 %v2444, %v2250
  %v2446 = vadd.f32 %v2445, %v2251
  %v2447 = vadd.f32 %v2446, %v2252
  %v2448 = vrot.slane %v2447, 4
  %v2449 = vadd.f32 %v2447, %v2448
  %v2450 = vrot.slane %v2449, 2
  %v2451 = vadd.f32 %v2449, %v2450
  %v2452 = vrot.slane %v2451, 1
  %v2453 = vadd.f32 %v2451, %v2452
  %v2454 = vmul.f32 %v2453, 0.0006377551
  %v2455 = vmul.f32 %v2056, %v2056
  %v2456 = vsub.f32 %v2454, %v2455
  %v2457 = vmax.f32 %v2456, 0.0
  %v2458 = vld [vmem:[%s2] sm:$0x1]
  %v2459 = vadd.f32 %v2457, 1e-05
  %v2460 = vrsqrt.pop %v2459
  %v2461 = vmul.f32 %v2458, %v2460
  %v2462 = vld [vmem:[%s3] sm:$0x1]
  %v2463 = vmul.f32 %v2056, %v2461
  %v2464 = vsub.f32 %v2462, %v2463
  %v2466 = vlaneseq
  %v2467 = vshrl.u32 %v2466, 7
  %v2468 = vsub.s32 0, %v2467
  %v2469 = vrot.slane %v2461, %v2468
  %v2471 = vmul.f32 %v877, %v2469
  %v2472 = vmul.f32 %v882, %v2469
  %v2473 = vmul.f32 %v887, %v2469
  %v2474 = vmul.f32 %v892, %v2469
  %v2475 = vmul.f32 %v897, %v2469
  %v2476 = vmul.f32 %v902, %v2469
  %v2477 = vmul.f32 %v907, %v2469
  %v2478 = vmul.f32 %v912, %v2469
  %v2479 = vmul.f32 %v917, %v2469
  %v2480 = vmul.f32 %v922, %v2469
  %v2481 = vmul.f32 %v927, %v2469
  %v2482 = vmul.f32 %v932, %v2469
  %v2483 = vmul.f32 %v937, %v2469
  %v2484 = vmul.f32 %v942, %v2469
  %v2485 = vmul.f32 %v947, %v2469
  %v2486 = vmul.f32 %v952, %v2469
  %v2487 = vmul.f32 %v957, %v2469
  %v2488 = vmul.f32 %v962, %v2469
  %v2489 = vmul.f32 %v967, %v2469
  %v2490 = vmul.f32 %v972, %v2469
  %v2491 = vmul.f32 %v977, %v2469
  %v2492 = vmul.f32 %v982, %v2469
  %v2493 = vmul.f32 %v987, %v2469
  %v2494 = vmul.f32 %v992, %v2469
  %v2495 = vmul.f32 %v997, %v2469
  %v2496 = vmul.f32 %v1002, %v2469
  %v2497 = vmul.f32 %v1007, %v2469
  %v2498 = vmul.f32 %v1012, %v2469
  %v2499 = vmul.f32 %v1017, %v2469
  %v2500 = vmul.f32 %v1022, %v2469
  %v2501 = vmul.f32 %v1027, %v2469
  %v2502 = vmul.f32 %v1032, %v2469
  %v2503 = vmul.f32 %v1037, %v2469
  %v2504 = vmul.f32 %v1042, %v2469
  %v2505 = vmul.f32 %v1047, %v2469
  %v2506 = vmul.f32 %v1052, %v2469
  %v2507 = vmul.f32 %v1057, %v2469
  %v2508 = vmul.f32 %v1062, %v2469
  %v2509 = vmul.f32 %v1067, %v2469
  %v2510 = vmul.f32 %v1072, %v2469
  %v2511 = vmul.f32 %v1077, %v2469
  %v2512 = vmul.f32 %v1082, %v2469
  %v2513 = vmul.f32 %v1087, %v2469
  %v2514 = vmul.f32 %v1092, %v2469
  %v2515 = vmul.f32 %v1097, %v2469
  %v2516 = vmul.f32 %v1102, %v2469
  %v2517 = vmul.f32 %v1107, %v2469
  %v2518 = vmul.f32 %v1112, %v2469
  %v2519 = vmul.f32 %v1117, %v2469
  %v2520 = vmul.f32 %v1122, %v2469
  %v2521 = vmul.f32 %v1127, %v2469
  %v2522 = vmul.f32 %v1132, %v2469
  %v2523 = vmul.f32 %v1137, %v2469
  %v2524 = vmul.f32 %v1142, %v2469
  %v2525 = vmul.f32 %v1147, %v2469
  %v2526 = vmul.f32 %v1152, %v2469
  %v2527 = vmul.f32 %v1157, %v2469
  %v2528 = vmul.f32 %v1162, %v2469
  %v2529 = vmul.f32 %v1167, %v2469
  %v2530 = vmul.f32 %v1172, %v2469
  %v2531 = vmul.f32 %v1177, %v2469
  %v2532 = vmul.f32 %v1182, %v2469
  %v2533 = vmul.f32 %v1187, %v2469
  %v2534 = vmul.f32 %v1192, %v2469
  %v2535 = vmul.f32 %v1197, %v2469
  %v2536 = vmul.f32 %v1202, %v2469
  %v2537 = vmul.f32 %v1207, %v2469
  %v2538 = vmul.f32 %v1212, %v2469
  %v2539 = vmul.f32 %v1217, %v2469
  %v2540 = vmul.f32 %v1222, %v2469
  %v2541 = vmul.f32 %v1227, %v2469
  %v2542 = vmul.f32 %v1232, %v2469
  %v2543 = vmul.f32 %v1237, %v2469
  %v2544 = vmul.f32 %v1242, %v2469
  %v2545 = vmul.f32 %v1247, %v2469
  %v2546 = vmul.f32 %v1252, %v2469
  %v2547 = vmul.f32 %v1257, %v2469
  %v2548 = vmul.f32 %v1262, %v2469
  %v2549 = vmul.f32 %v1267, %v2469
  %v2550 = vmul.f32 %v1272, %v2469
  %v2551 = vmul.f32 %v1277, %v2469
  %v2552 = vmul.f32 %v1282, %v2469
  %v2553 = vmul.f32 %v1287, %v2469
  %v2554 = vmul.f32 %v1292, %v2469
  %v2555 = vmul.f32 %v1297, %v2469
  %v2556 = vmul.f32 %v1302, %v2469
  %v2557 = vmul.f32 %v1307, %v2469
  %v2558 = vmul.f32 %v1312, %v2469
  %v2559 = vmul.f32 %v1317, %v2469
  %v2560 = vmul.f32 %v1322, %v2469
  %v2561 = vmul.f32 %v1327, %v2469
  %v2562 = vmul.f32 %v1332, %v2469
  %v2563 = vmul.f32 %v1337, %v2469
  %v2564 = vmul.f32 %v1342, %v2469
  %v2565 = vmul.f32 %v1347, %v2469
  %v2566 = vmul.f32 %v1352, %v2469
  %v2567 = vmul.f32 %v1357, %v2469
  %v2568 = vmul.f32 %v1362, %v2469
  %v2569 = vmul.f32 %v1367, %v2469
  %v2570 = vmul.f32 %v1372, %v2469
  %v2571 = vmul.f32 %v1377, %v2469
  %v2572 = vmul.f32 %v1382, %v2469
  %v2573 = vmul.f32 %v1387, %v2469
  %v2574 = vmul.f32 %v1392, %v2469
  %v2575 = vmul.f32 %v1397, %v2469
  %v2576 = vmul.f32 %v1402, %v2469
  %v2577 = vmul.f32 %v1407, %v2469
  %v2578 = vmul.f32 %v1412, %v2469
  %v2579 = vmul.f32 %v1417, %v2469
  %v2580 = vmul.f32 %v1422, %v2469
  %v2581 = vmul.f32 %v1427, %v2469
  %v2582 = vmul.f32 %v1432, %v2469
  %v2583 = vmul.f32 %v1437, %v2469
  %v2584 = vmul.f32 %v1442, %v2469
  %v2585 = vmul.f32 %v1447, %v2469
  %v2586 = vmul.f32 %v1452, %v2469
  %v2587 = vmul.f32 %v1457, %v2469
  %v2588 = vmul.f32 %v1462, %v2469
  %v2589 = vmul.f32 %v1467, %v2469
  %v2590 = vmul.f32 %v1472, %v2469
  %v2591 = vmul.f32 %v1477, %v2469
  %v2592 = vmul.f32 %v1482, %v2469
  %v2593 = vmul.f32 %v1487, %v2469
  %v2594 = vmul.f32 %v1492, %v2469
  %v2595 = vmul.f32 %v1497, %v2469
  %v2596 = vmul.f32 %v1502, %v2469
  %v2597 = vmul.f32 %v1507, %v2469
  %v2598 = vmul.f32 %v1512, %v2469
  %v2599 = vmul.f32 %v1517, %v2469
  %v2600 = vmul.f32 %v1522, %v2469
  %v2601 = vmul.f32 %v1527, %v2469
  %v2602 = vmul.f32 %v1532, %v2469
  %v2603 = vmul.f32 %v1537, %v2469
  %v2604 = vmul.f32 %v1542, %v2469
  %v2605 = vmul.f32 %v1547, %v2469
  %v2606 = vmul.f32 %v1552, %v2469
  %v2607 = vmul.f32 %v1557, %v2469
  %v2608 = vmul.f32 %v1562, %v2469
  %v2609 = vmul.f32 %v1567, %v2469
  %v2610 = vmul.f32 %v1572, %v2469
  %v2611 = vmul.f32 %v1577, %v2469
  %v2612 = vmul.f32 %v1582, %v2469
  %v2613 = vmul.f32 %v1587, %v2469
  %v2614 = vmul.f32 %v1592, %v2469
  %v2615 = vmul.f32 %v1597, %v2469
  %v2616 = vmul.f32 %v1602, %v2469
  %v2617 = vmul.f32 %v1607, %v2469
  %v2618 = vmul.f32 %v1612, %v2469
  %v2619 = vmul.f32 %v1617, %v2469
  %v2620 = vmul.f32 %v1622, %v2469
  %v2621 = vmul.f32 %v1627, %v2469
  %v2622 = vmul.f32 %v1632, %v2469
  %v2623 = vmul.f32 %v1637, %v2469
  %v2624 = vmul.f32 %v1642, %v2469
  %v2625 = vmul.f32 %v1647, %v2469
  %v2626 = vmul.f32 %v1652, %v2469
  %v2627 = vmul.f32 %v1657, %v2469
  %v2628 = vmul.f32 %v1662, %v2469
  %v2629 = vmul.f32 %v1667, %v2469
  %v2630 = vmul.f32 %v1672, %v2469
  %v2631 = vmul.f32 %v1677, %v2469
  %v2632 = vmul.f32 %v1682, %v2469
  %v2633 = vmul.f32 %v1687, %v2469
  %v2634 = vmul.f32 %v1692, %v2469
  %v2635 = vmul.f32 %v1697, %v2469
  %v2636 = vmul.f32 %v1702, %v2469
  %v2637 = vmul.f32 %v1707, %v2469
  %v2638 = vmul.f32 %v1712, %v2469
  %v2639 = vmul.f32 %v1717, %v2469
  %v2640 = vmul.f32 %v1722, %v2469
  %v2641 = vmul.f32 %v1727, %v2469
  %v2642 = vmul.f32 %v1732, %v2469
  %v2643 = vmul.f32 %v1737, %v2469
  %v2644 = vmul.f32 %v1742, %v2469
  %v2645 = vmul.f32 %v1747, %v2469
  %v2646 = vmul.f32 %v1752, %v2469
  %v2647 = vmul.f32 %v1757, %v2469
  %v2648 = vmul.f32 %v1762, %v2469
  %v2649 = vmul.f32 %v1767, %v2469
  %v2650 = vmul.f32 %v1772, %v2469
  %v2651 = vmul.f32 %v1777, %v2469
  %v2652 = vmul.f32 %v1782, %v2469
  %v2653 = vmul.f32 %v1787, %v2469
  %v2654 = vmul.f32 %v1792, %v2469
  %v2655 = vmul.f32 %v1797, %v2469
  %v2656 = vmul.f32 %v1802, %v2469
  %v2657 = vmul.f32 %v1807, %v2469
  %v2658 = vmul.f32 %v1812, %v2469
  %v2659 = vmul.f32 %v1817, %v2469
  %v2660 = vmul.f32 %v1822, %v2469
  %v2661 = vmul.f32 %v1827, %v2469
  %v2662 = vmul.f32 %v1832, %v2469
  %v2663 = vmul.f32 %v1837, %v2469
  %v2664 = vmul.f32 %v1842, %v2469
  %v2665 = vmul.f32 %v1847, %v2469
  %v2666 = vmul.f32 %v1852, %v2469
  %v2668 = vlaneseq
  %v2669 = vshrl.u32 %v2668, 7
  %v2670 = vsub.s32 0, %v2669
  %v2671 = vrot.slane %v2464, %v2670
  %v2673 = vadd.f32 %v2471, %v2671
  %v2674 = vadd.f32 %v2472, %v2671
  %v2675 = vadd.f32 %v2473, %v2671
  %v2676 = vadd.f32 %v2474, %v2671
  %v2677 = vadd.f32 %v2475, %v2671
  %v2678 = vadd.f32 %v2476, %v2671
  %v2679 = vadd.f32 %v2477, %v2671
  %v2680 = vadd.f32 %v2478, %v2671
  %v2681 = vadd.f32 %v2479, %v2671
  %v2682 = vadd.f32 %v2480, %v2671
  %v2683 = vadd.f32 %v2481, %v2671
  %v2684 = vadd.f32 %v2482, %v2671
  %v2685 = vadd.f32 %v2483, %v2671
  %v2686 = vadd.f32 %v2484, %v2671
  %v2687 = vadd.f32 %v2485, %v2671
  %v2688 = vadd.f32 %v2486, %v2671
  %v2689 = vadd.f32 %v2487, %v2671
  %v2690 = vadd.f32 %v2488, %v2671
  %v2691 = vadd.f32 %v2489, %v2671
  %v2692 = vadd.f32 %v2490, %v2671
  %v2693 = vadd.f32 %v2491, %v2671
  %v2694 = vadd.f32 %v2492, %v2671
  %v2695 = vadd.f32 %v2493, %v2671
  %v2696 = vadd.f32 %v2494, %v2671
  %v2697 = vadd.f32 %v2495, %v2671
  %v2698 = vadd.f32 %v2496, %v2671
  %v2699 = vadd.f32 %v2497, %v2671
  %v2700 = vadd.f32 %v2498, %v2671
  %v2701 = vadd.f32 %v2499, %v2671
  %v2702 = vadd.f32 %v2500, %v2671
  %v2703 = vadd.f32 %v2501, %v2671
  %v2704 = vadd.f32 %v2502, %v2671
  %v2705 = vadd.f32 %v2503, %v2671
  %v2706 = vadd.f32 %v2504, %v2671
  %v2707 = vadd.f32 %v2505, %v2671
  %v2708 = vadd.f32 %v2506, %v2671
  %v2709 = vadd.f32 %v2507, %v2671
  %v2710 = vadd.f32 %v2508, %v2671
  %v2711 = vadd.f32 %v2509, %v2671
  %v2712 = vadd.f32 %v2510, %v2671
  %v2713 = vadd.f32 %v2511, %v2671
  %v2714 = vadd.f32 %v2512, %v2671
  %v2715 = vadd.f32 %v2513, %v2671
  %v2716 = vadd.f32 %v2514, %v2671
  %v2717 = vadd.f32 %v2515, %v2671
  %v2718 = vadd.f32 %v2516, %v2671
  %v2719 = vadd.f32 %v2517, %v2671
  %v2720 = vadd.f32 %v2518, %v2671
  %v2721 = vadd.f32 %v2519, %v2671
  %v2722 = vadd.f32 %v2520, %v2671
  %v2723 = vadd.f32 %v2521, %v2671
  %v2724 = vadd.f32 %v2522, %v2671
  %v2725 = vadd.f32 %v2523, %v2671
  %v2726 = vadd.f32 %v2524, %v2671
  %v2727 = vadd.f32 %v2525, %v2671
  %v2728 = vadd.f32 %v2526, %v2671
  %v2729 = vadd.f32 %v2527, %v2671
  %v2730 = vadd.f32 %v2528, %v2671
  %v2731 = vadd.f32 %v2529, %v2671
  %v2732 = vadd.f32 %v2530, %v2671
  %v2733 = vadd.f32 %v2531, %v2671
  %v2734 = vadd.f32 %v2532, %v2671
  %v2735 = vadd.f32 %v2533, %v2671
  %v2736 = vadd.f32 %v2534, %v2671
  %v2737 = vadd.f32 %v2535, %v2671
  %v2738 = vadd.f32 %v2536, %v2671
  %v2739 = vadd.f32 %v2537, %v2671
  %v2740 = vadd.f32 %v2538, %v2671
  %v2741 = vadd.f32 %v2539, %v2671
  %v2742 = vadd.f32 %v2540, %v2671
  %v2743 = vadd.f32 %v2541, %v2671
  %v2744 = vadd.f32 %v2542, %v2671
  %v2745 = vadd.f32 %v2543, %v2671
  %v2746 = vadd.f32 %v2544, %v2671
  %v2747 = vadd.f32 %v2545, %v2671
  %v2748 = vadd.f32 %v2546, %v2671
  %v2749 = vadd.f32 %v2547, %v2671
  %v2750 = vadd.f32 %v2548, %v2671
  %v2751 = vadd.f32 %v2549, %v2671
  %v2752 = vadd.f32 %v2550, %v2671
  %v2753 = vadd.f32 %v2551, %v2671
  %v2754 = vadd.f32 %v2552, %v2671
  %v2755 = vadd.f32 %v2553, %v2671
  %v2756 = vadd.f32 %v2554, %v2671
  %v2757 = vadd.f32 %v2555, %v2671
  %v2758 = vadd.f32 %v2556, %v2671
  %v2759 = vadd.f32 %v2557, %v2671
  %v2760 = vadd.f32 %v2558, %v2671
  %v2761 = vadd.f32 %v2559, %v2671
  %v2762 = vadd.f32 %v2560, %v2671
  %v2763 = vadd.f32 %v2561, %v2671
  %v2764 = vadd.f32 %v2562, %v2671
  %v2765 = vadd.f32 %v2563, %v2671
  %v2766 = vadd.f32 %v2564, %v2671
  %v2767 = vadd.f32 %v2565, %v2671
  %v2768 = vadd.f32 %v2566, %v2671
  %v2769 = vadd.f32 %v2567, %v2671
  %v2770 = vadd.f32 %v2568, %v2671
  %v2771 = vadd.f32 %v2569, %v2671
  %v2772 = vadd.f32 %v2570, %v2671
  %v2773 = vadd.f32 %v2571, %v2671
  %v2774 = vadd.f32 %v2572, %v2671
  %v2775 = vadd.f32 %v2573, %v2671
  %v2776 = vadd.f32 %v2574, %v2671
  %v2777 = vadd.f32 %v2575, %v2671
  %v2778 = vadd.f32 %v2576, %v2671
  %v2779 = vadd.f32 %v2577, %v2671
  %v2780 = vadd.f32 %v2578, %v2671
  %v2781 = vadd.f32 %v2579, %v2671
  %v2782 = vadd.f32 %v2580, %v2671
  %v2783 = vadd.f32 %v2581, %v2671
  %v2784 = vadd.f32 %v2582, %v2671
  %v2785 = vadd.f32 %v2583, %v2671
  %v2786 = vadd.f32 %v2584, %v2671
  %v2787 = vadd.f32 %v2585, %v2671
  %v2788 = vadd.f32 %v2586, %v2671
  %v2789 = vadd.f32 %v2587, %v2671
  %v2790 = vadd.f32 %v2588, %v2671
  %v2791 = vadd.f32 %v2589, %v2671
  %v2792 = vadd.f32 %v2590, %v2671
  %v2793 = vadd.f32 %v2591, %v2671
  %v2794 = vadd.f32 %v2592, %v2671
  %v2795 = vadd.f32 %v2593, %v2671
  %v2796 = vadd.f32 %v2594, %v2671
  %v2797 = vadd.f32 %v2595, %v2671
  %v2798 = vadd.f32 %v2596, %v2671
  %v2799 = vadd.f32 %v2597, %v2671
  %v2800 = vadd.f32 %v2598, %v2671
  %v2801 = vadd.f32 %v2599, %v2671
  %v2802 = vadd.f32 %v2600, %v2671
  %v2803 = vadd.f32 %v2601, %v2671
  %v2804 = vadd.f32 %v2602, %v2671
  %v2805 = vadd.f32 %v2603, %v2671
  %v2806 = vadd.f32 %v2604, %v2671
  %v2807 = vadd.f32 %v2605, %v2671
  %v2808 = vadd.f32 %v2606, %v2671
  %v2809 = vadd.f32 %v2607, %v2671
  %v2810 = vadd.f32 %v2608, %v2671
  %v2811 = vadd.f32 %v2609, %v2671
  %v2812 = vadd.f32 %v2610, %v2671
  %v2813 = vadd.f32 %v2611, %v2671
  %v2814 = vadd.f32 %v2612, %v2671
  %v2815 = vadd.f32 %v2613, %v2671
  %v2816 = vadd.f32 %v2614, %v2671
  %v2817 = vadd.f32 %v2615, %v2671
  %v2818 = vadd.f32 %v2616, %v2671
  %v2819 = vadd.f32 %v2617, %v2671
  %v2820 = vadd.f32 %v2618, %v2671
  %v2821 = vadd.f32 %v2619, %v2671
  %v2822 = vadd.f32 %v2620, %v2671
  %v2823 = vadd.f32 %v2621, %v2671
  %v2824 = vadd.f32 %v2622, %v2671
  %v2825 = vadd.f32 %v2623, %v2671
  %v2826 = vadd.f32 %v2624, %v2671
  %v2827 = vadd.f32 %v2625, %v2671
  %v2828 = vadd.f32 %v2626, %v2671
  %v2829 = vadd.f32 %v2627, %v2671
  %v2830 = vadd.f32 %v2628, %v2671
  %v2831 = vadd.f32 %v2629, %v2671
  %v2832 = vadd.f32 %v2630, %v2671
  %v2833 = vadd.f32 %v2631, %v2671
  %v2834 = vadd.f32 %v2632, %v2671
  %v2835 = vadd.f32 %v2633, %v2671
  %v2836 = vadd.f32 %v2634, %v2671
  %v2837 = vadd.f32 %v2635, %v2671
  %v2838 = vadd.f32 %v2636, %v2671
  %v2839 = vadd.f32 %v2637, %v2671
  %v2840 = vadd.f32 %v2638, %v2671
  %v2841 = vadd.f32 %v2639, %v2671
  %v2842 = vadd.f32 %v2640, %v2671
  %v2843 = vadd.f32 %v2641, %v2671
  %v2844 = vadd.f32 %v2642, %v2671
  %v2845 = vadd.f32 %v2643, %v2671
  %v2846 = vadd.f32 %v2644, %v2671
  %v2847 = vadd.f32 %v2645, %v2671
  %v2848 = vadd.f32 %v2646, %v2671
  %v2849 = vadd.f32 %v2647, %v2671
  %v2850 = vadd.f32 %v2648, %v2671
  %v2851 = vadd.f32 %v2649, %v2671
  %v2852 = vadd.f32 %v2650, %v2671
  %v2853 = vadd.f32 %v2651, %v2671
  %v2854 = vadd.f32 %v2652, %v2671
  %v2855 = vadd.f32 %v2653, %v2671
  %v2856 = vadd.f32 %v2654, %v2671
  %v2857 = vadd.f32 %v2655, %v2671
  %v2858 = vadd.f32 %v2656, %v2671
  %v2859 = vadd.f32 %v2657, %v2671
  %v2860 = vadd.f32 %v2658, %v2671
  %v2861 = vadd.f32 %v2659, %v2671
  %v2862 = vadd.f32 %v2660, %v2671
  %v2863 = vadd.f32 %v2661, %v2671
  %v2864 = vadd.f32 %v2662, %v2671
  %v2865 = vadd.f32 %v2663, %v2671
  %v2866 = vadd.f32 %v2664, %v2671
  %v2867 = vadd.f32 %v2665, %v2671
  %v2868 = vadd.f32 %v2666, %v2671
  %v2869 = vmax.f32 %v2673, 0.0
  %v2870 = vmax.f32 %v2674, 0.0
  %v2871 = vmax.f32 %v2675, 0.0
  %v2872 = vmax.f32 %v2676, 0.0
  %v2873 = vmax.f32 %v2677, 0.0
  %v2874 = vmax.f32 %v2678, 0.0
  %v2875 = vmax.f32 %v2679, 0.0
  %v2876 = vmax.f32 %v2680, 0.0
  %v2877 = vmax.f32 %v2681, 0.0
  %v2878 = vmax.f32 %v2682, 0.0
  %v2879 = vmax.f32 %v2683, 0.0
  %v2880 = vmax.f32 %v2684, 0.0
  %v2881 = vmax.f32 %v2685, 0.0
  %v2882 = vmax.f32 %v2686, 0.0
  %v2883 = vmax.f32 %v2687, 0.0
  %v2884 = vmax.f32 %v2688, 0.0
  %v2885 = vmax.f32 %v2689, 0.0
  %v2886 = vmax.f32 %v2690, 0.0
  %v2887 = vmax.f32 %v2691, 0.0
  %v2888 = vmax.f32 %v2692, 0.0
  %v2889 = vmax.f32 %v2693, 0.0
  %v2890 = vmax.f32 %v2694, 0.0
  %v2891 = vmax.f32 %v2695, 0.0
  %v2892 = vmax.f32 %v2696, 0.0
  %v2893 = vmax.f32 %v2697, 0.0
  %v2894 = vmax.f32 %v2698, 0.0
  %v2895 = vmax.f32 %v2699, 0.0
  %v2896 = vmax.f32 %v2700, 0.0
  %v2897 = vmax.f32 %v2701, 0.0
  %v2898 = vmax.f32 %v2702, 0.0
  %v2899 = vmax.f32 %v2703, 0.0
  %v2900 = vmax.f32 %v2704, 0.0
  %v2901 = vmax.f32 %v2705, 0.0
  %v2902 = vmax.f32 %v2706, 0.0
  %v2903 = vmax.f32 %v2707, 0.0
  %v2904 = vmax.f32 %v2708, 0.0
  %v2905 = vmax.f32 %v2709, 0.0
  %v2906 = vmax.f32 %v2710, 0.0
  %v2907 = vmax.f32 %v2711, 0.0
  %v2908 = vmax.f32 %v2712, 0.0
  %v2909 = vmax.f32 %v2713, 0.0
  %v2910 = vmax.f32 %v2714, 0.0
  %v2911 = vmax.f32 %v2715, 0.0
  %v2912 = vmax.f32 %v2716, 0.0
  %v2913 = vmax.f32 %v2717, 0.0
  %v2914 = vmax.f32 %v2718, 0.0
  %v2915 = vmax.f32 %v2719, 0.0
  %v2916 = vmax.f32 %v2720, 0.0
  %v2917 = vmax.f32 %v2721, 0.0
  %v2918 = vmax.f32 %v2722, 0.0
  %v2919 = vmax.f32 %v2723, 0.0
  %v2920 = vmax.f32 %v2724, 0.0
  %v2921 = vmax.f32 %v2725, 0.0
  %v2922 = vmax.f32 %v2726, 0.0
  %v2923 = vmax.f32 %v2727, 0.0
  %v2924 = vmax.f32 %v2728, 0.0
  %v2925 = vmax.f32 %v2729, 0.0
  %v2926 = vmax.f32 %v2730, 0.0
  %v2927 = vmax.f32 %v2731, 0.0
  %v2928 = vmax.f32 %v2732, 0.0
  %v2929 = vmax.f32 %v2733, 0.0
  %v2930 = vmax.f32 %v2734, 0.0
  %v2931 = vmax.f32 %v2735, 0.0
  %v2932 = vmax.f32 %v2736, 0.0
  %v2933 = vmax.f32 %v2737, 0.0
  %v2934 = vmax.f32 %v2738, 0.0
  %v2935 = vmax.f32 %v2739, 0.0
  %v2936 = vmax.f32 %v2740, 0.0
  %v2937 = vmax.f32 %v2741, 0.0
  %v2938 = vmax.f32 %v2742, 0.0
  %v2939 = vmax.f32 %v2743, 0.0
  %v2940 = vmax.f32 %v2744, 0.0
  %v2941 = vmax.f32 %v2745, 0.0
  %v2942 = vmax.f32 %v2746, 0.0
  %v2943 = vmax.f32 %v2747, 0.0
  %v2944 = vmax.f32 %v2748, 0.0
  %v2945 = vmax.f32 %v2749, 0.0
  %v2946 = vmax.f32 %v2750, 0.0
  %v2947 = vmax.f32 %v2751, 0.0
  %v2948 = vmax.f32 %v2752, 0.0
  %v2949 = vmax.f32 %v2753, 0.0
  %v2950 = vmax.f32 %v2754, 0.0
  %v2951 = vmax.f32 %v2755, 0.0
  %v2952 = vmax.f32 %v2756, 0.0
  %v2953 = vmax.f32 %v2757, 0.0
  %v2954 = vmax.f32 %v2758, 0.0
  %v2955 = vmax.f32 %v2759, 0.0
  %v2956 = vmax.f32 %v2760, 0.0
  %v2957 = vmax.f32 %v2761, 0.0
  %v2958 = vmax.f32 %v2762, 0.0
  %v2959 = vmax.f32 %v2763, 0.0
  %v2960 = vmax.f32 %v2764, 0.0
  %v2961 = vmax.f32 %v2765, 0.0
  %v2962 = vmax.f32 %v2766, 0.0
  %v2963 = vmax.f32 %v2767, 0.0
  %v2964 = vmax.f32 %v2768, 0.0
  %v2965 = vmax.f32 %v2769, 0.0
  %v2966 = vmax.f32 %v2770, 0.0
  %v2967 = vmax.f32 %v2771, 0.0
  %v2968 = vmax.f32 %v2772, 0.0
  %v2969 = vmax.f32 %v2773, 0.0
  %v2970 = vmax.f32 %v2774, 0.0
  %v2971 = vmax.f32 %v2775, 0.0
  %v2972 = vmax.f32 %v2776, 0.0
  %v2973 = vmax.f32 %v2777, 0.0
  %v2974 = vmax.f32 %v2778, 0.0
  %v2975 = vmax.f32 %v2779, 0.0
  %v2976 = vmax.f32 %v2780, 0.0
  %v2977 = vmax.f32 %v2781, 0.0
  %v2978 = vmax.f32 %v2782, 0.0
  %v2979 = vmax.f32 %v2783, 0.0
  %v2980 = vmax.f32 %v2784, 0.0
  %v2981 = vmax.f32 %v2785, 0.0
  %v2982 = vmax.f32 %v2786, 0.0
  %v2983 = vmax.f32 %v2787, 0.0
  %v2984 = vmax.f32 %v2788, 0.0
  %v2985 = vmax.f32 %v2789, 0.0
  %v2986 = vmax.f32 %v2790, 0.0
  %v2987 = vmax.f32 %v2791, 0.0
  %v2988 = vmax.f32 %v2792, 0.0
  %v2989 = vmax.f32 %v2793, 0.0
  %v2990 = vmax.f32 %v2794, 0.0
  %v2991 = vmax.f32 %v2795, 0.0
  %v2992 = vmax.f32 %v2796, 0.0
  %v2993 = vmax.f32 %v2797, 0.0
  %v2994 = vmax.f32 %v2798, 0.0
  %v2995 = vmax.f32 %v2799, 0.0
  %v2996 = vmax.f32 %v2800, 0.0
  %v2997 = vmax.f32 %v2801, 0.0
  %v2998 = vmax.f32 %v2802, 0.0
  %v2999 = vmax.f32 %v2803, 0.0
  %v3000 = vmax.f32 %v2804, 0.0
  %v3001 = vmax.f32 %v2805, 0.0
  %v3002 = vmax.f32 %v2806, 0.0
  %v3003 = vmax.f32 %v2807, 0.0
  %v3004 = vmax.f32 %v2808, 0.0
  %v3005 = vmax.f32 %v2809, 0.0
  %v3006 = vmax.f32 %v2810, 0.0
  %v3007 = vmax.f32 %v2811, 0.0
  %v3008 = vmax.f32 %v2812, 0.0
  %v3009 = vmax.f32 %v2813, 0.0
  %v3010 = vmax.f32 %v2814, 0.0
  %v3011 = vmax.f32 %v2815, 0.0
  %v3012 = vmax.f32 %v2816, 0.0
  %v3013 = vmax.f32 %v2817, 0.0
  %v3014 = vmax.f32 %v2818, 0.0
  %v3015 = vmax.f32 %v2819, 0.0
  %v3016 = vmax.f32 %v2820, 0.0
  %v3017 = vmax.f32 %v2821, 0.0
  %v3018 = vmax.f32 %v2822, 0.0
  %v3019 = vmax.f32 %v2823, 0.0
  %v3020 = vmax.f32 %v2824, 0.0
  %v3021 = vmax.f32 %v2825, 0.0
  %v3022 = vmax.f32 %v2826, 0.0
  %v3023 = vmax.f32 %v2827, 0.0
  %v3024 = vmax.f32 %v2828, 0.0
  %v3025 = vmax.f32 %v2829, 0.0
  %v3026 = vmax.f32 %v2830, 0.0
  %v3027 = vmax.f32 %v2831, 0.0
  %v3028 = vmax.f32 %v2832, 0.0
  %v3029 = vmax.f32 %v2833, 0.0
  %v3030 = vmax.f32 %v2834, 0.0
  %v3031 = vmax.f32 %v2835, 0.0
  %v3032 = vmax.f32 %v2836, 0.0
  %v3033 = vmax.f32 %v2837, 0.0
  %v3034 = vmax.f32 %v2838, 0.0
  %v3035 = vmax.f32 %v2839, 0.0
  %v3036 = vmax.f32 %v2840, 0.0
  %v3037 = vmax.f32 %v2841, 0.0
  %v3038 = vmax.f32 %v2842, 0.0
  %v3039 = vmax.f32 %v2843, 0.0
  %v3040 = vmax.f32 %v2844, 0.0
  %v3041 = vmax.f32 %v2845, 0.0
  %v3042 = vmax.f32 %v2846, 0.0
  %v3043 = vmax.f32 %v2847, 0.0
  %v3044 = vmax.f32 %v2848, 0.0
  %v3045 = vmax.f32 %v2849, 0.0
  %v3046 = vmax.f32 %v2850, 0.0
  %v3047 = vmax.f32 %v2851, 0.0
  %v3048 = vmax.f32 %v2852, 0.0
  %v3049 = vmax.f32 %v2853, 0.0
  %v3050 = vmax.f32 %v2854, 0.0
  %v3051 = vmax.f32 %v2855, 0.0
  %v3052 = vmax.f32 %v2856, 0.0
  %v3053 = vmax.f32 %v2857, 0.0
  %v3054 = vmax.f32 %v2858, 0.0
  %v3055 = vmax.f32 %v2859, 0.0
  %v3056 = vmax.f32 %v2860, 0.0
  %v3057 = vmax.f32 %v2861, 0.0
  %v3058 = vmax.f32 %v2862, 0.0
  %v3059 = vmax.f32 %v2863, 0.0
  %v3060 = vmax.f32 %v2864, 0.0
  %v3061 = vmax.f32 %v2865, 0.0
  %v3062 = vmax.f32 %v2866, 0.0
  %v3063 = vmax.f32 %v2867, 0.0
  %v3064 = vmax.f32 %v2868, 0.0
  %3065 = vst [vmem:[%s4] sm:$0xff] %v2869
  %3066 = vst [vmem:[%s4 + $0x8] sm:$0xff] %v2870
  %3067 = vst [vmem:[%s4 + $0x10] sm:$0xff] %v2871
  %3068 = vst [vmem:[%s4 + $0x18] sm:$0xff] %v2872
  %3069 = vst [vmem:[%s4 + $0x20] sm:$0xff] %v2873
  %3070 = vst [vmem:[%s4 + $0x28] sm:$0xff] %v2874
  %3071 = vst [vmem:[%s4 + $0x30] sm:$0xff] %v2875
  %3072 = vst [vmem:[%s4 + $0x38] sm:$0xff] %v2876
  %3073 = vst [vmem:[%s4 + $0x40] sm:$0xff] %v2877
  %3074 = vst [vmem:[%s4 + $0x48] sm:$0xff] %v2878
  %3075 = vst [vmem:[%s4 + $0x50] sm:$0xff] %v2879
  %3076 = vst [vmem:[%s4 + $0x58] sm:$0xff] %v2880
  %3077 = vst [vmem:[%s4 + $0x60] sm:$0xff] %v2881
  %3078 = vst [vmem:[%s4 + $0x68] sm:$0xff] %v2882
  %3079 = vst [vmem:[%s4 + $0x70] sm:$0xff] %v2883
  %3080 = vst [vmem:[%s4 + $0x78] sm:$0xff] %v2884
  %3081 = vst [vmem:[%s4 + $0x80] sm:$0xff] %v2885
  %3082 = vst [vmem:[%s4 + $0x88] sm:$0xff] %v2886
  %3083 = vst [vmem:[%s4 + $0x90] sm:$0xff] %v2887
  %3084 = vst [vmem:[%s4 + $0x98] sm:$0xff] %v2888
  %3085 = vst [vmem:[%s4 + $0xa0] sm:$0xff] %v2889
  %3086 = vst [vmem:[%s4 + $0xa8] sm:$0xff] %v2890
  %3087 = vst [vmem:[%s4 + $0xb0] sm:$0xff] %v2891
  %3088 = vst [vmem:[%s4 + $0xb8] sm:$0xff] %v2892
  %3089 = vst [vmem:[%s4 + $0xc0] sm:$0xff] %v2893
  %3090 = vst [vmem:[%s4 + $0xc8] sm:$0xff] %v2894
  %3091 = vst [vmem:[%s4 + $0xd0] sm:$0xff] %v2895
  %3092 = vst [vmem:[%s4 + $0xd8] sm:$0xff] %v2896
  %3093 = vst [vmem:[%s4 + $0xe0] sm:$0xff] %v2897
  %3094 = vst [vmem:[%s4 + $0xe8] sm:$0xff] %v2898
  %3095 = vst [vmem:[%s4 + $0xf0] sm:$0xff] %v2899
  %3096 = vst [vmem:[%s4 + $0xf8] sm:$0xff] %v2900
  %3097 = vst [vmem:[%s4 + $0x100] sm:$0xff] %v2901
  %3098 = vst [vmem:[%s4 + $0x108] sm:$0xff] %v2902
  %3099 = vst [vmem:[%s4 + $0x110] sm:$0xff] %v2903
  %3100 = vst [vmem:[%s4 + $0x118] sm:$0xff] %v2904
  %3101 = vst [vmem:[%s4 + $0x120] sm:$0xff] %v2905
  %3102 = vst [vmem:[%s4 + $0x128] sm:$0xff] %v2906
  %3103 = vst [vmem:[%s4 + $0x130] sm:$0xff] %v2907
  %3104 = vst [vmem:[%s4 + $0x138] sm:$0xff] %v2908
  %3105 = vst [vmem:[%s4 + $0x140] sm:$0xff] %v2909
  %3106 = vst [vmem:[%s4 + $0x148] sm:$0xff] %v2910
  %3107 = vst [vmem:[%s4 + $0x150] sm:$0xff] %v2911
  %3108 = vst [vmem:[%s4 + $0x158] sm:$0xff] %v2912
  %3109 = vst [vmem:[%s4 + $0x160] sm:$0xff] %v2913
  %3110 = vst [vmem:[%s4 + $0x168] sm:$0xff] %v2914
  %3111 = vst [vmem:[%s4 + $0x170] sm:$0xff] %v2915
  %3112 = vst [vmem:[%s4 + $0x178] sm:$0xff] %v2916
  %3113 = vst [vmem:[%s4 + $0x180] sm:$0xff] %v2917
  %3114 = vst [vmem:[%s4 + $0x188] sm:$0xff] %v2918
  %3115 = vst [vmem:[%s4 + $0x190] sm:$0xff] %v2919
  %3116 = vst [vmem:[%s4 + $0x198] sm:$0xff] %v2920
  %3117 = vst [vmem:[%s4 + $0x1a0] sm:$0xff] %v2921
  %3118 = vst [vmem:[%s4 + $0x1a8] sm:$0xff] %v2922
  %3119 = vst [vmem:[%s4 + $0x1b0] sm:$0xff] %v2923
  %3120 = vst [vmem:[%s4 + $0x1b8] sm:$0xff] %v2924
  %3121 = vst [vmem:[%s4 + $0x1c0] sm:$0xff] %v2925
  %3122 = vst [vmem:[%s4 + $0x1c8] sm:$0xff] %v2926
  %3123 = vst [vmem:[%s4 + $0x1d0] sm:$0xff] %v2927
  %3124 = vst [vmem:[%s4 + $0x1d8] sm:$0xff] %v2928
  %3125 = vst [vmem:[%s4 + $0x1e0] sm:$0xff] %v2929
  %3126 = vst [vmem:[%s4 + $0x1e8] sm:$0xff] %v2930
  %3127 = vst [vmem:[%s4 + $0x1f0] sm:$0xff] %v2931
  %3128 = vst [vmem:[%s4 + $0x1f8] sm:$0xff] %v2932
  %3129 = vst [vmem:[%s4 + $0x200] sm:$0xff] %v2933
  %3130 = vst [vmem:[%s4 + $0x208] sm:$0xff] %v2934
  %3131 = vst [vmem:[%s4 + $0x210] sm:$0xff] %v2935
  %3132 = vst [vmem:[%s4 + $0x218] sm:$0xff] %v2936
  %3133 = vst [vmem:[%s4 + $0x220] sm:$0xff] %v2937
  %3134 = vst [vmem:[%s4 + $0x228] sm:$0xff] %v2938
  %3135 = vst [vmem:[%s4 + $0x230] sm:$0xff] %v2939
  %3136 = vst [vmem:[%s4 + $0x238] sm:$0xff] %v2940
  %3137 = vst [vmem:[%s4 + $0x240] sm:$0xff] %v2941
  %3138 = vst [vmem:[%s4 + $0x248] sm:$0xff] %v2942
  %3139 = vst [vmem:[%s4 + $0x250] sm:$0xff] %v2943
  %3140 = vst [vmem:[%s4 + $0x258] sm:$0xff] %v2944
  %3141 = vst [vmem:[%s4 + $0x260] sm:$0xff] %v2945
  %3142 = vst [vmem:[%s4 + $0x268] sm:$0xff] %v2946
  %3143 = vst [vmem:[%s4 + $0x270] sm:$0xff] %v2947
  %3144 = vst [vmem:[%s4 + $0x278] sm:$0xff] %v2948
  %3145 = vst [vmem:[%s4 + $0x280] sm:$0xff] %v2949
  %3146 = vst [vmem:[%s4 + $0x288] sm:$0xff] %v2950
  %3147 = vst [vmem:[%s4 + $0x290] sm:$0xff] %v2951
  %3148 = vst [vmem:[%s4 + $0x298] sm:$0xff] %v2952
  %3149 = vst [vmem:[%s4 + $0x2a0] sm:$0xff] %v2953
  %3150 = vst [vmem:[%s4 + $0x2a8] sm:$0xff] %v2954
  %3151 = vst [vmem:[%s4 + $0x2b0] sm:$0xff] %v2955
  %3152 = vst [vmem:[%s4 + $0x2b8] sm:$0xff] %v2956
  %3153 = vst [vmem:[%s4 + $0x2c0] sm:$0xff] %v2957
  %3154 = vst [vmem:[%s4 + $0x2c8] sm:$0xff] %v2958
  %3155 = vst [vmem:[%s4 + $0x2d0] sm:$0xff] %v2959
  %3156 = vst [vmem:[%s4 + $0x2d8] sm:$0xff] %v2960
  %3157 = vst [vmem:[%s4 + $0x2e0] sm:$0xff] %v2961
  %3158 = vst [vmem:[%s4 + $0x2e8] sm:$0xff] %v2962
  %3159 = vst [vmem:[%s4 + $0x2f0] sm:$0xff] %v2963
  %3160 = vst [vmem:[%s4 + $0x2f8] sm:$0xff] %v2964
  %3161 = vst [vmem:[%s4 + $0x300] sm:$0xff] %v2965
  %3162 = vst [vmem:[%s4 + $0x308] sm:$0xff] %v2966
  %3163 = vst [vmem:[%s4 + $0x310] sm:$0xff] %v2967
  %3164 = vst [vmem:[%s4 + $0x318] sm:$0xff] %v2968
  %3165 = vst [vmem:[%s4 + $0x320] sm:$0xff] %v2969
  %3166 = vst [vmem:[%s4 + $0x328] sm:$0xff] %v2970
  %3167 = vst [vmem:[%s4 + $0x330] sm:$0xff] %v2971
  %3168 = vst [vmem:[%s4 + $0x338] sm:$0xff] %v2972
  %3169 = vst [vmem:[%s4 + $0x340] sm:$0xff] %v2973
  %3170 = vst [vmem:[%s4 + $0x348] sm:$0xff] %v2974
  %3171 = vst [vmem:[%s4 + $0x350] sm:$0xff] %v2975
  %3172 = vst [vmem:[%s4 + $0x358] sm:$0xff] %v2976
  %3173 = vst [vmem:[%s4 + $0x360] sm:$0xff] %v2977
  %3174 = vst [vmem:[%s4 + $0x368] sm:$0xff] %v2978
  %3175 = vst [vmem:[%s4 + $0x370] sm:$0xff] %v2979
  %3176 = vst [vmem:[%s4 + $0x378] sm:$0xff] %v2980
  %3177 = vst [vmem:[%s4 + $0x380] sm:$0xff] %v2981
  %3178 = vst [vmem:[%s4 + $0x388] sm:$0xff] %v2982
  %3179 = vst [vmem:[%s4 + $0x390] sm:$0xff] %v2983
  %3180 = vst [vmem:[%s4 + $0x398] sm:$0xff] %v2984
  %3181 = vst [vmem:[%s4 + $0x3a0] sm:$0xff] %v2985
  %3182 = vst [vmem:[%s4 + $0x3a8] sm:$0xff] %v2986
  %3183 = vst [vmem:[%s4 + $0x3b0] sm:$0xff] %v2987
  %3184 = vst [vmem:[%s4 + $0x3b8] sm:$0xff] %v2988
  %3185 = vst [vmem:[%s4 + $0x3c0] sm:$0xff] %v2989
  %3186 = vst [vmem:[%s4 + $0x3c8] sm:$0xff] %v2990
  %3187 = vst [vmem:[%s4 + $0x3d0] sm:$0xff] %v2991
  %3188 = vst [vmem:[%s4 + $0x3d8] sm:$0xff] %v2992
  %3189 = vst [vmem:[%s4 + $0x3e0] sm:$0xff] %v2993
  %3190 = vst [vmem:[%s4 + $0x3e8] sm:$0xff] %v2994
  %3191 = vst [vmem:[%s4 + $0x3f0] sm:$0xff] %v2995
  %3192 = vst [vmem:[%s4 + $0x3f8] sm:$0xff] %v2996
  %3193 = vst [vmem:[%s4 + $0x400] sm:$0xff] %v2997
  %3194 = vst [vmem:[%s4 + $0x408] sm:$0xff] %v2998
  %3195 = vst [vmem:[%s4 + $0x410] sm:$0xff] %v2999
  %3196 = vst [vmem:[%s4 + $0x418] sm:$0xff] %v3000
  %3197 = vst [vmem:[%s4 + $0x420] sm:$0xff] %v3001
  %3198 = vst [vmem:[%s4 + $0x428] sm:$0xff] %v3002
  %3199 = vst [vmem:[%s4 + $0x430] sm:$0xff] %v3003
  %3200 = vst [vmem:[%s4 + $0x438] sm:$0xff] %v3004
  %3201 = vst [vmem:[%s4 + $0x440] sm:$0xff] %v3005
  %3202 = vst [vmem:[%s4 + $0x448] sm:$0xff] %v3006
  %3203 = vst [vmem:[%s4 + $0x450] sm:$0xff] %v3007
  %3204 = vst [vmem:[%s4 + $0x458] sm:$0xff] %v3008
  %3205 = vst [vmem:[%s4 + $0x460] sm:$0xff] %v3009
  %3206 = vst [vmem:[%s4 + $0x468] sm:$0xff] %v3010
  %3207 = vst [vmem:[%s4 + $0x470] sm:$0xff] %v3011
  %3208 = vst [vmem:[%s4 + $0x478] sm:$0xff] %v3012
  %3209 = vst [vmem:[%s4 + $0x480] sm:$0xff] %v3013
  %3210 = vst [vmem:[%s4 + $0x488] sm:$0xff] %v3014
  %3211 = vst [vmem:[%s4 + $0x490] sm:$0xff] %v3015
  %3212 = vst [vmem:[%s4 + $0x498] sm:$0xff] %v3016
  %3213 = vst [vmem:[%s4 + $0x4a0] sm:$0xff] %v3017
  %3214 = vst [vmem:[%s4 + $0x4a8] sm:$0xff] %v3018
  %3215 = vst [vmem:[%s4 + $0x4b0] sm:$0xff] %v3019
  %3216 = vst [vmem:[%s4 + $0x4b8] sm:$0xff] %v3020
  %3217 = vst [vmem:[%s4 + $0x4c0] sm:$0xff] %v3021
  %3218 = vst [vmem:[%s4 + $0x4c8] sm:$0xff] %v3022
  %3219 = vst [vmem:[%s4 + $0x4d0] sm:$0xff] %v3023
  %3220 = vst [vmem:[%s4 + $0x4d8] sm:$0xff] %v3024
  %3221 = vst [vmem:[%s4 + $0x4e0] sm:$0xff] %v3025
  %3222 = vst [vmem:[%s4 + $0x4e8] sm:$0xff] %v3026
  %3223 = vst [vmem:[%s4 + $0x4f0] sm:$0xff] %v3027
  %3224 = vst [vmem:[%s4 + $0x4f8] sm:$0xff] %v3028
  %3225 = vst [vmem:[%s4 + $0x500] sm:$0xff] %v3029
  %3226 = vst [vmem:[%s4 + $0x508] sm:$0xff] %v3030
  %3227 = vst [vmem:[%s4 + $0x510] sm:$0xff] %v3031
  %3228 = vst [vmem:[%s4 + $0x518] sm:$0xff] %v3032
  %3229 = vst [vmem:[%s4 + $0x520] sm:$0xff] %v3033
  %3230 = vst [vmem:[%s4 + $0x528] sm:$0xff] %v3034
  %3231 = vst [vmem:[%s4 + $0x530] sm:$0xff] %v3035
  %3232 = vst [vmem:[%s4 + $0x538] sm:$0xff] %v3036
  %3233 = vst [vmem:[%s4 + $0x540] sm:$0xff] %v3037
  %3234 = vst [vmem:[%s4 + $0x548] sm:$0xff] %v3038
  %3235 = vst [vmem:[%s4 + $0x550] sm:$0xff] %v3039
  %3236 = vst [vmem:[%s4 + $0x558] sm:$0xff] %v3040
  %3237 = vst [vmem:[%s4 + $0x560] sm:$0xff] %v3041
  %3238 = vst [vmem:[%s4 + $0x568] sm:$0xff] %v3042
  %3239 = vst [vmem:[%s4 + $0x570] sm:$0xff] %v3043
  %3240 = vst [vmem:[%s4 + $0x578] sm:$0xff] %v3044
  %3241 = vst [vmem:[%s4 + $0x580] sm:$0xff] %v3045
  %3242 = vst [vmem:[%s4 + $0x588] sm:$0xff] %v3046
  %3243 = vst [vmem:[%s4 + $0x590] sm:$0xff] %v3047
  %3244 = vst [vmem:[%s4 + $0x598] sm:$0xff] %v3048
  %3245 = vst [vmem:[%s4 + $0x5a0] sm:$0xff] %v3049
  %3246 = vst [vmem:[%s4 + $0x5a8] sm:$0xff] %v3050
  %3247 = vst [vmem:[%s4 + $0x5b0] sm:$0xff] %v3051
  %3248 = vst [vmem:[%s4 + $0x5b8] sm:$0xff] %v3052
  %3249 = vst [vmem:[%s4 + $0x5c0] sm:$0xff] %v3053
  %3250 = vst [vmem:[%s4 + $0x5c8] sm:$0xff] %v3054
  %3251 = vst [vmem:[%s4 + $0x5d0] sm:$0xff] %v3055
  %3252 = vst [vmem:[%s4 + $0x5d8] sm:$0xff] %v3056
  %3253 = vst [vmem:[%s4 + $0x5e0] sm:$0xff] %v3057
  %3254 = vst [vmem:[%s4 + $0x5e8] sm:$0xff] %v3058
  %3255 = vst [vmem:[%s4 + $0x5f0] sm:$0xff] %v3059
  %3256 = vst [vmem:[%s4 + $0x5f8] sm:$0xff] %v3060
  %3257 = vst [vmem:[%s4 + $0x600] sm:$0xff] %v3061
  %3258 = vst [vmem:[%s4 + $0x608] sm:$0xff] %v3062
  %3259 = vst [vmem:[%s4 + $0x610] sm:$0xff] %v3063
  %3260 = vst [vmem:[%s4 + $0x618] sm:$0xff] %v3064
  // Predicated region
  $region18: #{net22_3_forward.4} parent=0 // pred_check
    _
  $region19: #{net22_3_forward.4} parent=0 // pred_check_branch
    %3262 = sbr.rel (0) target = $region21
  $region20: #{net22_3_forward.4} parent=0 // pred_region
    _
  $region21: #{net22_3_forward.4} parent=0 // pred_fallthru
    _
  // Predicated region
  $region22: #{net22_3_forward.4} parent=0 // pred_check
    _
  $region23: #{net22_3_forward.4} parent=0 // pred_check_branch
    %3264 = sbr.rel (0) target = $region25
  $region24: #{net22_3_forward.4} parent=0 // pred_region
    _
  $region25: #{net22_3_forward.4} parent=0 // pred_fallthru
    _

// kernel: net22_3_forward.5
$region0: #{net22_3_forward.5}
  #allocation0 [shape = 'u32[]', space=smem, size = 0x4, offset = 0x4, fixed_abs, tag = 'smem constant byte address 0x4 - core index']
  #allocation1 [shape = 'u32[144,128]{1,0:T(1,128)}', space=vmem, size = 0x12000, scoped, tag = 'internal scratch']
  %s0 = inlined_call_operand.vmem [shape: f32[2,12544], index: 0, kind: input, shape index: {}]
  %s1 = inlined_call_operand.vmem [shape: f32[12544,16], index: 1, kind: input, shape index: {}]
  %s2 = inlined_call_operand.vmem [shape: f32[1,16], index: 2, kind: input, shape index: {}]
  %s3 = inlined_call_operand.vmem [shape: f32[16,128], index: 3, kind: input, shape index: {}]
  %s4 = inlined_call_operand.vmem [shape: f32[1,128], index: 4, kind: input, shape index: {}]
  %s5 = inlined_call_operand.hbm [shape: f32[2,128], index: 5, kind: output, shape index: {}]
  %s6 = sld [smem:[#allocation0]]
  $region30: #{net22_3_forward.5} parent=0
    _
  %s8 = ssub.s32 1, %s6
  %s9 = scalar_select 0, %s8, %s6
  $region1: #{net22_3_forward.5} parent=0
    #allocation2 [shape = 'u8[1024]{0}', space=vmem, size = 0x400, scoped, tag = 'output window, operand 0, single buffered']
    #allocation3 [shape = 's32[1]{0}', space=sflag, size = 0x4, scoped, tag = 'scoped memory for net22_3_forward.5']
    %10 = vsyncpa [#allocation3], 0
    // Predicated region
    $region2: #{net22_3_forward.5} parent=1 // pred_check
      _
    $region3: #{net22_3_forward.5} parent=1 // pred_check_branch
      %12 = sbr.rel (0) target = $region5
    $region4: #{net22_3_forward.5} parent=1 // pred_region
      _
    $region5: #{net22_3_forward.5} parent=1 // pred_fallthru
      _
    // Predicated region
    $region6: #{net22_3_forward.5} parent=1 // pred_check
      _
    $region7: #{net22_3_forward.5} parent=1 // pred_check_branch
      %14 = sbr.rel (0) target = $region9
    $region8: #{net22_3_forward.5} parent=1 // pred_region
      _
    $region9: #{net22_3_forward.5} parent=1 // pred_fallthru
      _
    // Predicated region
    $region10: #{net22_3_forward.5} parent=1 // pred_check
      _
    $region11: #{net22_3_forward.5} parent=1 // pred_check_branch
      %16 = sbr.rel (0) target = $region13
    $region12: #{net22_3_forward.5} parent=1 // pred_region
      _
    $region13: #{net22_3_forward.5} parent=1 // pred_fallthru
      _
    // Predicated region
    $region14: #{net22_3_forward.5} parent=1 // pred_check
      _
    $region15: #{net22_3_forward.5} parent=1 // pred_check_branch
      %18 = sbr.rel (0) target = $region17
    $region16: #{net22_3_forward.5} parent=1 // pred_region
      _
    $region17: #{net22_3_forward.5} parent=1 // pred_fallthru
      _
    // Predicated region
    $region18: #{net22_3_forward.5} parent=1 // pred_check
      _
    $region19: #{net22_3_forward.5} parent=1 // pred_check_branch
      %20 = sbr.rel (0) target = $region21
    $region20: #{net22_3_forward.5} parent=1 // pred_region
      _
    $region21: #{net22_3_forward.5} parent=1 // pred_fallthru
      _
    %v21 = vld [vmem:[%s0] sm:$0xff]
    %v22 = vld [vmem:[%s0 + $0x8] sm:$0xff]
    %v23 = vld [vmem:[%s0 + $0x10] sm:$0xff]
    %v24 = vld [vmem:[%s0 + $0x18] sm:$0xff]
    %v25 = vld [vmem:[%s0 + $0x20] sm:$0xff]
    %v26 = vld [vmem:[%s0 + $0x28] sm:$0xff]
    %v27 = vld [vmem:[%s0 + $0x30] sm:$0xff]
    %v28 = vld [vmem:[%s0 + $0x38] sm:$0xff]
    %v29 = vld [vmem:[%s0 + $0x40] sm:$0xff]
    %v30 = vld [vmem:[%s0 + $0x48] sm:$0xff]
    %v31 = vld [vmem:[%s0 + $0x50] sm:$0xff]
    %v32 = vld [vmem:[%s0 + $0x58] sm:$0xff]
    %v33 = vld [vmem:[%s0 + $0x60] sm:$0xff]
    %v34 = vld [vmem:[%s0 + $0x68] sm:$0xff]
    %v35 = vld [vmem:[%s0 + $0x70] sm:$0xff]
    %v36 = vld [vmem:[%s0 + $0x78] sm:$0xff]
    %v37 = vld [vmem:[%s0 + $0x80] sm:$0xff]
    %v38 = vld [vmem:[%s0 + $0x88] sm:$0xff]
    %v39 = vld [vmem:[%s0 + $0x90] sm:$0xff]
    %v40 = vld [vmem:[%s0 + $0x98] sm:$0xff]
    %v41 = vld [vmem:[%s0 + $0xa0] sm:$0xff]
    %v42 = vld [vmem:[%s0 + $0xa8] sm:$0xff]
    %v43 = vld [vmem:[%s0 + $0xb0] sm:$0xff]
    %v44 = vld [vmem:[%s0 + $0xb8] sm:$0xff]
    %v45 = vld [vmem:[%s0 + $0xc0] sm:$0xf]
    %v46 = vld [vmem:[%s1] sm:$0xff]
    %v47 = vld [vmem:[%s1 + $0x8] sm:$0xff]
    %v48 = vld [vmem:[%s1 + $0x10] sm:$0xff]
    %v49 = vld [vmem:[%s1 + $0x18] sm:$0xff]
    %v50 = vld [vmem:[%s1 + $0x20] sm:$0xff]
    %v51 = vld [vmem:[%s1 + $0x28] sm:$0xff]
    %v52 = vld [vmem:[%s1 + $0x30] sm:$0xff]
    %v53 = vld [vmem:[%s1 + $0x38] sm:$0xff]
    %v54 = vld [vmem:[%s1 + $0x40] sm:$0xff]
    %v55 = vld [vmem:[%s1 + $0x48] sm:$0xff]
    %v56 = vld [vmem:[%s1 + $0x50] sm:$0xff]
    %v57 = vld [vmem:[%s1 + $0x58] sm:$0xff]
    %v58 = vld [vmem:[%s1 + $0x60] sm:$0xff]
    %v59 = vld [vmem:[%s1 + $0x68] sm:$0xff]
    %v60 = vld [vmem:[%s1 + $0x70] sm:$0xff]
    %v61 = vld [vmem:[%s1 + $0x78] sm:$0xff]
    %v62 = vld [vmem:[%s1 + $0x80] sm:$0xff]
    %v63 = vld [vmem:[%s1 + $0x88] sm:$0xff]
    %v64 = vld [vmem:[%s1 + $0x90] sm:$0xff]
    %v65 = vld [vmem:[%s1 + $0x98] sm:$0xff]
    %v66 = vld [vmem:[%s1 + $0xa0] sm:$0xff]
    %v67 = vld [vmem:[%s1 + $0xa8] sm:$0xff]
    %v68 = vld [vmem:[%s1 + $0xb0] sm:$0xff]
    %v69 = vld [vmem:[%s1 + $0xb8] sm:$0xff]
    %v70 = vld [vmem:[%s1 + $0xc0] sm:$0xff]
    %v71 = vld [vmem:[%s1 + $0xc8] sm:$0xff]
    %v72 = vld [vmem:[%s1 + $0xd0] sm:$0xff]
    %v73 = vld [vmem:[%s1 + $0xd8] sm:$0xff]
    %v74 = vld [vmem:[%s1 + $0xe0] sm:$0xff]
    %v75 = vld [vmem:[%s1 + $0xe8] sm:$0xff]
    %v76 = vld [vmem:[%s1 + $0xf0] sm:$0xff]
    %v77 = vld [vmem:[%s1 + $0xf8] sm:$0xff]
    %v78 = vld [vmem:[%s1 + $0x100] sm:$0xff]
    %v79 = vld [vmem:[%s1 + $0x108] sm:$0xff]
    %v80 = vld [vmem:[%s1 + $0x110] sm:$0xff]
    %v81 = vld [vmem:[%s1 + $0x118] sm:$0xff]
    %v82 = vld [vmem:[%s1 + $0x120] sm:$0xff]
    %v83 = vld [vmem:[%s1 + $0x128] sm:$0xff]
    %v84 = vld [vmem:[%s1 + $0x130] sm:$0xff]
    %v85 = vld [vmem:[%s1 + $0x138] sm:$0xff]
    %v86 = vld [vmem:[%s1 + $0x140] sm:$0xff]
    %v87 = vld [vmem:[%s1 + $0x148] sm:$0xff]
    %v88 = vld [vmem:[%s1 + $0x150] sm:$0xff]
    %v89 = vld [vmem:[%s1 + $0x158] sm:$0xff]
    %v90 = vld [vmem:[%s1 + $0x160] sm:$0xff]
    %v91 = vld [vmem:[%s1 + $0x168] sm:$0xff]
    %v92 = vld [vmem:[%s1 + $0x170] sm:$0xff]
    %v93 = vld [vmem:[%s1 + $0x178] sm:$0xff]
    %v94 = vld [vmem:[%s1 + $0x180] sm:$0xff]
    %v95 = vld [vmem:[%s1 + $0x188] sm:$0xff]
    %v96 = vld [vmem:[%s1 + $0x190] sm:$0xff]
    %v97 = vld [vmem:[%s1 + $0x198] sm:$0xff]
    %v98 = vld [vmem:[%s1 + $0x1a0] sm:$0xff]
    %v99 = vld [vmem:[%s1 + $0x1a8] sm:$0xff]
    %v100 = vld [vmem:[%s1 + $0x1b0] sm:$0xff]
    %v101 = vld [vmem:[%s1 + $0x1b8] sm:$0xff]
    %v102 = vld [vmem:[%s1 + $0x1c0] sm:$0xff]
    %v103 = vld [vmem:[%s1 + $0x1c8] sm:$0xff]
    %v104 = vld [vmem:[%s1 + $0x1d0] sm:$0xff]
    %v105 = vld [vmem:[%s1 + $0x1d8] sm:$0xff]
    %v106 = vld [vmem:[%s1 + $0x1e0] sm:$0xff]
    %v107 = vld [vmem:[%s1 + $0x1e8] sm:$0xff]
    %v108 = vld [vmem:[%s1 + $0x1f0] sm:$0xff]
    %v109 = vld [vmem:[%s1 + $0x1f8] sm:$0xff]
    %v110 = vld [vmem:[%s1 + $0x200] sm:$0xff]
    %v111 = vld [vmem:[%s1 + $0x208] sm:$0xff]
    %v112 = vld [vmem:[%s1 + $0x210] sm:$0xff]
    %v113 = vld [vmem:[%s1 + $0x218] sm:$0xff]
    %v114 = vld [vmem:[%s1 + $0x220] sm:$0xff]
    %v115 = vld [vmem:[%s1 + $0x228] sm:$0xff]
    %v116 = vld [vmem:[%s1 + $0x230] sm:$0xff]
    %v117 = vld [vmem:[%s1 + $0x238] sm:$0xff]
    %v118 = vld [vmem:[%s1 + $0x240] sm:$0xff]
    %v119 = vld [vmem:[%s1 + $0x248] sm:$0xff]
    %v120 = vld [vmem:[%s1 + $0x250] sm:$0xff]
    %v121 = vld [vmem:[%s1 + $0x258] sm:$0xff]
    %v122 = vld [vmem:[%s1 + $0x260] sm:$0xff]
    %v123 = vld [vmem:[%s1 + $0x268] sm:$0xff]
    %v124 = vld [vmem:[%s1 + $0x270] sm:$0xff]
    %v125 = vld [vmem:[%s1 + $0x278] sm:$0xff]
    %v126 = vld [vmem:[%s1 + $0x280] sm:$0xff]
    %v127 = vld [vmem:[%s1 + $0x288] sm:$0xff]
    %v128 = vld [vmem:[%s1 + $0x290] sm:$0xff]
    %v129 = vld [vmem:[%s1 + $0x298] sm:$0xff]
    %v130 = vld [vmem:[%s1 + $0x2a0] sm:$0xff]
    %v131 = vld [vmem:[%s1 + $0x2a8] sm:$0xff]
    %v132 = vld [vmem:[%s1 + $0x2b0] sm:$0xff]
    %v133 = vld [vmem:[%s1 + $0x2b8] sm:$0xff]
    %v134 = vld [vmem:[%s1 + $0x2c0] sm:$0xff]
    %v135 = vld [vmem:[%s1 + $0x2c8] sm:$0xff]
    %v136 = vld [vmem:[%s1 + $0x2d0] sm:$0xff]
    %v137 = vld [vmem:[%s1 + $0x2d8] sm:$0xff]
    %v138 = vld [vmem:[%s1 + $0x2e0] sm:$0xff]
    %v139 = vld [vmem:[%s1 + $0x2e8] sm:$0xff]
    %v140 = vld [vmem:[%s1 + $0x2f0] sm:$0xff]
    %v141 = vld [vmem:[%s1 + $0x2f8] sm:$0xff]
    %v142 = vld [vmem:[%s1 + $0x300] sm:$0xff]
    %v143 = vld [vmem:[%s1 + $0x308] sm:$0xff]
    %v144 = vld [vmem:[%s1 + $0x310] sm:$0xff]
    %v145 = vld [vmem:[%s1 + $0x318] sm:$0xff]
    %v146 = vld [vmem:[%s1 + $0x320] sm:$0xff]
    %v147 = vld [vmem:[%s1 + $0x328] sm:$0xff]
    %v148 = vld [vmem:[%s1 + $0x330] sm:$0xff]
    %v149 = vld [vmem:[%s1 + $0x338] sm:$0xff]
    %v150 = vld [vmem:[%s1 + $0x340] sm:$0xff]
    %v151 = vld [vmem:[%s1 + $0x348] sm:$0xff]
    %v152 = vld [vmem:[%s1 + $0x350] sm:$0xff]
    %v153 = vld [vmem:[%s1 + $0x358] sm:$0xff]
    %v154 = vld [vmem:[%s1 + $0x360] sm:$0xff]
    %v155 = vld [vmem:[%s1 + $0x368] sm:$0xff]
    %v156 = vld [vmem:[%s1 + $0x370] sm:$0xff]
    %v157 = vld [vmem:[%s1 + $0x378] sm:$0xff]
    %v158 = vld [vmem:[%s1 + $0x380] sm:$0xff]
    %v159 = vld [vmem:[%s1 + $0x388] sm:$0xff]
    %v160 = vld [vmem:[%s1 + $0x390] sm:$0xff]
    %v161 = vld [vmem:[%s1 + $0x398] sm:$0xff]
    %v162 = vld [vmem:[%s1 + $0x3a0] sm:$0xff]
    %v163 = vld [vmem:[%s1 + $0x3a8] sm:$0xff]
    %v164 = vld [vmem:[%s1 + $0x3b0] sm:$0xff]
    %v165 = vld [vmem:[%s1 + $0x3b8] sm:$0xff]
    %v166 = vld [vmem:[%s1 + $0x3c0] sm:$0xff]
    %v167 = vld [vmem:[%s1 + $0x3c8] sm:$0xff]
    %v168 = vld [vmem:[%s1 + $0x3d0] sm:$0xff]
    %v169 = vld [vmem:[%s1 + $0x3d8] sm:$0xff]
    %v170 = vld [vmem:[%s1 + $0x3e0] sm:$0xff]
    %v171 = vld [vmem:[%s1 + $0x3e8] sm:$0xff]
    %v172 = vld [vmem:[%s1 + $0x3f0] sm:$0xff]
    %v173 = vld [vmem:[%s1 + $0x3f8] sm:$0xff]
    %v174 = vld [vmem:[%s1 + $0x400] sm:$0xff]
    %v175 = vld [vmem:[%s1 + $0x408] sm:$0xff]
    %v176 = vld [vmem:[%s1 + $0x410] sm:$0xff]
    %v177 = vld [vmem:[%s1 + $0x418] sm:$0xff]
    %v178 = vld [vmem:[%s1 + $0x420] sm:$0xff]
    %v179 = vld [vmem:[%s1 + $0x428] sm:$0xff]
    %v180 = vld [vmem:[%s1 + $0x430] sm:$0xff]
    %v181 = vld [vmem:[%s1 + $0x438] sm:$0xff]
    %v182 = vld [vmem:[%s1 + $0x440] sm:$0xff]
    %v183 = vld [vmem:[%s1 + $0x448] sm:$0xff]
    %v184 = vld [vmem:[%s1 + $0x450] sm:$0xff]
    %v185 = vld [vmem:[%s1 + $0x458] sm:$0xff]
    %v186 = vld [vmem:[%s1 + $0x460] sm:$0xff]
    %v187 = vld [vmem:[%s1 + $0x468] sm:$0xff]
    %v188 = vld [vmem:[%s1 + $0x470] sm:$0xff]
    %v189 = vld [vmem:[%s1 + $0x478] sm:$0xff]
    %v190 = vld [vmem:[%s1 + $0x480] sm:$0xff]
    %v191 = vld [vmem:[%s1 + $0x488] sm:$0xff]
    %v192 = vld [vmem:[%s1 + $0x490] sm:$0xff]
    %v193 = vld [vmem:[%s1 + $0x498] sm:$0xff]
    %v194 = vld [vmem:[%s1 + $0x4a0] sm:$0xff]
    %v195 = vld [vmem:[%s1 + $0x4a8] sm:$0xff]
    %v196 = vld [vmem:[%s1 + $0x4b0] sm:$0xff]
    %v197 = vld [vmem:[%s1 + $0x4b8] sm:$0xff]
    %v198 = vld [vmem:[%s1 + $0x4c0] sm:$0xff]
    %v199 = vld [vmem:[%s1 + $0x4c8] sm:$0xff]
    %v200 = vld [vmem:[%s1 + $0x4d0] sm:$0xff]
    %v201 = vld [vmem:[%s1 + $0x4d8] sm:$0xff]
    %v202 = vld [vmem:[%s1 + $0x4e0] sm:$0xff]
    %v203 = vld [vmem:[%s1 + $0x4e8] sm:$0xff]
    %v204 = vld [vmem:[%s1 + $0x4f0] sm:$0xff]
    %v205 = vld [vmem:[%s1 + $0x4f8] sm:$0xff]
    %v206 = vld [vmem:[%s1 + $0x500] sm:$0xff]
    %v207 = vld [vmem:[%s1 + $0x508] sm:$0xff]
    %v208 = vld [vmem:[%s1 + $0x510] sm:$0xff]
    %v209 = vld [vmem:[%s1 + $0x518] sm:$0xff]
    %v210 = vld [vmem:[%s1 + $0x520] sm:$0xff]
    %v211 = vld [vmem:[%s1 + $0x528] sm:$0xff]
    %v212 = vld [vmem:[%s1 + $0x530] sm:$0xff]
    %v213 = vld [vmem:[%s1 + $0x538] sm:$0xff]
    %v214 = vld [vmem:[%s1 + $0x540] sm:$0xff]
    %v215 = vld [vmem:[%s1 + $0x548] sm:$0xff]
    %v216 = vld [vmem:[%s1 + $0x550] sm:$0xff]
    %v217 = vld [vmem:[%s1 + $0x558] sm:$0xff]
    %v218 = vld [vmem:[%s1 + $0x560] sm:$0xff]
    %v219 = vld [vmem:[%s1 + $0x568] sm:$0xff]
    %v220 = vld [vmem:[%s1 + $0x570] sm:$0xff]
    %v221 = vld [vmem:[%s1 + $0x578] sm:$0xff]
    %v222 = vld [vmem:[%s1 + $0x580] sm:$0xff]
    %v223 = vld [vmem:[%s1 + $0x588] sm:$0xff]
    %v224 = vld [vmem:[%s1 + $0x590] sm:$0xff]
    %v225 = vld [vmem:[%s1 + $0x598] sm:$0xff]
    %v226 = vld [vmem:[%s1 + $0x5a0] sm:$0xff]
    %v227 = vld [vmem:[%s1 + $0x5a8] sm:$0xff]
    %v228 = vld [vmem:[%s1 + $0x5b0] sm:$0xff]
    %v229 = vld [vmem:[%s1 + $0x5b8] sm:$0xff]
    %v230 = vld [vmem:[%s1 + $0x5c0] sm:$0xff]
    %v231 = vld [vmem:[%s1 + $0x5c8] sm:$0xff]
    %v232 = vld [vmem:[%s1 + $0x5d0] sm:$0xff]
    %v233 = vld [vmem:[%s1 + $0x5d8] sm:$0xff]
    %v234 = vld [vmem:[%s1 + $0x5e0] sm:$0xff]
    %v235 = vld [vmem:[%s1 + $0x5e8] sm:$0xff]
    %v236 = vld [vmem:[%s1 + $0x5f0] sm:$0xff]
    %v237 = vld [vmem:[%s1 + $0x5f8] sm:$0xff]
    %v238 = vld [vmem:[%s1 + $0x600] sm:$0xff]
    %v239 = vld [vmem:[%s1 + $0x608] sm:$0xff]
    %v240 = vld [vmem:[%s1 + $0x610] sm:$0xff]
    %v241 = vld [vmem:[%s1 + $0x618] sm:$0xff]
    %v242 = vld [vmem:[%s1 + $0x620] sm:$0xff]
    %v243 = vld [vmem:[%s1 + $0x628] sm:$0xff]
    %v244 = vld [vmem:[%s1 + $0x630] sm:$0xff]
    %v245 = vld [vmem:[%s1 + $0x638] sm:$0xff]
    %v246 = vld [vmem:[%s1 + $0x640] sm:$0xff]
    %v247 = vld [vmem:[%s1 + $0x648] sm:$0xff]
    %v248 = vld [vmem:[%s1 + $0x650] sm:$0xff]
    %v249 = vld [vmem:[%s1 + $0x658] sm:$0xff]
    %v250 = vld [vmem:[%s1 + $0x660] sm:$0xff]
    %v251 = vld [vmem:[%s1 + $0x668] sm:$0xff]
    %v252 = vld [vmem:[%s1 + $0x670] sm:$0xff]
    %v253 = vld [vmem:[%s1 + $0x678] sm:$0xff]
    %v254 = vld [vmem:[%s1 + $0x680] sm:$0xff]
    %v255 = vld [vmem:[%s1 + $0x688] sm:$0xff]
    %v256 = vld [vmem:[%s1 + $0x690] sm:$0xff]
    %v257 = vld [vmem:[%s1 + $0x698] sm:$0xff]
    %v258 = vld [vmem:[%s1 + $0x6a0] sm:$0xff]
    %v259 = vld [vmem:[%s1 + $0x6a8] sm:$0xff]
    %v260 = vld [vmem:[%s1 + $0x6b0] sm:$0xff]
    %v261 = vld [vmem:[%s1 + $0x6b8] sm:$0xff]
    %v262 = vld [vmem:[%s1 + $0x6c0] sm:$0xff]
    %v263 = vld [vmem:[%s1 + $0x6c8] sm:$0xff]
    %v264 = vld [vmem:[%s1 + $0x6d0] sm:$0xff]
    %v265 = vld [vmem:[%s1 + $0x6d8] sm:$0xff]
    %v266 = vld [vmem:[%s1 + $0x6e0] sm:$0xff]
    %v267 = vld [vmem:[%s1 + $0x6e8] sm:$0xff]
    %v268 = vld [vmem:[%s1 + $0x6f0] sm:$0xff]
    %v269 = vld [vmem:[%s1 + $0x6f8] sm:$0xff]
    %v270 = vld [vmem:[%s1 + $0x700] sm:$0xff]
    %v271 = vld [vmem:[%s1 + $0x708] sm:$0xff]
    %v272 = vld [vmem:[%s1 + $0x710] sm:$0xff]
    %v273 = vld [vmem:[%s1 + $0x718] sm:$0xff]
    %v274 = vld [vmem:[%s1 + $0x720] sm:$0xff]
    %v275 = vld [vmem:[%s1 + $0x728] sm:$0xff]
    %v276 = vld [vmem:[%s1 + $0x730] sm:$0xff]
    %v277 = vld [vmem:[%s1 + $0x738] sm:$0xff]
    %v278 = vld [vmem:[%s1 + $0x740] sm:$0xff]
    %v279 = vld [vmem:[%s1 + $0x748] sm:$0xff]
    %v280 = vld [vmem:[%s1 + $0x750] sm:$0xff]
    %v281 = vld [vmem:[%s1 + $0x758] sm:$0xff]
    %v282 = vld [vmem:[%s1 + $0x760] sm:$0xff]
    %v283 = vld [vmem:[%s1 + $0x768] sm:$0xff]
    %v284 = vld [vmem:[%s1 + $0x770] sm:$0xff]
    %v285 = vld [vmem:[%s1 + $0x778] sm:$0xff]
    %v286 = vld [vmem:[%s1 + $0x780] sm:$0xff]
    %v287 = vld [vmem:[%s1 + $0x788] sm:$0xff]
    %v288 = vld [vmem:[%s1 + $0x790] sm:$0xff]
    %v289 = vld [vmem:[%s1 + $0x798] sm:$0xff]
    %v290 = vld [vmem:[%s1 + $0x7a0] sm:$0xff]
    %v291 = vld [vmem:[%s1 + $0x7a8] sm:$0xff]
    %v292 = vld [vmem:[%s1 + $0x7b0] sm:$0xff]
    %v293 = vld [vmem:[%s1 + $0x7b8] sm:$0xff]
    %v294 = vld [vmem:[%s1 + $0x7c0] sm:$0xff]
    %v295 = vld [vmem:[%s1 + $0x7c8] sm:$0xff]
    %v296 = vld [vmem:[%s1 + $0x7d0] sm:$0xff]
    %v297 = vld [vmem:[%s1 + $0x7d8] sm:$0xff]
    %v298 = vld [vmem:[%s1 + $0x7e0] sm:$0xff]
    %v299 = vld [vmem:[%s1 + $0x7e8] sm:$0xff]
    %v300 = vld [vmem:[%s1 + $0x7f0] sm:$0xff]
    %v301 = vld [vmem:[%s1 + $0x7f8] sm:$0xff]
    %v302 = vld [vmem:[%s1 + $0x800] sm:$0xff]
    %v303 = vld [vmem:[%s1 + $0x808] sm:$0xff]
    %v304 = vld [vmem:[%s1 + $0x810] sm:$0xff]
    %v305 = vld [vmem:[%s1 + $0x818] sm:$0xff]
    %v306 = vld [vmem:[%s1 + $0x820] sm:$0xff]
    %v307 = vld [vmem:[%s1 + $0x828] sm:$0xff]
    %v308 = vld [vmem:[%s1 + $0x830] sm:$0xff]
    %v309 = vld [vmem:[%s1 + $0x838] sm:$0xff]
    %v310 = vld [vmem:[%s1 + $0x840] sm:$0xff]
    %v311 = vld [vmem:[%s1 + $0x848] sm:$0xff]
    %v312 = vld [vmem:[%s1 + $0x850] sm:$0xff]
    %v313 = vld [vmem:[%s1 + $0x858] sm:$0xff]
    %v314 = vld [vmem:[%s1 + $0x860] sm:$0xff]
    %v315 = vld [vmem:[%s1 + $0x868] sm:$0xff]
    %v316 = vld [vmem:[%s1 + $0x870] sm:$0xff]
    %v317 = vld [vmem:[%s1 + $0x878] sm:$0xff]
    %v318 = vld [vmem:[%s1 + $0x880] sm:$0xff]
    %v319 = vld [vmem:[%s1 + $0x888] sm:$0xff]
    %v320 = vld [vmem:[%s1 + $0x890] sm:$0xff]
    %v321 = vld [vmem:[%s1 + $0x898] sm:$0xff]
    %v322 = vld [vmem:[%s1 + $0x8a0] sm:$0xff]
    %v323 = vld [vmem:[%s1 + $0x8a8] sm:$0xff]
    %v324 = vld [vmem:[%s1 + $0x8b0] sm:$0xff]
    %v325 = vld [vmem:[%s1 + $0x8b8] sm:$0xff]
    %v326 = vld [vmem:[%s1 + $0x8c0] sm:$0xff]
    %v327 = vld [vmem:[%s1 + $0x8c8] sm:$0xff]
    %v328 = vld [vmem:[%s1 + $0x8d0] sm:$0xff]
    %v329 = vld [vmem:[%s1 + $0x8d8] sm:$0xff]
    %v330 = vld [vmem:[%s1 + $0x8e0] sm:$0xff]
    %v331 = vld [vmem:[%s1 + $0x8e8] sm:$0xff]
    %v332 = vld [vmem:[%s1 + $0x8f0] sm:$0xff]
    %v333 = vld [vmem:[%s1 + $0x8f8] sm:$0xff]
    %v334 = vld [vmem:[%s1 + $0x900] sm:$0xff]
    %v335 = vld [vmem:[%s1 + $0x908] sm:$0xff]
    %v336 = vld [vmem:[%s1 + $0x910] sm:$0xff]
    %v337 = vld [vmem:[%s1 + $0x918] sm:$0xff]
    %v338 = vld [vmem:[%s1 + $0x920] sm:$0xff]
    %v339 = vld [vmem:[%s1 + $0x928] sm:$0xff]
    %v340 = vld [vmem:[%s1 + $0x930] sm:$0xff]
    %v341 = vld [vmem:[%s1 + $0x938] sm:$0xff]
    %v342 = vld [vmem:[%s1 + $0x940] sm:$0xff]
    %v343 = vld [vmem:[%s1 + $0x948] sm:$0xff]
    %v344 = vld [vmem:[%s1 + $0x950] sm:$0xff]
    %v345 = vld [vmem:[%s1 + $0x958] sm:$0xff]
    %v346 = vld [vmem:[%s1 + $0x960] sm:$0xff]
    %v347 = vld [vmem:[%s1 + $0x968] sm:$0xff]
    %v348 = vld [vmem:[%s1 + $0x970] sm:$0xff]
    %v349 = vld [vmem:[%s1 + $0x978] sm:$0xff]
    %v350 = vld [vmem:[%s1 + $0x980] sm:$0xff]
    %v351 = vld [vmem:[%s1 + $0x988] sm:$0xff]
    %v352 = vld [vmem:[%s1 + $0x990] sm:$0xff]
    %v353 = vld [vmem:[%s1 + $0x998] sm:$0xff]
    %v354 = vld [vmem:[%s1 + $0x9a0] sm:$0xff]
    %v355 = vld [vmem:[%s1 + $0x9a8] sm:$0xff]
    %v356 = vld [vmem:[%s1 + $0x9b0] sm:$0xff]
    %v357 = vld [vmem:[%s1 + $0x9b8] sm:$0xff]
    %v358 = vld [vmem:[%s1 + $0x9c0] sm:$0xff]
    %v359 = vld [vmem:[%s1 + $0x9c8] sm:$0xff]
    %v360 = vld [vmem:[%s1 + $0x9d0] sm:$0xff]
    %v361 = vld [vmem:[%s1 + $0x9d8] sm:$0xff]
    %v362 = vld [vmem:[%s1 + $0x9e0] sm:$0xff]
    %v363 = vld [vmem:[%s1 + $0x9e8] sm:$0xff]
    %v364 = vld [vmem:[%s1 + $0x9f0] sm:$0xff]
    %v365 = vld [vmem:[%s1 + $0x9f8] sm:$0xff]
    %v366 = vld [vmem:[%s1 + $0xa00] sm:$0xff]
    %v367 = vld [vmem:[%s1 + $0xa08] sm:$0xff]
    %v368 = vld [vmem:[%s1 + $0xa10] sm:$0xff]
    %v369 = vld [vmem:[%s1 + $0xa18] sm:$0xff]
    %v370 = vld [vmem:[%s1 + $0xa20] sm:$0xff]
    %v371 = vld [vmem:[%s1 + $0xa28] sm:$0xff]
    %v372 = vld [vmem:[%s1 + $0xa30] sm:$0xff]
    %v373 = vld [vmem:[%s1 + $0xa38] sm:$0xff]
    %v374 = vld [vmem:[%s1 + $0xa40] sm:$0xff]
    %v375 = vld [vmem:[%s1 + $0xa48] sm:$0xff]
    %v376 = vld [vmem:[%s1 + $0xa50] sm:$0xff]
    %v377 = vld [vmem:[%s1 + $0xa58] sm:$0xff]
    %v378 = vld [vmem:[%s1 + $0xa60] sm:$0xff]
    %v379 = vld [vmem:[%s1 + $0xa68] sm:$0xff]
    %v380 = vld [vmem:[%s1 + $0xa70] sm:$0xff]
    %v381 = vld [vmem:[%s1 + $0xa78] sm:$0xff]
    %v382 = vld [vmem:[%s1 + $0xa80] sm:$0xff]
    %v383 = vld [vmem:[%s1 + $0xa88] sm:$0xff]
    %v384 = vld [vmem:[%s1 + $0xa90] sm:$0xff]
    %v385 = vld [vmem:[%s1 + $0xa98] sm:$0xff]
    %v386 = vld [vmem:[%s1 + $0xaa0] sm:$0xff]
    %v387 = vld [vmem:[%s1 + $0xaa8] sm:$0xff]
    %v388 = vld [vmem:[%s1 + $0xab0] sm:$0xff]
    %v389 = vld [vmem:[%s1 + $0xab8] sm:$0xff]
    %v390 = vld [vmem:[%s1 + $0xac0] sm:$0xff]
    %v391 = vld [vmem:[%s1 + $0xac8] sm:$0xff]
    %v392 = vld [vmem:[%s1 + $0xad0] sm:$0xff]
    %v393 = vld [vmem:[%s1 + $0xad8] sm:$0xff]
    %v394 = vld [vmem:[%s1 + $0xae0] sm:$0xff]
    %v395 = vld [vmem:[%s1 + $0xae8] sm:$0xff]
    %v396 = vld [vmem:[%s1 + $0xaf0] sm:$0xff]
    %v397 = vld [vmem:[%s1 + $0xaf8] sm:$0xff]
    %v398 = vld [vmem:[%s1 + $0xb00] sm:$0xff]
    %v399 = vld [vmem:[%s1 + $0xb08] sm:$0xff]
    %v400 = vld [vmem:[%s1 + $0xb10] sm:$0xff]
    %v401 = vld [vmem:[%s1 + $0xb18] sm:$0xff]
    %v402 = vld [vmem:[%s1 + $0xb20] sm:$0xff]
    %v403 = vld [vmem:[%s1 + $0xb28] sm:$0xff]
    %v404 = vld [vmem:[%s1 + $0xb30] sm:$0xff]
    %v405 = vld [vmem:[%s1 + $0xb38] sm:$0xff]
    %v406 = vld [vmem:[%s1 + $0xb40] sm:$0xff]
    %v407 = vld [vmem:[%s1 + $0xb48] sm:$0xff]
    %v408 = vld [vmem:[%s1 + $0xb50] sm:$0xff]
    %v409 = vld [vmem:[%s1 + $0xb58] sm:$0xff]
    %v410 = vld [vmem:[%s1 + $0xb60] sm:$0xff]
    %v411 = vld [vmem:[%s1 + $0xb68] sm:$0xff]
    %v412 = vld [vmem:[%s1 + $0xb70] sm:$0xff]
    %v413 = vld [vmem:[%s1 + $0xb78] sm:$0xff]
    %v414 = vld [vmem:[%s1 + $0xb80] sm:$0xff]
    %v415 = vld [vmem:[%s1 + $0xb88] sm:$0xff]
    %v416 = vld [vmem:[%s1 + $0xb90] sm:$0xff]
    %v417 = vld [vmem:[%s1 + $0xb98] sm:$0xff]
    %v418 = vld [vmem:[%s1 + $0xba0] sm:$0xff]
    %v419 = vld [vmem:[%s1 + $0xba8] sm:$0xff]
    %v420 = vld [vmem:[%s1 + $0xbb0] sm:$0xff]
    %v421 = vld [vmem:[%s1 + $0xbb8] sm:$0xff]
    %v422 = vld [vmem:[%s1 + $0xbc0] sm:$0xff]
    %v423 = vld [vmem:[%s1 + $0xbc8] sm:$0xff]
    %v424 = vld [vmem:[%s1 + $0xbd0] sm:$0xff]
    %v425 = vld [vmem:[%s1 + $0xbd8] sm:$0xff]
    %v426 = vld [vmem:[%s1 + $0xbe0] sm:$0xff]
    %v427 = vld [vmem:[%s1 + $0xbe8] sm:$0xff]
    %v428 = vld [vmem:[%s1 + $0xbf0] sm:$0xff]
    %v429 = vld [vmem:[%s1 + $0xbf8] sm:$0xff]
    %v430 = vld [vmem:[%s1 + $0xc00] sm:$0xff]
    %v431 = vld [vmem:[%s1 + $0xc08] sm:$0xff]
    %v432 = vld [vmem:[%s1 + $0xc10] sm:$0xff]
    %v433 = vld [vmem:[%s1 + $0xc18] sm:$0xff]
    %v434 = vld [vmem:[%s1 + $0xc20] sm:$0xff]
    %v435 = vld [vmem:[%s1 + $0xc28] sm:$0xff]
    %v436 = vld [vmem:[%s1 + $0xc30] sm:$0xff]
    %v437 = vld [vmem:[%s1 + $0xc38] sm:$0xff]
    %v438 = vld [vmem:[%s1 + $0xc40] sm:$0xff]
    %v439 = vld [vmem:[%s1 + $0xc48] sm:$0xff]
    %v440 = vld [vmem:[%s1 + $0xc50] sm:$0xff]
    %v441 = vld [vmem:[%s1 + $0xc58] sm:$0xff]
    %v442 = vld [vmem:[%s1 + $0xc60] sm:$0xff]
    %v443 = vld [vmem:[%s1 + $0xc68] sm:$0xff]
    %v444 = vld [vmem:[%s1 + $0xc70] sm:$0xff]
    %v445 = vld [vmem:[%s1 + $0xc78] sm:$0xff]
    %v446 = vld [vmem:[%s1 + $0xc80] sm:$0xff]
    %v447 = vld [vmem:[%s1 + $0xc88] sm:$0xff]
    %v448 = vld [vmem:[%s1 + $0xc90] sm:$0xff]
    %v449 = vld [vmem:[%s1 + $0xc98] sm:$0xff]
    %v450 = vld [vmem:[%s1 + $0xca0] sm:$0xff]
    %v451 = vld [vmem:[%s1 + $0xca8] sm:$0xff]
    %v452 = vld [vmem:[%s1 + $0xcb0] sm:$0xff]
    %v453 = vld [vmem:[%s1 + $0xcb8] sm:$0xff]
    %v454 = vld [vmem:[%s1 + $0xcc0] sm:$0xff]
    %v455 = vld [vmem:[%s1 + $0xcc8] sm:$0xff]
    %v456 = vld [vmem:[%s1 + $0xcd0] sm:$0xff]
    %v457 = vld [vmem:[%s1 + $0xcd8] sm:$0xff]
    %v458 = vld [vmem:[%s1 + $0xce0] sm:$0xff]
    %v459 = vld [vmem:[%s1 + $0xce8] sm:$0xff]
    %v460 = vld [vmem:[%s1 + $0xcf0] sm:$0xff]
    %v461 = vld [vmem:[%s1 + $0xcf8] sm:$0xff]
    %v462 = vld [vmem:[%s1 + $0xd00] sm:$0xff]
    %v463 = vld [vmem:[%s1 + $0xd08] sm:$0xff]
    %v464 = vld [vmem:[%s1 + $0xd10] sm:$0xff]
    %v465 = vld [vmem:[%s1 + $0xd18] sm:$0xff]
    %v466 = vld [vmem:[%s1 + $0xd20] sm:$0xff]
    %v467 = vld [vmem:[%s1 + $0xd28] sm:$0xff]
    %v468 = vld [vmem:[%s1 + $0xd30] sm:$0xff]
    %v469 = vld [vmem:[%s1 + $0xd38] sm:$0xff]
    %v470 = vld [vmem:[%s1 + $0xd40] sm:$0xff]
    %v471 = vld [vmem:[%s1 + $0xd48] sm:$0xff]
    %v472 = vld [vmem:[%s1 + $0xd50] sm:$0xff]
    %v473 = vld [vmem:[%s1 + $0xd58] sm:$0xff]
    %v474 = vld [vmem:[%s1 + $0xd60] sm:$0xff]
    %v475 = vld [vmem:[%s1 + $0xd68] sm:$0xff]
    %v476 = vld [vmem:[%s1 + $0xd70] sm:$0xff]
    %v477 = vld [vmem:[%s1 + $0xd78] sm:$0xff]
    %v478 = vld [vmem:[%s1 + $0xd80] sm:$0xff]
    %v479 = vld [vmem:[%s1 + $0xd88] sm:$0xff]
    %v480 = vld [vmem:[%s1 + $0xd90] sm:$0xff]
    %v481 = vld [vmem:[%s1 + $0xd98] sm:$0xff]
    %v482 = vld [vmem:[%s1 + $0xda0] sm:$0xff]
    %v483 = vld [vmem:[%s1 + $0xda8] sm:$0xff]
    %v484 = vld [vmem:[%s1 + $0xdb0] sm:$0xff]
    %v485 = vld [vmem:[%s1 + $0xdb8] sm:$0xff]
    %v486 = vld [vmem:[%s1 + $0xdc0] sm:$0xff]
    %v487 = vld [vmem:[%s1 + $0xdc8] sm:$0xff]
    %v488 = vld [vmem:[%s1 + $0xdd0] sm:$0xff]
    %v489 = vld [vmem:[%s1 + $0xdd8] sm:$0xff]
    %v490 = vld [vmem:[%s1 + $0xde0] sm:$0xff]
    %v491 = vld [vmem:[%s1 + $0xde8] sm:$0xff]
    %v492 = vld [vmem:[%s1 + $0xdf0] sm:$0xff]
    %v493 = vld [vmem:[%s1 + $0xdf8] sm:$0xff]
    %v494 = vld [vmem:[%s1 + $0xe00] sm:$0xff]
    %v495 = vld [vmem:[%s1 + $0xe08] sm:$0xff]
    %v496 = vld [vmem:[%s1 + $0xe10] sm:$0xff]
    %v497 = vld [vmem:[%s1 + $0xe18] sm:$0xff]
    %v498 = vld [vmem:[%s1 + $0xe20] sm:$0xff]
    %v499 = vld [vmem:[%s1 + $0xe28] sm:$0xff]
    %v500 = vld [vmem:[%s1 + $0xe30] sm:$0xff]
    %v501 = vld [vmem:[%s1 + $0xe38] sm:$0xff]
    %v502 = vld [vmem:[%s1 + $0xe40] sm:$0xff]
    %v503 = vld [vmem:[%s1 + $0xe48] sm:$0xff]
    %v504 = vld [vmem:[%s1 + $0xe50] sm:$0xff]
    %v505 = vld [vmem:[%s1 + $0xe58] sm:$0xff]
    %v506 = vld [vmem:[%s1 + $0xe60] sm:$0xff]
    %v507 = vld [vmem:[%s1 + $0xe68] sm:$0xff]
    %v508 = vld [vmem:[%s1 + $0xe70] sm:$0xff]
    %v509 = vld [vmem:[%s1 + $0xe78] sm:$0xff]
    %v510 = vld [vmem:[%s1 + $0xe80] sm:$0xff]
    %v511 = vld [vmem:[%s1 + $0xe88] sm:$0xff]
    %v512 = vld [vmem:[%s1 + $0xe90] sm:$0xff]
    %v513 = vld [vmem:[%s1 + $0xe98] sm:$0xff]
    %v514 = vld [vmem:[%s1 + $0xea0] sm:$0xff]
    %v515 = vld [vmem:[%s1 + $0xea8] sm:$0xff]
    %v516 = vld [vmem:[%s1 + $0xeb0] sm:$0xff]
    %v517 = vld [vmem:[%s1 + $0xeb8] sm:$0xff]
    %v518 = vld [vmem:[%s1 + $0xec0] sm:$0xff]
    %v519 = vld [vmem:[%s1 + $0xec8] sm:$0xff]
    %v520 = vld [vmem:[%s1 + $0xed0] sm:$0xff]
    %v521 = vld [vmem:[%s1 + $0xed8] sm:$0xff]
    %v522 = vld [vmem:[%s1 + $0xee0] sm:$0xff]
    %v523 = vld [vmem:[%s1 + $0xee8] sm:$0xff]
    %v524 = vld [vmem:[%s1 + $0xef0] sm:$0xff]
    %v525 = vld [vmem:[%s1 + $0xef8] sm:$0xff]
    %v526 = vld [vmem:[%s1 + $0xf00] sm:$0xff]
    %v527 = vld [vmem:[%s1 + $0xf08] sm:$0xff]
    %v528 = vld [vmem:[%s1 + $0xf10] sm:$0xff]
    %v529 = vld [vmem:[%s1 + $0xf18] sm:$0xff]
    %v530 = vld [vmem:[%s1 + $0xf20] sm:$0xff]
    %v531 = vld [vmem:[%s1 + $0xf28] sm:$0xff]
    %v532 = vld [vmem:[%s1 + $0xf30] sm:$0xff]
    %v533 = vld [vmem:[%s1 + $0xf38] sm:$0xff]
    %v534 = vld [vmem:[%s1 + $0xf40] sm:$0xff]
    %v535 = vld [vmem:[%s1 + $0xf48] sm:$0xff]
    %v536 = vld [vmem:[%s1 + $0xf50] sm:$0xff]
    %v537 = vld [vmem:[%s1 + $0xf58] sm:$0xff]
    %v538 = vld [vmem:[%s1 + $0xf60] sm:$0xff]
    %v539 = vld [vmem:[%s1 + $0xf68] sm:$0xff]
    %v540 = vld [vmem:[%s1 + $0xf70] sm:$0xff]
    %v541 = vld [vmem:[%s1 + $0xf78] sm:$0xff]
    %v542 = vld [vmem:[%s1 + $0xf80] sm:$0xff]
    %v543 = vld [vmem:[%s1 + $0xf88] sm:$0xff]
    %v544 = vld [vmem:[%s1 + $0xf90] sm:$0xff]
    %v545 = vld [vmem:[%s1 + $0xf98] sm:$0xff]
    %v546 = vld [vmem:[%s1 + $0xfa0] sm:$0xff]
    %v547 = vld [vmem:[%s1 + $0xfa8] sm:$0xff]
    %v548 = vld [vmem:[%s1 + $0xfb0] sm:$0xff]
    %v549 = vld [vmem:[%s1 + $0xfb8] sm:$0xff]
    %v550 = vld [vmem:[%s1 + $0xfc0] sm:$0xff]
    %v551 = vld [vmem:[%s1 + $0xfc8] sm:$0xff]
    %v552 = vld [vmem:[%s1 + $0xfd0] sm:$0xff]
    %v553 = vld [vmem:[%s1 + $0xfd8] sm:$0xff]
    %v554 = vld [vmem:[%s1 + $0xfe0] sm:$0xff]
    %v555 = vld [vmem:[%s1 + $0xfe8] sm:$0xff]
    %v556 = vld [vmem:[%s1 + $0xff0] sm:$0xff]
    %v557 = vld [vmem:[%s1 + $0xff8] sm:$0xff]
    %v558 = vld [vmem:[%s1 + $0x1000] sm:$0xff]
    %v559 = vld [vmem:[%s1 + $0x1008] sm:$0xff]
    %v560 = vld [vmem:[%s1 + $0x1010] sm:$0xff]
    %v561 = vld [vmem:[%s1 + $0x1018] sm:$0xff]
    %v562 = vld [vmem:[%s1 + $0x1020] sm:$0xff]
    %v563 = vld [vmem:[%s1 + $0x1028] sm:$0xff]
    %v564 = vld [vmem:[%s1 + $0x1030] sm:$0xff]
    %v565 = vld [vmem:[%s1 + $0x1038] sm:$0xff]
    %v566 = vld [vmem:[%s1 + $0x1040] sm:$0xff]
    %v567 = vld [vmem:[%s1 + $0x1048] sm:$0xff]
    %v568 = vld [vmem:[%s1 + $0x1050] sm:$0xff]
    %v569 = vld [vmem:[%s1 + $0x1058] sm:$0xff]
    %v570 = vld [vmem:[%s1 + $0x1060] sm:$0xff]
    %v571 = vld [vmem:[%s1 + $0x1068] sm:$0xff]
    %v572 = vld [vmem:[%s1 + $0x1070] sm:$0xff]
    %v573 = vld [vmem:[%s1 + $0x1078] sm:$0xff]
    %v574 = vld [vmem:[%s1 + $0x1080] sm:$0xff]
    %v575 = vld [vmem:[%s1 + $0x1088] sm:$0xff]
    %v576 = vld [vmem:[%s1 + $0x1090] sm:$0xff]
    %v577 = vld [vmem:[%s1 + $0x1098] sm:$0xff]
    %v578 = vld [vmem:[%s1 + $0x10a0] sm:$0xff]
    %v579 = vld [vmem:[%s1 + $0x10a8] sm:$0xff]
    %v580 = vld [vmem:[%s1 + $0x10b0] sm:$0xff]
    %v581 = vld [vmem:[%s1 + $0x10b8] sm:$0xff]
    %v582 = vld [vmem:[%s1 + $0x10c0] sm:$0xff]
    %v583 = vld [vmem:[%s1 + $0x10c8] sm:$0xff]
    %v584 = vld [vmem:[%s1 + $0x10d0] sm:$0xff]
    %v585 = vld [vmem:[%s1 + $0x10d8] sm:$0xff]
    %v586 = vld [vmem:[%s1 + $0x10e0] sm:$0xff]
    %v587 = vld [vmem:[%s1 + $0x10e8] sm:$0xff]
    %v588 = vld [vmem:[%s1 + $0x10f0] sm:$0xff]
    %v589 = vld [vmem:[%s1 + $0x10f8] sm:$0xff]
    %v590 = vld [vmem:[%s1 + $0x1100] sm:$0xff]
    %v591 = vld [vmem:[%s1 + $0x1108] sm:$0xff]
    %v592 = vld [vmem:[%s1 + $0x1110] sm:$0xff]
    %v593 = vld [vmem:[%s1 + $0x1118] sm:$0xff]
    %v594 = vld [vmem:[%s1 + $0x1120] sm:$0xff]
    %v595 = vld [vmem:[%s1 + $0x1128] sm:$0xff]
    %v596 = vld [vmem:[%s1 + $0x1130] sm:$0xff]
    %v597 = vld [vmem:[%s1 + $0x1138] sm:$0xff]
    %v598 = vld [vmem:[%s1 + $0x1140] sm:$0xff]
    %v599 = vld [vmem:[%s1 + $0x1148] sm:$0xff]
    %v600 = vld [vmem:[%s1 + $0x1150] sm:$0xff]
    %v601 = vld [vmem:[%s1 + $0x1158] sm:$0xff]
    %v602 = vld [vmem:[%s1 + $0x1160] sm:$0xff]
    %v603 = vld [vmem:[%s1 + $0x1168] sm:$0xff]
    %v604 = vld [vmem:[%s1 + $0x1170] sm:$0xff]
    %v605 = vld [vmem:[%s1 + $0x1178] sm:$0xff]
    %v606 = vld [vmem:[%s1 + $0x1180] sm:$0xff]
    %v607 = vld [vmem:[%s1 + $0x1188] sm:$0xff]
    %v608 = vld [vmem:[%s1 + $0x1190] sm:$0xff]
    %v609 = vld [vmem:[%s1 + $0x1198] sm:$0xff]
    %v610 = vld [vmem:[%s1 + $0x11a0] sm:$0xff]
    %v611 = vld [vmem:[%s1 + $0x11a8] sm:$0xff]
    %v612 = vld [vmem:[%s1 + $0x11b0] sm:$0xff]
    %v613 = vld [vmem:[%s1 + $0x11b8] sm:$0xff]
    %v614 = vld [vmem:[%s1 + $0x11c0] sm:$0xff]
    %v615 = vld [vmem:[%s1 + $0x11c8] sm:$0xff]
    %v616 = vld [vmem:[%s1 + $0x11d0] sm:$0xff]
    %v617 = vld [vmem:[%s1 + $0x11d8] sm:$0xff]
    %v618 = vld [vmem:[%s1 + $0x11e0] sm:$0xff]
    %v619 = vld [vmem:[%s1 + $0x11e8] sm:$0xff]
    %v620 = vld [vmem:[%s1 + $0x11f0] sm:$0xff]
    %v621 = vld [vmem:[%s1 + $0x11f8] sm:$0xff]
    %v622 = vld [vmem:[%s1 + $0x1200] sm:$0xff]
    %v623 = vld [vmem:[%s1 + $0x1208] sm:$0xff]
    %v624 = vld [vmem:[%s1 + $0x1210] sm:$0xff]
    %v625 = vld [vmem:[%s1 + $0x1218] sm:$0xff]
    %v626 = vld [vmem:[%s1 + $0x1220] sm:$0xff]
    %v627 = vld [vmem:[%s1 + $0x1228] sm:$0xff]
    %v628 = vld [vmem:[%s1 + $0x1230] sm:$0xff]
    %v629 = vld [vmem:[%s1 + $0x1238] sm:$0xff]
    %v630 = vld [vmem:[%s1 + $0x1240] sm:$0xff]
    %v631 = vld [vmem:[%s1 + $0x1248] sm:$0xff]
    %v632 = vld [vmem:[%s1 + $0x1250] sm:$0xff]
    %v633 = vld [vmem:[%s1 + $0x1258] sm:$0xff]
    %v634 = vld [vmem:[%s1 + $0x1260] sm:$0xff]
    %v635 = vld [vmem:[%s1 + $0x1268] sm:$0xff]
    %v636 = vld [vmem:[%s1 + $0x1270] sm:$0xff]
    %v637 = vld [vmem:[%s1 + $0x1278] sm:$0xff]
    %v638 = vld [vmem:[%s1 + $0x1280] sm:$0xff]
    %v639 = vld [vmem:[%s1 + $0x1288] sm:$0xff]
    %v640 = vld [vmem:[%s1 + $0x1290] sm:$0xff]
    %v641 = vld [vmem:[%s1 + $0x1298] sm:$0xff]
    %v642 = vld [vmem:[%s1 + $0x12a0] sm:$0xff]
    %v643 = vld [vmem:[%s1 + $0x12a8] sm:$0xff]
    %v644 = vld [vmem:[%s1 + $0x12b0] sm:$0xff]
    %v645 = vld [vmem:[%s1 + $0x12b8] sm:$0xff]
    %v646 = vld [vmem:[%s1 + $0x12c0] sm:$0xff]
    %v647 = vld [vmem:[%s1 + $0x12c8] sm:$0xff]
    %v648 = vld [vmem:[%s1 + $0x12d0] sm:$0xff]
    %v649 = vld [vmem:[%s1 + $0x12d8] sm:$0xff]
    %v650 = vld [vmem:[%s1 + $0x12e0] sm:$0xff]
    %v651 = vld [vmem:[%s1 + $0x12e8] sm:$0xff]
    %v652 = vld [vmem:[%s1 + $0x12f0] sm:$0xff]
    %v653 = vld [vmem:[%s1 + $0x12f8] sm:$0xff]
    %v654 = vld [vmem:[%s1 + $0x1300] sm:$0xff]
    %v655 = vld [vmem:[%s1 + $0x1308] sm:$0xff]
    %v656 = vld [vmem:[%s1 + $0x1310] sm:$0xff]
    %v657 = vld [vmem:[%s1 + $0x1318] sm:$0xff]
    %v658 = vld [vmem:[%s1 + $0x1320] sm:$0xff]
    %v659 = vld [vmem:[%s1 + $0x1328] sm:$0xff]
    %v660 = vld [vmem:[%s1 + $0x1330] sm:$0xff]
    %v661 = vld [vmem:[%s1 + $0x1338] sm:$0xff]
    %v662 = vld [vmem:[%s1 + $0x1340] sm:$0xff]
    %v663 = vld [vmem:[%s1 + $0x1348] sm:$0xff]
    %v664 = vld [vmem:[%s1 + $0x1350] sm:$0xff]
    %v665 = vld [vmem:[%s1 + $0x1358] sm:$0xff]
    %v666 = vld [vmem:[%s1 + $0x1360] sm:$0xff]
    %v667 = vld [vmem:[%s1 + $0x1368] sm:$0xff]
    %v668 = vld [vmem:[%s1 + $0x1370] sm:$0xff]
    %v669 = vld [vmem:[%s1 + $0x1378] sm:$0xff]
    %v670 = vld [vmem:[%s1 + $0x1380] sm:$0xff]
    %v671 = vld [vmem:[%s1 + $0x1388] sm:$0xff]
    %v672 = vld [vmem:[%s1 + $0x1390] sm:$0xff]
    %v673 = vld [vmem:[%s1 + $0x1398] sm:$0xff]
    %v674 = vld [vmem:[%s1 + $0x13a0] sm:$0xff]
    %v675 = vld [vmem:[%s1 + $0x13a8] sm:$0xff]
    %v676 = vld [vmem:[%s1 + $0x13b0] sm:$0xff]
    %v677 = vld [vmem:[%s1 + $0x13b8] sm:$0xff]
    %v678 = vld [vmem:[%s1 + $0x13c0] sm:$0xff]
    %v679 = vld [vmem:[%s1 + $0x13c8] sm:$0xff]
    %v680 = vld [vmem:[%s1 + $0x13d0] sm:$0xff]
    %v681 = vld [vmem:[%s1 + $0x13d8] sm:$0xff]
    %v682 = vld [vmem:[%s1 + $0x13e0] sm:$0xff]
    %v683 = vld [vmem:[%s1 + $0x13e8] sm:$0xff]
    %v684 = vld [vmem:[%s1 + $0x13f0] sm:$0xff]
    %v685 = vld [vmem:[%s1 + $0x13f8] sm:$0xff]
    %v686 = vld [vmem:[%s1 + $0x1400] sm:$0xff]
    %v687 = vld [vmem:[%s1 + $0x1408] sm:$0xff]
    %v688 = vld [vmem:[%s1 + $0x1410] sm:$0xff]
    %v689 = vld [vmem:[%s1 + $0x1418] sm:$0xff]
    %v690 = vld [vmem:[%s1 + $0x1420] sm:$0xff]
    %v691 = vld [vmem:[%s1 + $0x1428] sm:$0xff]
    %v692 = vld [vmem:[%s1 + $0x1430] sm:$0xff]
    %v693 = vld [vmem:[%s1 + $0x1438] sm:$0xff]
    %v694 = vld [vmem:[%s1 + $0x1440] sm:$0xff]
    %v695 = vld [vmem:[%s1 + $0x1448] sm:$0xff]
    %v696 = vld [vmem:[%s1 + $0x1450] sm:$0xff]
    %v697 = vld [vmem:[%s1 + $0x1458] sm:$0xff]
    %v698 = vld [vmem:[%s1 + $0x1460] sm:$0xff]
    %v699 = vld [vmem:[%s1 + $0x1468] sm:$0xff]
    %v700 = vld [vmem:[%s1 + $0x1470] sm:$0xff]
    %v701 = vld [vmem:[%s1 + $0x1478] sm:$0xff]
    %v702 = vld [vmem:[%s1 + $0x1480] sm:$0xff]
    %v703 = vld [vmem:[%s1 + $0x1488] sm:$0xff]
    %v704 = vld [vmem:[%s1 + $0x1490] sm:$0xff]
    %v705 = vld [vmem:[%s1 + $0x1498] sm:$0xff]
    %v706 = vld [vmem:[%s1 + $0x14a0] sm:$0xff]
    %v707 = vld [vmem:[%s1 + $0x14a8] sm:$0xff]
    %v708 = vld [vmem:[%s1 + $0x14b0] sm:$0xff]
    %v709 = vld [vmem:[%s1 + $0x14b8] sm:$0xff]
    %v710 = vld [vmem:[%s1 + $0x14c0] sm:$0xff]
    %v711 = vld [vmem:[%s1 + $0x14c8] sm:$0xff]
    %v712 = vld [vmem:[%s1 + $0x14d0] sm:$0xff]
    %v713 = vld [vmem:[%s1 + $0x14d8] sm:$0xff]
    %v714 = vld [vmem:[%s1 + $0x14e0] sm:$0xff]
    %v715 = vld [vmem:[%s1 + $0x14e8] sm:$0xff]
    %v716 = vld [vmem:[%s1 + $0x14f0] sm:$0xff]
    %v717 = vld [vmem:[%s1 + $0x14f8] sm:$0xff]
    %v718 = vld [vmem:[%s1 + $0x1500] sm:$0xff]
    %v719 = vld [vmem:[%s1 + $0x1508] sm:$0xff]
    %v720 = vld [vmem:[%s1 + $0x1510] sm:$0xff]
    %v721 = vld [vmem:[%s1 + $0x1518] sm:$0xff]
    %v722 = vld [vmem:[%s1 + $0x1520] sm:$0xff]
    %v723 = vld [vmem:[%s1 + $0x1528] sm:$0xff]
    %v724 = vld [vmem:[%s1 + $0x1530] sm:$0xff]
    %v725 = vld [vmem:[%s1 + $0x1538] sm:$0xff]
    %v726 = vld [vmem:[%s1 + $0x1540] sm:$0xff]
    %v727 = vld [vmem:[%s1 + $0x1548] sm:$0xff]
    %v728 = vld [vmem:[%s1 + $0x1550] sm:$0xff]
    %v729 = vld [vmem:[%s1 + $0x1558] sm:$0xff]
    %v730 = vld [vmem:[%s1 + $0x1560] sm:$0xff]
    %v731 = vld [vmem:[%s1 + $0x1568] sm:$0xff]
    %v732 = vld [vmem:[%s1 + $0x1570] sm:$0xff]
    %v733 = vld [vmem:[%s1 + $0x1578] sm:$0xff]
    %v734 = vld [vmem:[%s1 + $0x1580] sm:$0xff]
    %v735 = vld [vmem:[%s1 + $0x1588] sm:$0xff]
    %v736 = vld [vmem:[%s1 + $0x1590] sm:$0xff]
    %v737 = vld [vmem:[%s1 + $0x1598] sm:$0xff]
    %v738 = vld [vmem:[%s1 + $0x15a0] sm:$0xff]
    %v739 = vld [vmem:[%s1 + $0x15a8] sm:$0xff]
    %v740 = vld [vmem:[%s1 + $0x15b0] sm:$0xff]
    %v741 = vld [vmem:[%s1 + $0x15b8] sm:$0xff]
    %v742 = vld [vmem:[%s1 + $0x15c0] sm:$0xff]
    %v743 = vld [vmem:[%s1 + $0x15c8] sm:$0xff]
    %v744 = vld [vmem:[%s1 + $0x15d0] sm:$0xff]
    %v745 = vld [vmem:[%s1 + $0x15d8] sm:$0xff]
    %v746 = vld [vmem:[%s1 + $0x15e0] sm:$0xff]
    %v747 = vld [vmem:[%s1 + $0x15e8] sm:$0xff]
    %v748 = vld [vmem:[%s1 + $0x15f0] sm:$0xff]
    %v749 = vld [vmem:[%s1 + $0x15f8] sm:$0xff]
    %v750 = vld [vmem:[%s1 + $0x1600] sm:$0xff]
    %v751 = vld [vmem:[%s1 + $0x1608] sm:$0xff]
    %v752 = vld [vmem:[%s1 + $0x1610] sm:$0xff]
    %v753 = vld [vmem:[%s1 + $0x1618] sm:$0xff]
    %v754 = vld [vmem:[%s1 + $0x1620] sm:$0xff]
    %v755 = vld [vmem:[%s1 + $0x1628] sm:$0xff]
    %v756 = vld [vmem:[%s1 + $0x1630] sm:$0xff]
    %v757 = vld [vmem:[%s1 + $0x1638] sm:$0xff]
    %v758 = vld [vmem:[%s1 + $0x1640] sm:$0xff]
    %v759 = vld [vmem:[%s1 + $0x1648] sm:$0xff]
    %v760 = vld [vmem:[%s1 + $0x1650] sm:$0xff]
    %v761 = vld [vmem:[%s1 + $0x1658] sm:$0xff]
    %v762 = vld [vmem:[%s1 + $0x1660] sm:$0xff]
    %v763 = vld [vmem:[%s1 + $0x1668] sm:$0xff]
    %v764 = vld [vmem:[%s1 + $0x1670] sm:$0xff]
    %v765 = vld [vmem:[%s1 + $0x1678] sm:$0xff]
    %v766 = vld [vmem:[%s1 + $0x1680] sm:$0xff]
    %v767 = vld [vmem:[%s1 + $0x1688] sm:$0xff]
    %v768 = vld [vmem:[%s1 + $0x1690] sm:$0xff]
    %v769 = vld [vmem:[%s1 + $0x1698] sm:$0xff]
    %v770 = vld [vmem:[%s1 + $0x16a0] sm:$0xff]
    %v771 = vld [vmem:[%s1 + $0x16a8] sm:$0xff]
    %v772 = vld [vmem:[%s1 + $0x16b0] sm:$0xff]
    %v773 = vld [vmem:[%s1 + $0x16b8] sm:$0xff]
    %v774 = vld [vmem:[%s1 + $0x16c0] sm:$0xff]
    %v775 = vld [vmem:[%s1 + $0x16c8] sm:$0xff]
    %v776 = vld [vmem:[%s1 + $0x16d0] sm:$0xff]
    %v777 = vld [vmem:[%s1 + $0x16d8] sm:$0xff]
    %v778 = vld [vmem:[%s1 + $0x16e0] sm:$0xff]
    %v779 = vld [vmem:[%s1 + $0x16e8] sm:$0xff]
    %v780 = vld [vmem:[%s1 + $0x16f0] sm:$0xff]
    %v781 = vld [vmem:[%s1 + $0x16f8] sm:$0xff]
    %v782 = vld [vmem:[%s1 + $0x1700] sm:$0xff]
    %v783 = vld [vmem:[%s1 + $0x1708] sm:$0xff]
    %v784 = vld [vmem:[%s1 + $0x1710] sm:$0xff]
    %v785 = vld [vmem:[%s1 + $0x1718] sm:$0xff]
    %v786 = vld [vmem:[%s1 + $0x1720] sm:$0xff]
    %v787 = vld [vmem:[%s1 + $0x1728] sm:$0xff]
    %v788 = vld [vmem:[%s1 + $0x1730] sm:$0xff]
    %v789 = vld [vmem:[%s1 + $0x1738] sm:$0xff]
    %v790 = vld [vmem:[%s1 + $0x1740] sm:$0xff]
    %v791 = vld [vmem:[%s1 + $0x1748] sm:$0xff]
    %v792 = vld [vmem:[%s1 + $0x1750] sm:$0xff]
    %v793 = vld [vmem:[%s1 + $0x1758] sm:$0xff]
    %v794 = vld [vmem:[%s1 + $0x1760] sm:$0xff]
    %v795 = vld [vmem:[%s1 + $0x1768] sm:$0xff]
    %v796 = vld [vmem:[%s1 + $0x1770] sm:$0xff]
    %v797 = vld [vmem:[%s1 + $0x1778] sm:$0xff]
    %v798 = vld [vmem:[%s1 + $0x1780] sm:$0xff]
    %v799 = vld [vmem:[%s1 + $0x1788] sm:$0xff]
    %v800 = vld [vmem:[%s1 + $0x1790] sm:$0xff]
    %v801 = vld [vmem:[%s1 + $0x1798] sm:$0xff]
    %v802 = vld [vmem:[%s1 + $0x17a0] sm:$0xff]
    %v803 = vld [vmem:[%s1 + $0x17a8] sm:$0xff]
    %v804 = vld [vmem:[%s1 + $0x17b0] sm:$0xff]
    %v805 = vld [vmem:[%s1 + $0x17b8] sm:$0xff]
    %v806 = vld [vmem:[%s1 + $0x17c0] sm:$0xff]
    %v807 = vld [vmem:[%s1 + $0x17c8] sm:$0xff]
    %v808 = vld [vmem:[%s1 + $0x17d0] sm:$0xff]
    %v809 = vld [vmem:[%s1 + $0x17d8] sm:$0xff]
    %v810 = vld [vmem:[%s1 + $0x17e0] sm:$0xff]
    %v811 = vld [vmem:[%s1 + $0x17e8] sm:$0xff]
    %v812 = vld [vmem:[%s1 + $0x17f0] sm:$0xff]
    %v813 = vld [vmem:[%s1 + $0x17f8] sm:$0xff]
    %v814 = vld [vmem:[%s1 + $0x1800] sm:$0xff]
    %v815 = vld [vmem:[%s1 + $0x1808] sm:$0xff]
    %v816 = vld [vmem:[%s1 + $0x1810] sm:$0xff]
    %v817 = vld [vmem:[%s1 + $0x1818] sm:$0xff]
    %v818 = vld [vmem:[%s1 + $0x1820] sm:$0xff]
    %v819 = vld [vmem:[%s1 + $0x1828] sm:$0xff]
    %v820 = vld [vmem:[%s1 + $0x1830] sm:$0xff]
    %v821 = vld [vmem:[%s1 + $0x1838] sm:$0xff]
    %v822 = vld [vmem:[%s1 + $0x1840] sm:$0xff]
    %v823 = vld [vmem:[%s1 + $0x1848] sm:$0xff]
    %v824 = vld [vmem:[%s1 + $0x1850] sm:$0xff]
    %v825 = vld [vmem:[%s1 + $0x1858] sm:$0xff]
    %v826 = vld [vmem:[%s1 + $0x1860] sm:$0xff]
    %v827 = vld [vmem:[%s1 + $0x1868] sm:$0xff]
    %v828 = vld [vmem:[%s1 + $0x1870] sm:$0xff]
    %v829 = vld [vmem:[%s1 + $0x1878] sm:$0xff]
    %v830 = vld [vmem:[%s1 + $0x1880] sm:$0xff]
    %v831 = vld [vmem:[%s1 + $0x1888] sm:$0xff]
    %v832 = vld [vmem:[%s1 + $0x1890] sm:$0xff]
    %v833 = vld [vmem:[%s1 + $0x1898] sm:$0xff]
    %v834 = vld [vmem:[%s1 + $0x18a0] sm:$0xff]
    %v835 = vld [vmem:[%s1 + $0x18a8] sm:$0xff]
    %v836 = vld [vmem:[%s1 + $0x18b0] sm:$0xff]
    %v837 = vld [vmem:[%s1 + $0x18b8] sm:$0xff]
    %v838 = vld [vmem:[%s1 + $0x18c0] sm:$0xff]
    %v839 = vld [vmem:[%s1 + $0x18c8] sm:$0xff]
    %v840 = vld [vmem:[%s1 + $0x18d0] sm:$0xff]
    %v841 = vld [vmem:[%s1 + $0x18d8] sm:$0xff]
    %v842 = vld [vmem:[%s1 + $0x18e0] sm:$0xff]
    %v843 = vld [vmem:[%s1 + $0x18e8] sm:$0xff]
    %v844 = vld [vmem:[%s1 + $0x18f0] sm:$0xff]
    %v845 = vld [vmem:[%s1 + $0x18f8] sm:$0xff]
    %v846 = vld [vmem:[%s1 + $0x1900] sm:$0xff]
    %v847 = vld [vmem:[%s1 + $0x1908] sm:$0xff]
    %v848 = vld [vmem:[%s1 + $0x1910] sm:$0xff]
    %v849 = vld [vmem:[%s1 + $0x1918] sm:$0xff]
    %v850 = vld [vmem:[%s1 + $0x1920] sm:$0xff]
    %v851 = vld [vmem:[%s1 + $0x1928] sm:$0xff]
    %v852 = vld [vmem:[%s1 + $0x1930] sm:$0xff]
    %v853 = vld [vmem:[%s1 + $0x1938] sm:$0xff]
    %v854 = vld [vmem:[%s1 + $0x1940] sm:$0xff]
    %v855 = vld [vmem:[%s1 + $0x1948] sm:$0xff]
    %v856 = vld [vmem:[%s1 + $0x1950] sm:$0xff]
    %v857 = vld [vmem:[%s1 + $0x1958] sm:$0xff]
    %v858 = vld [vmem:[%s1 + $0x1960] sm:$0xff]
    %v859 = vld [vmem:[%s1 + $0x1968] sm:$0xff]
    %v860 = vld [vmem:[%s1 + $0x1970] sm:$0xff]
    %v861 = vld [vmem:[%s1 + $0x1978] sm:$0xff]
    %v862 = vld [vmem:[%s1 + $0x1980] sm:$0xff]
    %v863 = vld [vmem:[%s1 + $0x1988] sm:$0xff]
    %v864 = vld [vmem:[%s1 + $0x1990] sm:$0xff]
    %v865 = vld [vmem:[%s1 + $0x1998] sm:$0xff]
    %v866 = vld [vmem:[%s1 + $0x19a0] sm:$0xff]
    %v867 = vld [vmem:[%s1 + $0x19a8] sm:$0xff]
    %v868 = vld [vmem:[%s1 + $0x19b0] sm:$0xff]
    %v869 = vld [vmem:[%s1 + $0x19b8] sm:$0xff]
    %v870 = vld [vmem:[%s1 + $0x19c0] sm:$0xff]
    %v871 = vld [vmem:[%s1 + $0x19c8] sm:$0xff]
    %v872 = vld [vmem:[%s1 + $0x19d0] sm:$0xff]
    %v873 = vld [vmem:[%s1 + $0x19d8] sm:$0xff]
    %v874 = vld [vmem:[%s1 + $0x19e0] sm:$0xff]
    %v875 = vld [vmem:[%s1 + $0x19e8] sm:$0xff]
    %v876 = vld [vmem:[%s1 + $0x19f0] sm:$0xff]
    %v877 = vld [vmem:[%s1 + $0x19f8] sm:$0xff]
    %v878 = vld [vmem:[%s1 + $0x1a00] sm:$0xff]
    %v879 = vld [vmem:[%s1 + $0x1a08] sm:$0xff]
    %v880 = vld [vmem:[%s1 + $0x1a10] sm:$0xff]
    %v881 = vld [vmem:[%s1 + $0x1a18] sm:$0xff]
    %v882 = vld [vmem:[%s1 + $0x1a20] sm:$0xff]
    %v883 = vld [vmem:[%s1 + $0x1a28] sm:$0xff]
    %v884 = vld [vmem:[%s1 + $0x1a30] sm:$0xff]
    %v885 = vld [vmem:[%s1 + $0x1a38] sm:$0xff]
    %v886 = vld [vmem:[%s1 + $0x1a40] sm:$0xff]
    %v887 = vld [vmem:[%s1 + $0x1a48] sm:$0xff]
    %v888 = vld [vmem:[%s1 + $0x1a50] sm:$0xff]
    %v889 = vld [vmem:[%s1 + $0x1a58] sm:$0xff]
    %v890 = vld [vmem:[%s1 + $0x1a60] sm:$0xff]
    %v891 = vld [vmem:[%s1 + $0x1a68] sm:$0xff]
    %v892 = vld [vmem:[%s1 + $0x1a70] sm:$0xff]
    %v893 = vld [vmem:[%s1 + $0x1a78] sm:$0xff]
    %v894 = vld [vmem:[%s1 + $0x1a80] sm:$0xff]
    %v895 = vld [vmem:[%s1 + $0x1a88] sm:$0xff]
    %v896 = vld [vmem:[%s1 + $0x1a90] sm:$0xff]
    %v897 = vld [vmem:[%s1 + $0x1a98] sm:$0xff]
    %v898 = vld [vmem:[%s1 + $0x1aa0] sm:$0xff]
    %v899 = vld [vmem:[%s1 + $0x1aa8] sm:$0xff]
    %v900 = vld [vmem:[%s1 + $0x1ab0] sm:$0xff]
    %v901 = vld [vmem:[%s1 + $0x1ab8] sm:$0xff]
    %v902 = vld [vmem:[%s1 + $0x1ac0] sm:$0xff]
    %v903 = vld [vmem:[%s1 + $0x1ac8] sm:$0xff]
    %v904 = vld [vmem:[%s1 + $0x1ad0] sm:$0xff]
    %v905 = vld [vmem:[%s1 + $0x1ad8] sm:$0xff]
    %v906 = vld [vmem:[%s1 + $0x1ae0] sm:$0xff]
    %v907 = vld [vmem:[%s1 + $0x1ae8] sm:$0xff]
    %v908 = vld [vmem:[%s1 + $0x1af0] sm:$0xff]
    %v909 = vld [vmem:[%s1 + $0x1af8] sm:$0xff]
    %v910 = vld [vmem:[%s1 + $0x1b00] sm:$0xff]
    %v911 = vld [vmem:[%s1 + $0x1b08] sm:$0xff]
    %v912 = vld [vmem:[%s1 + $0x1b10] sm:$0xff]
    %v913 = vld [vmem:[%s1 + $0x1b18] sm:$0xff]
    %v914 = vld [vmem:[%s1 + $0x1b20] sm:$0xff]
    %v915 = vld [vmem:[%s1 + $0x1b28] sm:$0xff]
    %v916 = vld [vmem:[%s1 + $0x1b30] sm:$0xff]
    %v917 = vld [vmem:[%s1 + $0x1b38] sm:$0xff]
    %v918 = vld [vmem:[%s1 + $0x1b40] sm:$0xff]
    %v919 = vld [vmem:[%s1 + $0x1b48] sm:$0xff]
    %v920 = vld [vmem:[%s1 + $0x1b50] sm:$0xff]
    %v921 = vld [vmem:[%s1 + $0x1b58] sm:$0xff]
    %v922 = vld [vmem:[%s1 + $0x1b60] sm:$0xff]
    %v923 = vld [vmem:[%s1 + $0x1b68] sm:$0xff]
    %v924 = vld [vmem:[%s1 + $0x1b70] sm:$0xff]
    %v925 = vld [vmem:[%s1 + $0x1b78] sm:$0xff]
    %v926 = vld [vmem:[%s1 + $0x1b80] sm:$0xff]
    %v927 = vld [vmem:[%s1 + $0x1b88] sm:$0xff]
    %v928 = vld [vmem:[%s1 + $0x1b90] sm:$0xff]
    %v929 = vld [vmem:[%s1 + $0x1b98] sm:$0xff]
    %v930 = vld [vmem:[%s1 + $0x1ba0] sm:$0xff]
    %v931 = vld [vmem:[%s1 + $0x1ba8] sm:$0xff]
    %v932 = vld [vmem:[%s1 + $0x1bb0] sm:$0xff]
    %v933 = vld [vmem:[%s1 + $0x1bb8] sm:$0xff]
    %v934 = vld [vmem:[%s1 + $0x1bc0] sm:$0xff]
    %v935 = vld [vmem:[%s1 + $0x1bc8] sm:$0xff]
    %v936 = vld [vmem:[%s1 + $0x1bd0] sm:$0xff]
    %v937 = vld [vmem:[%s1 + $0x1bd8] sm:$0xff]
    %v938 = vld [vmem:[%s1 + $0x1be0] sm:$0xff]
    %v939 = vld [vmem:[%s1 + $0x1be8] sm:$0xff]
    %v940 = vld [vmem:[%s1 + $0x1bf0] sm:$0xff]
    %v941 = vld [vmem:[%s1 + $0x1bf8] sm:$0xff]
    %v942 = vld [vmem:[%s1 + $0x1c00] sm:$0xff]
    %v943 = vld [vmem:[%s1 + $0x1c08] sm:$0xff]
    %v944 = vld [vmem:[%s1 + $0x1c10] sm:$0xff]
    %v945 = vld [vmem:[%s1 + $0x1c18] sm:$0xff]
    %v946 = vld [vmem:[%s1 + $0x1c20] sm:$0xff]
    %v947 = vld [vmem:[%s1 + $0x1c28] sm:$0xff]
    %v948 = vld [vmem:[%s1 + $0x1c30] sm:$0xff]
    %v949 = vld [vmem:[%s1 + $0x1c38] sm:$0xff]
    %v950 = vld [vmem:[%s1 + $0x1c40] sm:$0xff]
    %v951 = vld [vmem:[%s1 + $0x1c48] sm:$0xff]
    %v952 = vld [vmem:[%s1 + $0x1c50] sm:$0xff]
    %v953 = vld [vmem:[%s1 + $0x1c58] sm:$0xff]
    %v954 = vld [vmem:[%s1 + $0x1c60] sm:$0xff]
    %v955 = vld [vmem:[%s1 + $0x1c68] sm:$0xff]
    %v956 = vld [vmem:[%s1 + $0x1c70] sm:$0xff]
    %v957 = vld [vmem:[%s1 + $0x1c78] sm:$0xff]
    %v958 = vld [vmem:[%s1 + $0x1c80] sm:$0xff]
    %v959 = vld [vmem:[%s1 + $0x1c88] sm:$0xff]
    %v960 = vld [vmem:[%s1 + $0x1c90] sm:$0xff]
    %v961 = vld [vmem:[%s1 + $0x1c98] sm:$0xff]
    %v962 = vld [vmem:[%s1 + $0x1ca0] sm:$0xff]
    %v963 = vld [vmem:[%s1 + $0x1ca8] sm:$0xff]
    %v964 = vld [vmem:[%s1 + $0x1cb0] sm:$0xff]
    %v965 = vld [vmem:[%s1 + $0x1cb8] sm:$0xff]
    %v966 = vld [vmem:[%s1 + $0x1cc0] sm:$0xff]
    %v967 = vld [vmem:[%s1 + $0x1cc8] sm:$0xff]
    %v968 = vld [vmem:[%s1 + $0x1cd0] sm:$0xff]
    %v969 = vld [vmem:[%s1 + $0x1cd8] sm:$0xff]
    %v970 = vld [vmem:[%s1 + $0x1ce0] sm:$0xff]
    %v971 = vld [vmem:[%s1 + $0x1ce8] sm:$0xff]
    %v972 = vld [vmem:[%s1 + $0x1cf0] sm:$0xff]
    %v973 = vld [vmem:[%s1 + $0x1cf8] sm:$0xff]
    %v974 = vld [vmem:[%s1 + $0x1d00] sm:$0xff]
    %v975 = vld [vmem:[%s1 + $0x1d08] sm:$0xff]
    %v976 = vld [vmem:[%s1 + $0x1d10] sm:$0xff]
    %v977 = vld [vmem:[%s1 + $0x1d18] sm:$0xff]
    %v978 = vld [vmem:[%s1 + $0x1d20] sm:$0xff]
    %v979 = vld [vmem:[%s1 + $0x1d28] sm:$0xff]
    %v980 = vld [vmem:[%s1 + $0x1d30] sm:$0xff]
    %v981 = vld [vmem:[%s1 + $0x1d38] sm:$0xff]
    %v982 = vld [vmem:[%s1 + $0x1d40] sm:$0xff]
    %v983 = vld [vmem:[%s1 + $0x1d48] sm:$0xff]
    %v984 = vld [vmem:[%s1 + $0x1d50] sm:$0xff]
    %v985 = vld [vmem:[%s1 + $0x1d58] sm:$0xff]
    %v986 = vld [vmem:[%s1 + $0x1d60] sm:$0xff]
    %v987 = vld [vmem:[%s1 + $0x1d68] sm:$0xff]
    %v988 = vld [vmem:[%s1 + $0x1d70] sm:$0xff]
    %v989 = vld [vmem:[%s1 + $0x1d78] sm:$0xff]
    %v990 = vld [vmem:[%s1 + $0x1d80] sm:$0xff]
    %v991 = vld [vmem:[%s1 + $0x1d88] sm:$0xff]
    %v992 = vld [vmem:[%s1 + $0x1d90] sm:$0xff]
    %v993 = vld [vmem:[%s1 + $0x1d98] sm:$0xff]
    %v994 = vld [vmem:[%s1 + $0x1da0] sm:$0xff]
    %v995 = vld [vmem:[%s1 + $0x1da8] sm:$0xff]
    %v996 = vld [vmem:[%s1 + $0x1db0] sm:$0xff]
    %v997 = vld [vmem:[%s1 + $0x1db8] sm:$0xff]
    %v998 = vld [vmem:[%s1 + $0x1dc0] sm:$0xff]
    %v999 = vld [vmem:[%s1 + $0x1dc8] sm:$0xff]
    %v1000 = vld [vmem:[%s1 + $0x1dd0] sm:$0xff]
    %v1001 = vld [vmem:[%s1 + $0x1dd8] sm:$0xff]
    %v1002 = vld [vmem:[%s1 + $0x1de0] sm:$0xff]
    %v1003 = vld [vmem:[%s1 + $0x1de8] sm:$0xff]
    %v1004 = vld [vmem:[%s1 + $0x1df0] sm:$0xff]
    %v1005 = vld [vmem:[%s1 + $0x1df8] sm:$0xff]
    %v1006 = vld [vmem:[%s1 + $0x1e00] sm:$0xff]
    %v1007 = vld [vmem:[%s1 + $0x1e08] sm:$0xff]
    %v1008 = vld [vmem:[%s1 + $0x1e10] sm:$0xff]
    %v1009 = vld [vmem:[%s1 + $0x1e18] sm:$0xff]
    %v1010 = vld [vmem:[%s1 + $0x1e20] sm:$0xff]
    %v1011 = vld [vmem:[%s1 + $0x1e28] sm:$0xff]
    %v1012 = vld [vmem:[%s1 + $0x1e30] sm:$0xff]
    %v1013 = vld [vmem:[%s1 + $0x1e38] sm:$0xff]
    %v1014 = vld [vmem:[%s1 + $0x1e40] sm:$0xff]
    %v1015 = vld [vmem:[%s1 + $0x1e48] sm:$0xff]
    %v1016 = vld [vmem:[%s1 + $0x1e50] sm:$0xff]
    %v1017 = vld [vmem:[%s1 + $0x1e58] sm:$0xff]
    %v1018 = vld [vmem:[%s1 + $0x1e60] sm:$0xff]
    %v1019 = vld [vmem:[%s1 + $0x1e68] sm:$0xff]
    %v1020 = vld [vmem:[%s1 + $0x1e70] sm:$0xff]
    %v1021 = vld [vmem:[%s1 + $0x1e78] sm:$0xff]
    %v1022 = vld [vmem:[%s1 + $0x1e80] sm:$0xff]
    %v1023 = vld [vmem:[%s1 + $0x1e88] sm:$0xff]
    %v1024 = vld [vmem:[%s1 + $0x1e90] sm:$0xff]
    %v1025 = vld [vmem:[%s1 + $0x1e98] sm:$0xff]
    %v1026 = vld [vmem:[%s1 + $0x1ea0] sm:$0xff]
    %v1027 = vld [vmem:[%s1 + $0x1ea8] sm:$0xff]
    %v1028 = vld [vmem:[%s1 + $0x1eb0] sm:$0xff]
    %v1029 = vld [vmem:[%s1 + $0x1eb8] sm:$0xff]
    %v1030 = vld [vmem:[%s1 + $0x1ec0] sm:$0xff]
    %v1031 = vld [vmem:[%s1 + $0x1ec8] sm:$0xff]
    %v1032 = vld [vmem:[%s1 + $0x1ed0] sm:$0xff]
    %v1033 = vld [vmem:[%s1 + $0x1ed8] sm:$0xff]
    %v1034 = vld [vmem:[%s1 + $0x1ee0] sm:$0xff]
    %v1035 = vld [vmem:[%s1 + $0x1ee8] sm:$0xff]
    %v1036 = vld [vmem:[%s1 + $0x1ef0] sm:$0xff]
    %v1037 = vld [vmem:[%s1 + $0x1ef8] sm:$0xff]
    %v1038 = vld [vmem:[%s1 + $0x1f00] sm:$0xff]
    %v1039 = vld [vmem:[%s1 + $0x1f08] sm:$0xff]
    %v1040 = vld [vmem:[%s1 + $0x1f10] sm:$0xff]
    %v1041 = vld [vmem:[%s1 + $0x1f18] sm:$0xff]
    %v1042 = vld [vmem:[%s1 + $0x1f20] sm:$0xff]
    %v1043 = vld [vmem:[%s1 + $0x1f28] sm:$0xff]
    %v1044 = vld [vmem:[%s1 + $0x1f30] sm:$0xff]
    %v1045 = vld [vmem:[%s1 + $0x1f38] sm:$0xff]
    %v1046 = vld [vmem:[%s1 + $0x1f40] sm:$0xff]
    %v1047 = vld [vmem:[%s1 + $0x1f48] sm:$0xff]
    %v1048 = vld [vmem:[%s1 + $0x1f50] sm:$0xff]
    %v1049 = vld [vmem:[%s1 + $0x1f58] sm:$0xff]
    %v1050 = vld [vmem:[%s1 + $0x1f60] sm:$0xff]
    %v1051 = vld [vmem:[%s1 + $0x1f68] sm:$0xff]
    %v1052 = vld [vmem:[%s1 + $0x1f70] sm:$0xff]
    %v1053 = vld [vmem:[%s1 + $0x1f78] sm:$0xff]
    %v1054 = vld [vmem:[%s1 + $0x1f80] sm:$0xff]
    %v1055 = vld [vmem:[%s1 + $0x1f88] sm:$0xff]
    %v1056 = vld [vmem:[%s1 + $0x1f90] sm:$0xff]
    %v1057 = vld [vmem:[%s1 + $0x1f98] sm:$0xff]
    %v1058 = vld [vmem:[%s1 + $0x1fa0] sm:$0xff]
    %v1059 = vld [vmem:[%s1 + $0x1fa8] sm:$0xff]
    %v1060 = vld [vmem:[%s1 + $0x1fb0] sm:$0xff]
    %v1061 = vld [vmem:[%s1 + $0x1fb8] sm:$0xff]
    %v1062 = vld [vmem:[%s1 + $0x1fc0] sm:$0xff]
    %v1063 = vld [vmem:[%s1 + $0x1fc8] sm:$0xff]
    %v1064 = vld [vmem:[%s1 + $0x1fd0] sm:$0xff]
    %v1065 = vld [vmem:[%s1 + $0x1fd8] sm:$0xff]
    %v1066 = vld [vmem:[%s1 + $0x1fe0] sm:$0xff]
    %v1067 = vld [vmem:[%s1 + $0x1fe8] sm:$0xff]
    %v1068 = vld [vmem:[%s1 + $0x1ff0] sm:$0xff]
    %v1069 = vld [vmem:[%s1 + $0x1ff8] sm:$0xff]
    %v1070 = vld [vmem:[%s1 + $0x2000] sm:$0xff]
    %v1071 = vld [vmem:[%s1 + $0x2008] sm:$0xff]
    %v1072 = vld [vmem:[%s1 + $0x2010] sm:$0xff]
    %v1073 = vld [vmem:[%s1 + $0x2018] sm:$0xff]
    %v1074 = vld [vmem:[%s1 + $0x2020] sm:$0xff]
    %v1075 = vld [vmem:[%s1 + $0x2028] sm:$0xff]
    %v1076 = vld [vmem:[%s1 + $0x2030] sm:$0xff]
    %v1077 = vld [vmem:[%s1 + $0x2038] sm:$0xff]
    %v1078 = vld [vmem:[%s1 + $0x2040] sm:$0xff]
    %v1079 = vld [vmem:[%s1 + $0x2048] sm:$0xff]
    %v1080 = vld [vmem:[%s1 + $0x2050] sm:$0xff]
    %v1081 = vld [vmem:[%s1 + $0x2058] sm:$0xff]
    %v1082 = vld [vmem:[%s1 + $0x2060] sm:$0xff]
    %v1083 = vld [vmem:[%s1 + $0x2068] sm:$0xff]
    %v1084 = vld [vmem:[%s1 + $0x2070] sm:$0xff]
    %v1085 = vld [vmem:[%s1 + $0x2078] sm:$0xff]
    %v1086 = vld [vmem:[%s1 + $0x2080] sm:$0xff]
    %v1087 = vld [vmem:[%s1 + $0x2088] sm:$0xff]
    %v1088 = vld [vmem:[%s1 + $0x2090] sm:$0xff]
    %v1089 = vld [vmem:[%s1 + $0x2098] sm:$0xff]
    %v1090 = vld [vmem:[%s1 + $0x20a0] sm:$0xff]
    %v1091 = vld [vmem:[%s1 + $0x20a8] sm:$0xff]
    %v1092 = vld [vmem:[%s1 + $0x20b0] sm:$0xff]
    %v1093 = vld [vmem:[%s1 + $0x20b8] sm:$0xff]
    %v1094 = vld [vmem:[%s1 + $0x20c0] sm:$0xff]
    %v1095 = vld [vmem:[%s1 + $0x20c8] sm:$0xff]
    %v1096 = vld [vmem:[%s1 + $0x20d0] sm:$0xff]
    %v1097 = vld [vmem:[%s1 + $0x20d8] sm:$0xff]
    %v1098 = vld [vmem:[%s1 + $0x20e0] sm:$0xff]
    %v1099 = vld [vmem:[%s1 + $0x20e8] sm:$0xff]
    %v1100 = vld [vmem:[%s1 + $0x20f0] sm:$0xff]
    %v1101 = vld [vmem:[%s1 + $0x20f8] sm:$0xff]
    %v1102 = vld [vmem:[%s1 + $0x2100] sm:$0xff]
    %v1103 = vld [vmem:[%s1 + $0x2108] sm:$0xff]
    %v1104 = vld [vmem:[%s1 + $0x2110] sm:$0xff]
    %v1105 = vld [vmem:[%s1 + $0x2118] sm:$0xff]
    %v1106 = vld [vmem:[%s1 + $0x2120] sm:$0xff]
    %v1107 = vld [vmem:[%s1 + $0x2128] sm:$0xff]
    %v1108 = vld [vmem:[%s1 + $0x2130] sm:$0xff]
    %v1109 = vld [vmem:[%s1 + $0x2138] sm:$0xff]
    %v1110 = vld [vmem:[%s1 + $0x2140] sm:$0xff]
    %v1111 = vld [vmem:[%s1 + $0x2148] sm:$0xff]
    %v1112 = vld [vmem:[%s1 + $0x2150] sm:$0xff]
    %v1113 = vld [vmem:[%s1 + $0x2158] sm:$0xff]
    %v1114 = vld [vmem:[%s1 + $0x2160] sm:$0xff]
    %v1115 = vld [vmem:[%s1 + $0x2168] sm:$0xff]
    %v1116 = vld [vmem:[%s1 + $0x2170] sm:$0xff]
    %v1117 = vld [vmem:[%s1 + $0x2178] sm:$0xff]
    %v1118 = vld [vmem:[%s1 + $0x2180] sm:$0xff]
    %v1119 = vld [vmem:[%s1 + $0x2188] sm:$0xff]
    %v1120 = vld [vmem:[%s1 + $0x2190] sm:$0xff]
    %v1121 = vld [vmem:[%s1 + $0x2198] sm:$0xff]
    %v1122 = vld [vmem:[%s1 + $0x21a0] sm:$0xff]
    %v1123 = vld [vmem:[%s1 + $0x21a8] sm:$0xff]
    %v1124 = vld [vmem:[%s1 + $0x21b0] sm:$0xff]
    %v1125 = vld [vmem:[%s1 + $0x21b8] sm:$0xff]
    %v1126 = vld [vmem:[%s1 + $0x21c0] sm:$0xff]
    %v1127 = vld [vmem:[%s1 + $0x21c8] sm:$0xff]
    %v1128 = vld [vmem:[%s1 + $0x21d0] sm:$0xff]
    %v1129 = vld [vmem:[%s1 + $0x21d8] sm:$0xff]
    %v1130 = vld [vmem:[%s1 + $0x21e0] sm:$0xff]
    %v1131 = vld [vmem:[%s1 + $0x21e8] sm:$0xff]
    %v1132 = vld [vmem:[%s1 + $0x21f0] sm:$0xff]
    %v1133 = vld [vmem:[%s1 + $0x21f8] sm:$0xff]
    %v1134 = vld [vmem:[%s1 + $0x2200] sm:$0xff]
    %v1135 = vld [vmem:[%s1 + $0x2208] sm:$0xff]
    %v1136 = vld [vmem:[%s1 + $0x2210] sm:$0xff]
    %v1137 = vld [vmem:[%s1 + $0x2218] sm:$0xff]
    %v1138 = vld [vmem:[%s1 + $0x2220] sm:$0xff]
    %v1139 = vld [vmem:[%s1 + $0x2228] sm:$0xff]
    %v1140 = vld [vmem:[%s1 + $0x2230] sm:$0xff]
    %v1141 = vld [vmem:[%s1 + $0x2238] sm:$0xff]
    %v1142 = vld [vmem:[%s1 + $0x2240] sm:$0xff]
    %v1143 = vld [vmem:[%s1 + $0x2248] sm:$0xff]
    %v1144 = vld [vmem:[%s1 + $0x2250] sm:$0xff]
    %v1145 = vld [vmem:[%s1 + $0x2258] sm:$0xff]
    %v1146 = vld [vmem:[%s1 + $0x2260] sm:$0xff]
    %v1147 = vld [vmem:[%s1 + $0x2268] sm:$0xff]
    %v1148 = vld [vmem:[%s1 + $0x2270] sm:$0xff]
    %v1149 = vld [vmem:[%s1 + $0x2278] sm:$0xff]
    %v1150 = vld [vmem:[%s1 + $0x2280] sm:$0xff]
    %v1151 = vld [vmem:[%s1 + $0x2288] sm:$0xff]
    %v1152 = vld [vmem:[%s1 + $0x2290] sm:$0xff]
    %v1153 = vld [vmem:[%s1 + $0x2298] sm:$0xff]
    %v1154 = vld [vmem:[%s1 + $0x22a0] sm:$0xff]
    %v1155 = vld [vmem:[%s1 + $0x22a8] sm:$0xff]
    %v1156 = vld [vmem:[%s1 + $0x22b0] sm:$0xff]
    %v1157 = vld [vmem:[%s1 + $0x22b8] sm:$0xff]
    %v1158 = vld [vmem:[%s1 + $0x22c0] sm:$0xff]
    %v1159 = vld [vmem:[%s1 + $0x22c8] sm:$0xff]
    %v1160 = vld [vmem:[%s1 + $0x22d0] sm:$0xff]
    %v1161 = vld [vmem:[%s1 + $0x22d8] sm:$0xff]
    %v1162 = vld [vmem:[%s1 + $0x22e0] sm:$0xff]
    %v1163 = vld [vmem:[%s1 + $0x22e8] sm:$0xff]
    %v1164 = vld [vmem:[%s1 + $0x22f0] sm:$0xff]
    %v1165 = vld [vmem:[%s1 + $0x22f8] sm:$0xff]
    %v1166 = vld [vmem:[%s1 + $0x2300] sm:$0xff]
    %v1167 = vld [vmem:[%s1 + $0x2308] sm:$0xff]
    %v1168 = vld [vmem:[%s1 + $0x2310] sm:$0xff]
    %v1169 = vld [vmem:[%s1 + $0x2318] sm:$0xff]
    %v1170 = vld [vmem:[%s1 + $0x2320] sm:$0xff]
    %v1171 = vld [vmem:[%s1 + $0x2328] sm:$0xff]
    %v1172 = vld [vmem:[%s1 + $0x2330] sm:$0xff]
    %v1173 = vld [vmem:[%s1 + $0x2338] sm:$0xff]
    %v1174 = vld [vmem:[%s1 + $0x2340] sm:$0xff]
    %v1175 = vld [vmem:[%s1 + $0x2348] sm:$0xff]
    %v1176 = vld [vmem:[%s1 + $0x2350] sm:$0xff]
    %v1177 = vld [vmem:[%s1 + $0x2358] sm:$0xff]
    %v1178 = vld [vmem:[%s1 + $0x2360] sm:$0xff]
    %v1179 = vld [vmem:[%s1 + $0x2368] sm:$0xff]
    %v1180 = vld [vmem:[%s1 + $0x2370] sm:$0xff]
    %v1181 = vld [vmem:[%s1 + $0x2378] sm:$0xff]
    %v1182 = vld [vmem:[%s1 + $0x2380] sm:$0xff]
    %v1183 = vld [vmem:[%s1 + $0x2388] sm:$0xff]
    %v1184 = vld [vmem:[%s1 + $0x2390] sm:$0xff]
    %v1185 = vld [vmem:[%s1 + $0x2398] sm:$0xff]
    %v1186 = vld [vmem:[%s1 + $0x23a0] sm:$0xff]
    %v1187 = vld [vmem:[%s1 + $0x23a8] sm:$0xff]
    %v1188 = vld [vmem:[%s1 + $0x23b0] sm:$0xff]
    %v1189 = vld [vmem:[%s1 + $0x23b8] sm:$0xff]
    %v1190 = vld [vmem:[%s1 + $0x23c0] sm:$0xff]
    %v1191 = vld [vmem:[%s1 + $0x23c8] sm:$0xff]
    %v1192 = vld [vmem:[%s1 + $0x23d0] sm:$0xff]
    %v1193 = vld [vmem:[%s1 + $0x23d8] sm:$0xff]
    %v1194 = vld [vmem:[%s1 + $0x23e0] sm:$0xff]
    %v1195 = vld [vmem:[%s1 + $0x23e8] sm:$0xff]
    %v1196 = vld [vmem:[%s1 + $0x23f0] sm:$0xff]
    %v1197 = vld [vmem:[%s1 + $0x23f8] sm:$0xff]
    %v1198 = vld [vmem:[%s1 + $0x2400] sm:$0xff]
    %v1199 = vld [vmem:[%s1 + $0x2408] sm:$0xff]
    %v1200 = vld [vmem:[%s1 + $0x2410] sm:$0xff]
    %v1201 = vld [vmem:[%s1 + $0x2418] sm:$0xff]
    %v1202 = vld [vmem:[%s1 + $0x2420] sm:$0xff]
    %v1203 = vld [vmem:[%s1 + $0x2428] sm:$0xff]
    %v1204 = vld [vmem:[%s1 + $0x2430] sm:$0xff]
    %v1205 = vld [vmem:[%s1 + $0x2438] sm:$0xff]
    %v1206 = vld [vmem:[%s1 + $0x2440] sm:$0xff]
    %v1207 = vld [vmem:[%s1 + $0x2448] sm:$0xff]
    %v1208 = vld [vmem:[%s1 + $0x2450] sm:$0xff]
    %v1209 = vld [vmem:[%s1 + $0x2458] sm:$0xff]
    %v1210 = vld [vmem:[%s1 + $0x2460] sm:$0xff]
    %v1211 = vld [vmem:[%s1 + $0x2468] sm:$0xff]
    %v1212 = vld [vmem:[%s1 + $0x2470] sm:$0xff]
    %v1213 = vld [vmem:[%s1 + $0x2478] sm:$0xff]
    %v1214 = vld [vmem:[%s1 + $0x2480] sm:$0xff]
    %v1215 = vld [vmem:[%s1 + $0x2488] sm:$0xff]
    %v1216 = vld [vmem:[%s1 + $0x2490] sm:$0xff]
    %v1217 = vld [vmem:[%s1 + $0x2498] sm:$0xff]
    %v1218 = vld [vmem:[%s1 + $0x24a0] sm:$0xff]
    %v1219 = vld [vmem:[%s1 + $0x24a8] sm:$0xff]
    %v1220 = vld [vmem:[%s1 + $0x24b0] sm:$0xff]
    %v1221 = vld [vmem:[%s1 + $0x24b8] sm:$0xff]
    %v1222 = vld [vmem:[%s1 + $0x24c0] sm:$0xff]
    %v1223 = vld [vmem:[%s1 + $0x24c8] sm:$0xff]
    %v1224 = vld [vmem:[%s1 + $0x24d0] sm:$0xff]
    %v1225 = vld [vmem:[%s1 + $0x24d8] sm:$0xff]
    %v1226 = vld [vmem:[%s1 + $0x24e0] sm:$0xff]
    %v1227 = vld [vmem:[%s1 + $0x24e8] sm:$0xff]
    %v1228 = vld [vmem:[%s1 + $0x24f0] sm:$0xff]
    %v1229 = vld [vmem:[%s1 + $0x24f8] sm:$0xff]
    %v1230 = vld [vmem:[%s1 + $0x2500] sm:$0xff]
    %v1231 = vld [vmem:[%s1 + $0x2508] sm:$0xff]
    %v1232 = vld [vmem:[%s1 + $0x2510] sm:$0xff]
    %v1233 = vld [vmem:[%s1 + $0x2518] sm:$0xff]
    %v1234 = vld [vmem:[%s1 + $0x2520] sm:$0xff]
    %v1235 = vld [vmem:[%s1 + $0x2528] sm:$0xff]
    %v1236 = vld [vmem:[%s1 + $0x2530] sm:$0xff]
    %v1237 = vld [vmem:[%s1 + $0x2538] sm:$0xff]
    %v1238 = vld [vmem:[%s1 + $0x2540] sm:$0xff]
    %v1239 = vld [vmem:[%s1 + $0x2548] sm:$0xff]
    %v1240 = vld [vmem:[%s1 + $0x2550] sm:$0xff]
    %v1241 = vld [vmem:[%s1 + $0x2558] sm:$0xff]
    %v1242 = vld [vmem:[%s1 + $0x2560] sm:$0xff]
    %v1243 = vld [vmem:[%s1 + $0x2568] sm:$0xff]
    %v1244 = vld [vmem:[%s1 + $0x2570] sm:$0xff]
    %v1245 = vld [vmem:[%s1 + $0x2578] sm:$0xff]
    %v1246 = vld [vmem:[%s1 + $0x2580] sm:$0xff]
    %v1247 = vld [vmem:[%s1 + $0x2588] sm:$0xff]
    %v1248 = vld [vmem:[%s1 + $0x2590] sm:$0xff]
    %v1249 = vld [vmem:[%s1 + $0x2598] sm:$0xff]
    %v1250 = vld [vmem:[%s1 + $0x25a0] sm:$0xff]
    %v1251 = vld [vmem:[%s1 + $0x25a8] sm:$0xff]
    %v1252 = vld [vmem:[%s1 + $0x25b0] sm:$0xff]
    %v1253 = vld [vmem:[%s1 + $0x25b8] sm:$0xff]
    %v1254 = vld [vmem:[%s1 + $0x25c0] sm:$0xff]
    %v1255 = vld [vmem:[%s1 + $0x25c8] sm:$0xff]
    %v1256 = vld [vmem:[%s1 + $0x25d0] sm:$0xff]
    %v1257 = vld [vmem:[%s1 + $0x25d8] sm:$0xff]
    %v1258 = vld [vmem:[%s1 + $0x25e0] sm:$0xff]
    %v1259 = vld [vmem:[%s1 + $0x25e8] sm:$0xff]
    %v1260 = vld [vmem:[%s1 + $0x25f0] sm:$0xff]
    %v1261 = vld [vmem:[%s1 + $0x25f8] sm:$0xff]
    %v1262 = vld [vmem:[%s1 + $0x2600] sm:$0xff]
    %v1263 = vld [vmem:[%s1 + $0x2608] sm:$0xff]
    %v1264 = vld [vmem:[%s1 + $0x2610] sm:$0xff]
    %v1265 = vld [vmem:[%s1 + $0x2618] sm:$0xff]
    %v1266 = vld [vmem:[%s1 + $0x2620] sm:$0xff]
    %v1267 = vld [vmem:[%s1 + $0x2628] sm:$0xff]
    %v1268 = vld [vmem:[%s1 + $0x2630] sm:$0xff]
    %v1269 = vld [vmem:[%s1 + $0x2638] sm:$0xff]
    %v1270 = vld [vmem:[%s1 + $0x2640] sm:$0xff]
    %v1271 = vld [vmem:[%s1 + $0x2648] sm:$0xff]
    %v1272 = vld [vmem:[%s1 + $0x2650] sm:$0xff]
    %v1273 = vld [vmem:[%s1 + $0x2658] sm:$0xff]
    %v1274 = vld [vmem:[%s1 + $0x2660] sm:$0xff]
    %v1275 = vld [vmem:[%s1 + $0x2668] sm:$0xff]
    %v1276 = vld [vmem:[%s1 + $0x2670] sm:$0xff]
    %v1277 = vld [vmem:[%s1 + $0x2678] sm:$0xff]
    %v1278 = vld [vmem:[%s1 + $0x2680] sm:$0xff]
    %v1279 = vld [vmem:[%s1 + $0x2688] sm:$0xff]
    %v1280 = vld [vmem:[%s1 + $0x2690] sm:$0xff]
    %v1281 = vld [vmem:[%s1 + $0x2698] sm:$0xff]
    %v1282 = vld [vmem:[%s1 + $0x26a0] sm:$0xff]
    %v1283 = vld [vmem:[%s1 + $0x26a8] sm:$0xff]
    %v1284 = vld [vmem:[%s1 + $0x26b0] sm:$0xff]
    %v1285 = vld [vmem:[%s1 + $0x26b8] sm:$0xff]
    %v1286 = vld [vmem:[%s1 + $0x26c0] sm:$0xff]
    %v1287 = vld [vmem:[%s1 + $0x26c8] sm:$0xff]
    %v1288 = vld [vmem:[%s1 + $0x26d0] sm:$0xff]
    %v1289 = vld [vmem:[%s1 + $0x26d8] sm:$0xff]
    %v1290 = vld [vmem:[%s1 + $0x26e0] sm:$0xff]
    %v1291 = vld [vmem:[%s1 + $0x26e8] sm:$0xff]
    %v1292 = vld [vmem:[%s1 + $0x26f0] sm:$0xff]
    %v1293 = vld [vmem:[%s1 + $0x26f8] sm:$0xff]
    %v1294 = vld [vmem:[%s1 + $0x2700] sm:$0xff]
    %v1295 = vld [vmem:[%s1 + $0x2708] sm:$0xff]
    %v1296 = vld [vmem:[%s1 + $0x2710] sm:$0xff]
    %v1297 = vld [vmem:[%s1 + $0x2718] sm:$0xff]
    %v1298 = vld [vmem:[%s1 + $0x2720] sm:$0xff]
    %v1299 = vld [vmem:[%s1 + $0x2728] sm:$0xff]
    %v1300 = vld [vmem:[%s1 + $0x2730] sm:$0xff]
    %v1301 = vld [vmem:[%s1 + $0x2738] sm:$0xff]
    %v1302 = vld [vmem:[%s1 + $0x2740] sm:$0xff]
    %v1303 = vld [vmem:[%s1 + $0x2748] sm:$0xff]
    %v1304 = vld [vmem:[%s1 + $0x2750] sm:$0xff]
    %v1305 = vld [vmem:[%s1 + $0x2758] sm:$0xff]
    %v1306 = vld [vmem:[%s1 + $0x2760] sm:$0xff]
    %v1307 = vld [vmem:[%s1 + $0x2768] sm:$0xff]
    %v1308 = vld [vmem:[%s1 + $0x2770] sm:$0xff]
    %v1309 = vld [vmem:[%s1 + $0x2778] sm:$0xff]
    %v1310 = vld [vmem:[%s1 + $0x2780] sm:$0xff]
    %v1311 = vld [vmem:[%s1 + $0x2788] sm:$0xff]
    %v1312 = vld [vmem:[%s1 + $0x2790] sm:$0xff]
    %v1313 = vld [vmem:[%s1 + $0x2798] sm:$0xff]
    %v1314 = vld [vmem:[%s1 + $0x27a0] sm:$0xff]
    %v1315 = vld [vmem:[%s1 + $0x27a8] sm:$0xff]
    %v1316 = vld [vmem:[%s1 + $0x27b0] sm:$0xff]
    %v1317 = vld [vmem:[%s1 + $0x27b8] sm:$0xff]
    %v1318 = vld [vmem:[%s1 + $0x27c0] sm:$0xff]
    %v1319 = vld [vmem:[%s1 + $0x27c8] sm:$0xff]
    %v1320 = vld [vmem:[%s1 + $0x27d0] sm:$0xff]
    %v1321 = vld [vmem:[%s1 + $0x27d8] sm:$0xff]
    %v1322 = vld [vmem:[%s1 + $0x27e0] sm:$0xff]
    %v1323 = vld [vmem:[%s1 + $0x27e8] sm:$0xff]
    %v1324 = vld [vmem:[%s1 + $0x27f0] sm:$0xff]
    %v1325 = vld [vmem:[%s1 + $0x27f8] sm:$0xff]
    %v1326 = vld [vmem:[%s1 + $0x2800] sm:$0xff]
    %v1327 = vld [vmem:[%s1 + $0x2808] sm:$0xff]
    %v1328 = vld [vmem:[%s1 + $0x2810] sm:$0xff]
    %v1329 = vld [vmem:[%s1 + $0x2818] sm:$0xff]
    %v1330 = vld [vmem:[%s1 + $0x2820] sm:$0xff]
    %v1331 = vld [vmem:[%s1 + $0x2828] sm:$0xff]
    %v1332 = vld [vmem:[%s1 + $0x2830] sm:$0xff]
    %v1333 = vld [vmem:[%s1 + $0x2838] sm:$0xff]
    %v1334 = vld [vmem:[%s1 + $0x2840] sm:$0xff]
    %v1335 = vld [vmem:[%s1 + $0x2848] sm:$0xff]
    %v1336 = vld [vmem:[%s1 + $0x2850] sm:$0xff]
    %v1337 = vld [vmem:[%s1 + $0x2858] sm:$0xff]
    %v1338 = vld [vmem:[%s1 + $0x2860] sm:$0xff]
    %v1339 = vld [vmem:[%s1 + $0x2868] sm:$0xff]
    %v1340 = vld [vmem:[%s1 + $0x2870] sm:$0xff]
    %v1341 = vld [vmem:[%s1 + $0x2878] sm:$0xff]
    %v1342 = vld [vmem:[%s1 + $0x2880] sm:$0xff]
    %v1343 = vld [vmem:[%s1 + $0x2888] sm:$0xff]
    %v1344 = vld [vmem:[%s1 + $0x2890] sm:$0xff]
    %v1345 = vld [vmem:[%s1 + $0x2898] sm:$0xff]
    %v1346 = vld [vmem:[%s1 + $0x28a0] sm:$0xff]
    %v1347 = vld [vmem:[%s1 + $0x28a8] sm:$0xff]
    %v1348 = vld [vmem:[%s1 + $0x28b0] sm:$0xff]
    %v1349 = vld [vmem:[%s1 + $0x28b8] sm:$0xff]
    %v1350 = vld [vmem:[%s1 + $0x28c0] sm:$0xff]
    %v1351 = vld [vmem:[%s1 + $0x28c8] sm:$0xff]
    %v1352 = vld [vmem:[%s1 + $0x28d0] sm:$0xff]
    %v1353 = vld [vmem:[%s1 + $0x28d8] sm:$0xff]
    %v1354 = vld [vmem:[%s1 + $0x28e0] sm:$0xff]
    %v1355 = vld [vmem:[%s1 + $0x28e8] sm:$0xff]
    %v1356 = vld [vmem:[%s1 + $0x28f0] sm:$0xff]
    %v1357 = vld [vmem:[%s1 + $0x28f8] sm:$0xff]
    %v1358 = vld [vmem:[%s1 + $0x2900] sm:$0xff]
    %v1359 = vld [vmem:[%s1 + $0x2908] sm:$0xff]
    %v1360 = vld [vmem:[%s1 + $0x2910] sm:$0xff]
    %v1361 = vld [vmem:[%s1 + $0x2918] sm:$0xff]
    %v1362 = vld [vmem:[%s1 + $0x2920] sm:$0xff]
    %v1363 = vld [vmem:[%s1 + $0x2928] sm:$0xff]
    %v1364 = vld [vmem:[%s1 + $0x2930] sm:$0xff]
    %v1365 = vld [vmem:[%s1 + $0x2938] sm:$0xff]
    %v1366 = vld [vmem:[%s1 + $0x2940] sm:$0xff]
    %v1367 = vld [vmem:[%s1 + $0x2948] sm:$0xff]
    %v1368 = vld [vmem:[%s1 + $0x2950] sm:$0xff]
    %v1369 = vld [vmem:[%s1 + $0x2958] sm:$0xff]
    %v1370 = vld [vmem:[%s1 + $0x2960] sm:$0xff]
    %v1371 = vld [vmem:[%s1 + $0x2968] sm:$0xff]
    %v1372 = vld [vmem:[%s1 + $0x2970] sm:$0xff]
    %v1373 = vld [vmem:[%s1 + $0x2978] sm:$0xff]
    %v1374 = vld [vmem:[%s1 + $0x2980] sm:$0xff]
    %v1375 = vld [vmem:[%s1 + $0x2988] sm:$0xff]
    %v1376 = vld [vmem:[%s1 + $0x2990] sm:$0xff]
    %v1377 = vld [vmem:[%s1 + $0x2998] sm:$0xff]
    %v1378 = vld [vmem:[%s1 + $0x29a0] sm:$0xff]
    %v1379 = vld [vmem:[%s1 + $0x29a8] sm:$0xff]
    %v1380 = vld [vmem:[%s1 + $0x29b0] sm:$0xff]
    %v1381 = vld [vmem:[%s1 + $0x29b8] sm:$0xff]
    %v1382 = vld [vmem:[%s1 + $0x29c0] sm:$0xff]
    %v1383 = vld [vmem:[%s1 + $0x29c8] sm:$0xff]
    %v1384 = vld [vmem:[%s1 + $0x29d0] sm:$0xff]
    %v1385 = vld [vmem:[%s1 + $0x29d8] sm:$0xff]
    %v1386 = vld [vmem:[%s1 + $0x29e0] sm:$0xff]
    %v1387 = vld [vmem:[%s1 + $0x29e8] sm:$0xff]
    %v1388 = vld [vmem:[%s1 + $0x29f0] sm:$0xff]
    %v1389 = vld [vmem:[%s1 + $0x29f8] sm:$0xff]
    %v1390 = vld [vmem:[%s1 + $0x2a00] sm:$0xff]
    %v1391 = vld [vmem:[%s1 + $0x2a08] sm:$0xff]
    %v1392 = vld [vmem:[%s1 + $0x2a10] sm:$0xff]
    %v1393 = vld [vmem:[%s1 + $0x2a18] sm:$0xff]
    %v1394 = vld [vmem:[%s1 + $0x2a20] sm:$0xff]
    %v1395 = vld [vmem:[%s1 + $0x2a28] sm:$0xff]
    %v1396 = vld [vmem:[%s1 + $0x2a30] sm:$0xff]
    %v1397 = vld [vmem:[%s1 + $0x2a38] sm:$0xff]
    %v1398 = vld [vmem:[%s1 + $0x2a40] sm:$0xff]
    %v1399 = vld [vmem:[%s1 + $0x2a48] sm:$0xff]
    %v1400 = vld [vmem:[%s1 + $0x2a50] sm:$0xff]
    %v1401 = vld [vmem:[%s1 + $0x2a58] sm:$0xff]
    %v1402 = vld [vmem:[%s1 + $0x2a60] sm:$0xff]
    %v1403 = vld [vmem:[%s1 + $0x2a68] sm:$0xff]
    %v1404 = vld [vmem:[%s1 + $0x2a70] sm:$0xff]
    %v1405 = vld [vmem:[%s1 + $0x2a78] sm:$0xff]
    %v1406 = vld [vmem:[%s1 + $0x2a80] sm:$0xff]
    %v1407 = vld [vmem:[%s1 + $0x2a88] sm:$0xff]
    %v1408 = vld [vmem:[%s1 + $0x2a90] sm:$0xff]
    %v1409 = vld [vmem:[%s1 + $0x2a98] sm:$0xff]
    %v1410 = vld [vmem:[%s1 + $0x2aa0] sm:$0xff]
    %v1411 = vld [vmem:[%s1 + $0x2aa8] sm:$0xff]
    %v1412 = vld [vmem:[%s1 + $0x2ab0] sm:$0xff]
    %v1413 = vld [vmem:[%s1 + $0x2ab8] sm:$0xff]
    %v1414 = vld [vmem:[%s1 + $0x2ac0] sm:$0xff]
    %v1415 = vld [vmem:[%s1 + $0x2ac8] sm:$0xff]
    %v1416 = vld [vmem:[%s1 + $0x2ad0] sm:$0xff]
    %v1417 = vld [vmem:[%s1 + $0x2ad8] sm:$0xff]
    %v1418 = vld [vmem:[%s1 + $0x2ae0] sm:$0xff]
    %v1419 = vld [vmem:[%s1 + $0x2ae8] sm:$0xff]
    %v1420 = vld [vmem:[%s1 + $0x2af0] sm:$0xff]
    %v1421 = vld [vmem:[%s1 + $0x2af8] sm:$0xff]
    %v1422 = vld [vmem:[%s1 + $0x2b00] sm:$0xff]
    %v1423 = vld [vmem:[%s1 + $0x2b08] sm:$0xff]
    %v1424 = vld [vmem:[%s1 + $0x2b10] sm:$0xff]
    %v1425 = vld [vmem:[%s1 + $0x2b18] sm:$0xff]
    %v1426 = vld [vmem:[%s1 + $0x2b20] sm:$0xff]
    %v1427 = vld [vmem:[%s1 + $0x2b28] sm:$0xff]
    %v1428 = vld [vmem:[%s1 + $0x2b30] sm:$0xff]
    %v1429 = vld [vmem:[%s1 + $0x2b38] sm:$0xff]
    %v1430 = vld [vmem:[%s1 + $0x2b40] sm:$0xff]
    %v1431 = vld [vmem:[%s1 + $0x2b48] sm:$0xff]
    %v1432 = vld [vmem:[%s1 + $0x2b50] sm:$0xff]
    %v1433 = vld [vmem:[%s1 + $0x2b58] sm:$0xff]
    %v1434 = vld [vmem:[%s1 + $0x2b60] sm:$0xff]
    %v1435 = vld [vmem:[%s1 + $0x2b68] sm:$0xff]
    %v1436 = vld [vmem:[%s1 + $0x2b70] sm:$0xff]
    %v1437 = vld [vmem:[%s1 + $0x2b78] sm:$0xff]
    %v1438 = vld [vmem:[%s1 + $0x2b80] sm:$0xff]
    %v1439 = vld [vmem:[%s1 + $0x2b88] sm:$0xff]
    %v1440 = vld [vmem:[%s1 + $0x2b90] sm:$0xff]
    %v1441 = vld [vmem:[%s1 + $0x2b98] sm:$0xff]
    %v1442 = vld [vmem:[%s1 + $0x2ba0] sm:$0xff]
    %v1443 = vld [vmem:[%s1 + $0x2ba8] sm:$0xff]
    %v1444 = vld [vmem:[%s1 + $0x2bb0] sm:$0xff]
    %v1445 = vld [vmem:[%s1 + $0x2bb8] sm:$0xff]
    %v1446 = vld [vmem:[%s1 + $0x2bc0] sm:$0xff]
    %v1447 = vld [vmem:[%s1 + $0x2bc8] sm:$0xff]
    %v1448 = vld [vmem:[%s1 + $0x2bd0] sm:$0xff]
    %v1449 = vld [vmem:[%s1 + $0x2bd8] sm:$0xff]
    %v1450 = vld [vmem:[%s1 + $0x2be0] sm:$0xff]
    %v1451 = vld [vmem:[%s1 + $0x2be8] sm:$0xff]
    %v1452 = vld [vmem:[%s1 + $0x2bf0] sm:$0xff]
    %v1453 = vld [vmem:[%s1 + $0x2bf8] sm:$0xff]
    %v1454 = vld [vmem:[%s1 + $0x2c00] sm:$0xff]
    %v1455 = vld [vmem:[%s1 + $0x2c08] sm:$0xff]
    %v1456 = vld [vmem:[%s1 + $0x2c10] sm:$0xff]
    %v1457 = vld [vmem:[%s1 + $0x2c18] sm:$0xff]
    %v1458 = vld [vmem:[%s1 + $0x2c20] sm:$0xff]
    %v1459 = vld [vmem:[%s1 + $0x2c28] sm:$0xff]
    %v1460 = vld [vmem:[%s1 + $0x2c30] sm:$0xff]
    %v1461 = vld [vmem:[%s1 + $0x2c38] sm:$0xff]
    %v1462 = vld [vmem:[%s1 + $0x2c40] sm:$0xff]
    %v1463 = vld [vmem:[%s1 + $0x2c48] sm:$0xff]
    %v1464 = vld [vmem:[%s1 + $0x2c50] sm:$0xff]
    %v1465 = vld [vmem:[%s1 + $0x2c58] sm:$0xff]
    %v1466 = vld [vmem:[%s1 + $0x2c60] sm:$0xff]
    %v1467 = vld [vmem:[%s1 + $0x2c68] sm:$0xff]
    %v1468 = vld [vmem:[%s1 + $0x2c70] sm:$0xff]
    %v1469 = vld [vmem:[%s1 + $0x2c78] sm:$0xff]
    %v1470 = vld [vmem:[%s1 + $0x2c80] sm:$0xff]
    %v1471 = vld [vmem:[%s1 + $0x2c88] sm:$0xff]
    %v1472 = vld [vmem:[%s1 + $0x2c90] sm:$0xff]
    %v1473 = vld [vmem:[%s1 + $0x2c98] sm:$0xff]
    %v1474 = vld [vmem:[%s1 + $0x2ca0] sm:$0xff]
    %v1475 = vld [vmem:[%s1 + $0x2ca8] sm:$0xff]
    %v1476 = vld [vmem:[%s1 + $0x2cb0] sm:$0xff]
    %v1477 = vld [vmem:[%s1 + $0x2cb8] sm:$0xff]
    %v1478 = vld [vmem:[%s1 + $0x2cc0] sm:$0xff]
    %v1479 = vld [vmem:[%s1 + $0x2cc8] sm:$0xff]
    %v1480 = vld [vmem:[%s1 + $0x2cd0] sm:$0xff]
    %v1481 = vld [vmem:[%s1 + $0x2cd8] sm:$0xff]
    %v1482 = vld [vmem:[%s1 + $0x2ce0] sm:$0xff]
    %v1483 = vld [vmem:[%s1 + $0x2ce8] sm:$0xff]
    %v1484 = vld [vmem:[%s1 + $0x2cf0] sm:$0xff]
    %v1485 = vld [vmem:[%s1 + $0x2cf8] sm:$0xff]
    %v1486 = vld [vmem:[%s1 + $0x2d00] sm:$0xff]
    %v1487 = vld [vmem:[%s1 + $0x2d08] sm:$0xff]
    %v1488 = vld [vmem:[%s1 + $0x2d10] sm:$0xff]
    %v1489 = vld [vmem:[%s1 + $0x2d18] sm:$0xff]
    %v1490 = vld [vmem:[%s1 + $0x2d20] sm:$0xff]
    %v1491 = vld [vmem:[%s1 + $0x2d28] sm:$0xff]
    %v1492 = vld [vmem:[%s1 + $0x2d30] sm:$0xff]
    %v1493 = vld [vmem:[%s1 + $0x2d38] sm:$0xff]
    %v1494 = vld [vmem:[%s1 + $0x2d40] sm:$0xff]
    %v1495 = vld [vmem:[%s1 + $0x2d48] sm:$0xff]
    %v1496 = vld [vmem:[%s1 + $0x2d50] sm:$0xff]
    %v1497 = vld [vmem:[%s1 + $0x2d58] sm:$0xff]
    %v1498 = vld [vmem:[%s1 + $0x2d60] sm:$0xff]
    %v1499 = vld [vmem:[%s1 + $0x2d68] sm:$0xff]
    %v1500 = vld [vmem:[%s1 + $0x2d70] sm:$0xff]
    %v1501 = vld [vmem:[%s1 + $0x2d78] sm:$0xff]
    %v1502 = vld [vmem:[%s1 + $0x2d80] sm:$0xff]
    %v1503 = vld [vmem:[%s1 + $0x2d88] sm:$0xff]
    %v1504 = vld [vmem:[%s1 + $0x2d90] sm:$0xff]
    %v1505 = vld [vmem:[%s1 + $0x2d98] sm:$0xff]
    %v1506 = vld [vmem:[%s1 + $0x2da0] sm:$0xff]
    %v1507 = vld [vmem:[%s1 + $0x2da8] sm:$0xff]
    %v1508 = vld [vmem:[%s1 + $0x2db0] sm:$0xff]
    %v1509 = vld [vmem:[%s1 + $0x2db8] sm:$0xff]
    %v1510 = vld [vmem:[%s1 + $0x2dc0] sm:$0xff]
    %v1511 = vld [vmem:[%s1 + $0x2dc8] sm:$0xff]
    %v1512 = vld [vmem:[%s1 + $0x2dd0] sm:$0xff]
    %v1513 = vld [vmem:[%s1 + $0x2dd8] sm:$0xff]
    %v1514 = vld [vmem:[%s1 + $0x2de0] sm:$0xff]
    %v1515 = vld [vmem:[%s1 + $0x2de8] sm:$0xff]
    %v1516 = vld [vmem:[%s1 + $0x2df0] sm:$0xff]
    %v1517 = vld [vmem:[%s1 + $0x2df8] sm:$0xff]
    %v1518 = vld [vmem:[%s1 + $0x2e00] sm:$0xff]
    %v1519 = vld [vmem:[%s1 + $0x2e08] sm:$0xff]
    %v1520 = vld [vmem:[%s1 + $0x2e10] sm:$0xff]
    %v1521 = vld [vmem:[%s1 + $0x2e18] sm:$0xff]
    %v1522 = vld [vmem:[%s1 + $0x2e20] sm:$0xff]
    %v1523 = vld [vmem:[%s1 + $0x2e28] sm:$0xff]
    %v1524 = vld [vmem:[%s1 + $0x2e30] sm:$0xff]
    %v1525 = vld [vmem:[%s1 + $0x2e38] sm:$0xff]
    %v1526 = vld [vmem:[%s1 + $0x2e40] sm:$0xff]
    %v1527 = vld [vmem:[%s1 + $0x2e48] sm:$0xff]
    %v1528 = vld [vmem:[%s1 + $0x2e50] sm:$0xff]
    %v1529 = vld [vmem:[%s1 + $0x2e58] sm:$0xff]
    %v1530 = vld [vmem:[%s1 + $0x2e60] sm:$0xff]
    %v1531 = vld [vmem:[%s1 + $0x2e68] sm:$0xff]
    %v1532 = vld [vmem:[%s1 + $0x2e70] sm:$0xff]
    %v1533 = vld [vmem:[%s1 + $0x2e78] sm:$0xff]
    %v1534 = vld [vmem:[%s1 + $0x2e80] sm:$0xff]
    %v1535 = vld [vmem:[%s1 + $0x2e88] sm:$0xff]
    %v1536 = vld [vmem:[%s1 + $0x2e90] sm:$0xff]
    %v1537 = vld [vmem:[%s1 + $0x2e98] sm:$0xff]
    %v1538 = vld [vmem:[%s1 + $0x2ea0] sm:$0xff]
    %v1539 = vld [vmem:[%s1 + $0x2ea8] sm:$0xff]
    %v1540 = vld [vmem:[%s1 + $0x2eb0] sm:$0xff]
    %v1541 = vld [vmem:[%s1 + $0x2eb8] sm:$0xff]
    %v1542 = vld [vmem:[%s1 + $0x2ec0] sm:$0xff]
    %v1543 = vld [vmem:[%s1 + $0x2ec8] sm:$0xff]
    %v1544 = vld [vmem:[%s1 + $0x2ed0] sm:$0xff]
    %v1545 = vld [vmem:[%s1 + $0x2ed8] sm:$0xff]
    %v1546 = vld [vmem:[%s1 + $0x2ee0] sm:$0xff]
    %v1547 = vld [vmem:[%s1 + $0x2ee8] sm:$0xff]
    %v1548 = vld [vmem:[%s1 + $0x2ef0] sm:$0xff]
    %v1549 = vld [vmem:[%s1 + $0x2ef8] sm:$0xff]
    %v1550 = vld [vmem:[%s1 + $0x2f00] sm:$0xff]
    %v1551 = vld [vmem:[%s1 + $0x2f08] sm:$0xff]
    %v1552 = vld [vmem:[%s1 + $0x2f10] sm:$0xff]
    %v1553 = vld [vmem:[%s1 + $0x2f18] sm:$0xff]
    %v1554 = vld [vmem:[%s1 + $0x2f20] sm:$0xff]
    %v1555 = vld [vmem:[%s1 + $0x2f28] sm:$0xff]
    %v1556 = vld [vmem:[%s1 + $0x2f30] sm:$0xff]
    %v1557 = vld [vmem:[%s1 + $0x2f38] sm:$0xff]
    %v1558 = vld [vmem:[%s1 + $0x2f40] sm:$0xff]
    %v1559 = vld [vmem:[%s1 + $0x2f48] sm:$0xff]
    %v1560 = vld [vmem:[%s1 + $0x2f50] sm:$0xff]
    %v1561 = vld [vmem:[%s1 + $0x2f58] sm:$0xff]
    %v1562 = vld [vmem:[%s1 + $0x2f60] sm:$0xff]
    %v1563 = vld [vmem:[%s1 + $0x2f68] sm:$0xff]
    %v1564 = vld [vmem:[%s1 + $0x2f70] sm:$0xff]
    %v1565 = vld [vmem:[%s1 + $0x2f78] sm:$0xff]
    %v1566 = vld [vmem:[%s1 + $0x2f80] sm:$0xff]
    %v1567 = vld [vmem:[%s1 + $0x2f88] sm:$0xff]
    %v1568 = vld [vmem:[%s1 + $0x2f90] sm:$0xff]
    %v1569 = vld [vmem:[%s1 + $0x2f98] sm:$0xff]
    %v1570 = vld [vmem:[%s1 + $0x2fa0] sm:$0xff]
    %v1571 = vld [vmem:[%s1 + $0x2fa8] sm:$0xff]
    %v1572 = vld [vmem:[%s1 + $0x2fb0] sm:$0xff]
    %v1573 = vld [vmem:[%s1 + $0x2fb8] sm:$0xff]
    %v1574 = vld [vmem:[%s1 + $0x2fc0] sm:$0xff]
    %v1575 = vld [vmem:[%s1 + $0x2fc8] sm:$0xff]
    %v1576 = vld [vmem:[%s1 + $0x2fd0] sm:$0xff]
    %v1577 = vld [vmem:[%s1 + $0x2fd8] sm:$0xff]
    %v1578 = vld [vmem:[%s1 + $0x2fe0] sm:$0xff]
    %v1579 = vld [vmem:[%s1 + $0x2fe8] sm:$0xff]
    %v1580 = vld [vmem:[%s1 + $0x2ff0] sm:$0xff]
    %v1581 = vld [vmem:[%s1 + $0x2ff8] sm:$0xff]
    %v1582 = vld [vmem:[%s1 + $0x3000] sm:$0xff]
    %v1583 = vld [vmem:[%s1 + $0x3008] sm:$0xff]
    %v1584 = vld [vmem:[%s1 + $0x3010] sm:$0xff]
    %v1585 = vld [vmem:[%s1 + $0x3018] sm:$0xff]
    %v1586 = vld [vmem:[%s1 + $0x3020] sm:$0xff]
    %v1587 = vld [vmem:[%s1 + $0x3028] sm:$0xff]
    %v1588 = vld [vmem:[%s1 + $0x3030] sm:$0xff]
    %v1589 = vld [vmem:[%s1 + $0x3038] sm:$0xff]
    %v1590 = vld [vmem:[%s1 + $0x3040] sm:$0xff]
    %v1591 = vld [vmem:[%s1 + $0x3048] sm:$0xff]
    %v1592 = vld [vmem:[%s1 + $0x3050] sm:$0xff]
    %v1593 = vld [vmem:[%s1 + $0x3058] sm:$0xff]
    %v1594 = vld [vmem:[%s1 + $0x3060] sm:$0xff]
    %v1595 = vld [vmem:[%s1 + $0x3068] sm:$0xff]
    %v1596 = vld [vmem:[%s1 + $0x3070] sm:$0xff]
    %v1597 = vld [vmem:[%s1 + $0x3078] sm:$0xff]
    %v1598 = vld [vmem:[%s1 + $0x3080] sm:$0xff]
    %v1599 = vld [vmem:[%s1 + $0x3088] sm:$0xff]
    %v1600 = vld [vmem:[%s1 + $0x3090] sm:$0xff]
    %v1601 = vld [vmem:[%s1 + $0x3098] sm:$0xff]
    %v1602 = vld [vmem:[%s1 + $0x30a0] sm:$0xff]
    %v1603 = vld [vmem:[%s1 + $0x30a8] sm:$0xff]
    %v1604 = vld [vmem:[%s1 + $0x30b0] sm:$0xff]
    %v1605 = vld [vmem:[%s1 + $0x30b8] sm:$0xff]
    %v1606 = vld [vmem:[%s1 + $0x30c0] sm:$0xff]
    %v1607 = vld [vmem:[%s1 + $0x30c8] sm:$0xff]
    %v1608 = vld [vmem:[%s1 + $0x30d0] sm:$0xff]
    %v1609 = vld [vmem:[%s1 + $0x30d8] sm:$0xff]
    %v1610 = vld [vmem:[%s1 + $0x30e0] sm:$0xff]
    %v1611 = vld [vmem:[%s1 + $0x30e8] sm:$0xff]
    %v1612 = vld [vmem:[%s1 + $0x30f0] sm:$0xff]
    %v1613 = vld [vmem:[%s1 + $0x30f8] sm:$0xff]
    %v1614 = vld [vmem:[%s2] sm:$0x1]
    %v1616 = vlaneseq
    %v1617 = vshrl.u32 %v1616, 7
    %v1618 = vsub.s32 0, %v1617
    %v1619 = vrot.slane %v1614, %v1618
    %v1646 = vcombine.high %v21, %v21
    %v1648 = vunpack.c.l.s4 1983009808
    %v1649 = vunpack.c.0.s8 %v1648
    %v1650 = vlaneseq
    %v1651 = vshrl.u32 %v1650, 7
    %v1652 = vsub.s32 %v1649, %v1651
    %v1653 = vrot.slane %v21, %v1652
    %v1655 = vunpack.c.l.s4 1983009808
    %v1656 = vunpack.c.0.s8 %v1655
    %v1657 = vlaneseq
    %v1658 = vshrl.u32 %v1657, 7
    %v1659 = vsub.s32 %v1656, %v1658
    %v1660 = vrot.slane %v1646, %v1659
    %v1661 = vcombine.high %v1653, %v1653
    %v1662 = vcombine.high %v1660, %v1660
    %v1663 = vcombine.high %v22, %v22
    %v1665 = vunpack.c.l.s4 1983009808
    %v1666 = vunpack.c.0.s8 %v1665
    %v1667 = vlaneseq
    %v1668 = vshrl.u32 %v1667, 7
    %v1669 = vsub.s32 %v1666, %v1668
    %v1670 = vrot.slane %v22, %v1669
    %v1672 = vunpack.c.l.s4 1983009808
    %v1673 = vunpack.c.0.s8 %v1672
    %v1674 = vlaneseq
    %v1675 = vshrl.u32 %v1674, 7
    %v1676 = vsub.s32 %v1673, %v1675
    %v1677 = vrot.slane %v1663, %v1676
    %v1678 = vcombine.high %v1670, %v1670
    %v1679 = vcombine.high %v1677, %v1677
    %v1680 = vcombine.high %v23, %v23
    %v1682 = vunpack.c.l.s4 1983009808
    %v1683 = vunpack.c.0.s8 %v1682
    %v1684 = vlaneseq
    %v1685 = vshrl.u32 %v1684, 7
    %v1686 = vsub.s32 %v1683, %v1685
    %v1687 = vrot.slane %v23, %v1686
    %v1689 = vunpack.c.l.s4 1983009808
    %v1690 = vunpack.c.0.s8 %v1689
    %v1691 = vlaneseq
    %v1692 = vshrl.u32 %v1691, 7
    %v1693 = vsub.s32 %v1690, %v1692
    %v1694 = vrot.slane %v1680, %v1693
    %v1695 = vcombine.high %v1687, %v1687
    %v1696 = vcombine.high %v1694, %v1694
    %v1697 = vcombine.high %v24, %v24
    %v1699 = vunpack.c.l.s4 1983009808
    %v1700 = vunpack.c.0.s8 %v1699
    %v1701 = vlaneseq
    %v1702 = vshrl.u32 %v1701, 7
    %v1703 = vsub.s32 %v1700, %v1702
    %v1704 = vrot.slane %v24, %v1703
    %v1706 = vunpack.c.l.s4 1983009808
    %v1707 = vunpack.c.0.s8 %v1706
    %v1708 = vlaneseq
    %v1709 = vshrl.u32 %v1708, 7
    %v1710 = vsub.s32 %v1707, %v1709
    %v1711 = vrot.slane %v1697, %v1710
    %v1712 = vcombine.high %v1704, %v1704
    %v1713 = vcombine.high %v1711, %v1711
    %v1714 = vcombine.high %v25, %v25
    %v1716 = vunpack.c.l.s4 1983009808
    %v1717 = vunpack.c.0.s8 %v1716
    %v1718 = vlaneseq
    %v1719 = vshrl.u32 %v1718, 7
    %v1720 = vsub.s32 %v1717, %v1719
    %v1721 = vrot.slane %v25, %v1720
    %v1723 = vunpack.c.l.s4 1983009808
    %v1724 = vunpack.c.0.s8 %v1723
    %v1725 = vlaneseq
    %v1726 = vshrl.u32 %v1725, 7
    %v1727 = vsub.s32 %v1724, %v1726
    %v1728 = vrot.slane %v1714, %v1727
    %v1729 = vcombine.high %v1721, %v1721
    %v1730 = vcombine.high %v1728, %v1728
    %v1731 = vcombine.high %v26, %v26
    %v1733 = vunpack.c.l.s4 1983009808
    %v1734 = vunpack.c.0.s8 %v1733
    %v1735 = vlaneseq
    %v1736 = vshrl.u32 %v1735, 7
    %v1737 = vsub.s32 %v1734, %v1736
    %v1738 = vrot.slane %v26, %v1737
    %v1740 = vunpack.c.l.s4 1983009808
    %v1741 = vunpack.c.0.s8 %v1740
    %v1742 = vlaneseq
    %v1743 = vshrl.u32 %v1742, 7
    %v1744 = vsub.s32 %v1741, %v1743
    %v1745 = vrot.slane %v1731, %v1744
    %v1746 = vcombine.high %v1738, %v1738
    %v1747 = vcombine.high %v1745, %v1745
    %v1748 = vcombine.high %v27, %v27
    %v1750 = vunpack.c.l.s4 1983009808
    %v1751 = vunpack.c.0.s8 %v1750
    %v1752 = vlaneseq
    %v1753 = vshrl.u32 %v1752, 7
    %v1754 = vsub.s32 %v1751, %v1753
    %v1755 = vrot.slane %v27, %v1754
    %v1757 = vunpack.c.l.s4 1983009808
    %v1758 = vunpack.c.0.s8 %v1757
    %v1759 = vlaneseq
    %v1760 = vshrl.u32 %v1759, 7
    %v1761 = vsub.s32 %v1758, %v1760
    %v1762 = vrot.slane %v1748, %v1761
    %v1763 = vcombine.high %v1755, %v1755
    %v1764 = vcombine.high %v1762, %v1762
    %v1765 = vcombine.high %v28, %v28
    %v1767 = vunpack.c.l.s4 1983009808
    %v1768 = vunpack.c.0.s8 %v1767
    %v1769 = vlaneseq
    %v1770 = vshrl.u32 %v1769, 7
    %v1771 = vsub.s32 %v1768, %v1770
    %v1772 = vrot.slane %v28, %v1771
    %v1774 = vunpack.c.l.s4 1983009808
    %v1775 = vunpack.c.0.s8 %v1774
    %v1776 = vlaneseq
    %v1777 = vshrl.u32 %v1776, 7
    %v1778 = vsub.s32 %v1775, %v1777
    %v1779 = vrot.slane %v1765, %v1778
    %v1780 = vcombine.high %v1772, %v1772
    %v1781 = vcombine.high %v1779, %v1779
    %v1782 = vcombine.high %v29, %v29
    %v1784 = vunpack.c.l.s4 1983009808
    %v1785 = vunpack.c.0.s8 %v1784
    %v1786 = vlaneseq
    %v1787 = vshrl.u32 %v1786, 7
    %v1788 = vsub.s32 %v1785, %v1787
    %v1789 = vrot.slane %v29, %v1788
    %v1791 = vunpack.c.l.s4 1983009808
    %v1792 = vunpack.c.0.s8 %v1791
    %v1793 = vlaneseq
    %v1794 = vshrl.u32 %v1793, 7
    %v1795 = vsub.s32 %v1792, %v1794
    %v1796 = vrot.slane %v1782, %v1795
    %v1797 = vcombine.high %v1789, %v1789
    %v1798 = vcombine.high %v1796, %v1796
    %v1799 = vcombine.high %v30, %v30
    %v1801 = vunpack.c.l.s4 1983009808
    %v1802 = vunpack.c.0.s8 %v1801
    %v1803 = vlaneseq
    %v1804 = vshrl.u32 %v1803, 7
    %v1805 = vsub.s32 %v1802, %v1804
    %v1806 = vrot.slane %v30, %v1805
    %v1808 = vunpack.c.l.s4 1983009808
    %v1809 = vunpack.c.0.s8 %v1808
    %v1810 = vlaneseq
    %v1811 = vshrl.u32 %v1810, 7
    %v1812 = vsub.s32 %v1809, %v1811
    %v1813 = vrot.slane %v1799, %v1812
    %v1814 = vcombine.high %v1806, %v1806
    %v1815 = vcombine.high %v1813, %v1813
    %v1816 = vcombine.high %v31, %v31
    %v1818 = vunpack.c.l.s4 1983009808
    %v1819 = vunpack.c.0.s8 %v1818
    %v1820 = vlaneseq
    %v1821 = vshrl.u32 %v1820, 7
    %v1822 = vsub.s32 %v1819, %v1821
    %v1823 = vrot.slane %v31, %v1822
    %v1825 = vunpack.c.l.s4 1983009808
    %v1826 = vunpack.c.0.s8 %v1825
    %v1827 = vlaneseq
    %v1828 = vshrl.u32 %v1827, 7
    %v1829 = vsub.s32 %v1826, %v1828
    %v1830 = vrot.slane %v1816, %v1829
    %v1831 = vcombine.high %v1823, %v1823
    %v1832 = vcombine.high %v1830, %v1830
    %v1833 = vcombine.high %v32, %v32
    %v1835 = vunpack.c.l.s4 1983009808
    %v1836 = vunpack.c.0.s8 %v1835
    %v1837 = vlaneseq
    %v1838 = vshrl.u32 %v1837, 7
    %v1839 = vsub.s32 %v1836, %v1838
    %v1840 = vrot.slane %v32, %v1839
    %v1842 = vunpack.c.l.s4 1983009808
    %v1843 = vunpack.c.0.s8 %v1842
    %v1844 = vlaneseq
    %v1845 = vshrl.u32 %v1844, 7
    %v1846 = vsub.s32 %v1843, %v1845
    %v1847 = vrot.slane %v1833, %v1846
    %v1848 = vcombine.high %v1840, %v1840
    %v1849 = vcombine.high %v1847, %v1847
    %v1850 = vcombine.high %v33, %v33
    %v1852 = vunpack.c.l.s4 1983009808
    %v1853 = vunpack.c.0.s8 %v1852
    %v1854 = vlaneseq
    %v1855 = vshrl.u32 %v1854, 7
    %v1856 = vsub.s32 %v1853, %v1855
    %v1857 = vrot.slane %v33, %v1856
    %v1859 = vunpack.c.l.s4 1983009808
    %v1860 = vunpack.c.0.s8 %v1859
    %v1861 = vlaneseq
    %v1862 = vshrl.u32 %v1861, 7
    %v1863 = vsub.s32 %v1860, %v1862
    %v1864 = vrot.slane %v1850, %v1863
    %v1865 = vcombine.high %v1857, %v1857
    %v1866 = vcombine.high %v1864, %v1864
    %v1867 = vcombine.high %v34, %v34
    %v1869 = vunpack.c.l.s4 1983009808
    %v1870 = vunpack.c.0.s8 %v1869
    %v1871 = vlaneseq
    %v1872 = vshrl.u32 %v1871, 7
    %v1873 = vsub.s32 %v1870, %v1872
    %v1874 = vrot.slane %v34, %v1873
    %v1876 = vunpack.c.l.s4 1983009808
    %v1877 = vunpack.c.0.s8 %v1876
    %v1878 = vlaneseq
    %v1879 = vshrl.u32 %v1878, 7
    %v1880 = vsub.s32 %v1877, %v1879
    %v1881 = vrot.slane %v1867, %v1880
    %v1882 = vcombine.high %v1874, %v1874
    %v1883 = vcombine.high %v1881, %v1881
    %v1884 = vcombine.high %v35, %v35
    %v1886 = vunpack.c.l.s4 1983009808
    %v1887 = vunpack.c.0.s8 %v1886
    %v1888 = vlaneseq
    %v1889 = vshrl.u32 %v1888, 7
    %v1890 = vsub.s32 %v1887, %v1889
    %v1891 = vrot.slane %v35, %v1890
    %v1893 = vunpack.c.l.s4 1983009808
    %v1894 = vunpack.c.0.s8 %v1893
    %v1895 = vlaneseq
    %v1896 = vshrl.u32 %v1895, 7
    %v1897 = vsub.s32 %v1894, %v1896
    %v1898 = vrot.slane %v1884, %v1897
    %v1899 = vcombine.high %v1891, %v1891
    %v1900 = vcombine.high %v1898, %v1898
    %v1901 = vcombine.high %v36, %v36
    %v1903 = vunpack.c.l.s4 1983009808
    %v1904 = vunpack.c.0.s8 %v1903
    %v1905 = vlaneseq
    %v1906 = vshrl.u32 %v1905, 7
    %v1907 = vsub.s32 %v1904, %v1906
    %v1908 = vrot.slane %v36, %v1907
    %v1910 = vunpack.c.l.s4 1983009808
    %v1911 = vunpack.c.0.s8 %v1910
    %v1912 = vlaneseq
    %v1913 = vshrl.u32 %v1912, 7
    %v1914 = vsub.s32 %v1911, %v1913
    %v1915 = vrot.slane %v1901, %v1914
    %v1916 = vcombine.high %v1908, %v1908
    %v1917 = vcombine.high %v1915, %v1915
    %v1918 = vcombine.high %v37, %v37
    %v1920 = vunpack.c.l.s4 1983009808
    %v1921 = vunpack.c.0.s8 %v1920
    %v1922 = vlaneseq
    %v1923 = vshrl.u32 %v1922, 7
    %v1924 = vsub.s32 %v1921, %v1923
    %v1925 = vrot.slane %v37, %v1924
    %v1927 = vunpack.c.l.s4 1983009808
    %v1928 = vunpack.c.0.s8 %v1927
    %v1929 = vlaneseq
    %v1930 = vshrl.u32 %v1929, 7
    %v1931 = vsub.s32 %v1928, %v1930
    %v1932 = vrot.slane %v1918, %v1931
    %v1933 = vcombine.high %v1925, %v1925
    %v1934 = vcombine.high %v1932, %v1932
    %v1935 = vcombine.high %v38, %v38
    %v1937 = vunpack.c.l.s4 1983009808
    %v1938 = vunpack.c.0.s8 %v1937
    %v1939 = vlaneseq
    %v1940 = vshrl.u32 %v1939, 7
    %v1941 = vsub.s32 %v1938, %v1940
    %v1942 = vrot.slane %v38, %v1941
    %v1944 = vunpack.c.l.s4 1983009808
    %v1945 = vunpack.c.0.s8 %v1944
    %v1946 = vlaneseq
    %v1947 = vshrl.u32 %v1946, 7
    %v1948 = vsub.s32 %v1945, %v1947
    %v1949 = vrot.slane %v1935, %v1948
    %v1950 = vcombine.high %v1942, %v1942
    %v1951 = vcombine.high %v1949, %v1949
    %v1952 = vcombine.high %v39, %v39
    %v1954 = vunpack.c.l.s4 1983009808
    %v1955 = vunpack.c.0.s8 %v1954
    %v1956 = vlaneseq
    %v1957 = vshrl.u32 %v1956, 7
    %v1958 = vsub.s32 %v1955, %v1957
    %v1959 = vrot.slane %v39, %v1958
    %v1961 = vunpack.c.l.s4 1983009808
    %v1962 = vunpack.c.0.s8 %v1961
    %v1963 = vlaneseq
    %v1964 = vshrl.u32 %v1963, 7
    %v1965 = vsub.s32 %v1962, %v1964
    %v1966 = vrot.slane %v1952, %v1965
    %v1967 = vcombine.high %v1959, %v1959
    %v1968 = vcombine.high %v1966, %v1966
    %v1969 = vcombine.high %v40, %v40
    %v1971 = vunpack.c.l.s4 1983009808
    %v1972 = vunpack.c.0.s8 %v1971
    %v1973 = vlaneseq
    %v1974 = vshrl.u32 %v1973, 7
    %v1975 = vsub.s32 %v1972, %v1974
    %v1976 = vrot.slane %v40, %v1975
    %v1978 = vunpack.c.l.s4 1983009808
    %v1979 = vunpack.c.0.s8 %v1978
    %v1980 = vlaneseq
    %v1981 = vshrl.u32 %v1980, 7
    %v1982 = vsub.s32 %v1979, %v1981
    %v1983 = vrot.slane %v1969, %v1982
    %v1984 = vcombine.high %v1976, %v1976
    %v1985 = vcombine.high %v1983, %v1983
    %v1986 = vcombine.high %v41, %v41
    %v1988 = vunpack.c.l.s4 1983009808
    %v1989 = vunpack.c.0.s8 %v1988
    %v1990 = vlaneseq
    %v1991 = vshrl.u32 %v1990, 7
    %v1992 = vsub.s32 %v1989, %v1991
    %v1993 = vrot.slane %v41, %v1992
    %v1995 = vunpack.c.l.s4 1983009808
    %v1996 = vunpack.c.0.s8 %v1995
    %v1997 = vlaneseq
    %v1998 = vshrl.u32 %v1997, 7
    %v1999 = vsub.s32 %v1996, %v1998
    %v2000 = vrot.slane %v1986, %v1999
    %v2001 = vcombine.high %v1993, %v1993
    %v2002 = vcombine.high %v2000, %v2000
    %v2003 = vcombine.high %v42, %v42
    %v2005 = vunpack.c.l.s4 1983009808
    %v2006 = vunpack.c.0.s8 %v2005
    %v2007 = vlaneseq
    %v2008 = vshrl.u32 %v2007, 7
    %v2009 = vsub.s32 %v2006, %v2008
    %v2010 = vrot.slane %v42, %v2009
    %v2012 = vunpack.c.l.s4 1983009808
    %v2013 = vunpack.c.0.s8 %v2012
    %v2014 = vlaneseq
    %v2015 = vshrl.u32 %v2014, 7
    %v2016 = vsub.s32 %v2013, %v2015
    %v2017 = vrot.slane %v2003, %v2016
    %v2018 = vcombine.high %v2010, %v2010
    %v2019 = vcombine.high %v2017, %v2017
    %v2020 = vcombine.high %v43, %v43
    %v2022 = vunpack.c.l.s4 1983009808
    %v2023 = vunpack.c.0.s8 %v2022
    %v2024 = vlaneseq
    %v2025 = vshrl.u32 %v2024, 7
    %v2026 = vsub.s32 %v2023, %v2025
    %v2027 = vrot.slane %v43, %v2026
    %v2029 = vunpack.c.l.s4 1983009808
    %v2030 = vunpack.c.0.s8 %v2029
    %v2031 = vlaneseq
    %v2032 = vshrl.u32 %v2031, 7
    %v2033 = vsub.s32 %v2030, %v2032
    %v2034 = vrot.slane %v2020, %v2033
    %v2035 = vcombine.high %v2027, %v2027
    %v2036 = vcombine.high %v2034, %v2034
    %v2037 = vcombine.high %v44, %v44
    %v2039 = vunpack.c.l.s4 1983009808
    %v2040 = vunpack.c.0.s8 %v2039
    %v2041 = vlaneseq
    %v2042 = vshrl.u32 %v2041, 7
    %v2043 = vsub.s32 %v2040, %v2042
    %v2044 = vrot.slane %v44, %v2043
    %v2046 = vunpack.c.l.s4 1983009808
    %v2047 = vunpack.c.0.s8 %v2046
    %v2048 = vlaneseq
    %v2049 = vshrl.u32 %v2048, 7
    %v2050 = vsub.s32 %v2047, %v2049
    %v2051 = vrot.slane %v2037, %v2050
    %v2052 = vcombine.high %v2044, %v2044
    %v2053 = vcombine.high %v2051, %v2051
    %v2055 = vunpack.c.l.s4 1983009808
    %v2056 = vunpack.c.0.s8 %v2055
    %v2057 = vlaneseq
    %v2058 = vshrl.u32 %v2057, 7
    %v2059 = vsub.s32 %v2056, %v2058
    %v2060 = vrot.slane %v45, %v2059
    %v2061 = vcombine.high %v2060, %v2060
    %2160 = vmatprep.subr.mxu0 0.0
    %2161 = vmatpush1.msra.mxu0 %v46
    %2162 = vmatprep.subr.mxu0 0.0
    %2163 = vmatpush1.msra.mxu0 %v47
    %2164 = vmatprep.subr.mxu0 0.0
    %2165 = vmatpush1.msra.mxu0 %v48
    %2166 = vmatprep.subr.mxu0 0.0
    %2167 = vmatpush1.msra.mxu0 %v49
    %2168 = vmatprep.subr.mxu0 0.0
    %2169 = vmatpush1.msra.mxu0 %v50
    %2170 = vmatprep.subr.mxu0 0.0
    %2171 = vmatpush1.msra.mxu0 %v51
    %2172 = vmatprep.subr.mxu0 0.0
    %2173 = vmatpush1.msra.mxu0 %v52
    %2174 = vmatprep.subr.mxu0 0.0
    %2175 = vmatpush1.msra.mxu0 %v53
    %2176 = vmatprep.subr.mxu0 0.0
    %2177 = vmatpush1.msra.mxu0 %v54
    %2178 = vmatprep.subr.mxu0 0.0
    %2179 = vmatpush1.msra.mxu0 %v55
    %2180 = vmatprep.subr.mxu0 0.0
    %2181 = vmatpush1.msra.mxu0 %v56
    %2182 = vmatprep.subr.mxu0 0.0
    %2183 = vmatpush1.msra.mxu0 %v57
    %2184 = vmatprep.subr.mxu0 0.0
    %2185 = vmatpush1.msra.mxu0 %v58
    %2186 = vmatprep.subr.mxu0 0.0
    %2187 = vmatpush1.msra.mxu0 %v59
    %2188 = vmatprep.subr.mxu0 0.0
    %2189 = vmatpush1.msra.mxu0 %v60
    %2190 = vmatprep.subr.mxu0 0.0
    %2191 = vmatpush1.msra.mxu0 %v61
    %2192 = vmatprep.subr.mxu0 0.0
    %2193 = vmatpush1.msra.mxu0 %v62
    %2194 = vmatprep.subr.mxu0 0.0
    %2195 = vmatpush1.msra.mxu0 %v63
    %2196 = vmatprep.subr.mxu0 0.0
    %2197 = vmatpush1.msra.mxu0 %v64
    %2198 = vmatprep.subr.mxu0 0.0
    %2199 = vmatpush1.msra.mxu0 %v65
    %2200 = vmatprep.subr.mxu0 0.0
    %2201 = vmatpush1.msra.mxu0 %v66
    %2202 = vmatprep.subr.mxu0 0.0
    %2203 = vmatpush1.msra.mxu0 %v67
    %2204 = vmatprep.subr.mxu0 0.0
    %2205 = vmatpush1.msra.mxu0 %v68
    %2206 = vmatprep.subr.mxu0 0.0
    %2207 = vmatpush1.msra.mxu0 %v69
    %2208 = vmatprep.subr.mxu0 0.0
    %2209 = vmatpush1.msra.mxu0 %v70
    %2210 = vmatprep.subr.mxu0 0.0
    %2211 = vmatpush1.msra.mxu0 %v71
    %2212 = vmatprep.subr.mxu0 0.0
    %2213 = vmatpush1.msra.mxu0 %v72
    %2214 = vmatprep.subr.mxu0 0.0
    %2215 = vmatpush1.msra.mxu0 %v73
    %2216 = vmatprep.subr.mxu0 0.0
    %2217 = vmatpush1.msra.mxu0 %v74
    %2218 = vmatprep.subr.mxu0 0.0
    %2219 = vmatpush1.msra.mxu0 %v75
    %2220 = vmatprep.subr.mxu0 0.0
    %2221 = vmatpush1.msra.mxu0 %v76
    %2222 = vmatprep.subr.mxu0 0.0
    %2223 = vmatpush1.msra.mxu0 %v77
    %2224 = vmatprep.mubr.f32.mxu0 %v1661
    %2225 = vmatmul.mubr.f32.gmra.mrb[0].mxu0 %v1653
    %v2226 = vpop.f32.mrb[0].mxu0
    %v2227 = vadd.f32 %v1619, %v2226
    %v2228 = vpop.f32.mrb[0].mxu0
    %2229 = vdwg.mxu0
    %2230 = vmatprep.subr.mxu0 0.0
    %2231 = vmatpush1.msra.mxu0 %v78
    %2232 = vmatprep.subr.mxu0 0.0
    %2233 = vmatpush1.msra.mxu0 %v79
    %2234 = vmatprep.subr.mxu0 0.0
    %2235 = vmatpush1.msra.mxu0 %v80
    %2236 = vmatprep.subr.mxu0 0.0
    %2237 = vmatpush1.msra.mxu0 %v81
    %2238 = vmatprep.subr.mxu0 0.0
    %2239 = vmatpush1.msra.mxu0 %v82
    %2240 = vmatprep.subr.mxu0 0.0
    %2241 = vmatpush1.msra.mxu0 %v83
    %2242 = vmatprep.subr.mxu0 0.0
    %2243 = vmatpush1.msra.mxu0 %v84
    %2244 = vmatprep.subr.mxu0 0.0
    %2245 = vmatpush1.msra.mxu0 %v85
    %2246 = vmatprep.subr.mxu0 0.0
    %2247 = vmatpush1.msra.mxu0 %v86
    %2248 = vmatprep.subr.mxu0 0.0
    %2249 = vmatpush1.msra.mxu0 %v87
    %2250 = vmatprep.subr.mxu0 0.0
    %2251 = vmatpush1.msra.mxu0 %v88
    %2252 = vmatprep.subr.mxu0 0.0
    %2253 = vmatpush1.msra.mxu0 %v89
    %2254 = vmatprep.subr.mxu0 0.0
    %2255 = vmatpush1.msra.mxu0 %v90
    %2256 = vmatprep.subr.mxu0 0.0
    %2257 = vmatpush1.msra.mxu0 %v91
    %2258 = vmatprep.subr.mxu0 0.0
    %2259 = vmatpush1.msra.mxu0 %v92
    %2260 = vmatprep.subr.mxu0 0.0
    %2261 = vmatpush1.msra.mxu0 %v93
    %2262 = vmatprep.subr.mxu0 0.0
    %2263 = vmatpush1.msra.mxu0 %v94
    %2264 = vmatprep.subr.mxu0 0.0
    %2265 = vmatpush1.msra.mxu0 %v95
    %2266 = vmatprep.subr.mxu0 0.0
    %2267 = vmatpush1.msra.mxu0 %v96
    %2268 = vmatprep.subr.mxu0 0.0
    %2269 = vmatpush1.msra.mxu0 %v97
    %2270 = vmatprep.subr.mxu0 0.0
    %2271 = vmatpush1.msra.mxu0 %v98
    %2272 = vmatprep.subr.mxu0 0.0
    %2273 = vmatpush1.msra.mxu0 %v99
    %2274 = vmatprep.subr.mxu0 0.0
    %2275 = vmatpush1.msra.mxu0 %v100
    %2276 = vmatprep.subr.mxu0 0.0
    %2277 = vmatpush1.msra.mxu0 %v101
    %2278 = vmatprep.subr.mxu0 0.0
    %2279 = vmatpush1.msra.mxu0 %v102
    %2280 = vmatprep.subr.mxu0 0.0
    %2281 = vmatpush1.msra.mxu0 %v103
    %2282 = vmatprep.subr.mxu0 0.0
    %2283 = vmatpush1.msra.mxu0 %v104
    %2284 = vmatprep.subr.mxu0 0.0
    %2285 = vmatpush1.msra.mxu0 %v105
    %2286 = vmatprep.subr.mxu0 0.0
    %2287 = vmatpush1.msra.mxu0 %v106
    %2288 = vmatprep.subr.mxu0 0.0
    %2289 = vmatpush1.msra.mxu0 %v107
    %2290 = vmatprep.subr.mxu0 0.0
    %2291 = vmatpush1.msra.mxu0 %v108
    %2292 = vmatprep.subr.mxu0 0.0
    %2293 = vmatpush1.msra.mxu0 %v109
    %2294 = vmatprep.mubr.f32.mxu0 %v1662
    %2295 = vmatmul.mubr.f32.gmra.mrb[0].mxu0 %v1660
    %v2296 = vpop.f32.mrb[0].mxu0
    %v2297 = vadd.f32 %v2227, %v2296
    %v2298 = vpop.f32.mrb[0].mxu0
    %2299 = vdwg.mxu0
    %2300 = vmatprep.subr.mxu0 0.0
    %2301 = vmatpush1.msra.mxu0 %v110
    %2302 = vmatprep.subr.mxu0 0.0
    %2303 = vmatpush1.msra.mxu0 %v111
    %2304 = vmatprep.subr.mxu0 0.0
    %2305 = vmatpush1.msra.mxu0 %v112
    %2306 = vmatprep.subr.mxu0 0.0
    %2307 = vmatpush1.msra.mxu0 %v113
    %2308 = vmatprep.subr.mxu0 0.0
    %2309 = vmatpush1.msra.mxu0 %v114
    %2310 = vmatprep.subr.mxu0 0.0
    %2311 = vmatpush1.msra.mxu0 %v115
    %2312 = vmatprep.subr.mxu0 0.0
    %2313 = vmatpush1.msra.mxu0 %v116
    %2314 = vmatprep.subr.mxu0 0.0
    %2315 = vmatpush1.msra.mxu0 %v117
    %2316 = vmatprep.subr.mxu0 0.0
    %2317 = vmatpush1.msra.mxu0 %v118
    %2318 = vmatprep.subr.mxu0 0.0
    %2319 = vmatpush1.msra.mxu0 %v119
    %2320 = vmatprep.subr.mxu0 0.0
    %2321 = vmatpush1.msra.mxu0 %v120
    %2322 = vmatprep.subr.mxu0 0.0
    %2323 = vmatpush1.msra.mxu0 %v121
    %2324 = vmatprep.subr.mxu0 0.0
    %2325 = vmatpush1.msra.mxu0 %v122
    %2326 = vmatprep.subr.mxu0 0.0
    %2327 = vmatpush1.msra.mxu0 %v123
    %2328 = vmatprep.subr.mxu0 0.0
    %2329 = vmatpush1.msra.mxu0 %v124
    %2330 = vmatprep.subr.mxu0 0.0
    %2331 = vmatpush1.msra.mxu0 %v125
    %2332 = vmatprep.subr.mxu0 0.0
    %2333 = vmatpush1.msra.mxu0 %v126
    %2334 = vmatprep.subr.mxu0 0.0
    %2335 = vmatpush1.msra.mxu0 %v127
    %2336 = vmatprep.subr.mxu0 0.0
    %2337 = vmatpush1.msra.mxu0 %v128
    %2338 = vmatprep.subr.mxu0 0.0
    %2339 = vmatpush1.msra.mxu0 %v129
    %2340 = vmatprep.subr.mxu0 0.0
    %2341 = vmatpush1.msra.mxu0 %v130
    %2342 = vmatprep.subr.mxu0 0.0
    %2343 = vmatpush1.msra.mxu0 %v131
    %2344 = vmatprep.subr.mxu0 0.0
    %2345 = vmatpush1.msra.mxu0 %v132
    %2346 = vmatprep.subr.mxu0 0.0
    %2347 = vmatpush1.msra.mxu0 %v133
    %2348 = vmatprep.subr.mxu0 0.0
    %2349 = vmatpush1.msra.mxu0 %v134
    %2350 = vmatprep.subr.mxu0 0.0
    %2351 = vmatpush1.msra.mxu0 %v135
    %2352 = vmatprep.subr.mxu0 0.0
    %2353 = vmatpush1.msra.mxu0 %v136
    %2354 = vmatprep.subr.mxu0 0.0
    %2355 = vmatpush1.msra.mxu0 %v137
    %2356 = vmatprep.subr.mxu0 0.0
    %2357 = vmatpush1.msra.mxu0 %v138
    %2358 = vmatprep.subr.mxu0 0.0
    %2359 = vmatpush1.msra.mxu0 %v139
    %2360 = vmatprep.subr.mxu0 0.0
    %2361 = vmatpush1.msra.mxu0 %v140
    %2362 = vmatprep.subr.mxu0 0.0
    %2363 = vmatpush1.msra.mxu0 %v141
    %2364 = vmatprep.mubr.f32.mxu0 %v1678
    %2365 = vmatmul.mubr.f32.gmra.mrb[0].mxu0 %v1670
    %v2366 = vpop.f32.mrb[0].mxu0
    %v2367 = vadd.f32 %v2297, %v2366
    %v2368 = vpop.f32.mrb[0].mxu0
    %2369 = vdwg.mxu0
    %2370 = vmatprep.subr.mxu0 0.0
    %2371 = vmatpush1.msra.mxu0 %v142
    %2372 = vmatprep.subr.mxu0 0.0
    %2373 = vmatpush1.msra.mxu0 %v143
    %2374 = vmatprep.subr.mxu0 0.0
    %2375 = vmatpush1.msra.mxu0 %v144
    %2376 = vmatprep.subr.mxu0 0.0
    %2377 = vmatpush1.msra.mxu0 %v145
    %2378 = vmatprep.subr.mxu0 0.0
    %2379 = vmatpush1.msra.mxu0 %v146
    %2380 = vmatprep.subr.mxu0 0.0
    %2381 = vmatpush1.msra.mxu0 %v147
    %2382 = vmatprep.subr.mxu0 0.0
    %2383 = vmatpush1.msra.mxu0 %v148
    %2384 = vmatprep.subr.mxu0 0.0
    %2385 = vmatpush1.msra.mxu0 %v149
    %2386 = vmatprep.subr.mxu0 0.0
    %2387 = vmatpush1.msra.mxu0 %v150
    %2388 = vmatprep.subr.mxu0 0.0
    %2389 = vmatpush1.msra.mxu0 %v151
    %2390 = vmatprep.subr.mxu0 0.0
    %2391 = vmatpush1.msra.mxu0 %v152
    %2392 = vmatprep.subr.mxu0 0.0
    %2393 = vmatpush1.msra.mxu0 %v153
    %2394 = vmatprep.subr.mxu0 0.0
    %2395 = vmatpush1.msra.mxu0 %v154
    %2396 = vmatprep.subr.mxu0 0.0
    %2397 = vmatpush1.msra.mxu0 %v155
    %2398 = vmatprep.subr.mxu0 0.0
    %2399 = vmatpush1.msra.mxu0 %v156
    %2400 = vmatprep.subr.mxu0 0.0
    %2401 = vmatpush1.msra.mxu0 %v157
    %2402 = vmatprep.subr.mxu0 0.0
    %2403 = vmatpush1.msra.mxu0 %v158
    %2404 = vmatprep.subr.mxu0 0.0
    %2405 = vmatpush1.msra.mxu0 %v159
    %2406 = vmatprep.subr.mxu0 0.0
    %2407 = vmatpush1.msra.mxu0 %v160
    %2408 = vmatprep.subr.mxu0 0.0
    %2409 = vmatpush1.msra.mxu0 %v161
    %2410 = vmatprep.subr.mxu0 0.0
    %2411 = vmatpush1.msra.mxu0 %v162
    %2412 = vmatprep.subr.mxu0 0.0
    %2413 = vmatpush1.msra.mxu0 %v163
    %2414 = vmatprep.subr.mxu0 0.0
    %2415 = vmatpush1.msra.mxu0 %v164
    %2416 = vmatprep.subr.mxu0 0.0
    %2417 = vmatpush1.msra.mxu0 %v165
    %2418 = vmatprep.subr.mxu0 0.0
    %2419 = vmatpush1.msra.mxu0 %v166
    %2420 = vmatprep.subr.mxu0 0.0
    %2421 = vmatpush1.msra.mxu0 %v167
    %2422 = vmatprep.subr.mxu0 0.0
    %2423 = vmatpush1.msra.mxu0 %v168
    %2424 = vmatprep.subr.mxu0 0.0
    %2425 = vmatpush1.msra.mxu0 %v169
    %2426 = vmatprep.subr.mxu0 0.0
    %2427 = vmatpush1.msra.mxu0 %v170
    %2428 = vmatprep.subr.mxu0 0.0
    %2429 = vmatpush1.msra.mxu0 %v171
    %2430 = vmatprep.subr.mxu0 0.0
    %2431 = vmatpush1.msra.mxu0 %v172
    %2432 = vmatprep.subr.mxu0 0.0
    %2433 = vmatpush1.msra.mxu0 %v173
    %2434 = vmatprep.mubr.f32.mxu0 %v1679
    %2435 = vmatmul.mubr.f32.gmra.mrb[0].mxu0 %v1677
    %v2436 = vpop.f32.mrb[0].mxu0
    %v2437 = vadd.f32 %v2367, %v2436
    %v2438 = vpop.f32.mrb[0].mxu0
    %2439 = vdwg.mxu0
    %2440 = vmatprep.subr.mxu0 0.0
    %2441 = vmatpush1.msra.mxu0 %v174
    %2442 = vmatprep.subr.mxu0 0.0
    %2443 = vmatpush1.msra.mxu0 %v175
    %2444 = vmatprep.subr.mxu0 0.0
    %2445 = vmatpush1.msra.mxu0 %v176
    %2446 = vmatprep.subr.mxu0 0.0
    %2447 = vmatpush1.msra.mxu0 %v177
    %2448 = vmatprep.subr.mxu0 0.0
    %2449 = vmatpush1.msra.mxu0 %v178
    %2450 = vmatprep.subr.mxu0 0.0
    %2451 = vmatpush1.msra.mxu0 %v179
    %2452 = vmatprep.subr.mxu0 0.0
    %2453 = vmatpush1.msra.mxu0 %v180
    %2454 = vmatprep.subr.mxu0 0.0
    %2455 = vmatpush1.msra.mxu0 %v181
    %2456 = vmatprep.subr.mxu0 0.0
    %2457 = vmatpush1.msra.mxu0 %v182
    %2458 = vmatprep.subr.mxu0 0.0
    %2459 = vmatpush1.msra.mxu0 %v183
    %2460 = vmatprep.subr.mxu0 0.0
    %2461 = vmatpush1.msra.mxu0 %v184
    %2462 = vmatprep.subr.mxu0 0.0
    %2463 = vmatpush1.msra.mxu0 %v185
    %2464 = vmatprep.subr.mxu0 0.0
    %2465 = vmatpush1.msra.mxu0 %v186
    %2466 = vmatprep.subr.mxu0 0.0
    %2467 = vmatpush1.msra.mxu0 %v187
    %2468 = vmatprep.subr.mxu0 0.0
    %2469 = vmatpush1.msra.mxu0 %v188
    %2470 = vmatprep.subr.mxu0 0.0
    %2471 = vmatpush1.msra.mxu0 %v189
    %2472 = vmatprep.subr.mxu0 0.0
    %2473 = vmatpush1.msra.mxu0 %v190
    %2474 = vmatprep.subr.mxu0 0.0
    %2475 = vmatpush1.msra.mxu0 %v191
    %2476 = vmatprep.subr.mxu0 0.0
    %2477 = vmatpush1.msra.mxu0 %v192
    %2478 = vmatprep.subr.mxu0 0.0
    %2479 = vmatpush1.msra.mxu0 %v193
    %2480 = vmatprep.subr.mxu0 0.0
    %2481 = vmatpush1.msra.mxu0 %v194
    %2482 = vmatprep.subr.mxu0 0.0
    %2483 = vmatpush1.msra.mxu0 %v195
    %2484 = vmatprep.subr.mxu0 0.0
    %2485 = vmatpush1.msra.mxu0 %v196
    %2486 = vmatprep.subr.mxu0 0.0
    %2487 = vmatpush1.msra.mxu0 %v197
    %2488 = vmatprep.subr.mxu0 0.0
    %2489 = vmatpush1.msra.mxu0 %v198
    %2490 = vmatprep.subr.mxu0 0.0
    %2491 = vmatpush1.msra.mxu0 %v199
    %2492 = vmatprep.subr.mxu0 0.0
    %2493 = vmatpush1.msra.mxu0 %v200
    %2494 = vmatprep.subr.mxu0 0.0
    %2495 = vmatpush1.msra.mxu0 %v201
    %2496 = vmatprep.subr.mxu0 0.0
    %2497 = vmatpush1.msra.mxu0 %v202
    %2498 = vmatprep.subr.mxu0 0.0
    %2499 = vmatpush1.msra.mxu0 %v203
    %2500 = vmatprep.subr.mxu0 0.0
    %2501 = vmatpush1.msra.mxu0 %v204
    %2502 = vmatprep.subr.mxu0 0.0
    %2503 = vmatpush1.msra.mxu0 %v205
    %2504 = vmatprep.mubr.f32.mxu0 %v1695
    %2505 = vmatmul.mubr.f32.gmra.mrb[0].mxu0 %v1687
    %v2506 = vpop.f32.mrb[0].mxu0
    %v2507 = vadd.f32 %v2437, %v2506
    %v2508 = vpop.f32.mrb[0].mxu0
    %2509 = vdwg.mxu0
    %2510 = vmatprep.subr.mxu0 0.0
    %2511 = vmatpush1.msra.mxu0 %v206
    %2512 = vmatprep.subr.mxu0 0.0
    %2513 = vmatpush1.msra.mxu0 %v207
    %2514 = vmatprep.subr.mxu0 0.0
    %2515 = vmatpush1.msra.mxu0 %v208
    %2516 = vmatprep.subr.mxu0 0.0
    %2517 = vmatpush1.msra.mxu0 %v209
    %2518 = vmatprep.subr.mxu0 0.0
    %2519 = vmatpush1.msra.mxu0 %v210
    %2520 = vmatprep.subr.mxu0 0.0
    %2521 = vmatpush1.msra.mxu0 %v211
    %2522 = vmatprep.subr.mxu0 0.0
    %2523 = vmatpush1.msra.mxu0 %v212
    %2524 = vmatprep.subr.mxu0 0.0
    %2525 = vmatpush1.msra.mxu0 %v213
    %2526 = vmatprep.subr.mxu0 0.0
    %2527 = vmatpush1.msra.mxu0 %v214
    %2528 = vmatprep.subr.mxu0 0.0
    %2529 = vmatpush1.msra.mxu0 %v215
    %2530 = vmatprep.subr.mxu0 0.0
    %2531 = vmatpush1.msra.mxu0 %v216
    %2532 = vmatprep.subr.mxu0 0.0
    %2533 = vmatpush1.msra.mxu0 %v217
    %2534 = vmatprep.subr.mxu0 0.0
    %2535 = vmatpush1.msra.mxu0 %v218
    %2536 = vmatprep.subr.mxu0 0.0
    %2537 = vmatpush1.msra.mxu0 %v219
    %2538 = vmatprep.subr.mxu0 0.0
    %2539 = vmatpush1.msra.mxu0 %v220
    %2540 = vmatprep.subr.mxu0 0.0
    %2541 = vmatpush1.msra.mxu0 %v221
    %2542 = vmatprep.subr.mxu0 0.0
    %2543 = vmatpush1.msra.mxu0 %v222
    %2544 = vmatprep.subr.mxu0 0.0
    %2545 = vmatpush1.msra.mxu0 %v223
    %2546 = vmatprep.subr.mxu0 0.0
    %2547 = vmatpush1.msra.mxu0 %v224
    %2548 = vmatprep.subr.mxu0 0.0
    %2549 = vmatpush1.msra.mxu0 %v225
    %2550 = vmatprep.subr.mxu0 0.0
    %2551 = vmatpush1.msra.mxu0 %v226
    %2552 = vmatprep.subr.mxu0 0.0
    %2553 = vmatpush1.msra.mxu0 %v227
    %2554 = vmatprep.subr.mxu0 0.0
    %2555 = vmatpush1.msra.mxu0 %v228
    %2556 = vmatprep.subr.mxu0 0.0
    %2557 = vmatpush1.msra.mxu0 %v229
    %2558 = vmatprep.subr.mxu0 0.0
    %2559 = vmatpush1.msra.mxu0 %v230
    %2560 = vmatprep.subr.mxu0 0.0
    %2561 = vmatpush1.msra.mxu0 %v231
    %2562 = vmatprep.subr.mxu0 0.0
    %2563 = vmatpush1.msra.mxu0 %v232
    %2564 = vmatprep.subr.mxu0 0.0
    %2565 = vmatpush1.msra.mxu0 %v233
    %2566 = vmatprep.subr.mxu0 0.0
    %2567 = vmatpush1.msra.mxu0 %v234
    %2568 = vmatprep.subr.mxu0 0.0
    %2569 = vmatpush1.msra.mxu0 %v235
    %2570 = vmatprep.subr.mxu0 0.0
    %2571 = vmatpush1.msra.mxu0 %v236
    %2572 = vmatprep.subr.mxu0 0.0
    %2573 = vmatpush1.msra.mxu0 %v237
    %2574 = vmatprep.mubr.f32.mxu0 %v1696
    %2575 = vmatmul.mubr.f32.gmra.mrb[0].mxu0 %v1694
    %v2576 = vpop.f32.mrb[0].mxu0
    %v2577 = vadd.f32 %v2507, %v2576
    %v2578 = vpop.f32.mrb[0].mxu0
    %2579 = vdwg.mxu0
    %2580 = vmatprep.subr.mxu0 0.0
    %2581 = vmatpush1.msra.mxu0 %v238
    %2582 = vmatprep.subr.mxu0 0.0
    %2583 = vmatpush1.msra.mxu0 %v239
    %2584 = vmatprep.subr.mxu0 0.0
    %2585 = vmatpush1.msra.mxu0 %v240
    %2586 = vmatprep.subr.mxu0 0.0
    %2587 = vmatpush1.msra.mxu0 %v241
    %2588 = vmatprep.subr.mxu0 0.0
    %2589 = vmatpush1.msra.mxu0 %v242
    %2590 = vmatprep.subr.mxu0 0.0
    %2591 = vmatpush1.msra.mxu0 %v243
    %2592 = vmatprep.subr.mxu0 0.0
    %2593 = vmatpush1.msra.mxu0 %v244
    %2594 = vmatprep.subr.mxu0 0.0
    %2595 = vmatpush1.msra.mxu0 %v245
    %2596 = vmatprep.subr.mxu0 0.0
    %2597 = vmatpush1.msra.mxu0 %v246
    %2598 = vmatprep.subr.mxu0 0.0
    %2599 = vmatpush1.msra.mxu0 %v247
    %2600 = vmatprep.subr.mxu0 0.0
    %2601 = vmatpush1.msra.mxu0 %v248
    %2602 = vmatprep.subr.mxu0 0.0
    %2603 = vmatpush1.msra.mxu0 %v249
    %2604 = vmatprep.subr.mxu0 0.0
    %2605 = vmatpush1.msra.mxu0 %v250
    %2606 = vmatprep.subr.mxu0 0.0
    %2607 = vmatpush1.msra.mxu0 %v251
    %2608 = vmatprep.subr.mxu0 0.0
    %2609 = vmatpush1.msra.mxu0 %v252
    %2610 = vmatprep.subr.mxu0 0.0
    %2611 = vmatpush1.msra.mxu0 %v253
    %2612 = vmatprep.subr.mxu0 0.0
    %2613 = vmatpush1.msra.mxu0 %v254
    %2614 = vmatprep.subr.mxu0 0.0
    %2615 = vmatpush1.msra.mxu0 %v255
    %2616 = vmatprep.subr.mxu0 0.0
    %2617 = vmatpush1.msra.mxu0 %v256
    %2618 = vmatprep.subr.mxu0 0.0
    %2619 = vmatpush1.msra.mxu0 %v257
    %2620 = vmatprep.subr.mxu0 0.0
    %2621 = vmatpush1.msra.mxu0 %v258
    %2622 = vmatprep.subr.mxu0 0.0
    %2623 = vmatpush1.msra.mxu0 %v259
    %2624 = vmatprep.subr.mxu0 0.0
    %2625 = vmatpush1.msra.mxu0 %v260
    %2626 = vmatprep.subr.mxu0 0.0
    %2627 = vmatpush1.msra.mxu0 %v261
    %2628 = vmatprep.subr.mxu0 0.0
    %2629 = vmatpush1.msra.mxu0 %v262
    %2630 = vmatprep.subr.mxu0 0.0
    %2631 = vmatpush1.msra.mxu0 %v263
    %2632 = vmatprep.subr.mxu0 0.0
    %2633 = vmatpush1.msra.mxu0 %v264
    %2634 = vmatprep.subr.mxu0 0.0
    %2635 = vmatpush1.msra.mxu0 %v265
    %2636 = vmatprep.subr.mxu0 0.0
    %2637 = vmatpush1.msra.mxu0 %v266
    %2638 = vmatprep.subr.mxu0 0.0
    %2639 = vmatpush1.msra.mxu0 %v267
    %2640 = vmatprep.subr.mxu0 0.0
    %2641 = vmatpush1.msra.mxu0 %v268
    %2642 = vmatprep.subr.mxu0 0.0
    %2643 = vmatpush1.msra.mxu0 %v269
    %2644 = vmatprep.mubr.f32.mxu0 %v1712
    %2645 = vmatmul.mubr.f32.gmra.mrb[0].mxu0 %v1704
    %v2646 = vpop.f32.mrb[0].mxu0
    %v2647 = vadd.f32 %v2577, %v2646
    %v2648 = vpop.f32.mrb[0].mxu0
    %2649 = vdwg.mxu0
    %2650 = vmatprep.subr.mxu0 0.0
    %2651 = vmatpush1.msra.mxu0 %v270
    %2652 = vmatprep.subr.mxu0 0.0
    %2653 = vmatpush1.msra.mxu0 %v271
    %2654 = vmatprep.subr.mxu0 0.0
    %2655 = vmatpush1.msra.mxu0 %v272
    %2656 = vmatprep.subr.mxu0 0.0
    %2657 = vmatpush1.msra.mxu0 %v273
    %2658 = vmatprep.subr.mxu0 0.0
    %2659 = vmatpush1.msra.mxu0 %v274
    %2660 = vmatprep.subr.mxu0 0.0
    %2661 = vmatpush1.msra.mxu0 %v275
    %2662 = vmatprep.subr.mxu0 0.0
    %2663 = vmatpush1.msra.mxu0 %v276
    %2664 = vmatprep.subr.mxu0 0.0
    %2665 = vmatpush1.msra.mxu0 %v277
    %2666 = vmatprep.subr.mxu0 0.0
    %2667 = vmatpush1.msra.mxu0 %v278
    %2668 = vmatprep.subr.mxu0 0.0
    %2669 = vmatpush1.msra.mxu0 %v279
    %2670 = vmatprep.subr.mxu0 0.0
    %2671 = vmatpush1.msra.mxu0 %v280
    %2672 = vmatprep.subr.mxu0 0.0
    %2673 = vmatpush1.msra.mxu0 %v281
    %2674 = vmatprep.subr.mxu0 0.0
    %2675 = vmatpush1.msra.mxu0 %v282
    %2676 = vmatprep.subr.mxu0 0.0
    %2677 = vmatpush1.msra.mxu0 %v283
    %2678 = vmatprep.subr.mxu0 0.0
    %2679 = vmatpush1.msra.mxu0 %v284
    %2680 = vmatprep.subr.mxu0 0.0
    %2681 = vmatpush1.msra.mxu0 %v285
    %2682 = vmatprep.subr.mxu0 0.0
    %2683 = vmatpush1.msra.mxu0 %v286
    %2684 = vmatprep.subr.mxu0 0.0
    %2685 = vmatpush1.msra.mxu0 %v287
    %2686 = vmatprep.subr.mxu0 0.0
    %2687 = vmatpush1.msra.mxu0 %v288
    %2688 = vmatprep.subr.mxu0 0.0
    %2689 = vmatpush1.msra.mxu0 %v289
    %2690 = vmatprep.subr.mxu0 0.0
    %2691 = vmatpush1.msra.mxu0 %v290
    %2692 = vmatprep.subr.mxu0 0.0
    %2693 = vmatpush1.msra.mxu0 %v291
    %2694 = vmatprep.subr.mxu0 0.0
    %2695 = vmatpush1.msra.mxu0 %v292
    %2696 = vmatprep.subr.mxu0 0.0
    %2697 = vmatpush1.msra.mxu0 %v293
    %2698 = vmatprep.subr.mxu0 0.0
    %2699 = vmatpush1.msra.mxu0 %v294
    %2700 = vmatprep.subr.mxu0 0.0
    %2701 = vmatpush1.msra.mxu0 %v295
    %2702 = vmatprep.subr.mxu0 0.0
    %2703 = vmatpush1.msra.mxu0 %v296
    %2704 = vmatprep.subr.mxu0 0.0
    %2705 = vmatpush1.msra.mxu0 %v297
    %2706 = vmatprep.subr.mxu0 0.0
    %2707 = vmatpush1.msra.mxu0 %v298
    %2708 = vmatprep.subr.mxu0 0.0
    %2709 = vmatpush1.msra.mxu0 %v299
    %2710 = vmatprep.subr.mxu0 0.0
    %2711 = vmatpush1.msra.mxu0 %v300
    %2712 = vmatprep.subr.mxu0 0.0
    %2713 = vmatpush1.msra.mxu0 %v301
    %2714 = vmatprep.mubr.f32.mxu0 %v1713
    %2715 = vmatmul.mubr.f32.gmra.mrb[0].mxu0 %v1711
    %v2716 = vpop.f32.mrb[0].mxu0
    %v2717 = vadd.f32 %v2647, %v2716
    %v2718 = vpop.f32.mrb[0].mxu0
    %2719 = vdwg.mxu0
    %2720 = vmatprep.subr.mxu0 0.0
    %2721 = vmatpush1.msra.mxu0 %v302
    %2722 = vmatprep.subr.mxu0 0.0
    %2723 = vmatpush1.msra.mxu0 %v303
    %2724 = vmatprep.subr.mxu0 0.0
    %2725 = vmatpush1.msra.mxu0 %v304
    %2726 = vmatprep.subr.mxu0 0.0
    %2727 = vmatpush1.msra.mxu0 %v305
    %2728 = vmatprep.subr.mxu0 0.0
    %2729 = vmatpush1.msra.mxu0 %v306
    %2730 = vmatprep.subr.mxu0 0.0
    %2731 = vmatpush1.msra.mxu0 %v307
    %2732 = vmatprep.subr.mxu0 0.0
    %2733 = vmatpush1.msra.mxu0 %v308
    %2734 = vmatprep.subr.mxu0 0.0
    %2735 = vmatpush1.msra.mxu0 %v309
    %2736 = vmatprep.subr.mxu0 0.0
    %2737 = vmatpush1.msra.mxu0 %v310
    %2738 = vmatprep.subr.mxu0 0.0
    %2739 = vmatpush1.msra.mxu0 %v311
    %2740 = vmatprep.subr.mxu0 0.0
    %2741 = vmatpush1.msra.mxu0 %v312
    %2742 = vmatprep.subr.mxu0 0.0
    %2743 = vmatpush1.msra.mxu0 %v313
    %2744 = vmatprep.subr.mxu0 0.0
    %2745 = vmatpush1.msra.mxu0 %v314
    %2746 = vmatprep.subr.mxu0 0.0
    %2747 = vmatpush1.msra.mxu0 %v315
    %2748 = vmatprep.subr.mxu0 0.0
    %2749 = vmatpush1.msra.mxu0 %v316
    %2750 = vmatprep.subr.mxu0 0.0
    %2751 = vmatpush1.msra.mxu0 %v317
    %2752 = vmatprep.subr.mxu0 0.0
    %2753 = vmatpush1.msra.mxu0 %v318
    %2754 = vmatprep.subr.mxu0 0.0
    %2755 = vmatpush1.msra.mxu0 %v319
    %2756 = vmatprep.subr.mxu0 0.0
    %2757 = vmatpush1.msra.mxu0 %v320
    %2758 = vmatprep.subr.mxu0 0.0
    %2759 = vmatpush1.msra.mxu0 %v321
    %2760 = vmatprep.subr.mxu0 0.0
    %2761 = vmatpush1.msra.mxu0 %v322
    %2762 = vmatprep.subr.mxu0 0.0
    %2763 = vmatpush1.msra.mxu0 %v323
    %2764 = vmatprep.subr.mxu0 0.0
    %2765 = vmatpush1.msra.mxu0 %v324
    %2766 = vmatprep.subr.mxu0 0.0
    %2767 = vmatpush1.msra.mxu0 %v325
    %2768 = vmatprep.subr.mxu0 0.0
    %2769 = vmatpush1.msra.mxu0 %v326
    %2770 = vmatprep.subr.mxu0 0.0
    %2771 = vmatpush1.msra.mxu0 %v327
    %2772 = vmatprep.subr.mxu0 0.0
    %2773 = vmatpush1.msra.mxu0 %v328
    %2774 = vmatprep.subr.mxu0 0.0
    %2775 = vmatpush1.msra.mxu0 %v329
    %2776 = vmatprep.subr.mxu0 0.0
    %2777 = vmatpush1.msra.mxu0 %v330
    %2778 = vmatprep.subr.mxu0 0.0
    %2779 = vmatpush1.msra.mxu0 %v331
    %2780 = vmatprep.subr.mxu0 0.0
    %2781 = vmatpush1.msra.mxu0 %v332
    %2782 = vmatprep.subr.mxu0 0.0
    %2783 = vmatpush1.msra.mxu0 %v333
    %2784 = vmatprep.mubr.f32.mxu0 %v1729
    %2785 = vmatmul.mubr.f32.gmra.mrb[0].mxu0 %v1721
    %v2786 = vpop.f32.mrb[0].mxu0
    %v2787 = vadd.f32 %v2717, %v2786
    %v2788 = vpop.f32.mrb[0].mxu0
    %2789 = vdwg.mxu0
    %2790 = vmatprep.subr.mxu0 0.0
    %2791 = vmatpush1.msra.mxu0 %v334
    %2792 = vmatprep.subr.mxu0 0.0
    %2793 = vmatpush1.msra.mxu0 %v335
    %2794 = vmatprep.subr.mxu0 0.0
    %2795 = vmatpush1.msra.mxu0 %v336
    %2796 = vmatprep.subr.mxu0 0.0
    %2797 = vmatpush1.msra.mxu0 %v337
    %2798 = vmatprep.subr.mxu0 0.0
    %2799 = vmatpush1.msra.mxu0 %v338
    %2800 = vmatprep.subr.mxu0 0.0
    %2801 = vmatpush1.msra.mxu0 %v339
    %2802 = vmatprep.subr.mxu0 0.0
    %2803 = vmatpush1.msra.mxu0 %v340
    %2804 = vmatprep.subr.mxu0 0.0
    %2805 = vmatpush1.msra.mxu0 %v341
    %2806 = vmatprep.subr.mxu0 0.0
    %2807 = vmatpush1.msra.mxu0 %v342
    %2808 = vmatprep.subr.mxu0 0.0
    %2809 = vmatpush1.msra.mxu0 %v343
    %2810 = vmatprep.subr.mxu0 0.0
    %2811 = vmatpush1.msra.mxu0 %v344
    %2812 = vmatprep.subr.mxu0 0.0
    %2813 = vmatpush1.msra.mxu0 %v345
    %2814 = vmatprep.subr.mxu0 0.0
    %2815 = vmatpush1.msra.mxu0 %v346
    %2816 = vmatprep.subr.mxu0 0.0
    %2817 = vmatpush1.msra.mxu0 %v347
    %2818 = vmatprep.subr.mxu0 0.0
    %2819 = vmatpush1.msra.mxu0 %v348
    %2820 = vmatprep.subr.mxu0 0.0
    %2821 = vmatpush1.msra.mxu0 %v349
    %2822 = vmatprep.subr.mxu0 0.0
    %2823 = vmatpush1.msra.mxu0 %v350
    %2824 = vmatprep.subr.mxu0 0.0
    %2825 = vmatpush1.msra.mxu0 %v351
    %2826 = vmatprep.subr.mxu0 0.0
    %2827 = vmatpush1.msra.mxu0 %v352
    %2828 = vmatprep.subr.mxu0 0.0
    %2829 = vmatpush1.msra.mxu0 %v353
    %2830 = vmatprep.subr.mxu0 0.0
    %2831 = vmatpush1.msra.mxu0 %v354
    %2832 = vmatprep.subr.mxu0 0.0
    %2833 = vmatpush1.msra.mxu0 %v355
    %2834 = vmatprep.subr.mxu0 0.0
    %2835 = vmatpush1.msra.mxu0 %v356
    %2836 = vmatprep.subr.mxu0 0.0
    %2837 = vmatpush1.msra.mxu0 %v357
    %2838 = vmatprep.subr.mxu0 0.0
    %2839 = vmatpush1.msra.mxu0 %v358
    %2840 = vmatprep.subr.mxu0 0.0
    %2841 = vmatpush1.msra.mxu0 %v359
    %2842 = vmatprep.subr.mxu0 0.0
    %2843 = vmatpush1.msra.mxu0 %v360
    %2844 = vmatprep.subr.mxu0 0.0
    %2845 = vmatpush1.msra.mxu0 %v361
    %2846 = vmatprep.subr.mxu0 0.0
    %2847 = vmatpush1.msra.mxu0 %v362
    %2848 = vmatprep.subr.mxu0 0.0
    %2849 = vmatpush1.msra.mxu0 %v363
    %2850 = vmatprep.subr.mxu0 0.0
    %2851 = vmatpush1.msra.mxu0 %v364
    %2852 = vmatprep.subr.mxu0 0.0
    %2853 = vmatpush1.msra.mxu0 %v365
    %2854 = vmatprep.mubr.f32.mxu0 %v1730
    %2855 = vmatmul.mubr.f32.gmra.mrb[0].mxu0 %v1728
    %v2856 = vpop.f32.mrb[0].mxu0
    %v2857 = vadd.f32 %v2787, %v2856
    %v2858 = vpop.f32.mrb[0].mxu0
    %2859 = vdwg.mxu0
    %2860 = vmatprep.subr.mxu0 0.0
    %2861 = vmatpush1.msra.mxu0 %v366
    %2862 = vmatprep.subr.mxu0 0.0
    %2863 = vmatpush1.msra.mxu0 %v367
    %2864 = vmatprep.subr.mxu0 0.0
    %2865 = vmatpush1.msra.mxu0 %v368
    %2866 = vmatprep.subr.mxu0 0.0
    %2867 = vmatpush1.msra.mxu0 %v369
    %2868 = vmatprep.subr.mxu0 0.0
    %2869 = vmatpush1.msra.mxu0 %v370
    %2870 = vmatprep.subr.mxu0 0.0
    %2871 = vmatpush1.msra.mxu0 %v371
    %2872 = vmatprep.subr.mxu0 0.0
    %2873 = vmatpush1.msra.mxu0 %v372
    %2874 = vmatprep.subr.mxu0 0.0
    %2875 = vmatpush1.msra.mxu0 %v373
    %2876 = vmatprep.subr.mxu0 0.0
    %2877 = vmatpush1.msra.mxu0 %v374
    %2878 = vmatprep.subr.mxu0 0.0
    %2879 = vmatpush1.msra.mxu0 %v375
    %2880 = vmatprep.subr.mxu0 0.0
    %2881 = vmatpush1.msra.mxu0 %v376
    %2882 = vmatprep.subr.mxu0 0.0
    %2883 = vmatpush1.msra.mxu0 %v377
    %2884 = vmatprep.subr.mxu0 0.0
    %2885 = vmatpush1.msra.mxu0 %v378
    %2886 = vmatprep.subr.mxu0 0.0
    %2887 = vmatpush1.msra.mxu0 %v379
    %2888 = vmatprep.subr.mxu0 0.0
    %2889 = vmatpush1.msra.mxu0 %v380
    %2890 = vmatprep.subr.mxu0 0.0
    %2891 = vmatpush1.msra.mxu0 %v381
    %2892 = vmatprep.subr.mxu0 0.0
    %2893 = vmatpush1.msra.mxu0 %v382
    %2894 = vmatprep.subr.mxu0 0.0
    %2895 = vmatpush1.msra.mxu0 %v383
    %2896 = vmatprep.subr.mxu0 0.0
    %2897 = vmatpush1.msra.mxu0 %v384
    %2898 = vmatprep.subr.mxu0 0.0
    %2899 = vmatpush1.msra.mxu0 %v385
    %2900 = vmatprep.subr.mxu0 0.0
    %2901 = vmatpush1.msra.mxu0 %v386
    %2902 = vmatprep.subr.mxu0 0.0
    %2903 = vmatpush1.msra.mxu0 %v387
    %2904 = vmatprep.subr.mxu0 0.0
    %2905 = vmatpush1.msra.mxu0 %v388
    %2906 = vmatprep.subr.mxu0 0.0
    %2907 = vmatpush1.msra.mxu0 %v389
    %2908 = vmatprep.subr.mxu0 0.0
    %2909 = vmatpush1.msra.mxu0 %v390
    %2910 = vmatprep.subr.mxu0 0.0
    %2911 = vmatpush1.msra.mxu0 %v391
    %2912 = vmatprep.subr.mxu0 0.0
    %2913 = vmatpush1.msra.mxu0 %v392
    %2914 = vmatprep.subr.mxu0 0.0
    %2915 = vmatpush1.msra.mxu0 %v393
    %2916 = vmatprep.subr.mxu0 0.0
    %2917 = vmatpush1.msra.mxu0 %v394
    %2918 = vmatprep.subr.mxu0 0.0
    %2919 = vmatpush1.msra.mxu0 %v395
    %2920 = vmatprep.subr.mxu0 0.0
    %2921 = vmatpush1.msra.mxu0 %v396
    %2922 = vmatprep.subr.mxu0 0.0
    %2923 = vmatpush1.msra.mxu0 %v397
    %2924 = vmatprep.mubr.f32.mxu0 %v1746
    %2925 = vmatmul.mubr.f32.gmra.mrb[0].mxu0 %v1738
    %v2926 = vpop.f32.mrb[0].mxu0
    %v2927 = vadd.f32 %v2857, %v2926
    %v2928 = vpop.f32.mrb[0].mxu0
    %2929 = vdwg.mxu0
    %2930 = vmatprep.subr.mxu0 0.0
    %2931 = vmatpush1.msra.mxu0 %v398
    %2932 = vmatprep.subr.mxu0 0.0
    %2933 = vmatpush1.msra.mxu0 %v399
    %2934 = vmatprep.subr.mxu0 0.0
    %2935 = vmatpush1.msra.mxu0 %v400
    %2936 = vmatprep.subr.mxu0 0.0
    %2937 = vmatpush1.msra.mxu0 %v401
    %2938 = vmatprep.subr.mxu0 0.0
    %2939 = vmatpush1.msra.mxu0 %v402
    %2940 = vmatprep.subr.mxu0 0.0
    %2941 = vmatpush1.msra.mxu0 %v403
    %2942 = vmatprep.subr.mxu0 0.0
    %2943 = vmatpush1.msra.mxu0 %v404
    %2944 = vmatprep.subr.mxu0 0.0
    %2945 = vmatpush1.msra.mxu0 %v405
    %2946 = vmatprep.subr.mxu0 0.0
    %2947 = vmatpush1.msra.mxu0 %v406
    %2948 = vmatprep.subr.mxu0 0.0
    %2949 = vmatpush1.msra.mxu0 %v407
    %2950 = vmatprep.subr.mxu0 0.0
    %2951 = vmatpush1.msra.mxu0 %v408
    %2952 = vmatprep.subr.mxu0 0.0
    %2953 = vmatpush1.msra.mxu0 %v409
    %2954 = vmatprep.subr.mxu0 0.0
    %2955 = vmatpush1.msra.mxu0 %v410
    %2956 = vmatprep.subr.mxu0 0.0
    %2957 = vmatpush1.msra.mxu0 %v411
    %2958 = vmatprep.subr.mxu0 0.0
    %2959 = vmatpush1.msra.mxu0 %v412
    %2960 = vmatprep.subr.mxu0 0.0
    %2961 = vmatpush1.msra.mxu0 %v413
    %2962 = vmatprep.subr.mxu0 0.0
    %2963 = vmatpush1.msra.mxu0 %v414
    %2964 = vmatprep.subr.mxu0 0.0
    %2965 = vmatpush1.msra.mxu0 %v415
    %2966 = vmatprep.subr.mxu0 0.0
    %2967 = vmatpush1.msra.mxu0 %v416
    %2968 = vmatprep.subr.mxu0 0.0
    %2969 = vmatpush1.msra.mxu0 %v417
    %2970 = vmatprep.subr.mxu0 0.0
    %2971 = vmatpush1.msra.mxu0 %v418
    %2972 = vmatprep.subr.mxu0 0.0
    %2973 = vmatpush1.msra.mxu0 %v419
    %2974 = vmatprep.subr.mxu0 0.0
    %2975 = vmatpush1.msra.mxu0 %v420
    %2976 = vmatprep.subr.mxu0 0.0
    %2977 = vmatpush1.msra.mxu0 %v421
    %2978 = vmatprep.subr.mxu0 0.0
    %2979 = vmatpush1.msra.mxu0 %v422
    %2980 = vmatprep.subr.mxu0 0.0
    %2981 = vmatpush1.msra.mxu0 %v423
    %2982 = vmatprep.subr.mxu0 0.0
    %2983 = vmatpush1.msra.mxu0 %v424
    %2984 = vmatprep.subr.mxu0 0.0
    %2985 = vmatpush1.msra.mxu0 %v425
    %2986 = vmatprep.subr.mxu0 0.0
    %2987 = vmatpush1.msra.mxu0 %v426
    %2988 = vmatprep.subr.mxu0 0.0
    %2989 = vmatpush1.msra.mxu0 %v427
    %2990 = vmatprep.subr.mxu0 0.0
    %2991 = vmatpush1.msra.mxu0 %v428
    %2992 = vmatprep.subr.mxu0 0.0
    %2993 = vmatpush1.msra.mxu0 %v429
    %2994 = vmatprep.mubr.f32.mxu0 %v1747
    %2995 = vmatmul.mubr.f32.gmra.mrb[0].mxu0 %v1745
    %v2996 = vpop.f32.mrb[0].mxu0
    %v2997 = vadd.f32 %v2927, %v2996
    %v2998 = vpop.f32.mrb[0].mxu0
    %2999 = vdwg.mxu0
    %3000 = vmatprep.subr.mxu0 0.0
    %3001 = vmatpush1.msra.mxu0 %v430
    %3002 = vmatprep.subr.mxu0 0.0
    %3003 = vmatpush1.msra.mxu0 %v431
    %3004 = vmatprep.subr.mxu0 0.0
    %3005 = vmatpush1.msra.mxu0 %v432
    %3006 = vmatprep.subr.mxu0 0.0
    %3007 = vmatpush1.msra.mxu0 %v433
    %3008 = vmatprep.subr.mxu0 0.0
    %3009 = vmatpush1.msra.mxu0 %v434
    %3010 = vmatprep.subr.mxu0 0.0
    %3011 = vmatpush1.msra.mxu0 %v435
    %3012 = vmatprep.subr.mxu0 0.0
    %3013 = vmatpush1.msra.mxu0 %v436
    %3014 = vmatprep.subr.mxu0 0.0
    %3015 = vmatpush1.msra.mxu0 %v437
    %3016 = vmatprep.subr.mxu0 0.0
    %3017 = vmatpush1.msra.mxu0 %v438
    %3018 = vmatprep.subr.mxu0 0.0
    %3019 = vmatpush1.msra.mxu0 %v439
    %3020 = vmatprep.subr.mxu0 0.0
    %3021 = vmatpush1.msra.mxu0 %v440
    %3022 = vmatprep.subr.mxu0 0.0
    %3023 = vmatpush1.msra.mxu0 %v441
    %3024 = vmatprep.subr.mxu0 0.0
    %3025 = vmatpush1.msra.mxu0 %v442
    %3026 = vmatprep.subr.mxu0 0.0
    %3027 = vmatpush1.msra.mxu0 %v443
    %3028 = vmatprep.subr.mxu0 0.0
    %3029 = vmatpush1.msra.mxu0 %v444
    %3030 = vmatprep.subr.mxu0 0.0
    %3031 = vmatpush1.msra.mxu0 %v445
    %3032 = vmatprep.subr.mxu0 0.0
    %3033 = vmatpush1.msra.mxu0 %v446
    %3034 = vmatprep.subr.mxu0 0.0
    %3035 = vmatpush1.msra.mxu0 %v447
    %3036 = vmatprep.subr.mxu0 0.0
    %3037 = vmatpush1.msra.mxu0 %v448
    %3038 = vmatprep.subr.mxu0 0.0
    %3039 = vmatpush1.msra.mxu0 %v449
    %3040 = vmatprep.subr.mxu0 0.0
    %3041 = vmatpush1.msra.mxu0 %v450
    %3042 = vmatprep.subr.mxu0 0.0
    %3043 = vmatpush1.msra.mxu0 %v451
    %3044 = vmatprep.subr.mxu0 0.0
    %3045 = vmatpush1.msra.mxu0 %v452
    %3046 = vmatprep.subr.mxu0 0.0
    %3047 = vmatpush1.msra.mxu0 %v453
    %3048 = vmatprep.subr.mxu0 0.0
    %3049 = vmatpush1.msra.mxu0 %v454
    %3050 = vmatprep.subr.mxu0 0.0
    %3051 = vmatpush1.msra.mxu0 %v455
    %3052 = vmatprep.subr.mxu0 0.0
    %3053 = vmatpush1.msra.mxu0 %v456
    %3054 = vmatprep.subr.mxu0 0.0
    %3055 = vmatpush1.msra.mxu0 %v457
    %3056 = vmatprep.subr.mxu0 0.0
    %3057 = vmatpush1.msra.mxu0 %v458
    %3058 = vmatprep.subr.mxu0 0.0
    %3059 = vmatpush1.msra.mxu0 %v459
    %3060 = vmatprep.subr.mxu0 0.0
    %3061 = vmatpush1.msra.mxu0 %v460
    %3062 = vmatprep.subr.mxu0 0.0
    %3063 = vmatpush1.msra.mxu0 %v461
    %3064 = vmatprep.mubr.f32.mxu0 %v1763
    %3065 = vmatmul.mubr.f32.gmra.mrb[0].mxu0 %v1755
    %v3066 = vpop.f32.mrb[0].mxu0
    %v3067 = vadd.f32 %v2997, %v3066
    %v3068 = vpop.f32.mrb[0].mxu0
    %3069 = vdwg.mxu0
    %3070 = vmatprep.subr.mxu0 0.0
    %3071 = vmatpush1.msra.mxu0 %v462
    %3072 = vmatprep.subr.mxu0 0.0
    %3073 = vmatpush1.msra.mxu0 %v463
    %3074 = vmatprep.subr.mxu0 0.0
    %3075 = vmatpush1.msra.mxu0 %v464
    %3076 = vmatprep.subr.mxu0 0.0
    %3077 = vmatpush1.msra.mxu0 %v465
    %3078 = vmatprep.subr.mxu0 0.0
    %3079 = vmatpush1.msra.mxu0 %v466
    %3080 = vmatprep.subr.mxu0 0.0
    %3081 = vmatpush1.msra.mxu0 %v467
    %3082 = vmatprep.subr.mxu0 0.0
    %3083 = vmatpush1.msra.mxu0 %v468
    %3084 = vmatprep.subr.mxu0 0.0
    %3085 = vmatpush1.msra.mxu0 %v469
    %3086 = vmatprep.subr.mxu0 0.0
    %3087 = vmatpush1.msra.mxu0 %v470
    %3088 = vmatprep.subr.mxu0 0.0
    %3089 = vmatpush1.msra.mxu0 %v471
    %3090 = vmatprep.subr.mxu0 0.0
    %3091 = vmatpush1.msra.mxu0 %v472
    %3092 = vmatprep.subr.mxu0 0.0
    %3093 = vmatpush1.msra.mxu0 %v473
    %3094 = vmatprep.subr.mxu0 0.0
    %3095 = vmatpush1.msra.mxu0 %v474
    %3096 = vmatprep.subr.mxu0 0.0
    %3097 = vmatpush1.msra.mxu0 %v475
    %3098 = vmatprep.subr.mxu0 0.0
    %3099 = vmatpush1.msra.mxu0 %v476
    %3100 = vmatprep.subr.mxu0 0.0
    %3101 = vmatpush1.msra.mxu0 %v477
    %3102 = vmatprep.subr.mxu0 0.0
    %3103 = vmatpush1.msra.mxu0 %v478
    %3104 = vmatprep.subr.mxu0 0.0
    %3105 = vmatpush1.msra.mxu0 %v479
    %3106 = vmatprep.subr.mxu0 0.0
    %3107 = vmatpush1.msra.mxu0 %v480
    %3108 = vmatprep.subr.mxu0 0.0
    %3109 = vmatpush1.msra.mxu0 %v481
    %3110 = vmatprep.subr.mxu0 0.0
    %3111 = vmatpush1.msra.mxu0 %v482
    %3112 = vmatprep.subr.mxu0 0.0
    %3113 = vmatpush1.msra.mxu0 %v483
    %3114 = vmatprep.subr.mxu0 0.0
    %3115 = vmatpush1.msra.mxu0 %v484
    %3116 = vmatprep.subr.mxu0 0.0
    %3117 = vmatpush1.msra.mxu0 %v485
    %3118 = vmatprep.subr.mxu0 0.0
    %3119 = vmatpush1.msra.mxu0 %v486
    %3120 = vmatprep.subr.mxu0 0.0
    %3121 = vmatpush1.msra.mxu0 %v487
    %3122 = vmatprep.subr.mxu0 0.0
    %3123 = vmatpush1.msra.mxu0 %v488
    %3124 = vmatprep.subr.mxu0 0.0
    %3125 = vmatpush1.msra.mxu0 %v489
    %3126 = vmatprep.subr.mxu0 0.0
    %3127 = vmatpush1.msra.mxu0 %v490
    %3128 = vmatprep.subr.mxu0 0.0
    %3129 = vmatpush1.msra.mxu0 %v491
    %3130 = vmatprep.subr.mxu0 0.0
    %3131 = vmatpush1.msra.mxu0 %v492
    %3132 = vmatprep.subr.mxu0 0.0
    %3133 = vmatpush1.msra.mxu0 %v493
    %3134 = vmatprep.mubr.f32.mxu0 %v1764
    %3135 = vmatmul.mubr.f32.gmra.mrb[0].mxu0 %v1762
    %v3136 = vpop.f32.mrb[0].mxu0
    %v3137 = vadd.f32 %v3067, %v3136
    %v3138 = vpop.f32.mrb[0].mxu0
    %3139 = vdwg.mxu0
    %3140 = vmatprep.subr.mxu0 0.0
    %3141 = vmatpush1.msra.mxu0 %v494
    %3142 = vmatprep.subr.mxu0 0.0
    %3143 = vmatpush1.msra.mxu0 %v495
    %3144 = vmatprep.subr.mxu0 0.0
    %3145 = vmatpush1.msra.mxu0 %v496
    %3146 = vmatprep.subr.mxu0 0.0
    %3147 = vmatpush1.msra.mxu0 %v497
    %3148 = vmatprep.subr.mxu0 0.0
    %3149 = vmatpush1.msra.mxu0 %v498
    %3150 = vmatprep.subr.mxu0 0.0
    %3151 = vmatpush1.msra.mxu0 %v499
    %3152 = vmatprep.subr.mxu0 0.0
    %3153 = vmatpush1.msra.mxu0 %v500
    %3154 = vmatprep.subr.mxu0 0.0
    %3155 = vmatpush1.msra.mxu0 %v501
    %3156 = vmatprep.subr.mxu0 0.0
    %3157 = vmatpush1.msra.mxu0 %v502
    %3158 = vmatprep.subr.mxu0 0.0
    %3159 = vmatpush1.msra.mxu0 %v503
    %3160 = vmatprep.subr.mxu0 0.0
    %3161 = vmatpush1.msra.mxu0 %v504
    %3162 = vmatprep.subr.mxu0 0.0
    %3163 = vmatpush1.msra.mxu0 %v505
    %3164 = vmatprep.subr.mxu0 0.0
    %3165 = vmatpush1.msra.mxu0 %v506
    %3166 = vmatprep.subr.mxu0 0.0
    %3167 = vmatpush1.msra.mxu0 %v507
    %3168 = vmatprep.subr.mxu0 0.0
    %3169 = vmatpush1.msra.mxu0 %v508
    %3170 = vmatprep.subr.mxu0 0.0
    %3171 = vmatpush1.msra.mxu0 %v509
    %3172 = vmatprep.subr.mxu0 0.0
    %3173 = vmatpush1.msra.mxu0 %v510
    %3174 = vmatprep.subr.mxu0 0.0
    %3175 = vmatpush1.msra.mxu0 %v511
    %3176 = vmatprep.subr.mxu0 0.0
    %3177 = vmatpush1.msra.mxu0 %v512
    %3178 = vmatprep.subr.mxu0 0.0
    %3179 = vmatpush1.msra.mxu0 %v513
    %3180 = vmatprep.subr.mxu0 0.0
    %3181 = vmatpush1.msra.mxu0 %v514
    %3182 = vmatprep.subr.mxu0 0.0
    %3183 = vmatpush1.msra.mxu0 %v515
    %3184 = vmatprep.subr.mxu0 0.0
    %3185 = vmatpush1.msra.mxu0 %v516
    %3186 = vmatprep.subr.mxu0 0.0
    %3187 = vmatpush1.msra.mxu0 %v517
    %3188 = vmatprep.subr.mxu0 0.0
    %3189 = vmatpush1.msra.mxu0 %v518
    %3190 = vmatprep.subr.mxu0 0.0
    %3191 = vmatpush1.msra.mxu0 %v519
    %3192 = vmatprep.subr.mxu0 0.0
    %3193 = vmatpush1.msra.mxu0 %v520
    %3194 = vmatprep.subr.mxu0 0.0
    %3195 = vmatpush1.msra.mxu0 %v521
    %3196 = vmatprep.subr.mxu0 0.0
    %3197 = vmatpush1.msra.mxu0 %v522
    %3198 = vmatprep.subr.mxu0 0.0
    %3199 = vmatpush1.msra.mxu0 %v523
    %3200 = vmatprep.subr.mxu0 0.0
    %3201 = vmatpush1.msra.mxu0 %v524
    %3202 = vmatprep.subr.mxu0 0.0
    %3203 = vmatpush1.msra.mxu0 %v525
    %3204 = vmatprep.mubr.f32.mxu0 %v1780
    %3205 = vmatmul.mubr.f32.gmra.mrb[0].mxu0 %v1772
    %v3206 = vpop.f32.mrb[0].mxu0
    %v3207 = vadd.f32 %v3137, %v3206
    %v3208 = vpop.f32.mrb[0].mxu0
    %3209 = vdwg.mxu0
    %3210 = vmatprep.subr.mxu0 0.0
    %3211 = vmatpush1.msra.mxu0 %v526
    %3212 = vmatprep.subr.mxu0 0.0
    %3213 = vmatpush1.msra.mxu0 %v527
    %3214 = vmatprep.subr.mxu0 0.0
    %3215 = vmatpush1.msra.mxu0 %v528
    %3216 = vmatprep.subr.mxu0 0.0
    %3217 = vmatpush1.msra.mxu0 %v529
    %3218 = vmatprep.subr.mxu0 0.0
    %3219 = vmatpush1.msra.mxu0 %v530
    %3220 = vmatprep.subr.mxu0 0.0
    %3221 = vmatpush1.msra.mxu0 %v531
    %3222 = vmatprep.subr.mxu0 0.0
    %3223 = vmatpush1.msra.mxu0 %v532
    %3224 = vmatprep.subr.mxu0 0.0
    %3225 = vmatpush1.msra.mxu0 %v533
    %3226 = vmatprep.subr.mxu0 0.0
    %3227 = vmatpush1.msra.mxu0 %v534
    %3228 = vmatprep.subr.mxu0 0.0
    %3229 = vmatpush1.msra.mxu0 %v535
    %3230 = vmatprep.subr.mxu0 0.0
    %3231 = vmatpush1.msra.mxu0 %v536
    %3232 = vmatprep.subr.mxu0 0.0
    %3233 = vmatpush1.msra.mxu0 %v537
    %3234 = vmatprep.subr.mxu0 0.0
    %3235 = vmatpush1.msra.mxu0 %v538
    %3236 = vmatprep.subr.mxu0 0.0
    %3237 = vmatpush1.msra.mxu0 %v539
    %3238 = vmatprep.subr.mxu0 0.0
    %3239 = vmatpush1.msra.mxu0 %v540
    %3240 = vmatprep.subr.mxu0 0.0
    %3241 = vmatpush1.msra.mxu0 %v541
    %3242 = vmatprep.subr.mxu0 0.0
    %3243 = vmatpush1.msra.mxu0 %v542
    %3244 = vmatprep.subr.mxu0 0.0
    %3245 = vmatpush1.msra.mxu0 %v543
    %3246 = vmatprep.subr.mxu0 0.0
    %3247 = vmatpush1.msra.mxu0 %v544
    %3248 = vmatprep.subr.mxu0 0.0
    %3249 = vmatpush1.msra.mxu0 %v545
    %3250 = vmatprep.subr.mxu0 0.0
    %3251 = vmatpush1.msra.mxu0 %v546
    %3252 = vmatprep.subr.mxu0 0.0
    %3253 = vmatpush1.msra.mxu0 %v547
    %3254 = vmatprep.subr.mxu0 0.0
    %3255 = vmatpush1.msra.mxu0 %v548
    %3256 = vmatprep.subr.mxu0 0.0
    %3257 = vmatpush1.msra.mxu0 %v549
    %3258 = vmatprep.subr.mxu0 0.0
    %3259 = vmatpush1.msra.mxu0 %v550
    %3260 = vmatprep.subr.mxu0 0.0
    %3261 = vmatpush1.msra.mxu0 %v551
    %3262 = vmatprep.subr.mxu0 0.0
    %3263 = vmatpush1.msra.mxu0 %v552
    %3264 = vmatprep.subr.mxu0 0.0
    %3265 = vmatpush1.msra.mxu0 %v553
    %3266 = vmatprep.subr.mxu0 0.0
    %3267 = vmatpush1.msra.mxu0 %v554
    %3268 = vmatprep.subr.mxu0 0.0
    %3269 = vmatpush1.msra.mxu0 %v555
    %3270 = vmatprep.subr.mxu0 0.0
    %3271 = vmatpush1.msra.mxu0 %v556
    %3272 = vmatprep.subr.mxu0 0.0
    %3273 = vmatpush1.msra.mxu0 %v557
    %3274 = vmatprep.mubr.f32.mxu0 %v1781
    %3275 = vmatmul.mubr.f32.gmra.mrb[0].mxu0 %v1779
    %v3276 = vpop.f32.mrb[0].mxu0
    %v3277 = vadd.f32 %v3207, %v3276
    %v3278 = vpop.f32.mrb[0].mxu0
    %3279 = vdwg.mxu0
    %3280 = vmatprep.subr.mxu0 0.0
    %3281 = vmatpush1.msra.mxu0 %v558
    %3282 = vmatprep.subr.mxu0 0.0
    %3283 = vmatpush1.msra.mxu0 %v559
    %3284 = vmatprep.subr.mxu0 0.0
    %3285 = vmatpush1.msra.mxu0 %v560
    %3286 = vmatprep.subr.mxu0 0.0
    %3287 = vmatpush1.msra.mxu0 %v561
    %3288 = vmatprep.subr.mxu0 0.0
    %3289 = vmatpush1.msra.mxu0 %v562
    %3290 = vmatprep.subr.mxu0 0.0
    %3291 = vmatpush1.msra.mxu0 %v563
    %3292 = vmatprep.subr.mxu0 0.0
    %3293 = vmatpush1.msra.mxu0 %v564
    %3294 = vmatprep.subr.mxu0 0.0
    %3295 = vmatpush1.msra.mxu0 %v565
    %3296 = vmatprep.subr.mxu0 0.0
    %3297 = vmatpush1.msra.mxu0 %v566
    %3298 = vmatprep.subr.mxu0 0.0
    %3299 = vmatpush1.msra.mxu0 %v567
    %3300 = vmatprep.subr.mxu0 0.0
    %3301 = vmatpush1.msra.mxu0 %v568
    %3302 = vmatprep.subr.mxu0 0.0
    %3303 = vmatpush1.msra.mxu0 %v569
    %3304 = vmatprep.subr.mxu0 0.0
    %3305 = vmatpush1.msra.mxu0 %v570
    %3306 = vmatprep.subr.mxu0 0.0
    %3307 = vmatpush1.msra.mxu0 %v571
    %3308 = vmatprep.subr.mxu0 0.0
    %3309 = vmatpush1.msra.mxu0 %v572
    %3310 = vmatprep.subr.mxu0 0.0
    %3311 = vmatpush1.msra.mxu0 %v573
    %3312 = vmatprep.subr.mxu0 0.0
    %3313 = vmatpush1.msra.mxu0 %v574
    %3314 = vmatprep.subr.mxu0 0.0
    %3315 = vmatpush1.msra.mxu0 %v575
    %3316 = vmatprep.subr.mxu0 0.0
    %3317 = vmatpush1.msra.mxu0 %v576
    %3318 = vmatprep.subr.mxu0 0.0
    %3319 = vmatpush1.msra.mxu0 %v577
    %3320 = vmatprep.subr.mxu0 0.0
    %3321 = vmatpush1.msra.mxu0 %v578
    %3322 = vmatprep.subr.mxu0 0.0
    %3323 = vmatpush1.msra.mxu0 %v579
    %3324 = vmatprep.subr.mxu0 0.0
    %3325 = vmatpush1.msra.mxu0 %v580
    %3326 = vmatprep.subr.mxu0 0.0
    %3327 = vmatpush1.msra.mxu0 %v581
    %3328 = vmatprep.subr.mxu0 0.0
    %3329 = vmatpush1.msra.mxu0 %v582
    %3330 = vmatprep.subr.mxu0 0.0
    %3331 = vmatpush1.msra.mxu0 %v583
    %3332 = vmatprep.subr.mxu0 0.0
    %3333 = vmatpush1.msra.mxu0 %v584
    %3334 = vmatprep.subr.mxu0 0.0
    %3335 = vmatpush1.msra.mxu0 %v585
    %3336 = vmatprep.subr.mxu0 0.0
    %3337 = vmatpush1.msra.mxu0 %v586
    %3338 = vmatprep.subr.mxu0 0.0
    %3339 = vmatpush1.msra.mxu0 %v587
    %3340 = vmatprep.subr.mxu0 0.0
    %3341 = vmatpush1.msra.mxu0 %v588
    %3342 = vmatprep.subr.mxu0 0.0
    %3343 = vmatpush1.msra.mxu0 %v589
    %3344 = vmatprep.mubr.f32.mxu0 %v1797
    %3345 = vmatmul.mubr.f32.gmra.mrb[0].mxu0 %v1789
    %v3346 = vpop.f32.mrb[0].mxu0
    %v3347 = vadd.f32 %v3277, %v3346
    %v3348 = vpop.f32.mrb[0].mxu0
    %3349 = vdwg.mxu0
    %3350 = vmatprep.subr.mxu0 0.0
    %3351 = vmatpush1.msra.mxu0 %v590
    %3352 = vmatprep.subr.mxu0 0.0
    %3353 = vmatpush1.msra.mxu0 %v591
    %3354 = vmatprep.subr.mxu0 0.0
    %3355 = vmatpush1.msra.mxu0 %v592
    %3356 = vmatprep.subr.mxu0 0.0
    %3357 = vmatpush1.msra.mxu0 %v593
    %3358 = vmatprep.subr.mxu0 0.0
    %3359 = vmatpush1.msra.mxu0 %v594
    %3360 = vmatprep.subr.mxu0 0.0
    %3361 = vmatpush1.msra.mxu0 %v595
    %3362 = vmatprep.subr.mxu0 0.0
    %3363 = vmatpush1.msra.mxu0 %v596
    %3364 = vmatprep.subr.mxu0 0.0
    %3365 = vmatpush1.msra.mxu0 %v597
    %3366 = vmatprep.subr.mxu0 0.0
    %3367 = vmatpush1.msra.mxu0 %v598
    %3368 = vmatprep.subr.mxu0 0.0
    %3369 = vmatpush1.msra.mxu0 %v599
    %3370 = vmatprep.subr.mxu0 0.0
    %3371 = vmatpush1.msra.mxu0 %v600
    %3372 = vmatprep.subr.mxu0 0.0
    %3373 = vmatpush1.msra.mxu0 %v601
    %3374 = vmatprep.subr.mxu0 0.0
    %3375 = vmatpush1.msra.mxu0 %v602
    %3376 = vmatprep.subr.mxu0 0.0
    %3377 = vmatpush1.msra.mxu0 %v603
    %3378 = vmatprep.subr.mxu0 0.0
    %3379 = vmatpush1.msra.mxu0 %v604
    %3380 = vmatprep.subr.mxu0 0.0
    %3381 = vmatpush1.msra.mxu0 %v605
    %3382 = vmatprep.subr.mxu0 0.0
    %3383 = vmatpush1.msra.mxu0 %v606
    %3384 = vmatprep.subr.mxu0 0.0
    %3385 = vmatpush1.msra.mxu0 %v607
    %3386 = vmatprep.subr.mxu0 0.0
    %3387 = vmatpush1.msra.mxu0 %v608
    %3388 = vmatprep.subr.mxu0 0.0
    %3389 = vmatpush1.msra.mxu0 %v609
    %3390 = vmatprep.subr.mxu0 0.0
    %3391 = vmatpush1.msra.mxu0 %v610
    %3392 = vmatprep.subr.mxu0 0.0
    %3393 = vmatpush1.msra.mxu0 %v611
    %3394 = vmatprep.subr.mxu0 0.0
    %3395 = vmatpush1.msra.mxu0 %v612
    %3396 = vmatprep.subr.mxu0 0.0
    %3397 = vmatpush1.msra.mxu0 %v613
    %3398 = vmatprep.subr.mxu0 0.0
    %3399 = vmatpush1.msra.mxu0 %v614
    %3400 = vmatprep.subr.mxu0 0.0
    %3401 = vmatpush1.msra.mxu0 %v615
    %3402 = vmatprep.subr.mxu0 0.0
    %3403 = vmatpush1.msra.mxu0 %v616
    %3404 = vmatprep.subr.mxu0 0.0
    %3405 = vmatpush1.msra.mxu0 %v617
    %3406 = vmatprep.subr.mxu0 0.0
    %3407 = vmatpush1.msra.mxu0 %v618
    %3408 = vmatprep.subr.mxu0 0.0
    %3409 = vmatpush1.msra.mxu0 %v619
    %3410 = vmatprep.subr.mxu0 0.0
    %3411 = vmatpush1.msra.mxu0 %v620
    %3412 = vmatprep.subr.mxu0 0.0
    %3413 = vmatpush1.msra.mxu0 %v621
    %3414 = vmatprep.mubr.f32.mxu0 %v1798
    %3415 = vmatmul.mubr.f32.gmra.mrb[0].mxu0 %v1796
    %v3416 = vpop.f32.mrb[0].mxu0
    %v3417 = vadd.f32 %v3347, %v3416
    %v3418 = vpop.f32.mrb[0].mxu0
    %3419 = vdwg.mxu0
    %3420 = vmatprep.subr.mxu0 0.0
    %3421 = vmatpush1.msra.mxu0 %v622
    %3422 = vmatprep.subr.mxu0 0.0
    %3423 = vmatpush1.msra.mxu0 %v623
    %3424 = vmatprep.subr.mxu0 0.0
    %3425 = vmatpush1.msra.mxu0 %v624
    %3426 = vmatprep.subr.mxu0 0.0
    %3427 = vmatpush1.msra.mxu0 %v625
    %3428 = vmatprep.subr.mxu0 0.0
    %3429 = vmatpush1.msra.mxu0 %v626
    %3430 = vmatprep.subr.mxu0 0.0
    %3431 = vmatpush1.msra.mxu0 %v627
    %3432 = vmatprep.subr.mxu0 0.0
    %3433 = vmatpush1.msra.mxu0 %v628
    %3434 = vmatprep.subr.mxu0 0.0
    %3435 = vmatpush1.msra.mxu0 %v629
    %3436 = vmatprep.subr.mxu0 0.0
    %3437 = vmatpush1.msra.mxu0 %v630
    %3438 = vmatprep.subr.mxu0 0.0
    %3439 = vmatpush1.msra.mxu0 %v631
    %3440 = vmatprep.subr.mxu0 0.0
    %3441 = vmatpush1.msra.mxu0 %v632
    %3442 = vmatprep.subr.mxu0 0.0
    %3443 = vmatpush1.msra.mxu0 %v633
    %3444 = vmatprep.subr.mxu0 0.0
    %3445 = vmatpush1.msra.mxu0 %v634
    %3446 = vmatprep.subr.mxu0 0.0
    %3447 = vmatpush1.msra.mxu0 %v635
    %3448 = vmatprep.subr.mxu0 0.0
    %3449 = vmatpush1.msra.mxu0 %v636
    %3450 = vmatprep.subr.mxu0 0.0
    %3451 = vmatpush1.msra.mxu0 %v637
    %3452 = vmatprep.subr.mxu0 0.0
    %3453 = vmatpush1.msra.mxu0 %v638
    %3454 = vmatprep.subr.mxu0 0.0
    %3455 = vmatpush1.msra.mxu0 %v639
    %3456 = vmatprep.subr.mxu0 0.0
    %3457 = vmatpush1.msra.mxu0 %v640
    %3458 = vmatprep.subr.mxu0 0.0
    %3459 = vmatpush1.msra.mxu0 %v641
    %3460 = vmatprep.subr.mxu0 0.0
    %3461 = vmatpush1.msra.mxu0 %v642
    %3462 = vmatprep.subr.mxu0 0.0
    %3463 = vmatpush1.msra.mxu0 %v643
    %3464 = vmatprep.subr.mxu0 0.0
    %3465 = vmatpush1.msra.mxu0 %v644
    %3466 = vmatprep.subr.mxu0 0.0
    %3467 = vmatpush1.msra.mxu0 %v645
    %3468 = vmatprep.subr.mxu0 0.0
    %3469 = vmatpush1.msra.mxu0 %v646
    %3470 = vmatprep.subr.mxu0 0.0
    %3471 = vmatpush1.msra.mxu0 %v647
    %3472 = vmatprep.subr.mxu0 0.0
    %3473 = vmatpush1.msra.mxu0 %v648
    %3474 = vmatprep.subr.mxu0 0.0
    %3475 = vmatpush1.msra.mxu0 %v649
    %3476 = vmatprep.subr.mxu0 0.0
    %3477 = vmatpush1.msra.mxu0 %v650
    %3478 = vmatprep.subr.mxu0 0.0
    %3479 = vmatpush1.msra.mxu0 %v651
    %3480 = vmatprep.subr.mxu0 0.0
    %3481 = vmatpush1.msra.mxu0 %v652
    %3482 = vmatprep.subr.mxu0 0.0
    %3483 = vmatpush1.msra.mxu0 %v653
    %3484 = vmatprep.mubr.f32.mxu0 %v1814
    %3485 = vmatmul.mubr.f32.gmra.mrb[0].mxu0 %v1806
    %v3486 = vpop.f32.mrb[0].mxu0
    %v3487 = vadd.f32 %v3417, %v3486
    %v3488 = vpop.f32.mrb[0].mxu0
    %3489 = vdwg.mxu0
    %3490 = vmatprep.subr.mxu0 0.0
    %3491 = vmatpush1.msra.mxu0 %v654
    %3492 = vmatprep.subr.mxu0 0.0
    %3493 = vmatpush1.msra.mxu0 %v655
    %3494 = vmatprep.subr.mxu0 0.0
    %3495 = vmatpush1.msra.mxu0 %v656
    %3496 = vmatprep.subr.mxu0 0.0
    %3497 = vmatpush1.msra.mxu0 %v657
    %3498 = vmatprep.subr.mxu0 0.0
    %3499 = vmatpush1.msra.mxu0 %v658
    %3500 = vmatprep.subr.mxu0 0.0
    %3501 = vmatpush1.msra.mxu0 %v659
    %3502 = vmatprep.subr.mxu0 0.0
    %3503 = vmatpush1.msra.mxu0 %v660
    %3504 = vmatprep.subr.mxu0 0.0
    %3505 = vmatpush1.msra.mxu0 %v661
    %3506 = vmatprep.subr.mxu0 0.0
    %3507 = vmatpush1.msra.mxu0 %v662
    %3508 = vmatprep.subr.mxu0 0.0
    %3509 = vmatpush1.msra.mxu0 %v663
    %3510 = vmatprep.subr.mxu0 0.0
    %3511 = vmatpush1.msra.mxu0 %v664
    %3512 = vmatprep.subr.mxu0 0.0
    %3513 = vmatpush1.msra.mxu0 %v665
    %3514 = vmatprep.subr.mxu0 0.0
    %3515 = vmatpush1.msra.mxu0 %v666
    %3516 = vmatprep.subr.mxu0 0.0
    %3517 = vmatpush1.msra.mxu0 %v667
    %3518 = vmatprep.subr.mxu0 0.0
    %3519 = vmatpush1.msra.mxu0 %v668
    %3520 = vmatprep.subr.mxu0 0.0
    %3521 = vmatpush1.msra.mxu0 %v669
    %3522 = vmatprep.subr.mxu0 0.0
    %3523 = vmatpush1.msra.mxu0 %v670
    %3524 = vmatprep.subr.mxu0 0.0
    %3525 = vmatpush1.msra.mxu0 %v671
    %3526 = vmatprep.subr.mxu0 0.0
    %3527 = vmatpush1.msra.mxu0 %v672
    %3528 = vmatprep.subr.mxu0 0.0
    %3529 = vmatpush1.msra.mxu0 %v673
    %3530 = vmatprep.subr.mxu0 0.0
    %3531 = vmatpush1.msra.mxu0 %v674
    %3532 = vmatprep.subr.mxu0 0.0
    %3533 = vmatpush1.msra.mxu0 %v675
    %3534 = vmatprep.subr.mxu0 0.0
    %3535 = vmatpush1.msra.mxu0 %v676
    %3536 = vmatprep.subr.mxu0 0.0
    %3537 = vmatpush1.msra.mxu0 %v677
    %3538 = vmatprep.subr.mxu0 0.0
    %3539 = vmatpush1.msra.mxu0 %v678
    %3540 = vmatprep.subr.mxu0 0.0
    %3541 = vmatpush1.msra.mxu0 %v679
    %3542 = vmatprep.subr.mxu0 0.0
    %3543 = vmatpush1.msra.mxu0 %v680
    %3544 = vmatprep.subr.mxu0 0.0
    %3545 = vmatpush1.msra.mxu0 %v681
    %3546 = vmatprep.subr.mxu0 0.0
    %3547 = vmatpush1.msra.mxu0 %v682
    %3548 = vmatprep.subr.mxu0 0.0
    %3549 = vmatpush1.msra.mxu0 %v683
    %3550 = vmatprep.subr.mxu0 0.0
    %3551 = vmatpush1.msra.mxu0 %v684
    %3552 = vmatprep.subr.mxu0 0.0
    %3553 = vmatpush1.msra.mxu0 %v685
    %3554 = vmatprep.mubr.f32.mxu0 %v1815
    %3555 = vmatmul.mubr.f32.gmra.mrb[0].mxu0 %v1813
    %v3556 = vpop.f32.mrb[0].mxu0
    %v3557 = vadd.f32 %v3487, %v3556
    %v3558 = vpop.f32.mrb[0].mxu0
    %3559 = vdwg.mxu0
    %3560 = vmatprep.subr.mxu0 0.0
    %3561 = vmatpush1.msra.mxu0 %v686
    %3562 = vmatprep.subr.mxu0 0.0
    %3563 = vmatpush1.msra.mxu0 %v687
    %3564 = vmatprep.subr.mxu0 0.0
    %3565 = vmatpush1.msra.mxu0 %v688
    %3566 = vmatprep.subr.mxu0 0.0
    %3567 = vmatpush1.msra.mxu0 %v689
    %3568 = vmatprep.subr.mxu0 0.0
    %3569 = vmatpush1.msra.mxu0 %v690
    %3570 = vmatprep.subr.mxu0 0.0
    %3571 = vmatpush1.msra.mxu0 %v691
    %3572 = vmatprep.subr.mxu0 0.0
    %3573 = vmatpush1.msra.mxu0 %v692
    %3574 = vmatprep.subr.mxu0 0.0
    %3575 = vmatpush1.msra.mxu0 %v693
    %3576 = vmatprep.subr.mxu0 0.0
    %3577 = vmatpush1.msra.mxu0 %v694
    %3578 = vmatprep.subr.mxu0 0.0
    %3579 = vmatpush1.msra.mxu0 %v695
    %3580 = vmatprep.subr.mxu0 0.0
    %3581 = vmatpush1.msra.mxu0 %v696
    %3582 = vmatprep.subr.mxu0 0.0
    %3583 = vmatpush1.msra.mxu0 %v697
    %3584 = vmatprep.subr.mxu0 0.0
    %3585 = vmatpush1.msra.mxu0 %v698
    %3586 = vmatprep.subr.mxu0 0.0
    %3587 = vmatpush1.msra.mxu0 %v699
    %3588 = vmatprep.subr.mxu0 0.0
    %3589 = vmatpush1.msra.mxu0 %v700
    %3590 = vmatprep.subr.mxu0 0.0
    %3591 = vmatpush1.msra.mxu0 %v701
    %3592 = vmatprep.subr.mxu0 0.0
    %3593 = vmatpush1.msra.mxu0 %v702
    %3594 = vmatprep.subr.mxu0 0.0
    %3595 = vmatpush1.msra.mxu0 %v703
    %3596 = vmatprep.subr.mxu0 0.0
    %3597 = vmatpush1.msra.mxu0 %v704
    %3598 = vmatprep.subr.mxu0 0.0
    %3599 = vmatpush1.msra.mxu0 %v705
    %3600 = vmatprep.subr.mxu0 0.0
    %3601 = vmatpush1.msra.mxu0 %v706
    %3602 = vmatprep.subr.mxu0 0.0
    %3603 = vmatpush1.msra.mxu0 %v707
    %3604 = vmatprep.subr.mxu0 0.0
    %3605 = vmatpush1.msra.mxu0 %v708
    %3606 = vmatprep.subr.mxu0 0.0
    %3607 = vmatpush1.msra.mxu0 %v709
    %3608 = vmatprep.subr.mxu0 0.0
    %3609 = vmatpush1.msra.mxu0 %v710
    %3610 = vmatprep.subr.mxu0 0.0
    %3611 = vmatpush1.msra.mxu0 %v711
    %3612 = vmatprep.subr.mxu0 0.0
    %3613 = vmatpush1.msra.mxu0 %v712
    %3614 = vmatprep.subr.mxu0 0.0
    %3615 = vmatpush1.msra.mxu0 %v713
    %3616 = vmatprep.subr.mxu0 0.0
    %3617 = vmatpush1.msra.mxu0 %v714
    %3618 = vmatprep.subr.mxu0 0.0
    %3619 = vmatpush1.msra.mxu0 %v715
    %3620 = vmatprep.subr.mxu0 0.0
    %3621 = vmatpush1.msra.mxu0 %v716
    %3622 = vmatprep.subr.mxu0 0.0
    %3623 = vmatpush1.msra.mxu0 %v717
    %3624 = vmatprep.mubr.f32.mxu0 %v1831
    %3625 = vmatmul.mubr.f32.gmra.mrb[0].mxu0 %v1823
    %v3626 = vpop.f32.mrb[0].mxu0
    %v3627 = vadd.f32 %v3557, %v3626
    %v3628 = vpop.f32.mrb[0].mxu0
    %3629 = vdwg.mxu0
    %3630 = vmatprep.subr.mxu0 0.0
    %3631 = vmatpush1.msra.mxu0 %v718
    %3632 = vmatprep.subr.mxu0 0.0
    %3633 = vmatpush1.msra.mxu0 %v719
    %3634 = vmatprep.subr.mxu0 0.0
    %3635 = vmatpush1.msra.mxu0 %v720
    %3636 = vmatprep.subr.mxu0 0.0
    %3637 = vmatpush1.msra.mxu0 %v721
    %3638 = vmatprep.subr.mxu0 0.0
    %3639 = vmatpush1.msra.mxu0 %v722
    %3640 = vmatprep.subr.mxu0 0.0
    %3641 = vmatpush1.msra.mxu0 %v723
    %3642 = vmatprep.subr.mxu0 0.0
    %3643 = vmatpush1.msra.mxu0 %v724
    %3644 = vmatprep.subr.mxu0 0.0
    %3645 = vmatpush1.msra.mxu0 %v725
    %3646 = vmatprep.subr.mxu0 0.0
    %3647 = vmatpush1.msra.mxu0 %v726
    %3648 = vmatprep.subr.mxu0 0.0
    %3649 = vmatpush1.msra.mxu0 %v727
    %3650 = vmatprep.subr.mxu0 0.0
    %3651 = vmatpush1.msra.mxu0 %v728
    %3652 = vmatprep.subr.mxu0 0.0
    %3653 = vmatpush1.msra.mxu0 %v729
    %3654 = vmatprep.subr.mxu0 0.0
    %3655 = vmatpush1.msra.mxu0 %v730
    %3656 = vmatprep.subr.mxu0 0.0
    %3657 = vmatpush1.msra.mxu0 %v731
    %3658 = vmatprep.subr.mxu0 0.0
    %3659 = vmatpush1.msra.mxu0 %v732
    %3660 = vmatprep.subr.mxu0 0.0
    %3661 = vmatpush1.msra.mxu0 %v733
    %3662 = vmatprep.subr.mxu0 0.0
    %3663 = vmatpush1.msra.mxu0 %v734
    %3664 = vmatprep.subr.mxu0 0.0
    %3665 = vmatpush1.msra.mxu0 %v735
    %3666 = vmatprep.subr.mxu0 0.0
    %3667 = vmatpush1.msra.mxu0 %v736
    %3668 = vmatprep.subr.mxu0 0.0
    %3669 = vmatpush1.msra.mxu0 %v737
    %3670 = vmatprep.subr.mxu0 0.0
    %3671 = vmatpush1.msra.mxu0 %v738
    %3672 = vmatprep.subr.mxu0 0.0
    %3673 = vmatpush1.msra.mxu0 %v739
    %3674 = vmatprep.subr.mxu0 0.0
    %3675 = vmatpush1.msra.mxu0 %v740
    %3676 = vmatprep.subr.mxu0 0.0
    %3677 = vmatpush1.msra.mxu0 %v741
    %3678 = vmatprep.subr.mxu0 0.0
    %3679 = vmatpush1.msra.mxu0 %v742
    %3680 = vmatprep.subr.mxu0 0.0
    %3681 = vmatpush1.msra.mxu0 %v743
    %3682 = vmatprep.subr.mxu0 0.0
    %3683 = vmatpush1.msra.mxu0 %v744
    %3684 = vmatprep.subr.mxu0 0.0
    %3685 = vmatpush1.msra.mxu0 %v745
    %3686 = vmatprep.subr.mxu0 0.0
    %3687 = vmatpush1.msra.mxu0 %v746
    %3688 = vmatprep.subr.mxu0 0.0
    %3689 = vmatpush1.msra.mxu0 %v747
    %3690 = vmatprep.subr.mxu0 0.0
    %3691 = vmatpush1.msra.mxu0 %v748
    %3692 = vmatprep.subr.mxu0 0.0
    %3693 = vmatpush1.msra.mxu0 %v749
    %3694 = vmatprep.mubr.f32.mxu0 %v1832
    %3695 = vmatmul.mubr.f32.gmra.mrb[0].mxu0 %v1830
    %v3696 = vpop.f32.mrb[0].mxu0
    %v3697 = vadd.f32 %v3627, %v3696
    %v3698 = vpop.f32.mrb[0].mxu0
    %3699 = vdwg.mxu0
    %3700 = vmatprep.subr.mxu0 0.0
    %3701 = vmatpush1.msra.mxu0 %v750
    %3702 = vmatprep.subr.mxu0 0.0
    %3703 = vmatpush1.msra.mxu0 %v751
    %3704 = vmatprep.subr.mxu0 0.0
    %3705 = vmatpush1.msra.mxu0 %v752
    %3706 = vmatprep.subr.mxu0 0.0
    %3707 = vmatpush1.msra.mxu0 %v753
    %3708 = vmatprep.subr.mxu0 0.0
    %3709 = vmatpush1.msra.mxu0 %v754
    %3710 = vmatprep.subr.mxu0 0.0
    %3711 = vmatpush1.msra.mxu0 %v755
    %3712 = vmatprep.subr.mxu0 0.0
    %3713 = vmatpush1.msra.mxu0 %v756
    %3714 = vmatprep.subr.mxu0 0.0
    %3715 = vmatpush1.msra.mxu0 %v757
    %3716 = vmatprep.subr.mxu0 0.0
    %3717 = vmatpush1.msra.mxu0 %v758
    %3718 = vmatprep.subr.mxu0 0.0
    %3719 = vmatpush1.msra.mxu0 %v759
    %3720 = vmatprep.subr.mxu0 0.0
    %3721 = vmatpush1.msra.mxu0 %v760
    %3722 = vmatprep.subr.mxu0 0.0
    %3723 = vmatpush1.msra.mxu0 %v761
    %3724 = vmatprep.subr.mxu0 0.0
    %3725 = vmatpush1.msra.mxu0 %v762
    %3726 = vmatprep.subr.mxu0 0.0
    %3727 = vmatpush1.msra.mxu0 %v763
    %3728 = vmatprep.subr.mxu0 0.0
    %3729 = vmatpush1.msra.mxu0 %v764
    %3730 = vmatprep.subr.mxu0 0.0
    %3731 = vmatpush1.msra.mxu0 %v765
    %3732 = vmatprep.subr.mxu0 0.0
    %3733 = vmatpush1.msra.mxu0 %v766
    %3734 = vmatprep.subr.mxu0 0.0
    %3735 = vmatpush1.msra.mxu0 %v767
    %3736 = vmatprep.subr.mxu0 0.0
    %3737 = vmatpush1.msra.mxu0 %v768
    %3738 = vmatprep.subr.mxu0 0.0
    %3739 = vmatpush1.msra.mxu0 %v769
    %3740 = vmatprep.subr.mxu0 0.0
    %3741 = vmatpush1.msra.mxu0 %v770
    %3742 = vmatprep.subr.mxu0 0.0
    %3743 = vmatpush1.msra.mxu0 %v771
    %3744 = vmatprep.subr.mxu0 0.0
    %3745 = vmatpush1.msra.mxu0 %v772
    %3746 = vmatprep.subr.mxu0 0.0
    %3747 = vmatpush1.msra.mxu0 %v773
    %3748 = vmatprep.subr.mxu0 0.0
    %3749 = vmatpush1.msra.mxu0 %v774
    %3750 = vmatprep.subr.mxu0 0.0
    %3751 = vmatpush1.msra.mxu0 %v775
    %3752 = vmatprep.subr.mxu0 0.0
    %3753 = vmatpush1.msra.mxu0 %v776
    %3754 = vmatprep.subr.mxu0 0.0
    %3755 = vmatpush1.msra.mxu0 %v777
    %3756 = vmatprep.subr.mxu0 0.0
    %3757 = vmatpush1.msra.mxu0 %v778
    %3758 = vmatprep.subr.mxu0 0.0
    %3759 = vmatpush1.msra.mxu0 %v779
    %3760 = vmatprep.subr.mxu0 0.0
    %3761 = vmatpush1.msra.mxu0 %v780
    %3762 = vmatprep.subr.mxu0 0.0
    %3763 = vmatpush1.msra.mxu0 %v781
    %3764 = vmatprep.mubr.f32.mxu0 %v1848
    %3765 = vmatmul.mubr.f32.gmra.mrb[0].mxu0 %v1840
    %v3766 = vpop.f32.mrb[0].mxu0
    %v3767 = vadd.f32 %v3697, %v3766
    %v3768 = vpop.f32.mrb[0].mxu0
    %3769 = vdwg.mxu0
    %3770 = vmatprep.subr.mxu0 0.0
    %3771 = vmatpush1.msra.mxu0 %v782
    %3772 = vmatprep.subr.mxu0 0.0
    %3773 = vmatpush1.msra.mxu0 %v783
    %3774 = vmatprep.subr.mxu0 0.0
    %3775 = vmatpush1.msra.mxu0 %v784
    %3776 = vmatprep.subr.mxu0 0.0
    %3777 = vmatpush1.msra.mxu0 %v785
    %3778 = vmatprep.subr.mxu0 0.0
    %3779 = vmatpush1.msra.mxu0 %v786
    %3780 = vmatprep.subr.mxu0 0.0
    %3781 = vmatpush1.msra.mxu0 %v787
    %3782 = vmatprep.subr.mxu0 0.0
    %3783 = vmatpush1.msra.mxu0 %v788
    %3784 = vmatprep.subr.mxu0 0.0
    %3785 = vmatpush1.msra.mxu0 %v789
    %3786 = vmatprep.subr.mxu0 0.0
    %3787 = vmatpush1.msra.mxu0 %v790
    %3788 = vmatprep.subr.mxu0 0.0
    %3789 = vmatpush1.msra.mxu0 %v791
    %3790 = vmatprep.subr.mxu0 0.0
    %3791 = vmatpush1.msra.mxu0 %v792
    %3792 = vmatprep.subr.mxu0 0.0
    %3793 = vmatpush1.msra.mxu0 %v793
    %3794 = vmatprep.subr.mxu0 0.0
    %3795 = vmatpush1.msra.mxu0 %v794
    %3796 = vmatprep.subr.mxu0 0.0
    %3797 = vmatpush1.msra.mxu0 %v795
    %3798 = vmatprep.subr.mxu0 0.0
    %3799 = vmatpush1.msra.mxu0 %v796
    %3800 = vmatprep.subr.mxu0 0.0
    %3801 = vmatpush1.msra.mxu0 %v797
    %3802 = vmatprep.subr.mxu0 0.0
    %3803 = vmatpush1.msra.mxu0 %v798
    %3804 = vmatprep.subr.mxu0 0.0
    %3805 = vmatpush1.msra.mxu0 %v799
    %3806 = vmatprep.subr.mxu0 0.0
    %3807 = vmatpush1.msra.mxu0 %v800
    %3808 = vmatprep.subr.mxu0 0.0
    %3809 = vmatpush1.msra.mxu0 %v801
    %3810 = vmatprep.subr.mxu0 0.0
    %3811 = vmatpush1.msra.mxu0 %v802
    %3812 = vmatprep.subr.mxu0 0.0
    %3813 = vmatpush1.msra.mxu0 %v803
    %3814 = vmatprep.subr.mxu0 0.0
    %3815 = vmatpush1.msra.mxu0 %v804
    %3816 = vmatprep.subr.mxu0 0.0
    %3817 = vmatpush1.msra.mxu0 %v805
    %3818 = vmatprep.subr.mxu0 0.0
    %3819 = vmatpush1.msra.mxu0 %v806
    %3820 = vmatprep.subr.mxu0 0.0
    %3821 = vmatpush1.msra.mxu0 %v807
    %3822 = vmatprep.subr.mxu0 0.0
    %3823 = vmatpush1.msra.mxu0 %v808
    %3824 = vmatprep.subr.mxu0 0.0
    %3825 = vmatpush1.msra.mxu0 %v809
    %3826 = vmatprep.subr.mxu0 0.0
    %3827 = vmatpush1.msra.mxu0 %v810
    %3828 = vmatprep.subr.mxu0 0.0
    %3829 = vmatpush1.msra.mxu0 %v811
    %3830 = vmatprep.subr.mxu0 0.0
    %3831 = vmatpush1.msra.mxu0 %v812
    %3832 = vmatprep.subr.mxu0 0.0
    %3833 = vmatpush1.msra.mxu0 %v813
    %3834 = vmatprep.mubr.f32.mxu0 %v1849
    %3835 = vmatmul.mubr.f32.gmra.mrb[0].mxu0 %v1847
    %v3836 = vpop.f32.mrb[0].mxu0
    %v3837 = vadd.f32 %v3767, %v3836
    %v3838 = vpop.f32.mrb[0].mxu0
    %3839 = vdwg.mxu0
    %3840 = vmatprep.subr.mxu0 0.0
    %3841 = vmatpush1.msra.mxu0 %v814
    %3842 = vmatprep.subr.mxu0 0.0
    %3843 = vmatpush1.msra.mxu0 %v815
    %3844 = vmatprep.subr.mxu0 0.0
    %3845 = vmatpush1.msra.mxu0 %v816
    %3846 = vmatprep.subr.mxu0 0.0
    %3847 = vmatpush1.msra.mxu0 %v817
    %3848 = vmatprep.subr.mxu0 0.0
    %3849 = vmatpush1.msra.mxu0 %v818
    %3850 = vmatprep.subr.mxu0 0.0
    %3851 = vmatpush1.msra.mxu0 %v819
    %3852 = vmatprep.subr.mxu0 0.0
    %3853 = vmatpush1.msra.mxu0 %v820
    %3854 = vmatprep.subr.mxu0 0.0
    %3855 = vmatpush1.msra.mxu0 %v821
    %3856 = vmatprep.subr.mxu0 0.0
    %3857 = vmatpush1.msra.mxu0 %v822
    %3858 = vmatprep.subr.mxu0 0.0
    %3859 = vmatpush1.msra.mxu0 %v823
    %3860 = vmatprep.subr.mxu0 0.0
    %3861 = vmatpush1.msra.mxu0 %v824
    %3862 = vmatprep.subr.mxu0 0.0
    %3863 = vmatpush1.msra.mxu0 %v825
    %3864 = vmatprep.subr.mxu0 0.0
    %3865 = vmatpush1.msra.mxu0 %v826
    %3866 = vmatprep.subr.mxu0 0.0
    %3867 = vmatpush1.msra.mxu0 %v827
    %3868 = vmatprep.subr.mxu0 0.0
    %3869 = vmatpush1.msra.mxu0 %v828
    %3870 = vmatprep.subr.mxu0 0.0
    %3871 = vmatpush1.msra.mxu0 %v829
    %3872 = vmatprep.subr.mxu0 0.0
    %3873 = vmatpush1.msra.mxu0 %v830
    %3874 = vmatprep.subr.mxu0 0.0
    %3875 = vmatpush1.msra.mxu0 %v831
    %3876 = vmatprep.subr.mxu0 0.0
    %3877 = vmatpush1.msra.mxu0 %v832
    %3878 = vmatprep.subr.mxu0 0.0
    %3879 = vmatpush1.msra.mxu0 %v833
    %3880 = vmatprep.subr.mxu0 0.0
    %3881 = vmatpush1.msra.mxu0 %v834
    %3882 = vmatprep.subr.mxu0 0.0
    %3883 = vmatpush1.msra.mxu0 %v835
    %3884 = vmatprep.subr.mxu0 0.0
    %3885 = vmatpush1.msra.mxu0 %v836
    %3886 = vmatprep.subr.mxu0 0.0
    %3887 = vmatpush1.msra.mxu0 %v837
    %3888 = vmatprep.subr.mxu0 0.0
    %3889 = vmatpush1.msra.mxu0 %v838
    %3890 = vmatprep.subr.mxu0 0.0
    %3891 = vmatpush1.msra.mxu0 %v839
    %3892 = vmatprep.subr.mxu0 0.0
    %3893 = vmatpush1.msra.mxu0 %v840
    %3894 = vmatprep.subr.mxu0 0.0
    %3895 = vmatpush1.msra.mxu0 %v841
    %3896 = vmatprep.subr.mxu0 0.0
    %3897 = vmatpush1.msra.mxu0 %v842
    %3898 = vmatprep.subr.mxu0 0.0
    %3899 = vmatpush1.msra.mxu0 %v843
    %3900 = vmatprep.subr.mxu0 0.0
    %3901 = vmatpush1.msra.mxu0 %v844
    %3902 = vmatprep.subr.mxu0 0.0
    %3903 = vmatpush1.msra.mxu0 %v845
    %3904 = vmatprep.mubr.f32.mxu0 %v1865
    %3905 = vmatmul.mubr.f32.gmra.mrb[0].mxu0 %v1857
    %v3906 = vpop.f32.mrb[0].mxu0
    %v3907 = vadd.f32 %v3837, %v3906
    %v3908 = vpop.f32.mrb[0].mxu0
    %3909 = vdwg.mxu0
    %3910 = vmatprep.subr.mxu0 0.0
    %3911 = vmatpush1.msra.mxu0 %v846
    %3912 = vmatprep.subr.mxu0 0.0
    %3913 = vmatpush1.msra.mxu0 %v847
    %3914 = vmatprep.subr.mxu0 0.0
    %3915 = vmatpush1.msra.mxu0 %v848
    %3916 = vmatprep.subr.mxu0 0.0
    %3917 = vmatpush1.msra.mxu0 %v849
    %3918 = vmatprep.subr.mxu0 0.0
    %3919 = vmatpush1.msra.mxu0 %v850
    %3920 = vmatprep.subr.mxu0 0.0
    %3921 = vmatpush1.msra.mxu0 %v851
    %3922 = vmatprep.subr.mxu0 0.0
    %3923 = vmatpush1.msra.mxu0 %v852
    %3924 = vmatprep.subr.mxu0 0.0
    %3925 = vmatpush1.msra.mxu0 %v853
    %3926 = vmatprep.subr.mxu0 0.0
    %3927 = vmatpush1.msra.mxu0 %v854
    %3928 = vmatprep.subr.mxu0 0.0
    %3929 = vmatpush1.msra.mxu0 %v855
    %3930 = vmatprep.subr.mxu0 0.0
    %3931 = vmatpush1.msra.mxu0 %v856
    %3932 = vmatprep.subr.mxu0 0.0
    %3933 = vmatpush1.msra.mxu0 %v857
    %3934 = vmatprep.subr.mxu0 0.0
    %3935 = vmatpush1.msra.mxu0 %v858
    %3936 = vmatprep.subr.mxu0 0.0
    %3937 = vmatpush1.msra.mxu0 %v859
    %3938 = vmatprep.subr.mxu0 0.0
    %3939 = vmatpush1.msra.mxu0 %v860
    %3940 = vmatprep.subr.mxu0 0.0
    %3941 = vmatpush1.msra.mxu0 %v861
    %3942 = vmatprep.subr.mxu0 0.0
    %3943 = vmatpush1.msra.mxu0 %v862
    %3944 = vmatprep.subr.mxu0 0.0
    %3945 = vmatpush1.msra.mxu0 %v863
    %3946 = vmatprep.subr.mxu0 0.0
    %3947 = vmatpush1.msra.mxu0 %v864
    %3948 = vmatprep.subr.mxu0 0.0
    %3949 = vmatpush1.msra.mxu0 %v865
    %3950 = vmatprep.subr.mxu0 0.0
    %3951 = vmatpush1.msra.mxu0 %v866
    %3952 = vmatprep.subr.mxu0 0.0
    %3953 = vmatpush1.msra.mxu0 %v867
    %3954 = vmatprep.subr.mxu0 0.0
    %3955 = vmatpush1.msra.mxu0 %v868
    %3956 = vmatprep.subr.mxu0 0.0
    %3957 = vmatpush1.msra.mxu0 %v869
    %3958 = vmatprep.subr.mxu0 0.0
    %3959 = vmatpush1.msra.mxu0 %v870
    %3960 = vmatprep.subr.mxu0 0.0
    %3961 = vmatpush1.msra.mxu0 %v871
    %3962 = vmatprep.subr.mxu0 0.0
    %3963 = vmatpush1.msra.mxu0 %v872
    %3964 = vmatprep.subr.mxu0 0.0
    %3965 = vmatpush1.msra.mxu0 %v873
    %3966 = vmatprep.subr.mxu0 0.0
    %3967 = vmatpush1.msra.mxu0 %v874
    %3968 = vmatprep.subr.mxu0 0.0
    %3969 = vmatpush1.msra.mxu0 %v875
    %3970 = vmatprep.subr.mxu0 0.0
    %3971 = vmatpush1.msra.mxu0 %v876
    %3972 = vmatprep.subr.mxu0 0.0
    %3973 = vmatpush1.msra.mxu0 %v877
    %3974 = vmatprep.mubr.f32.mxu0 %v1866
    %3975 = vmatmul.mubr.f32.gmra.mrb[0].mxu0 %v1864
    %v3976 = vpop.f32.mrb[0].mxu0
    %v3977 = vadd.f32 %v3907, %v3976
    %v3978 = vpop.f32.mrb[0].mxu0
    %3979 = vdwg.mxu0
    %3980 = vmatprep.subr.mxu0 0.0
    %3981 = vmatpush1.msra.mxu0 %v878
    %3982 = vmatprep.subr.mxu0 0.0
    %3983 = vmatpush1.msra.mxu0 %v879
    %3984 = vmatprep.subr.mxu0 0.0
    %3985 = vmatpush1.msra.mxu0 %v880
    %3986 = vmatprep.subr.mxu0 0.0
    %3987 = vmatpush1.msra.mxu0 %v881
    %3988 = vmatprep.subr.mxu0 0.0
    %3989 = vmatpush1.msra.mxu0 %v882
    %3990 = vmatprep.subr.mxu0 0.0
    %3991 = vmatpush1.msra.mxu0 %v883
    %3992 = vmatprep.subr.mxu0 0.0
    %3993 = vmatpush1.msra.mxu0 %v884
    %3994 = vmatprep.subr.mxu0 0.0
    %3995 = vmatpush1.msra.mxu0 %v885
    %3996 = vmatprep.subr.mxu0 0.0
    %3997 = vmatpush1.msra.mxu0 %v886
    %3998 = vmatprep.subr.mxu0 0.0
    %3999 = vmatpush1.msra.mxu0 %v887
    %4000 = vmatprep.subr.mxu0 0.0
    %4001 = vmatpush1.msra.mxu0 %v888
    %4002 = vmatprep.subr.mxu0 0.0
    %4003 = vmatpush1.msra.mxu0 %v889
    %4004 = vmatprep.subr.mxu0 0.0
    %4005 = vmatpush1.msra.mxu0 %v890
    %4006 = vmatprep.subr.mxu0 0.0
    %4007 = vmatpush1.msra.mxu0 %v891
    %4008 = vmatprep.subr.mxu0 0.0
    %4009 = vmatpush1.msra.mxu0 %v892
    %4010 = vmatprep.subr.mxu0 0.0
    %4011 = vmatpush1.msra.mxu0 %v893
    %4012 = vmatprep.subr.mxu0 0.0
    %4013 = vmatpush1.msra.mxu0 %v894
    %4014 = vmatprep.subr.mxu0 0.0
    %4015 = vmatpush1.msra.mxu0 %v895
    %4016 = vmatprep.subr.mxu0 0.0
    %4017 = vmatpush1.msra.mxu0 %v896
    %4018 = vmatprep.subr.mxu0 0.0
    %4019 = vmatpush1.msra.mxu0 %v897
    %4020 = vmatprep.subr.mxu0 0.0
    %4021 = vmatpush1.msra.mxu0 %v898
    %4022 = vmatprep.subr.mxu0 0.0
    %4023 = vmatpush1.msra.mxu0 %v899
    %4024 = vmatprep.subr.mxu0 0.0
    %4025 = vmatpush1.msra.mxu0 %v900
    %4026 = vmatprep.subr.mxu0 0.0
    %4027 = vmatpush1.msra.mxu0 %v901
    %4028 = vmatprep.subr.mxu0 0.0
    %4029 = vmatpush1.msra.mxu0 %v902
    %4030 = vmatprep.subr.mxu0 0.0
    %4031 = vmatpush1.msra.mxu0 %v903
    %4032 = vmatprep.subr.mxu0 0.0
    %4033 = vmatpush1.msra.mxu0 %v904
    %4034 = vmatprep.subr.mxu0 0.0
    %4035 = vmatpush1.msra.mxu0 %v905
    %4036 = vmatprep.subr.mxu0 0.0
    %4037 = vmatpush1.msra.mxu0 %v906
    %4038 = vmatprep.subr.mxu0 0.0
    %4039 = vmatpush1.msra.mxu0 %v907
    %4040 = vmatprep.subr.mxu0 0.0
    %4041 = vmatpush1.msra.mxu0 %v908
    %4042 = vmatprep.subr.mxu0 0.0
    %4043 = vmatpush1.msra.mxu0 %v909
    %4044 = vmatprep.mubr.f32.mxu0 %v1882
    %4045 = vmatmul.mubr.f32.gmra.mrb[0].mxu0 %v1874
    %v4046 = vpop.f32.mrb[0].mxu0
    %v4047 = vadd.f32 %v3977, %v4046
    %v4048 = vpop.f32.mrb[0].mxu0
    %4049 = vdwg.mxu0
    %4050 = vmatprep.subr.mxu0 0.0
    %4051 = vmatpush1.msra.mxu0 %v910
    %4052 = vmatprep.subr.mxu0 0.0
    %4053 = vmatpush1.msra.mxu0 %v911
    %4054 = vmatprep.subr.mxu0 0.0
    %4055 = vmatpush1.msra.mxu0 %v912
    %4056 = vmatprep.subr.mxu0 0.0
    %4057 = vmatpush1.msra.mxu0 %v913
    %4058 = vmatprep.subr.mxu0 0.0
    %4059 = vmatpush1.msra.mxu0 %v914
    %4060 = vmatprep.subr.mxu0 0.0
    %4061 = vmatpush1.msra.mxu0 %v915
    %4062 = vmatprep.subr.mxu0 0.0
    %4063 = vmatpush1.msra.mxu0 %v916
    %4064 = vmatprep.subr.mxu0 0.0
    %4065 = vmatpush1.msra.mxu0 %v917
    %4066 = vmatprep.subr.mxu0 0.0
    %4067 = vmatpush1.msra.mxu0 %v918
    %4068 = vmatprep.subr.mxu0 0.0
    %4069 = vmatpush1.msra.mxu0 %v919
    %4070 = vmatprep.subr.mxu0 0.0
    %4071 = vmatpush1.msra.mxu0 %v920
    %4072 = vmatprep.subr.mxu0 0.0
    %4073 = vmatpush1.msra.mxu0 %v921
    %4074 = vmatprep.subr.mxu0 0.0
    %4075 = vmatpush1.msra.mxu0 %v922
    %4076 = vmatprep.subr.mxu0 0.0
    %4077 = vmatpush1.msra.mxu0 %v923
    %4078 = vmatprep.subr.mxu0 0.0
    %4079 = vmatpush1.msra.mxu0 %v924
    %4080 = vmatprep.subr.mxu0 0.0
    %4081 = vmatpush1.msra.mxu0 %v925
    %4082 = vmatprep.subr.mxu0 0.0
    %4083 = vmatpush1.msra.mxu0 %v926
    %4084 = vmatprep.subr.mxu0 0.0
    %4085 = vmatpush1.msra.mxu0 %v927
    %4086 = vmatprep.subr.mxu0 0.0
    %4087 = vmatpush1.msra.mxu0 %v928
    %4088 = vmatprep.subr.mxu0 0.0
    %4089 = vmatpush1.msra.mxu0 %v929
    %4090 = vmatprep.subr.mxu0 0.0
    %4091 = vmatpush1.msra.mxu0 %v930
    %4092 = vmatprep.subr.mxu0 0.0
    %4093 = vmatpush1.msra.mxu0 %v931
    %4094 = vmatprep.subr.mxu0 0.0
    %4095 = vmatpush1.msra.mxu0 %v932
    %4096 = vmatprep.subr.mxu0 0.0
    %4097 = vmatpush1.msra.mxu0 %v933
    %4098 = vmatprep.subr.mxu0 0.0
    %4099 = vmatpush1.msra.mxu0 %v934
    %4100 = vmatprep.subr.mxu0 0.0
    %4101 = vmatpush1.msra.mxu0 %v935
    %4102 = vmatprep.subr.mxu0 0.0
    %4103 = vmatpush1.msra.mxu0 %v936
    %4104 = vmatprep.subr.mxu0 0.0
    %4105 = vmatpush1.msra.mxu0 %v937
    %4106 = vmatprep.subr.mxu0 0.0
    %4107 = vmatpush1.msra.mxu0 %v938
    %4108 = vmatprep.subr.mxu0 0.0
    %4109 = vmatpush1.msra.mxu0 %v939
    %4110 = vmatprep.subr.mxu0 0.0
    %4111 = vmatpush1.msra.mxu0 %v940
    %4112 = vmatprep.subr.mxu0 0.0
    %4113 = vmatpush1.msra.mxu0 %v941
    %4114 = vmatprep.mubr.f32.mxu0 %v1883
    %4115 = vmatmul.mubr.f32.gmra.mrb[0].mxu0 %v1881
    %v4116 = vpop.f32.mrb[0].mxu0
    %v4117 = vadd.f32 %v4047, %v4116
    %v4118 = vpop.f32.mrb[0].mxu0
    %4119 = vdwg.mxu0
    %4120 = vmatprep.subr.mxu0 0.0
    %4121 = vmatpush1.msra.mxu0 %v942
    %4122 = vmatprep.subr.mxu0 0.0
    %4123 = vmatpush1.msra.mxu0 %v943
    %4124 = vmatprep.subr.mxu0 0.0
    %4125 = vmatpush1.msra.mxu0 %v944
    %4126 = vmatprep.subr.mxu0 0.0
    %4127 = vmatpush1.msra.mxu0 %v945
    %4128 = vmatprep.subr.mxu0 0.0
    %4129 = vmatpush1.msra.mxu0 %v946
    %4130 = vmatprep.subr.mxu0 0.0
    %4131 = vmatpush1.msra.mxu0 %v947
    %4132 = vmatprep.subr.mxu0 0.0
    %4133 = vmatpush1.msra.mxu0 %v948
    %4134 = vmatprep.subr.mxu0 0.0
    %4135 = vmatpush1.msra.mxu0 %v949
    %4136 = vmatprep.subr.mxu0 0.0
    %4137 = vmatpush1.msra.mxu0 %v950
    %4138 = vmatprep.subr.mxu0 0.0
    %4139 = vmatpush1.msra.mxu0 %v951
    %4140 = vmatprep.subr.mxu0 0.0
    %4141 = vmatpush1.msra.mxu0 %v952
    %4142 = vmatprep.subr.mxu0 0.0
    %4143 = vmatpush1.msra.mxu0 %v953
    %4144 = vmatprep.subr.mxu0 0.0
    %4145 = vmatpush1.msra.mxu0 %v954
    %4146 = vmatprep.subr.mxu0 0.0
    %4147 = vmatpush1.msra.mxu0 %v955
    %4148 = vmatprep.subr.mxu0 0.0
    %4149 = vmatpush1.msra.mxu0 %v956
    %4150 = vmatprep.subr.mxu0 0.0
    %4151 = vmatpush1.msra.mxu0 %v957
    %4152 = vmatprep.subr.mxu0 0.0
    %4153 = vmatpush1.msra.mxu0 %v958
    %4154 = vmatprep.subr.mxu0 0.0
    %4155 = vmatpush1.msra.mxu0 %v959
    %4156 = vmatprep.subr.mxu0 0.0
    %4157 = vmatpush1.msra.mxu0 %v960
    %4158 = vmatprep.subr.mxu0 0.0
    %4159 = vmatpush1.msra.mxu0 %v961
    %4160 = vmatprep.subr.mxu0 0.0
    %4161 = vmatpush1.msra.mxu0 %v962
    %4162 = vmatprep.subr.mxu0 0.0
    %4163 = vmatpush1.msra.mxu0 %v963
    %4164 = vmatprep.subr.mxu0 0.0
    %4165 = vmatpush1.msra.mxu0 %v964
    %4166 = vmatprep.subr.mxu0 0.0
    %4167 = vmatpush1.msra.mxu0 %v965
    %4168 = vmatprep.subr.mxu0 0.0
    %4169 = vmatpush1.msra.mxu0 %v966
    %4170 = vmatprep.subr.mxu0 0.0
    %4171 = vmatpush1.msra.mxu0 %v967
    %4172 = vmatprep.subr.mxu0 0.0
    %4173 = vmatpush1.msra.mxu0 %v968
    %4174 = vmatprep.subr.mxu0 0.0
    %4175 = vmatpush1.msra.mxu0 %v969
    %4176 = vmatprep.subr.mxu0 0.0
    %4177 = vmatpush1.msra.mxu0 %v970
    %4178 = vmatprep.subr.mxu0 0.0
    %4179 = vmatpush1.msra.mxu0 %v971
    %4180 = vmatprep.subr.mxu0 0.0
    %4181 = vmatpush1.msra.mxu0 %v972
    %4182 = vmatprep.subr.mxu0 0.0
    %4183 = vmatpush1.msra.mxu0 %v973
    %4184 = vmatprep.mubr.f32.mxu0 %v1899
    %4185 = vmatmul.mubr.f32.gmra.mrb[0].mxu0 %v1891
    %v4186 = vpop.f32.mrb[0].mxu0
    %v4187 = vadd.f32 %v4117, %v4186
    %v4188 = vpop.f32.mrb[0].mxu0
    %4189 = vdwg.mxu0
    %4190 = vmatprep.subr.mxu0 0.0
    %4191 = vmatpush1.msra.mxu0 %v974
    %4192 = vmatprep.subr.mxu0 0.0
    %4193 = vmatpush1.msra.mxu0 %v975
    %4194 = vmatprep.subr.mxu0 0.0
    %4195 = vmatpush1.msra.mxu0 %v976
    %4196 = vmatprep.subr.mxu0 0.0
    %4197 = vmatpush1.msra.mxu0 %v977
    %4198 = vmatprep.subr.mxu0 0.0
    %4199 = vmatpush1.msra.mxu0 %v978
    %4200 = vmatprep.subr.mxu0 0.0
    %4201 = vmatpush1.msra.mxu0 %v979
    %4202 = vmatprep.subr.mxu0 0.0
    %4203 = vmatpush1.msra.mxu0 %v980
    %4204 = vmatprep.subr.mxu0 0.0
    %4205 = vmatpush1.msra.mxu0 %v981
    %4206 = vmatprep.subr.mxu0 0.0
    %4207 = vmatpush1.msra.mxu0 %v982
    %4208 = vmatprep.subr.mxu0 0.0
    %4209 = vmatpush1.msra.mxu0 %v983
    %4210 = vmatprep.subr.mxu0 0.0
    %4211 = vmatpush1.msra.mxu0 %v984
    %4212 = vmatprep.subr.mxu0 0.0
    %4213 = vmatpush1.msra.mxu0 %v985
    %4214 = vmatprep.subr.mxu0 0.0
    %4215 = vmatpush1.msra.mxu0 %v986
    %4216 = vmatprep.subr.mxu0 0.0
    %4217 = vmatpush1.msra.mxu0 %v987
    %4218 = vmatprep.subr.mxu0 0.0
    %4219 = vmatpush1.msra.mxu0 %v988
    %4220 = vmatprep.subr.mxu0 0.0
    %4221 = vmatpush1.msra.mxu0 %v989
    %4222 = vmatprep.subr.mxu0 0.0
    %4223 = vmatpush1.msra.mxu0 %v990
    %4224 = vmatprep.subr.mxu0 0.0
    %4225 = vmatpush1.msra.mxu0 %v991
    %4226 = vmatprep.subr.mxu0 0.0
    %4227 = vmatpush1.msra.mxu0 %v992
    %4228 = vmatprep.subr.mxu0 0.0
    %4229 = vmatpush1.msra.mxu0 %v993
    %4230 = vmatprep.subr.mxu0 0.0
    %4231 = vmatpush1.msra.mxu0 %v994
    %4232 = vmatprep.subr.mxu0 0.0
    %4233 = vmatpush1.msra.mxu0 %v995
    %4234 = vmatprep.subr.mxu0 0.0
    %4235 = vmatpush1.msra.mxu0 %v996
    %4236 = vmatprep.subr.mxu0 0.0
    %4237 = vmatpush1.msra.mxu0 %v997
    %4238 = vmatprep.subr.mxu0 0.0
    %4239 = vmatpush1.msra.mxu0 %v998
    %4240 = vmatprep.subr.mxu0 0.0
    %4241 = vmatpush1.msra.mxu0 %v999
    %4242 = vmatprep.subr.mxu0 0.0
    %4243 = vmatpush1.msra.mxu0 %v1000
    %4244 = vmatprep.subr.mxu0 0.0
    %4245 = vmatpush1.msra.mxu0 %v1001
    %4246 = vmatprep.subr.mxu0 0.0
    %4247 = vmatpush1.msra.mxu0 %v1002
    %4248 = vmatprep.subr.mxu0 0.0
    %4249 = vmatpush1.msra.mxu0 %v1003
    %4250 = vmatprep.subr.mxu0 0.0
    %4251 = vmatpush1.msra.mxu0 %v1004
    %4252 = vmatprep.subr.mxu0 0.0
    %4253 = vmatpush1.msra.mxu0 %v1005
    %4254 = vmatprep.mubr.f32.mxu0 %v1900
    %4255 = vmatmul.mubr.f32.gmra.mrb[0].mxu0 %v1898
    %v4256 = vpop.f32.mrb[0].mxu0
    %v4257 = vadd.f32 %v4187, %v4256
    %v4258 = vpop.f32.mrb[0].mxu0
    %4259 = vdwg.mxu0
    %4260 = vmatprep.subr.mxu0 0.0
    %4261 = vmatpush1.msra.mxu0 %v1006
    %4262 = vmatprep.subr.mxu0 0.0
    %4263 = vmatpush1.msra.mxu0 %v1007
    %4264 = vmatprep.subr.mxu0 0.0
    %4265 = vmatpush1.msra.mxu0 %v1008
    %4266 = vmatprep.subr.mxu0 0.0
    %4267 = vmatpush1.msra.mxu0 %v1009
    %4268 = vmatprep.subr.mxu0 0.0
    %4269 = vmatpush1.msra.mxu0 %v1010
    %4270 = vmatprep.subr.mxu0 0.0
    %4271 = vmatpush1.msra.mxu0 %v1011
    %4272 = vmatprep.subr.mxu0 0.0
    %4273 = vmatpush1.msra.mxu0 %v1012
    %4274 = vmatprep.subr.mxu0 0.0
    %4275 = vmatpush1.msra.mxu0 %v1013
    %4276 = vmatprep.subr.mxu0 0.0
    %4277 = vmatpush1.msra.mxu0 %v1014
    %4278 = vmatprep.subr.mxu0 0.0
    %4279 = vmatpush1.msra.mxu0 %v1015
    %4280 = vmatprep.subr.mxu0 0.0
    %4281 = vmatpush1.msra.mxu0 %v1016
    %4282 = vmatprep.subr.mxu0 0.0
    %4283 = vmatpush1.msra.mxu0 %v1017
    %4284 = vmatprep.subr.mxu0 0.0
    %4285 = vmatpush1.msra.mxu0 %v1018
    %4286 = vmatprep.subr.mxu0 0.0
    %4287 = vmatpush1.msra.mxu0 %v1019
    %4288 = vmatprep.subr.mxu0 0.0
    %4289 = vmatpush1.msra.mxu0 %v1020
    %4290 = vmatprep.subr.mxu0 0.0
    %4291 = vmatpush1.msra.mxu0 %v1021
    %4292 = vmatprep.subr.mxu0 0.0
    %4293 = vmatpush1.msra.mxu0 %v1022
    %4294 = vmatprep.subr.mxu0 0.0
    %4295 = vmatpush1.msra.mxu0 %v1023
    %4296 = vmatprep.subr.mxu0 0.0
    %4297 = vmatpush1.msra.mxu0 %v1024
    %4298 = vmatprep.subr.mxu0 0.0
    %4299 = vmatpush1.msra.mxu0 %v1025
    %4300 = vmatprep.subr.mxu0 0.0
    %4301 = vmatpush1.msra.mxu0 %v1026
    %4302 = vmatprep.subr.mxu0 0.0
    %4303 = vmatpush1.msra.mxu0 %v1027
    %4304 = vmatprep.subr.mxu0 0.0
    %4305 = vmatpush1.msra.mxu0 %v1028
    %4306 = vmatprep.subr.mxu0 0.0
    %4307 = vmatpush1.msra.mxu0 %v1029
    %4308 = vmatprep.subr.mxu0 0.0
    %4309 = vmatpush1.msra.mxu0 %v1030
    %4310 = vmatprep.subr.mxu0 0.0
    %4311 = vmatpush1.msra.mxu0 %v1031
    %4312 = vmatprep.subr.mxu0 0.0
    %4313 = vmatpush1.msra.mxu0 %v1032
    %4314 = vmatprep.subr.mxu0 0.0
    %4315 = vmatpush1.msra.mxu0 %v1033
    %4316 = vmatprep.subr.mxu0 0.0
    %4317 = vmatpush1.msra.mxu0 %v1034
    %4318 = vmatprep.subr.mxu0 0.0
    %4319 = vmatpush1.msra.mxu0 %v1035
    %4320 = vmatprep.subr.mxu0 0.0
    %4321 = vmatpush1.msra.mxu0 %v1036
    %4322 = vmatprep.subr.mxu0 0.0
    %4323 = vmatpush1.msra.mxu0 %v1037
    %4324 = vmatprep.mubr.f32.mxu0 %v1916
    %4325 = vmatmul.mubr.f32.gmra.mrb[0].mxu0 %v1908
    %v4326 = vpop.f32.mrb[0].mxu0
    %v4327 = vadd.f32 %v4257, %v4326
    %v4328 = vpop.f32.mrb[0].mxu0
    %4329 = vdwg.mxu0
    %4330 = vmatprep.subr.mxu0 0.0
    %4331 = vmatpush1.msra.mxu0 %v1038
    %4332 = vmatprep.subr.mxu0 0.0
    %4333 = vmatpush1.msra.mxu0 %v1039
    %4334 = vmatprep.subr.mxu0 0.0
    %4335 = vmatpush1.msra.mxu0 %v1040
    %4336 = vmatprep.subr.mxu0 0.0
    %4337 = vmatpush1.msra.mxu0 %v1041
    %4338 = vmatprep.subr.mxu0 0.0
    %4339 = vmatpush1.msra.mxu0 %v1042
    %4340 = vmatprep.subr.mxu0 0.0
    %4341 = vmatpush1.msra.mxu0 %v1043
    %4342 = vmatprep.subr.mxu0 0.0
    %4343 = vmatpush1.msra.mxu0 %v1044
    %4344 = vmatprep.subr.mxu0 0.0
    %4345 = vmatpush1.msra.mxu0 %v1045
    %4346 = vmatprep.subr.mxu0 0.0
    %4347 = vmatpush1.msra.mxu0 %v1046
    %4348 = vmatprep.subr.mxu0 0.0
    %4349 = vmatpush1.msra.mxu0 %v1047
    %4350 = vmatprep.subr.mxu0 0.0
    %4351 = vmatpush1.msra.mxu0 %v1048
    %4352 = vmatprep.subr.mxu0 0.0
    %4353 = vmatpush1.msra.mxu0 %v1049
    %4354 = vmatprep.subr.mxu0 0.0
    %4355 = vmatpush1.msra.mxu0 %v1050
    %4356 = vmatprep.subr.mxu0 0.0
    %4357 = vmatpush1.msra.mxu0 %v1051
    %4358 = vmatprep.subr.mxu0 0.0
    %4359 = vmatpush1.msra.mxu0 %v1052
    %4360 = vmatprep.subr.mxu0 0.0
    %4361 = vmatpush1.msra.mxu0 %v1053
    %4362 = vmatprep.subr.mxu0 0.0
    %4363 = vmatpush1.msra.mxu0 %v1054
    %4364 = vmatprep.subr.mxu0 0.0
    %4365 = vmatpush1.msra.mxu0 %v1055
    %4366 = vmatprep.subr.mxu0 0.0
    %4367 = vmatpush1.msra.mxu0 %v1056
    %4368 = vmatprep.subr.mxu0 0.0
    %4369 = vmatpush1.msra.mxu0 %v1057
    %4370 = vmatprep.subr.mxu0 0.0
    %4371 = vmatpush1.msra.mxu0 %v1058
    %4372 = vmatprep.subr.mxu0 0.0
    %4373 = vmatpush1.msra.mxu0 %v1059
    %4374 = vmatprep.subr.mxu0 0.0
    %4375 = vmatpush1.msra.mxu0 %v1060
    %4376 = vmatprep.subr.mxu0 0.0
    %4377 = vmatpush1.msra.mxu0 %v1061
    %4378 = vmatprep.subr.mxu0 0.0
    %4379 = vmatpush1.msra.mxu0 %v1062
    %4380 = vmatprep.subr.mxu0 0.0
    %4381 = vmatpush1.msra.mxu0 %v1063
    %4382 = vmatprep.subr.mxu0 0.0
    %4383 = vmatpush1.msra.mxu0 %v1064
    %4384 = vmatprep.subr.mxu0 0.0
    %4385 = vmatpush1.msra.mxu0 %v1065
    %4386 = vmatprep.subr.mxu0 0.0
    %4387 = vmatpush1.msra.mxu0 %v1066
    %4388 = vmatprep.subr.mxu0 0.0
    %4389 = vmatpush1.msra.mxu0 %v1067
    %4390 = vmatprep.subr.mxu0 0.0
    %4391 = vmatpush1.msra.mxu0 %v1068
    %4392 = vmatprep.subr.mxu0 0.0
    %4393 = vmatpush1.msra.mxu0 %v1069
    %4394 = vmatprep.mubr.f32.mxu0 %v1917
    %4395 = vmatmul.mubr.f32.gmra.mrb[0].mxu0 %v1915
    %v4396 = vpop.f32.mrb[0].mxu0
    %v4397 = vadd.f32 %v4327, %v4396
    %v4398 = vpop.f32.mrb[0].mxu0
    %4399 = vdwg.mxu0
    %4400 = vmatprep.subr.mxu0 0.0
    %4401 = vmatpush1.msra.mxu0 %v1070
    %4402 = vmatprep.subr.mxu0 0.0
    %4403 = vmatpush1.msra.mxu0 %v1071
    %4404 = vmatprep.subr.mxu0 0.0
    %4405 = vmatpush1.msra.mxu0 %v1072
    %4406 = vmatprep.subr.mxu0 0.0
    %4407 = vmatpush1.msra.mxu0 %v1073
    %4408 = vmatprep.subr.mxu0 0.0
    %4409 = vmatpush1.msra.mxu0 %v1074
    %4410 = vmatprep.subr.mxu0 0.0
    %4411 = vmatpush1.msra.mxu0 %v1075
    %4412 = vmatprep.subr.mxu0 0.0
    %4413 = vmatpush1.msra.mxu0 %v1076
    %4414 = vmatprep.subr.mxu0 0.0
    %4415 = vmatpush1.msra.mxu0 %v1077
    %4416 = vmatprep.subr.mxu0 0.0
    %4417 = vmatpush1.msra.mxu0 %v1078
    %4418 = vmatprep.subr.mxu0 0.0
    %4419 = vmatpush1.msra.mxu0 %v1079
    %4420 = vmatprep.subr.mxu0 0.0
    %4421 = vmatpush1.msra.mxu0 %v1080
    %4422 = vmatprep.subr.mxu0 0.0
    %4423 = vmatpush1.msra.mxu0 %v1081
    %4424 = vmatprep.subr.mxu0 0.0
    %4425 = vmatpush1.msra.mxu0 %v1082
    %4426 = vmatprep.subr.mxu0 0.0
    %4427 = vmatpush1.msra.mxu0 %v1083
    %4428 = vmatprep.subr.mxu0 0.0
    %4429 = vmatpush1.msra.mxu0 %v1084
    %4430 = vmatprep.subr.mxu0 0.0
    %4431 = vmatpush1.msra.mxu0 %v1085
    %4432 = vmatprep.subr.mxu0 0.0
    %4433 = vmatpush1.msra.mxu0 %v1086
    %4434 = vmatprep.subr.mxu0 0.0
    %4435 = vmatpush1.msra.mxu0 %v1087
    %4436 = vmatprep.subr.mxu0 0.0
    %4437 = vmatpush1.msra.mxu0 %v1088
    %4438 = vmatprep.subr.mxu0 0.0
    %4439 = vmatpush1.msra.mxu0 %v1089
    %4440 = vmatprep.subr.mxu0 0.0
    %4441 = vmatpush1.msra.mxu0 %v1090
    %4442 = vmatprep.subr.mxu0 0.0
    %4443 = vmatpush1.msra.mxu0 %v1091
    %4444 = vmatprep.subr.mxu0 0.0
    %4445 = vmatpush1.msra.mxu0 %v1092
    %4446 = vmatprep.subr.mxu0 0.0
    %4447 = vmatpush1.msra.mxu0 %v1093
    %4448 = vmatprep.subr.mxu0 0.0
    %4449 = vmatpush1.msra.mxu0 %v1094
    %4450 = vmatprep.subr.mxu0 0.0
    %4451 = vmatpush1.msra.mxu0 %v1095
    %4452 = vmatprep.subr.mxu0 0.0
    %4453 = vmatpush1.msra.mxu0 %v1096
    %4454 = vmatprep.subr.mxu0 0.0
    %4455 = vmatpush1.msra.mxu0 %v1097
    %4456 = vmatprep.subr.mxu0 0.0
    %4457 = vmatpush1.msra.mxu0 %v1098
    %4458 = vmatprep.subr.mxu0 0.0
    %4459 = vmatpush1.msra.mxu0 %v1099
    %4460 = vmatprep.subr.mxu0 0.0
    %4461 = vmatpush1.msra.mxu0 %v1100
    %4462 = vmatprep.subr.mxu0 0.0
    %4463 = vmatpush1.msra.mxu0 %v1101
    %4464 = vmatprep.mubr.f32.mxu0 %v1933
    %4465 = vmatmul.mubr.f32.gmra.mrb[0].mxu0 %v1925
    %v4466 = vpop.f32.mrb[0].mxu0
    %v4467 = vadd.f32 %v4397, %v4466
    %v4468 = vpop.f32.mrb[0].mxu0
    %4469 = vdwg.mxu0
    %4470 = vmatprep.subr.mxu0 0.0
    %4471 = vmatpush1.msra.mxu0 %v1102
    %4472 = vmatprep.subr.mxu0 0.0
    %4473 = vmatpush1.msra.mxu0 %v1103
    %4474 = vmatprep.subr.mxu0 0.0
    %4475 = vmatpush1.msra.mxu0 %v1104
    %4476 = vmatprep.subr.mxu0 0.0
    %4477 = vmatpush1.msra.mxu0 %v1105
    %4478 = vmatprep.subr.mxu0 0.0
    %4479 = vmatpush1.msra.mxu0 %v1106
    %4480 = vmatprep.subr.mxu0 0.0
    %4481 = vmatpush1.msra.mxu0 %v1107
    %4482 = vmatprep.subr.mxu0 0.0
    %4483 = vmatpush1.msra.mxu0 %v1108
    %4484 = vmatprep.subr.mxu0 0.0
    %4485 = vmatpush1.msra.mxu0 %v1109
    %4486 = vmatprep.subr.mxu0 0.0
    %4487 = vmatpush1.msra.mxu0 %v1110
    %4488 = vmatprep.subr.mxu0 0.0
    %4489 = vmatpush1.msra.mxu0 %v1111
    %4490 = vmatprep.subr.mxu0 0.0
    %4491 = vmatpush1.msra.mxu0 %v1112
    %4492 = vmatprep.subr.mxu0 0.0
    %4493 = vmatpush1.msra.mxu0 %v1113
    %4494 = vmatprep.subr.mxu0 0.0
    %4495 = vmatpush1.msra.mxu0 %v1114
    %4496 = vmatprep.subr.mxu0 0.0
    %4497 = vmatpush1.msra.mxu0 %v1115
    %4498 = vmatprep.subr.mxu0 0.0
    %4499 = vmatpush1.msra.mxu0 %v1116
    %4500 = vmatprep.subr.mxu0 0.0
    %4501 = vmatpush1.msra.mxu0 %v1117
    %4502 = vmatprep.subr.mxu0 0.0
    %4503 = vmatpush1.msra.mxu0 %v1118
    %4504 = vmatprep.subr.mxu0 0.0
    %4505 = vmatpush1.msra.mxu0 %v1119
    %4506 = vmatprep.subr.mxu0 0.0
    %4507 = vmatpush1.msra.mxu0 %v1120
    %4508 = vmatprep.subr.mxu0 0.0
    %4509 = vmatpush1.msra.mxu0 %v1121
    %4510 = vmatprep.subr.mxu0 0.0
    %4511 = vmatpush1.msra.mxu0 %v1122
    %4512 = vmatprep.subr.mxu0 0.0
    %4513 = vmatpush1.msra.mxu0 %v1123
    %4514 = vmatprep.subr.mxu0 0.0
    %4515 = vmatpush1.msra.mxu0 %v1124
    %4516 = vmatprep.subr.mxu0 0.0
    %4517 = vmatpush1.msra.mxu0 %v1125
    %4518 = vmatprep.subr.mxu0 0.0
    %4519 = vmatpush1.msra.mxu0 %v1126
    %4520 = vmatprep.subr.mxu0 0.0
    %4521 = vmatpush1.msra.mxu0 %v1127
    %4522 = vmatprep.subr.mxu0 0.0
    %4523 = vmatpush1.msra.mxu0 %v1128
    %4524 = vmatprep.subr.mxu0 0.0
    %4525 = vmatpush1.msra.mxu0 %v1129
    %4526 = vmatprep.subr.mxu0 0.0
    %4527 = vmatpush1.msra.mxu0 %v1130
    %4528 = vmatprep.subr.mxu0 0.0
    %4529 = vmatpush1.msra.mxu0 %v1131
    %4530 = vmatprep.subr.mxu0 0.0
    %4531 = vmatpush1.msra.mxu0 %v1132
    %4532 = vmatprep.subr.mxu0 0.0
    %4533 = vmatpush1.msra.mxu0 %v1133
    %4534 = vmatprep.mubr.f32.mxu0 %v1934
    %4535 = vmatmul.mubr.f32.gmra.mrb[0].mxu0 %v1932
    %v4536 = vpop.f32.mrb[0].mxu0
    %v4537 = vadd.f32 %v4467, %v4536
    %v4538 = vpop.f32.mrb[0].mxu0
    %4539 = vdwg.mxu0
    %4540 = vmatprep.subr.mxu0 0.0
    %4541 = vmatpush1.msra.mxu0 %v1134
    %4542 = vmatprep.subr.mxu0 0.0
    %4543 = vmatpush1.msra.mxu0 %v1135
    %4544 = vmatprep.subr.mxu0 0.0
    %4545 = vmatpush1.msra.mxu0 %v1136
    %4546 = vmatprep.subr.mxu0 0.0
    %4547 = vmatpush1.msra.mxu0 %v1137
    %4548 = vmatprep.subr.mxu0 0.0
    %4549 = vmatpush1.msra.mxu0 %v1138
    %4550 = vmatprep.subr.mxu0 0.0
    %4551 = vmatpush1.msra.mxu0 %v1139
    %4552 = vmatprep.subr.mxu0 0.0
    %4553 = vmatpush1.msra.mxu0 %v1140
    %4554 = vmatprep.subr.mxu0 0.0
    %4555 = vmatpush1.msra.mxu0 %v1141
    %4556 = vmatprep.subr.mxu0 0.0
    %4557 = vmatpush1.msra.mxu0 %v1142
    %4558 = vmatprep.subr.mxu0 0.0
    %4559 = vmatpush1.msra.mxu0 %v1143
    %4560 = vmatprep.subr.mxu0 0.0
    %4561 = vmatpush1.msra.mxu0 %v1144
    %4562 = vmatprep.subr.mxu0 0.0
    %4563 = vmatpush1.msra.mxu0 %v1145
    %4564 = vmatprep.subr.mxu0 0.0
    %4565 = vmatpush1.msra.mxu0 %v1146
    %4566 = vmatprep.subr.mxu0 0.0
    %4567 = vmatpush1.msra.mxu0 %v1147
    %4568 = vmatprep.subr.mxu0 0.0
    %4569 = vmatpush1.msra.mxu0 %v1148
    %4570 = vmatprep.subr.mxu0 0.0
    %4571 = vmatpush1.msra.mxu0 %v1149
    %4572 = vmatprep.subr.mxu0 0.0
    %4573 = vmatpush1.msra.mxu0 %v1150
    %4574 = vmatprep.subr.mxu0 0.0
    %4575 = vmatpush1.msra.mxu0 %v1151
    %4576 = vmatprep.subr.mxu0 0.0
    %4577 = vmatpush1.msra.mxu0 %v1152
    %4578 = vmatprep.subr.mxu0 0.0
    %4579 = vmatpush1.msra.mxu0 %v1153
    %4580 = vmatprep.subr.mxu0 0.0
    %4581 = vmatpush1.msra.mxu0 %v1154
    %4582 = vmatprep.subr.mxu0 0.0
    %4583 = vmatpush1.msra.mxu0 %v1155
    %4584 = vmatprep.subr.mxu0 0.0
    %4585 = vmatpush1.msra.mxu0 %v1156
    %4586 = vmatprep.subr.mxu0 0.0
    %4587 = vmatpush1.msra.mxu0 %v1157
    %4588 = vmatprep.subr.mxu0 0.0
    %4589 = vmatpush1.msra.mxu0 %v1158
    %4590 = vmatprep.subr.mxu0 0.0
    %4591 = vmatpush1.msra.mxu0 %v1159
    %4592 = vmatprep.subr.mxu0 0.0
    %4593 = vmatpush1.msra.mxu0 %v1160
    %4594 = vmatprep.subr.mxu0 0.0
    %4595 = vmatpush1.msra.mxu0 %v1161
    %4596 = vmatprep.subr.mxu0 0.0
    %4597 = vmatpush1.msra.mxu0 %v1162
    %4598 = vmatprep.subr.mxu0 0.0
    %4599 = vmatpush1.msra.mxu0 %v1163
    %4600 = vmatprep.subr.mxu0 0.0
    %4601 = vmatpush1.msra.mxu0 %v1164
    %4602 = vmatprep.subr.mxu0 0.0
    %4603 = vmatpush1.msra.mxu0 %v1165
    %4604 = vmatprep.mubr.f32.mxu0 %v1950
    %4605 = vmatmul.mubr.f32.gmra.mrb[0].mxu0 %v1942
    %v4606 = vpop.f32.mrb[0].mxu0
    %v4607 = vadd.f32 %v4537, %v4606
    %v4608 = vpop.f32.mrb[0].mxu0
    %4609 = vdwg.mxu0
    %4610 = vmatprep.subr.mxu0 0.0
    %4611 = vmatpush1.msra.mxu0 %v1166
    %4612 = vmatprep.subr.mxu0 0.0
    %4613 = vmatpush1.msra.mxu0 %v1167
    %4614 = vmatprep.subr.mxu0 0.0
    %4615 = vmatpush1.msra.mxu0 %v1168
    %4616 = vmatprep.subr.mxu0 0.0
    %4617 = vmatpush1.msra.mxu0 %v1169
    %4618 = vmatprep.subr.mxu0 0.0
    %4619 = vmatpush1.msra.mxu0 %v1170
    %4620 = vmatprep.subr.mxu0 0.0
    %4621 = vmatpush1.msra.mxu0 %v1171
    %4622 = vmatprep.subr.mxu0 0.0
    %4623 = vmatpush1.msra.mxu0 %v1172
    %4624 = vmatprep.subr.mxu0 0.0
    %4625 = vmatpush1.msra.mxu0 %v1173
    %4626 = vmatprep.subr.mxu0 0.0
    %4627 = vmatpush1.msra.mxu0 %v1174
    %4628 = vmatprep.subr.mxu0 0.0
    %4629 = vmatpush1.msra.mxu0 %v1175
    %4630 = vmatprep.subr.mxu0 0.0
    %4631 = vmatpush1.msra.mxu0 %v1176
    %4632 = vmatprep.subr.mxu0 0.0
    %4633 = vmatpush1.msra.mxu0 %v1177
    %4634 = vmatprep.subr.mxu0 0.0
    %4635 = vmatpush1.msra.mxu0 %v1178
    %4636 = vmatprep.subr.mxu0 0.0
    %4637 = vmatpush1.msra.mxu0 %v1179
    %4638 = vmatprep.subr.mxu0 0.0
    %4639 = vmatpush1.msra.mxu0 %v1180
    %4640 = vmatprep.subr.mxu0 0.0
    %4641 = vmatpush1.msra.mxu0 %v1181
    %4642 = vmatprep.subr.mxu0 0.0
    %4643 = vmatpush1.msra.mxu0 %v1182
    %4644 = vmatprep.subr.mxu0 0.0
    %4645 = vmatpush1.msra.mxu0 %v1183
    %4646 = vmatprep.subr.mxu0 0.0
    %4647 = vmatpush1.msra.mxu0 %v1184
    %4648 = vmatprep.subr.mxu0 0.0
    %4649 = vmatpush1.msra.mxu0 %v1185
    %4650 = vmatprep.subr.mxu0 0.0
    %4651 = vmatpush1.msra.mxu0 %v1186
    %4652 = vmatprep.subr.mxu0 0.0
    %4653 = vmatpush1.msra.mxu0 %v1187
    %4654 = vmatprep.subr.mxu0 0.0
    %4655 = vmatpush1.msra.mxu0 %v1188
    %4656 = vmatprep.subr.mxu0 0.0
    %4657 = vmatpush1.msra.mxu0 %v1189
    %4658 = vmatprep.subr.mxu0 0.0
    %4659 = vmatpush1.msra.mxu0 %v1190
    %4660 = vmatprep.subr.mxu0 0.0
    %4661 = vmatpush1.msra.mxu0 %v1191
    %4662 = vmatprep.subr.mxu0 0.0
    %4663 = vmatpush1.msra.mxu0 %v1192
    %4664 = vmatprep.subr.mxu0 0.0
    %4665 = vmatpush1.msra.mxu0 %v1193
    %4666 = vmatprep.subr.mxu0 0.0
    %4667 = vmatpush1.msra.mxu0 %v1194
    %4668 = vmatprep.subr.mxu0 0.0
    %4669 = vmatpush1.msra.mxu0 %v1195
    %4670 = vmatprep.subr.mxu0 0.0
    %4671 = vmatpush1.msra.mxu0 %v1196
    %4672 = vmatprep.subr.mxu0 0.0
    %4673 = vmatpush1.msra.mxu0 %v1197
    %4674 = vmatprep.mubr.f32.mxu0 %v1951
    %4675 = vmatmul.mubr.f32.gmra.mrb[0].mxu0 %v1949
    %v4676 = vpop.f32.mrb[0].mxu0
    %v4677 = vadd.f32 %v4607, %v4676
    %v4678 = vpop.f32.mrb[0].mxu0
    %4679 = vdwg.mxu0
    %4680 = vmatprep.subr.mxu0 0.0
    %4681 = vmatpush1.msra.mxu0 %v1198
    %4682 = vmatprep.subr.mxu0 0.0
    %4683 = vmatpush1.msra.mxu0 %v1199
    %4684 = vmatprep.subr.mxu0 0.0
    %4685 = vmatpush1.msra.mxu0 %v1200
    %4686 = vmatprep.subr.mxu0 0.0
    %4687 = vmatpush1.msra.mxu0 %v1201
    %4688 = vmatprep.subr.mxu0 0.0
    %4689 = vmatpush1.msra.mxu0 %v1202
    %4690 = vmatprep.subr.mxu0 0.0
    %4691 = vmatpush1.msra.mxu0 %v1203
    %4692 = vmatprep.subr.mxu0 0.0
    %4693 = vmatpush1.msra.mxu0 %v1204
    %4694 = vmatprep.subr.mxu0 0.0
    %4695 = vmatpush1.msra.mxu0 %v1205
    %4696 = vmatprep.subr.mxu0 0.0
    %4697 = vmatpush1.msra.mxu0 %v1206
    %4698 = vmatprep.subr.mxu0 0.0
    %4699 = vmatpush1.msra.mxu0 %v1207
    %4700 = vmatprep.subr.mxu0 0.0
    %4701 = vmatpush1.msra.mxu0 %v1208
    %4702 = vmatprep.subr.mxu0 0.0
    %4703 = vmatpush1.msra.mxu0 %v1209
    %4704 = vmatprep.subr.mxu0 0.0
    %4705 = vmatpush1.msra.mxu0 %v1210
    %4706 = vmatprep.subr.mxu0 0.0
    %4707 = vmatpush1.msra.mxu0 %v1211
    %4708 = vmatprep.subr.mxu0 0.0
    %4709 = vmatpush1.msra.mxu0 %v1212
    %4710 = vmatprep.subr.mxu0 0.0
    %4711 = vmatpush1.msra.mxu0 %v1213
    %4712 = vmatprep.subr.mxu0 0.0
    %4713 = vmatpush1.msra.mxu0 %v1214
    %4714 = vmatprep.subr.mxu0 0.0
    %4715 = vmatpush1.msra.mxu0 %v1215
    %4716 = vmatprep.subr.mxu0 0.0
    %4717 = vmatpush1.msra.mxu0 %v1216
    %4718 = vmatprep.subr.mxu0 0.0
    %4719 = vmatpush1.msra.mxu0 %v1217
    %4720 = vmatprep.subr.mxu0 0.0
    %4721 = vmatpush1.msra.mxu0 %v1218
    %4722 = vmatprep.subr.mxu0 0.0
    %4723 = vmatpush1.msra.mxu0 %v1219
    %4724 = vmatprep.subr.mxu0 0.0
    %4725 = vmatpush1.msra.mxu0 %v1220
    %4726 = vmatprep.subr.mxu0 0.0
    %4727 = vmatpush1.msra.mxu0 %v1221
    %4728 = vmatprep.subr.mxu0 0.0
    %4729 = vmatpush1.msra.mxu0 %v1222
    %4730 = vmatprep.subr.mxu0 0.0
    %4731 = vmatpush1.msra.mxu0 %v1223
    %4732 = vmatprep.subr.mxu0 0.0
    %4733 = vmatpush1.msra.mxu0 %v1224
    %4734 = vmatprep.subr.mxu0 0.0
    %4735 = vmatpush1.msra.mxu0 %v1225
    %4736 = vmatprep.subr.mxu0 0.0
    %4737 = vmatpush1.msra.mxu0 %v1226
    %4738 = vmatprep.subr.mxu0 0.0
    %4739 = vmatpush1.msra.mxu0 %v1227
    %4740 = vmatprep.subr.mxu0 0.0
    %4741 = vmatpush1.msra.mxu0 %v1228
    %4742 = vmatprep.subr.mxu0 0.0
    %4743 = vmatpush1.msra.mxu0 %v1229
    %4744 = vmatprep.mubr.f32.mxu0 %v1967
    %4745 = vmatmul.mubr.f32.gmra.mrb[0].mxu0 %v1959
    %v4746 = vpop.f32.mrb[0].mxu0
    %v4747 = vadd.f32 %v4677, %v4746
    %v4748 = vpop.f32.mrb[0].mxu0
    %4749 = vdwg.mxu0
    %4750 = vmatprep.subr.mxu0 0.0
    %4751 = vmatpush1.msra.mxu0 %v1230
    %4752 = vmatprep.subr.mxu0 0.0
    %4753 = vmatpush1.msra.mxu0 %v1231
    %4754 = vmatprep.subr.mxu0 0.0
    %4755 = vmatpush1.msra.mxu0 %v1232
    %4756 = vmatprep.subr.mxu0 0.0
    %4757 = vmatpush1.msra.mxu0 %v1233
    %4758 = vmatprep.subr.mxu0 0.0
    %4759 = vmatpush1.msra.mxu0 %v1234
    %4760 = vmatprep.subr.mxu0 0.0
    %4761 = vmatpush1.msra.mxu0 %v1235
    %4762 = vmatprep.subr.mxu0 0.0
    %4763 = vmatpush1.msra.mxu0 %v1236
    %4764 = vmatprep.subr.mxu0 0.0
    %4765 = vmatpush1.msra.mxu0 %v1237
    %4766 = vmatprep.subr.mxu0 0.0
    %4767 = vmatpush1.msra.mxu0 %v1238
    %4768 = vmatprep.subr.mxu0 0.0
    %4769 = vmatpush1.msra.mxu0 %v1239
    %4770 = vmatprep.subr.mxu0 0.0
    %4771 = vmatpush1.msra.mxu0 %v1240
    %4772 = vmatprep.subr.mxu0 0.0
    %4773 = vmatpush1.msra.mxu0 %v1241
    %4774 = vmatprep.subr.mxu0 0.0
    %4775 = vmatpush1.msra.mxu0 %v1242
    %4776 = vmatprep.subr.mxu0 0.0
    %4777 = vmatpush1.msra.mxu0 %v1243
    %4778 = vmatprep.subr.mxu0 0.0
    %4779 = vmatpush1.msra.mxu0 %v1244
    %4780 = vmatprep.subr.mxu0 0.0
    %4781 = vmatpush1.msra.mxu0 %v1245
    %4782 = vmatprep.subr.mxu0 0.0
    %4783 = vmatpush1.msra.mxu0 %v1246
    %4784 = vmatprep.subr.mxu0 0.0
    %4785 = vmatpush1.msra.mxu0 %v1247
    %4786 = vmatprep.subr.mxu0 0.0
    %4787 = vmatpush1.msra.mxu0 %v1248
    %4788 = vmatprep.subr.mxu0 0.0
    %4789 = vmatpush1.msra.mxu0 %v1249
    %4790 = vmatprep.subr.mxu0 0.0
    %4791 = vmatpush1.msra.mxu0 %v1250
    %4792 = vmatprep.subr.mxu0 0.0
    %4793 = vmatpush1.msra.mxu0 %v1251
    %4794 = vmatprep.subr.mxu0 0.0
    %4795 = vmatpush1.msra.mxu0 %v1252
    %4796 = vmatprep.subr.mxu0 0.0
    %4797 = vmatpush1.msra.mxu0 %v1253
    %4798 = vmatprep.subr.mxu0 0.0
    %4799 = vmatpush1.msra.mxu0 %v1254
    %4800 = vmatprep.subr.mxu0 0.0
    %4801 = vmatpush1.msra.mxu0 %v1255
    %4802 = vmatprep.subr.mxu0 0.0
    %4803 = vmatpush1.msra.mxu0 %v1256
    %4804 = vmatprep.subr.mxu0 0.0
    %4805 = vmatpush1.msra.mxu0 %v1257
    %4806 = vmatprep.subr.mxu0 0.0
    %4807 = vmatpush1.msra.mxu0 %v1258
    %4808 = vmatprep.subr.mxu0 0.0
    %4809 = vmatpush1.msra.mxu0 %v1259
    %4810 = vmatprep.subr.mxu0 0.0
    %4811 = vmatpush1.msra.mxu0 %v1260
    %4812 = vmatprep.subr.mxu0 0.0
    %4813 = vmatpush1.msra.mxu0 %v1261
    %4814 = vmatprep.mubr.f32.mxu0 %v1968
    %4815 = vmatmul.mubr.f32.gmra.mrb[0].mxu0 %v1966
    %v4816 = vpop.f32.mrb[0].mxu0
    %v4817 = vadd.f32 %v4747, %v4816
    %v4818 = vpop.f32.mrb[0].mxu0
    %4819 = vdwg.mxu0
    %4820 = vmatprep.subr.mxu0 0.0
    %4821 = vmatpush1.msra.mxu0 %v1262
    %4822 = vmatprep.subr.mxu0 0.0
    %4823 = vmatpush1.msra.mxu0 %v1263
    %4824 = vmatprep.subr.mxu0 0.0
    %4825 = vmatpush1.msra.mxu0 %v1264
    %4826 = vmatprep.subr.mxu0 0.0
    %4827 = vmatpush1.msra.mxu0 %v1265
    %4828 = vmatprep.subr.mxu0 0.0
    %4829 = vmatpush1.msra.mxu0 %v1266
    %4830 = vmatprep.subr.mxu0 0.0
    %4831 = vmatpush1.msra.mxu0 %v1267
    %4832 = vmatprep.subr.mxu0 0.0
    %4833 = vmatpush1.msra.mxu0 %v1268
    %4834 = vmatprep.subr.mxu0 0.0
    %4835 = vmatpush1.msra.mxu0 %v1269
    %4836 = vmatprep.subr.mxu0 0.0
    %4837 = vmatpush1.msra.mxu0 %v1270
    %4838 = vmatprep.subr.mxu0 0.0
    %4839 = vmatpush1.msra.mxu0 %v1271
    %4840 = vmatprep.subr.mxu0 0.0
    %4841 = vmatpush1.msra.mxu0 %v1272
    %4842 = vmatprep.subr.mxu0 0.0
    %4843 = vmatpush1.msra.mxu0 %v1273
    %4844 = vmatprep.subr.mxu0 0.0
    %4845 = vmatpush1.msra.mxu0 %v1274
    %4846 = vmatprep.subr.mxu0 0.0
    %4847 = vmatpush1.msra.mxu0 %v1275
    %4848 = vmatprep.subr.mxu0 0.0
    %4849 = vmatpush1.msra.mxu0 %v1276
    %4850 = vmatprep.subr.mxu0 0.0
    %4851 = vmatpush1.msra.mxu0 %v1277
    %4852 = vmatprep.subr.mxu0 0.0
    %4853 = vmatpush1.msra.mxu0 %v1278
    %4854 = vmatprep.subr.mxu0 0.0
    %4855 = vmatpush1.msra.mxu0 %v1279
    %4856 = vmatprep.subr.mxu0 0.0
    %4857 = vmatpush1.msra.mxu0 %v1280
    %4858 = vmatprep.subr.mxu0 0.0
    %4859 = vmatpush1.msra.mxu0 %v1281
    %4860 = vmatprep.subr.mxu0 0.0
    %4861 = vmatpush1.msra.mxu0 %v1282
    %4862 = vmatprep.subr.mxu0 0.0
    %4863 = vmatpush1.msra.mxu0 %v1283
    %4864 = vmatprep.subr.mxu0 0.0
    %4865 = vmatpush1.msra.mxu0 %v1284
    %4866 = vmatprep.subr.mxu0 0.0
    %4867 = vmatpush1.msra.mxu0 %v1285
    %4868 = vmatprep.subr.mxu0 0.0
    %4869 = vmatpush1.msra.mxu0 %v1286
    %4870 = vmatprep.subr.mxu0 0.0
    %4871 = vmatpush1.msra.mxu0 %v1287
    %4872 = vmatprep.subr.mxu0 0.0
    %4873 = vmatpush1.msra.mxu0 %v1288
    %4874 = vmatprep.subr.mxu0 0.0
    %4875 = vmatpush1.msra.mxu0 %v1289
    %4876 = vmatprep.subr.mxu0 0.0
    %4877 = vmatpush1.msra.mxu0 %v1290
    %4878 = vmatprep.subr.mxu0 0.0
    %4879 = vmatpush1.msra.mxu0 %v1291
    %4880 = vmatprep.subr.mxu0 0.0
    %4881 = vmatpush1.msra.mxu0 %v1292
    %4882 = vmatprep.subr.mxu0 0.0
    %4883 = vmatpush1.msra.mxu0 %v1293
    %4884 = vmatprep.mubr.f32.mxu0 %v1984
    %4885 = vmatmul.mubr.f32.gmra.mrb[0].mxu0 %v1976
    %v4886 = vpop.f32.mrb[0].mxu0
    %v4887 = vadd.f32 %v4817, %v4886
    %v4888 = vpop.f32.mrb[0].mxu0
    %4889 = vdwg.mxu0
    %4890 = vmatprep.subr.mxu0 0.0
    %4891 = vmatpush1.msra.mxu0 %v1294
    %4892 = vmatprep.subr.mxu0 0.0
    %4893 = vmatpush1.msra.mxu0 %v1295
    %4894 = vmatprep.subr.mxu0 0.0
    %4895 = vmatpush1.msra.mxu0 %v1296
    %4896 = vmatprep.subr.mxu0 0.0
    %4897 = vmatpush1.msra.mxu0 %v1297
    %4898 = vmatprep.subr.mxu0 0.0
    %4899 = vmatpush1.msra.mxu0 %v1298
    %4900 = vmatprep.subr.mxu0 0.0
    %4901 = vmatpush1.msra.mxu0 %v1299
    %4902 = vmatprep.subr.mxu0 0.0
    %4903 = vmatpush1.msra.mxu0 %v1300
    %4904 = vmatprep.subr.mxu0 0.0
    %4905 = vmatpush1.msra.mxu0 %v1301
    %4906 = vmatprep.subr.mxu0 0.0
    %4907 = vmatpush1.msra.mxu0 %v1302
    %4908 = vmatprep.subr.mxu0 0.0
    %4909 = vmatpush1.msra.mxu0 %v1303
    %4910 = vmatprep.subr.mxu0 0.0
    %4911 = vmatpush1.msra.mxu0 %v1304
    %4912 = vmatprep.subr.mxu0 0.0
    %4913 = vmatpush1.msra.mxu0 %v1305
    %4914 = vmatprep.subr.mxu0 0.0
    %4915 = vmatpush1.msra.mxu0 %v1306
    %4916 = vmatprep.subr.mxu0 0.0
    %4917 = vmatpush1.msra.mxu0 %v1307
    %4918 = vmatprep.subr.mxu0 0.0
    %4919 = vmatpush1.msra.mxu0 %v1308
    %4920 = vmatprep.subr.mxu0 0.0
    %4921 = vmatpush1.msra.mxu0 %v1309
    %4922 = vmatprep.subr.mxu0 0.0
    %4923 = vmatpush1.msra.mxu0 %v1310
    %4924 = vmatprep.subr.mxu0 0.0
    %4925 = vmatpush1.msra.mxu0 %v1311
    %4926 = vmatprep.subr.mxu0 0.0
    %4927 = vmatpush1.msra.mxu0 %v1312
    %4928 = vmatprep.subr.mxu0 0.0
    %4929 = vmatpush1.msra.mxu0 %v1313
    %4930 = vmatprep.subr.mxu0 0.0
    %4931 = vmatpush1.msra.mxu0 %v1314
    %4932 = vmatprep.subr.mxu0 0.0
    %4933 = vmatpush1.msra.mxu0 %v1315
    %4934 = vmatprep.subr.mxu0 0.0
    %4935 = vmatpush1.msra.mxu0 %v1316
    %4936 = vmatprep.subr.mxu0 0.0
    %4937 = vmatpush1.msra.mxu0 %v1317
    %4938 = vmatprep.subr.mxu0 0.0
    %4939 = vmatpush1.msra.mxu0 %v1318
    %4940 = vmatprep.subr.mxu0 0.0
    %4941 = vmatpush1.msra.mxu0 %v1319
    %4942 = vmatprep.subr.mxu0 0.0
    %4943 = vmatpush1.msra.mxu0 %v1320
    %4944 = vmatprep.subr.mxu0 0.0
    %4945 = vmatpush1.msra.mxu0 %v1321
    %4946 = vmatprep.subr.mxu0 0.0
    %4947 = vmatpush1.msra.mxu0 %v1322
    %4948 = vmatprep.subr.mxu0 0.0
    %4949 = vmatpush1.msra.mxu0 %v1323
    %4950 = vmatprep.subr.mxu0 0.0
    %4951 = vmatpush1.msra.mxu0 %v1324
    %4952 = vmatprep.subr.mxu0 0.0
    %4953 = vmatpush1.msra.mxu0 %v1325
    %4954 = vmatprep.mubr.f32.mxu0 %v1985
    %4955 = vmatmul.mubr.f32.gmra.mrb[0].mxu0 %v1983
    %v4956 = vpop.f32.mrb[0].mxu0
    %v4957 = vadd.f32 %v4887, %v4956
    %v4958 = vpop.f32.mrb[0].mxu0
    %4959 = vdwg.mxu0
    %4960 = vmatprep.subr.mxu0 0.0
    %4961 = vmatpush1.msra.mxu0 %v1326
    %4962 = vmatprep.subr.mxu0 0.0
    %4963 = vmatpush1.msra.mxu0 %v1327
    %4964 = vmatprep.subr.mxu0 0.0
    %4965 = vmatpush1.msra.mxu0 %v1328
    %4966 = vmatprep.subr.mxu0 0.0
    %4967 = vmatpush1.msra.mxu0 %v1329
    %4968 = vmatprep.subr.mxu0 0.0
    %4969 = vmatpush1.msra.mxu0 %v1330
    %4970 = vmatprep.subr.mxu0 0.0
    %4971 = vmatpush1.msra.mxu0 %v1331
    %4972 = vmatprep.subr.mxu0 0.0
    %4973 = vmatpush1.msra.mxu0 %v1332
    %4974 = vmatprep.subr.mxu0 0.0
    %4975 = vmatpush1.msra.mxu0 %v1333
    %4976 = vmatprep.subr.mxu0 0.0
    %4977 = vmatpush1.msra.mxu0 %v1334
    %4978 = vmatprep.subr.mxu0 0.0
    %4979 = vmatpush1.msra.mxu0 %v1335
    %4980 = vmatprep.subr.mxu0 0.0
    %4981 = vmatpush1.msra.mxu0 %v1336
    %4982 = vmatprep.subr.mxu0 0.0
    %4983 = vmatpush1.msra.mxu0 %v1337
    %4984 = vmatprep.subr.mxu0 0.0
    %4985 = vmatpush1.msra.mxu0 %v1338
    %4986 = vmatprep.subr.mxu0 0.0
    %4987 = vmatpush1.msra.mxu0 %v1339
    %4988 = vmatprep.subr.mxu0 0.0
    %4989 = vmatpush1.msra.mxu0 %v1340
    %4990 = vmatprep.subr.mxu0 0.0
    %4991 = vmatpush1.msra.mxu0 %v1341
    %4992 = vmatprep.subr.mxu0 0.0
    %4993 = vmatpush1.msra.mxu0 %v1342
    %4994 = vmatprep.subr.mxu0 0.0
    %4995 = vmatpush1.msra.mxu0 %v1343
    %4996 = vmatprep.subr.mxu0 0.0
    %4997 = vmatpush1.msra.mxu0 %v1344
    %4998 = vmatprep.subr.mxu0 0.0
    %4999 = vmatpush1.msra.mxu0 %v1345
    %5000 = vmatprep.subr.mxu0 0.0
    %5001 = vmatpush1.msra.mxu0 %v1346
    %5002 = vmatprep.subr.mxu0 0.0
    %5003 = vmatpush1.msra.mxu0 %v1347
    %5004 = vmatprep.subr.mxu0 0.0
    %5005 = vmatpush1.msra.mxu0 %v1348
    %5006 = vmatprep.subr.mxu0 0.0
    %5007 = vmatpush1.msra.mxu0 %v1349
    %5008 = vmatprep.subr.mxu0 0.0
    %5009 = vmatpush1.msra.mxu0 %v1350
    %5010 = vmatprep.subr.mxu0 0.0
    %5011 = vmatpush1.msra.mxu0 %v1351
    %5012 = vmatprep.subr.mxu0 0.0
    %5013 = vmatpush1.msra.mxu0 %v1352
    %5014 = vmatprep.subr.mxu0 0.0
    %5015 = vmatpush1.msra.mxu0 %v1353
    %5016 = vmatprep.subr.mxu0 0.0
    %5017 = vmatpush1.msra.mxu0 %v1354
    %5018 = vmatprep.subr.mxu0 0.0
    %5019 = vmatpush1.msra.mxu0 %v1355
    %5020 = vmatprep.subr.mxu0 0.0
    %5021 = vmatpush1.msra.mxu0 %v1356
    %5022 = vmatprep.subr.mxu0 0.0
    %5023 = vmatpush1.msra.mxu0 %v1357
    %5024 = vmatprep.mubr.f32.mxu0 %v2001
    %5025 = vmatmul.mubr.f32.gmra.mrb[0].mxu0 %v1993
    %v5026 = vpop.f32.mrb[0].mxu0
    %v5027 = vadd.f32 %v4957, %v5026
    %v5028 = vpop.f32.mrb[0].mxu0
    %5029 = vdwg.mxu0
    %5030 = vmatprep.subr.mxu0 0.0
    %5031 = vmatpush1.msra.mxu0 %v1358
    %5032 = vmatprep.subr.mxu0 0.0
    %5033 = vmatpush1.msra.mxu0 %v1359
    %5034 = vmatprep.subr.mxu0 0.0
    %5035 = vmatpush1.msra.mxu0 %v1360
    %5036 = vmatprep.subr.mxu0 0.0
    %5037 = vmatpush1.msra.mxu0 %v1361
    %5038 = vmatprep.subr.mxu0 0.0
    %5039 = vmatpush1.msra.mxu0 %v1362
    %5040 = vmatprep.subr.mxu0 0.0
    %5041 = vmatpush1.msra.mxu0 %v1363
    %5042 = vmatprep.subr.mxu0 0.0
    %5043 = vmatpush1.msra.mxu0 %v1364
    %5044 = vmatprep.subr.mxu0 0.0
    %5045 = vmatpush1.msra.mxu0 %v1365
    %5046 = vmatprep.subr.mxu0 0.0
    %5047 = vmatpush1.msra.mxu0 %v1366
    %5048 = vmatprep.subr.mxu0 0.0
    %5049 = vmatpush1.msra.mxu0 %v1367
    %5050 = vmatprep.subr.mxu0 0.0
    %5051 = vmatpush1.msra.mxu0 %v1368
    %5052 = vmatprep.subr.mxu0 0.0
    %5053 = vmatpush1.msra.mxu0 %v1369
    %5054 = vmatprep.subr.mxu0 0.0
    %5055 = vmatpush1.msra.mxu0 %v1370
    %5056 = vmatprep.subr.mxu0 0.0
    %5057 = vmatpush1.msra.mxu0 %v1371
    %5058 = vmatprep.subr.mxu0 0.0
    %5059 = vmatpush1.msra.mxu0 %v1372
    %5060 = vmatprep.subr.mxu0 0.0
    %5061 = vmatpush1.msra.mxu0 %v1373
    %5062 = vmatprep.subr.mxu0 0.0
    %5063 = vmatpush1.msra.mxu0 %v1374
    %5064 = vmatprep.subr.mxu0 0.0
    %5065 = vmatpush1.msra.mxu0 %v1375
    %5066 = vmatprep.subr.mxu0 0.0
    %5067 = vmatpush1.msra.mxu0 %v1376
    %5068 = vmatprep.subr.mxu0 0.0
    %5069 = vmatpush1.msra.mxu0 %v1377
    %5070 = vmatprep.subr.mxu0 0.0
    %5071 = vmatpush1.msra.mxu0 %v1378
    %5072 = vmatprep.subr.mxu0 0.0
    %5073 = vmatpush1.msra.mxu0 %v1379
    %5074 = vmatprep.subr.mxu0 0.0
    %5075 = vmatpush1.msra.mxu0 %v1380
    %5076 = vmatprep.subr.mxu0 0.0
    %5077 = vmatpush1.msra.mxu0 %v1381
    %5078 = vmatprep.subr.mxu0 0.0
    %5079 = vmatpush1.msra.mxu0 %v1382
    %5080 = vmatprep.subr.mxu0 0.0
    %5081 = vmatpush1.msra.mxu0 %v1383
    %5082 = vmatprep.subr.mxu0 0.0
    %5083 = vmatpush1.msra.mxu0 %v1384
    %5084 = vmatprep.subr.mxu0 0.0
    %5085 = vmatpush1.msra.mxu0 %v1385
    %5086 = vmatprep.subr.mxu0 0.0
    %5087 = vmatpush1.msra.mxu0 %v1386
    %5088 = vmatprep.subr.mxu0 0.0
    %5089 = vmatpush1.msra.mxu0 %v1387
    %5090 = vmatprep.subr.mxu0 0.0
    %5091 = vmatpush1.msra.mxu0 %v1388
    %5092 = vmatprep.subr.mxu0 0.0
    %5093 = vmatpush1.msra.mxu0 %v1389
    %5094 = vmatprep.mubr.f32.mxu0 %v2002
    %5095 = vmatmul.mubr.f32.gmra.mrb[0].mxu0 %v2000
    %v5096 = vpop.f32.mrb[0].mxu0
    %v5097 = vadd.f32 %v5027, %v5096
    %v5098 = vpop.f32.mrb[0].mxu0
    %5099 = vdwg.mxu0
    %5100 = vmatprep.subr.mxu0 0.0
    %5101 = vmatpush1.msra.mxu0 %v1390
    %5102 = vmatprep.subr.mxu0 0.0
    %5103 = vmatpush1.msra.mxu0 %v1391
    %5104 = vmatprep.subr.mxu0 0.0
    %5105 = vmatpush1.msra.mxu0 %v1392
    %5106 = vmatprep.subr.mxu0 0.0
    %5107 = vmatpush1.msra.mxu0 %v1393
    %5108 = vmatprep.subr.mxu0 0.0
    %5109 = vmatpush1.msra.mxu0 %v1394
    %5110 = vmatprep.subr.mxu0 0.0
    %5111 = vmatpush1.msra.mxu0 %v1395
    %5112 = vmatprep.subr.mxu0 0.0
    %5113 = vmatpush1.msra.mxu0 %v1396
    %5114 = vmatprep.subr.mxu0 0.0
    %5115 = vmatpush1.msra.mxu0 %v1397
    %5116 = vmatprep.subr.mxu0 0.0
    %5117 = vmatpush1.msra.mxu0 %v1398
    %5118 = vmatprep.subr.mxu0 0.0
    %5119 = vmatpush1.msra.mxu0 %v1399
    %5120 = vmatprep.subr.mxu0 0.0
    %5121 = vmatpush1.msra.mxu0 %v1400
    %5122 = vmatprep.subr.mxu0 0.0
    %5123 = vmatpush1.msra.mxu0 %v1401
    %5124 = vmatprep.subr.mxu0 0.0
    %5125 = vmatpush1.msra.mxu0 %v1402
    %5126 = vmatprep.subr.mxu0 0.0
    %5127 = vmatpush1.msra.mxu0 %v1403
    %5128 = vmatprep.subr.mxu0 0.0
    %5129 = vmatpush1.msra.mxu0 %v1404
    %5130 = vmatprep.subr.mxu0 0.0
    %5131 = vmatpush1.msra.mxu0 %v1405
    %5132 = vmatprep.subr.mxu0 0.0
    %5133 = vmatpush1.msra.mxu0 %v1406
    %5134 = vmatprep.subr.mxu0 0.0
    %5135 = vmatpush1.msra.mxu0 %v1407
    %5136 = vmatprep.subr.mxu0 0.0
    %5137 = vmatpush1.msra.mxu0 %v1408
    %5138 = vmatprep.subr.mxu0 0.0
    %5139 = vmatpush1.msra.mxu0 %v1409
    %5140 = vmatprep.subr.mxu0 0.0
    %5141 = vmatpush1.msra.mxu0 %v1410
    %5142 = vmatprep.subr.mxu0 0.0
    %5143 = vmatpush1.msra.mxu0 %v1411
    %5144 = vmatprep.subr.mxu0 0.0
    %5145 = vmatpush1.msra.mxu0 %v1412
    %5146 = vmatprep.subr.mxu0 0.0
    %5147 = vmatpush1.msra.mxu0 %v1413
    %5148 = vmatprep.subr.mxu0 0.0
    %5149 = vmatpush1.msra.mxu0 %v1414
    %5150 = vmatprep.subr.mxu0 0.0
    %5151 = vmatpush1.msra.mxu0 %v1415
    %5152 = vmatprep.subr.mxu0 0.0
    %5153 = vmatpush1.msra.mxu0 %v1416
    %5154 = vmatprep.subr.mxu0 0.0
    %5155 = vmatpush1.msra.mxu0 %v1417
    %5156 = vmatprep.subr.mxu0 0.0
    %5157 = vmatpush1.msra.mxu0 %v1418
    %5158 = vmatprep.subr.mxu0 0.0
    %5159 = vmatpush1.msra.mxu0 %v1419
    %5160 = vmatprep.subr.mxu0 0.0
    %5161 = vmatpush1.msra.mxu0 %v1420
    %5162 = vmatprep.subr.mxu0 0.0
    %5163 = vmatpush1.msra.mxu0 %v1421
    %5164 = vmatprep.mubr.f32.mxu0 %v2018
    %5165 = vmatmul.mubr.f32.gmra.mrb[0].mxu0 %v2010
    %v5166 = vpop.f32.mrb[0].mxu0
    %v5167 = vadd.f32 %v5097, %v5166
    %v5168 = vpop.f32.mrb[0].mxu0
    %5169 = vdwg.mxu0
    %5170 = vmatprep.subr.mxu0 0.0
    %5171 = vmatpush1.msra.mxu0 %v1422
    %5172 = vmatprep.subr.mxu0 0.0
    %5173 = vmatpush1.msra.mxu0 %v1423
    %5174 = vmatprep.subr.mxu0 0.0
    %5175 = vmatpush1.msra.mxu0 %v1424
    %5176 = vmatprep.subr.mxu0 0.0
    %5177 = vmatpush1.msra.mxu0 %v1425
    %5178 = vmatprep.subr.mxu0 0.0
    %5179 = vmatpush1.msra.mxu0 %v1426
    %5180 = vmatprep.subr.mxu0 0.0
    %5181 = vmatpush1.msra.mxu0 %v1427
    %5182 = vmatprep.subr.mxu0 0.0
    %5183 = vmatpush1.msra.mxu0 %v1428
    %5184 = vmatprep.subr.mxu0 0.0
    %5185 = vmatpush1.msra.mxu0 %v1429
    %5186 = vmatprep.subr.mxu0 0.0
    %5187 = vmatpush1.msra.mxu0 %v1430
    %5188 = vmatprep.subr.mxu0 0.0
    %5189 = vmatpush1.msra.mxu0 %v1431
    %5190 = vmatprep.subr.mxu0 0.0
    %5191 = vmatpush1.msra.mxu0 %v1432
    %5192 = vmatprep.subr.mxu0 0.0
    %5193 = vmatpush1.msra.mxu0 %v1433
    %5194 = vmatprep.subr.mxu0 0.0
    %5195 = vmatpush1.msra.mxu0 %v1434
    %5196 = vmatprep.subr.mxu0 0.0
    %5197 = vmatpush1.msra.mxu0 %v1435
    %5198 = vmatprep.subr.mxu0 0.0
    %5199 = vmatpush1.msra.mxu0 %v1436
    %5200 = vmatprep.subr.mxu0 0.0
    %5201 = vmatpush1.msra.mxu0 %v1437
    %5202 = vmatprep.subr.mxu0 0.0
    %5203 = vmatpush1.msra.mxu0 %v1438
    %5204 = vmatprep.subr.mxu0 0.0
    %5205 = vmatpush1.msra.mxu0 %v1439
    %5206 = vmatprep.subr.mxu0 0.0
    %5207 = vmatpush1.msra.mxu0 %v1440
    %5208 = vmatprep.subr.mxu0 0.0
    %5209 = vmatpush1.msra.mxu0 %v1441
    %5210 = vmatprep.subr.mxu0 0.0
    %5211 = vmatpush1.msra.mxu0 %v1442
    %5212 = vmatprep.subr.mxu0 0.0
    %5213 = vmatpush1.msra.mxu0 %v1443
    %5214 = vmatprep.subr.mxu0 0.0
    %5215 = vmatpush1.msra.mxu0 %v1444
    %5216 = vmatprep.subr.mxu0 0.0
    %5217 = vmatpush1.msra.mxu0 %v1445
    %5218 = vmatprep.subr.mxu0 0.0
    %5219 = vmatpush1.msra.mxu0 %v1446
    %5220 = vmatprep.subr.mxu0 0.0
    %5221 = vmatpush1.msra.mxu0 %v1447
    %5222 = vmatprep.subr.mxu0 0.0
    %5223 = vmatpush1.msra.mxu0 %v1448
    %5224 = vmatprep.subr.mxu0 0.0
    %5225 = vmatpush1.msra.mxu0 %v1449
    %5226 = vmatprep.subr.mxu0 0.0
    %5227 = vmatpush1.msra.mxu0 %v1450
    %5228 = vmatprep.subr.mxu0 0.0
    %5229 = vmatpush1.msra.mxu0 %v1451
    %5230 = vmatprep.subr.mxu0 0.0
    %5231 = vmatpush1.msra.mxu0 %v1452
    %5232 = vmatprep.subr.mxu0 0.0
    %5233 = vmatpush1.msra.mxu0 %v1453
    %5234 = vmatprep.mubr.f32.mxu0 %v2019
    %5235 = vmatmul.mubr.f32.gmra.mrb[0].mxu0 %v2017
    %v5236 = vpop.f32.mrb[0].mxu0
    %v5237 = vadd.f32 %v5167, %v5236
    %v5238 = vpop.f32.mrb[0].mxu0
    %5239 = vdwg.mxu0
    %5240 = vmatprep.subr.mxu0 0.0
    %5241 = vmatpush1.msra.mxu0 %v1454
    %5242 = vmatprep.subr.mxu0 0.0
    %5243 = vmatpush1.msra.mxu0 %v1455
    %5244 = vmatprep.subr.mxu0 0.0
    %5245 = vmatpush1.msra.mxu0 %v1456
    %5246 = vmatprep.subr.mxu0 0.0
    %5247 = vmatpush1.msra.mxu0 %v1457
    %5248 = vmatprep.subr.mxu0 0.0
    %5249 = vmatpush1.msra.mxu0 %v1458
    %5250 = vmatprep.subr.mxu0 0.0
    %5251 = vmatpush1.msra.mxu0 %v1459
    %5252 = vmatprep.subr.mxu0 0.0
    %5253 = vmatpush1.msra.mxu0 %v1460
    %5254 = vmatprep.subr.mxu0 0.0
    %5255 = vmatpush1.msra.mxu0 %v1461
    %5256 = vmatprep.subr.mxu0 0.0
    %5257 = vmatpush1.msra.mxu0 %v1462
    %5258 = vmatprep.subr.mxu0 0.0
    %5259 = vmatpush1.msra.mxu0 %v1463
    %5260 = vmatprep.subr.mxu0 0.0
    %5261 = vmatpush1.msra.mxu0 %v1464
    %5262 = vmatprep.subr.mxu0 0.0
    %5263 = vmatpush1.msra.mxu0 %v1465
    %5264 = vmatprep.subr.mxu0 0.0
    %5265 = vmatpush1.msra.mxu0 %v1466
    %5266 = vmatprep.subr.mxu0 0.0
    %5267 = vmatpush1.msra.mxu0 %v1467
    %5268 = vmatprep.subr.mxu0 0.0
    %5269 = vmatpush1.msra.mxu0 %v1468
    %5270 = vmatprep.subr.mxu0 0.0
    %5271 = vmatpush1.msra.mxu0 %v1469
    %5272 = vmatprep.subr.mxu0 0.0
    %5273 = vmatpush1.msra.mxu0 %v1470
    %5274 = vmatprep.subr.mxu0 0.0
    %5275 = vmatpush1.msra.mxu0 %v1471
    %5276 = vmatprep.subr.mxu0 0.0
    %5277 = vmatpush1.msra.mxu0 %v1472
    %5278 = vmatprep.subr.mxu0 0.0
    %5279 = vmatpush1.msra.mxu0 %v1473
    %5280 = vmatprep.subr.mxu0 0.0
    %5281 = vmatpush1.msra.mxu0 %v1474
    %5282 = vmatprep.subr.mxu0 0.0
    %5283 = vmatpush1.msra.mxu0 %v1475
    %5284 = vmatprep.subr.mxu0 0.0
    %5285 = vmatpush1.msra.mxu0 %v1476
    %5286 = vmatprep.subr.mxu0 0.0
    %5287 = vmatpush1.msra.mxu0 %v1477
    %5288 = vmatprep.subr.mxu0 0.0
    %5289 = vmatpush1.msra.mxu0 %v1478
    %5290 = vmatprep.subr.mxu0 0.0
    %5291 = vmatpush1.msra.mxu0 %v1479
    %5292 = vmatprep.subr.mxu0 0.0
    %5293 = vmatpush1.msra.mxu0 %v1480
    %5294 = vmatprep.subr.mxu0 0.0
    %5295 = vmatpush1.msra.mxu0 %v1481
    %5296 = vmatprep.subr.mxu0 0.0
    %5297 = vmatpush1.msra.mxu0 %v1482
    %5298 = vmatprep.subr.mxu0 0.0
    %5299 = vmatpush1.msra.mxu0 %v1483
    %5300 = vmatprep.subr.mxu0 0.0
    %5301 = vmatpush1.msra.mxu0 %v1484
    %5302 = vmatprep.subr.mxu0 0.0
    %5303 = vmatpush1.msra.mxu0 %v1485
    %5304 = vmatprep.mubr.f32.mxu0 %v2035
    %5305 = vmatmul.mubr.f32.gmra.mrb[0].mxu0 %v2027
    %v5306 = vpop.f32.mrb[0].mxu0
    %v5307 = vadd.f32 %v5237, %v5306
    %v5308 = vpop.f32.mrb[0].mxu0
    %5309 = vdwg.mxu0
    %5310 = vmatprep.subr.mxu0 0.0
    %5311 = vmatpush1.msra.mxu0 %v1486
    %5312 = vmatprep.subr.mxu0 0.0
    %5313 = vmatpush1.msra.mxu0 %v1487
    %5314 = vmatprep.subr.mxu0 0.0
    %5315 = vmatpush1.msra.mxu0 %v1488
    %5316 = vmatprep.subr.mxu0 0.0
    %5317 = vmatpush1.msra.mxu0 %v1489
    %5318 = vmatprep.subr.mxu0 0.0
    %5319 = vmatpush1.msra.mxu0 %v1490
    %5320 = vmatprep.subr.mxu0 0.0
    %5321 = vmatpush1.msra.mxu0 %v1491
    %5322 = vmatprep.subr.mxu0 0.0
    %5323 = vmatpush1.msra.mxu0 %v1492
    %5324 = vmatprep.subr.mxu0 0.0
    %5325 = vmatpush1.msra.mxu0 %v1493
    %5326 = vmatprep.subr.mxu0 0.0
    %5327 = vmatpush1.msra.mxu0 %v1494
    %5328 = vmatprep.subr.mxu0 0.0
    %5329 = vmatpush1.msra.mxu0 %v1495
    %5330 = vmatprep.subr.mxu0 0.0
    %5331 = vmatpush1.msra.mxu0 %v1496
    %5332 = vmatprep.subr.mxu0 0.0
    %5333 = vmatpush1.msra.mxu0 %v1497
    %5334 = vmatprep.subr.mxu0 0.0
    %5335 = vmatpush1.msra.mxu0 %v1498
    %5336 = vmatprep.subr.mxu0 0.0
    %5337 = vmatpush1.msra.mxu0 %v1499
    %5338 = vmatprep.subr.mxu0 0.0
    %5339 = vmatpush1.msra.mxu0 %v1500
    %5340 = vmatprep.subr.mxu0 0.0
    %5341 = vmatpush1.msra.mxu0 %v1501
    %5342 = vmatprep.subr.mxu0 0.0
    %5343 = vmatpush1.msra.mxu0 %v1502
    %5344 = vmatprep.subr.mxu0 0.0
    %5345 = vmatpush1.msra.mxu0 %v1503
    %5346 = vmatprep.subr.mxu0 0.0
    %5347 = vmatpush1.msra.mxu0 %v1504
    %5348 = vmatprep.subr.mxu0 0.0
    %5349 = vmatpush1.msra.mxu0 %v1505
    %5350 = vmatprep.subr.mxu0 0.0
    %5351 = vmatpush1.msra.mxu0 %v1506
    %5352 = vmatprep.subr.mxu0 0.0
    %5353 = vmatpush1.msra.mxu0 %v1507
    %5354 = vmatprep.subr.mxu0 0.0
    %5355 = vmatpush1.msra.mxu0 %v1508
    %5356 = vmatprep.subr.mxu0 0.0
    %5357 = vmatpush1.msra.mxu0 %v1509
    %5358 = vmatprep.subr.mxu0 0.0
    %5359 = vmatpush1.msra.mxu0 %v1510
    %5360 = vmatprep.subr.mxu0 0.0
    %5361 = vmatpush1.msra.mxu0 %v1511
    %5362 = vmatprep.subr.mxu0 0.0
    %5363 = vmatpush1.msra.mxu0 %v1512
    %5364 = vmatprep.subr.mxu0 0.0
    %5365 = vmatpush1.msra.mxu0 %v1513
    %5366 = vmatprep.subr.mxu0 0.0
    %5367 = vmatpush1.msra.mxu0 %v1514
    %5368 = vmatprep.subr.mxu0 0.0
    %5369 = vmatpush1.msra.mxu0 %v1515
    %5370 = vmatprep.subr.mxu0 0.0
    %5371 = vmatpush1.msra.mxu0 %v1516
    %5372 = vmatprep.subr.mxu0 0.0
    %5373 = vmatpush1.msra.mxu0 %v1517
    %5374 = vmatprep.mubr.f32.mxu0 %v2036
    %5375 = vmatmul.mubr.f32.gmra.mrb[0].mxu0 %v2034
    %v5376 = vpop.f32.mrb[0].mxu0
    %v5377 = vadd.f32 %v5307, %v5376
    %v5378 = vpop.f32.mrb[0].mxu0
    %5379 = vdwg.mxu0
    %5380 = vmatprep.subr.mxu0 0.0
    %5381 = vmatpush1.msra.mxu0 %v1518
    %5382 = vmatprep.subr.mxu0 0.0
    %5383 = vmatpush1.msra.mxu0 %v1519
    %5384 = vmatprep.subr.mxu0 0.0
    %5385 = vmatpush1.msra.mxu0 %v1520
    %5386 = vmatprep.subr.mxu0 0.0
    %5387 = vmatpush1.msra.mxu0 %v1521
    %5388 = vmatprep.subr.mxu0 0.0
    %5389 = vmatpush1.msra.mxu0 %v1522
    %5390 = vmatprep.subr.mxu0 0.0
    %5391 = vmatpush1.msra.mxu0 %v1523
    %5392 = vmatprep.subr.mxu0 0.0
    %5393 = vmatpush1.msra.mxu0 %v1524
    %5394 = vmatprep.subr.mxu0 0.0
    %5395 = vmatpush1.msra.mxu0 %v1525
    %5396 = vmatprep.subr.mxu0 0.0
    %5397 = vmatpush1.msra.mxu0 %v1526
    %5398 = vmatprep.subr.mxu0 0.0
    %5399 = vmatpush1.msra.mxu0 %v1527
    %5400 = vmatprep.subr.mxu0 0.0
    %5401 = vmatpush1.msra.mxu0 %v1528
    %5402 = vmatprep.subr.mxu0 0.0
    %5403 = vmatpush1.msra.mxu0 %v1529
    %5404 = vmatprep.subr.mxu0 0.0
    %5405 = vmatpush1.msra.mxu0 %v1530
    %5406 = vmatprep.subr.mxu0 0.0
    %5407 = vmatpush1.msra.mxu0 %v1531
    %5408 = vmatprep.subr.mxu0 0.0
    %5409 = vmatpush1.msra.mxu0 %v1532
    %5410 = vmatprep.subr.mxu0 0.0
    %5411 = vmatpush1.msra.mxu0 %v1533
    %5412 = vmatprep.subr.mxu0 0.0
    %5413 = vmatpush1.msra.mxu0 %v1534
    %5414 = vmatprep.subr.mxu0 0.0
    %5415 = vmatpush1.msra.mxu0 %v1535
    %5416 = vmatprep.subr.mxu0 0.0
    %5417 = vmatpush1.msra.mxu0 %v1536
    %5418 = vmatprep.subr.mxu0 0.0
    %5419 = vmatpush1.msra.mxu0 %v1537
    %5420 = vmatprep.subr.mxu0 0.0
    %5421 = vmatpush1.msra.mxu0 %v1538
    %5422 = vmatprep.subr.mxu0 0.0
    %5423 = vmatpush1.msra.mxu0 %v1539
    %5424 = vmatprep.subr.mxu0 0.0
    %5425 = vmatpush1.msra.mxu0 %v1540
    %5426 = vmatprep.subr.mxu0 0.0
    %5427 = vmatpush1.msra.mxu0 %v1541
    %5428 = vmatprep.subr.mxu0 0.0
    %5429 = vmatpush1.msra.mxu0 %v1542
    %5430 = vmatprep.subr.mxu0 0.0
    %5431 = vmatpush1.msra.mxu0 %v1543
    %5432 = vmatprep.subr.mxu0 0.0
    %5433 = vmatpush1.msra.mxu0 %v1544
    %5434 = vmatprep.subr.mxu0 0.0
    %5435 = vmatpush1.msra.mxu0 %v1545
    %5436 = vmatprep.subr.mxu0 0.0
    %5437 = vmatpush1.msra.mxu0 %v1546
    %5438 = vmatprep.subr.mxu0 0.0
    %5439 = vmatpush1.msra.mxu0 %v1547
    %5440 = vmatprep.subr.mxu0 0.0
    %5441 = vmatpush1.msra.mxu0 %v1548
    %5442 = vmatprep.subr.mxu0 0.0
    %5443 = vmatpush1.msra.mxu0 %v1549
    %5444 = vmatprep.mubr.f32.mxu0 %v2052
    %5445 = vmatmul.mubr.f32.gmra.mrb[0].mxu0 %v2044
    %v5446 = vpop.f32.mrb[0].mxu0
    %v5447 = vadd.f32 %v5377, %v5446
    %v5448 = vpop.f32.mrb[0].mxu0
    %5449 = vdwg.mxu0
    %5450 = vmatprep.subr.mxu0 0.0
    %5451 = vmatpush1.msra.mxu0 %v1550
    %5452 = vmatprep.subr.mxu0 0.0
    %5453 = vmatpush1.msra.mxu0 %v1551
    %5454 = vmatprep.subr.mxu0 0.0
    %5455 = vmatpush1.msra.mxu0 %v1552
    %5456 = vmatprep.subr.mxu0 0.0
    %5457 = vmatpush1.msra.mxu0 %v1553
    %5458 = vmatprep.subr.mxu0 0.0
    %5459 = vmatpush1.msra.mxu0 %v1554
    %5460 = vmatprep.subr.mxu0 0.0
    %5461 = vmatpush1.msra.mxu0 %v1555
    %5462 = vmatprep.subr.mxu0 0.0
    %5463 = vmatpush1.msra.mxu0 %v1556
    %5464 = vmatprep.subr.mxu0 0.0
    %5465 = vmatpush1.msra.mxu0 %v1557
    %5466 = vmatprep.subr.mxu0 0.0
    %5467 = vmatpush1.msra.mxu0 %v1558
    %5468 = vmatprep.subr.mxu0 0.0
    %5469 = vmatpush1.msra.mxu0 %v1559
    %5470 = vmatprep.subr.mxu0 0.0
    %5471 = vmatpush1.msra.mxu0 %v1560
    %5472 = vmatprep.subr.mxu0 0.0
    %5473 = vmatpush1.msra.mxu0 %v1561
    %5474 = vmatprep.subr.mxu0 0.0
    %5475 = vmatpush1.msra.mxu0 %v1562
    %5476 = vmatprep.subr.mxu0 0.0
    %5477 = vmatpush1.msra.mxu0 %v1563
    %5478 = vmatprep.subr.mxu0 0.0
    %5479 = vmatpush1.msra.mxu0 %v1564
    %5480 = vmatprep.subr.mxu0 0.0
    %5481 = vmatpush1.msra.mxu0 %v1565
    %5482 = vmatprep.subr.mxu0 0.0
    %5483 = vmatpush1.msra.mxu0 %v1566
    %5484 = vmatprep.subr.mxu0 0.0
    %5485 = vmatpush1.msra.mxu0 %v1567
    %5486 = vmatprep.subr.mxu0 0.0
    %5487 = vmatpush1.msra.mxu0 %v1568
    %5488 = vmatprep.subr.mxu0 0.0
    %5489 = vmatpush1.msra.mxu0 %v1569
    %5490 = vmatprep.subr.mxu0 0.0
    %5491 = vmatpush1.msra.mxu0 %v1570
    %5492 = vmatprep.subr.mxu0 0.0
    %5493 = vmatpush1.msra.mxu0 %v1571
    %5494 = vmatprep.subr.mxu0 0.0
    %5495 = vmatpush1.msra.mxu0 %v1572
    %5496 = vmatprep.subr.mxu0 0.0
    %5497 = vmatpush1.msra.mxu0 %v1573
    %5498 = vmatprep.subr.mxu0 0.0
    %5499 = vmatpush1.msra.mxu0 %v1574
    %5500 = vmatprep.subr.mxu0 0.0
    %5501 = vmatpush1.msra.mxu0 %v1575
    %5502 = vmatprep.subr.mxu0 0.0
    %5503 = vmatpush1.msra.mxu0 %v1576
    %5504 = vmatprep.subr.mxu0 0.0
    %5505 = vmatpush1.msra.mxu0 %v1577
    %5506 = vmatprep.subr.mxu0 0.0
    %5507 = vmatpush1.msra.mxu0 %v1578
    %5508 = vmatprep.subr.mxu0 0.0
    %5509 = vmatpush1.msra.mxu0 %v1579
    %5510 = vmatprep.subr.mxu0 0.0
    %5511 = vmatpush1.msra.mxu0 %v1580
    %5512 = vmatprep.subr.mxu0 0.0
    %5513 = vmatpush1.msra.mxu0 %v1581
    %5514 = vmatprep.mubr.f32.mxu0 %v2053
    %5515 = vmatmul.mubr.f32.gmra.mrb[0].mxu0 %v2051
    %v5516 = vpop.f32.mrb[0].mxu0
    %v5517 = vadd.f32 %v5447, %v5516
    %v5518 = vpop.f32.mrb[0].mxu0
    %5519 = vdwg.mxu0
    %5520 = vmatprep.subr.mxu0 0.0
    %5521 = vmatpush1.msra.mxu0 %v1582
    %5522 = vmatprep.subr.mxu0 0.0
    %5523 = vmatpush1.msra.mxu0 %v1583
    %5524 = vmatprep.subr.mxu0 0.0
    %5525 = vmatpush1.msra.mxu0 %v1584
    %5526 = vmatprep.subr.mxu0 0.0
    %5527 = vmatpush1.msra.mxu0 %v1585
    %5528 = vmatprep.subr.mxu0 0.0
    %5529 = vmatpush1.msra.mxu0 %v1586
    %5530 = vmatprep.subr.mxu0 0.0
    %5531 = vmatpush1.msra.mxu0 %v1587
    %5532 = vmatprep.subr.mxu0 0.0
    %5533 = vmatpush1.msra.mxu0 %v1588
    %5534 = vmatprep.subr.mxu0 0.0
    %5535 = vmatpush1.msra.mxu0 %v1589
    %5536 = vmatprep.subr.mxu0 0.0
    %5537 = vmatpush1.msra.mxu0 %v1590
    %5538 = vmatprep.subr.mxu0 0.0
    %5539 = vmatpush1.msra.mxu0 %v1591
    %5540 = vmatprep.subr.mxu0 0.0
    %5541 = vmatpush1.msra.mxu0 %v1592
    %5542 = vmatprep.subr.mxu0 0.0
    %5543 = vmatpush1.msra.mxu0 %v1593
    %5544 = vmatprep.subr.mxu0 0.0
    %5545 = vmatpush1.msra.mxu0 %v1594
    %5546 = vmatprep.subr.mxu0 0.0
    %5547 = vmatpush1.msra.mxu0 %v1595
    %5548 = vmatprep.subr.mxu0 0.0
    %5549 = vmatpush1.msra.mxu0 %v1596
    %5550 = vmatprep.subr.mxu0 0.0
    %5551 = vmatpush1.msra.mxu0 %v1597
    %5552 = vmatprep.subr.mxu0 0.0
    %5553 = vmatpush1.msra.mxu0 %v1598
    %5554 = vmatprep.subr.mxu0 0.0
    %5555 = vmatpush1.msra.mxu0 %v1599
    %5556 = vmatprep.subr.mxu0 0.0
    %5557 = vmatpush1.msra.mxu0 %v1600
    %5558 = vmatprep.subr.mxu0 0.0
    %5559 = vmatpush1.msra.mxu0 %v1601
    %5560 = vmatprep.subr.mxu0 0.0
    %5561 = vmatpush1.msra.mxu0 %v1602
    %5562 = vmatprep.subr.mxu0 0.0
    %5563 = vmatpush1.msra.mxu0 %v1603
    %5564 = vmatprep.subr.mxu0 0.0
    %5565 = vmatpush1.msra.mxu0 %v1604
    %5566 = vmatprep.subr.mxu0 0.0
    %5567 = vmatpush1.msra.mxu0 %v1605
    %5568 = vmatprep.subr.mxu0 0.0
    %5569 = vmatpush1.msra.mxu0 %v1606
    %5570 = vmatprep.subr.mxu0 0.0
    %5571 = vmatpush1.msra.mxu0 %v1607
    %5572 = vmatprep.subr.mxu0 0.0
    %5573 = vmatpush1.msra.mxu0 %v1608
    %5574 = vmatprep.subr.mxu0 0.0
    %5575 = vmatpush1.msra.mxu0 %v1609
    %5576 = vmatprep.subr.mxu0 0.0
    %5577 = vmatpush1.msra.mxu0 %v1610
    %5578 = vmatprep.subr.mxu0 0.0
    %5579 = vmatpush1.msra.mxu0 %v1611
    %5580 = vmatprep.subr.mxu0 0.0
    %5581 = vmatpush1.msra.mxu0 %v1612
    %5582 = vmatprep.subr.mxu0 0.0
    %5583 = vmatpush1.msra.mxu0 %v1613
    %5584 = vmatprep.mubr.f32.mxu0 %v2061
    %5585 = vmatmul.mubr.f32.gmra.mrb[0].mxu0 %v2060
    %v5586 = vpop.f32.mrb[0].mxu0
    %v5587 = vadd.f32 %v5517, %v5586
    %v5588 = vpop.f32.mrb[0].mxu0
    %5589 = vdwg.mxu0
    %v5590 = vmax.f32 %v5587, 0.0
    %v5591 = vld [vmem:[%s3] sm:$0xff]
    %v5592 = vld [vmem:[%s3 + $0x8] sm:$0xff]
    %v5593 = vld [vmem:[%s4] sm:$0x1]
    %v5595 = vlaneseq
    %v5596 = vshrl.u32 %v5595, 7
    %v5597 = vsub.s32 0, %v5596
    %v5598 = vrot.slane %v5593, %v5597
    %vm5600 = vcmask 130048
    %v5602 = vsel %vm5600, %v5590, 0
    %5604 = vmatprep.subr.mxu0 0.0
    %5605 = vmatpush1.msra.mxu0 %v5591
    %5606 = vmatprep.subr.mxu0 0.0
    %5607 = vmatpush1.msra.mxu0 %v5592
    %5608 = vmatprep.subr.mxu0 0.0
    %5609 = vmatpush1.msra.mxu0 0.0
    %5610 = vmatprep.subr.mxu0 0.0
    %5611 = vmatpush1.msra.mxu0 0.0
    %5612 = vmatprep.subr.mxu0 0.0
    %5613 = vmatpush1.msra.mxu0 0.0
    %5614 = vmatprep.subr.mxu0 0.0
    %5615 = vmatpush1.msra.mxu0 0.0
    %5616 = vmatprep.subr.mxu0 0.0
    %5617 = vmatpush1.msra.mxu0 0.0
    %5618 = vmatprep.subr.mxu0 0.0
    %5619 = vmatpush1.msra.mxu0 0.0
    %5620 = vmatprep.subr.mxu0 0.0
    %5621 = vmatpush1.msra.mxu0 0.0
    %5622 = vmatprep.subr.mxu0 0.0
    %5623 = vmatpush1.msra.mxu0 0.0
    %5624 = vmatprep.subr.mxu0 0.0
    %5625 = vmatpush1.msra.mxu0 0.0
    %5626 = vmatprep.subr.mxu0 0.0
    %5627 = vmatpush1.msra.mxu0 0.0
    %5628 = vmatprep.subr.mxu0 0.0
    %5629 = vmatpush1.msra.mxu0 0.0
    %5630 = vmatprep.subr.mxu0 0.0
    %5631 = vmatpush1.msra.mxu0 0.0
    %5632 = vmatprep.subr.mxu0 0.0
    %5633 = vmatpush1.msra.mxu0 0.0
    %5634 = vmatprep.subr.mxu0 0.0
    %5635 = vmatpush1.msra.mxu0 0.0
    %5636 = vmatprep.subr.mxu0 0.0
    %5637 = vmatpush1.msra.mxu0 0.0
    %5638 = vmatprep.subr.mxu0 0.0
    %5639 = vmatpush1.msra.mxu0 0.0
    %5640 = vmatprep.subr.mxu0 0.0
    %5641 = vmatpush1.msra.mxu0 0.0
    %5642 = vmatprep.subr.mxu0 0.0
    %5643 = vmatpush1.msra.mxu0 0.0
    %5644 = vmatprep.subr.mxu0 0.0
    %5645 = vmatpush1.msra.mxu0 0.0
    %5646 = vmatprep.subr.mxu0 0.0
    %5647 = vmatpush1.msra.mxu0 0.0
    %5648 = vmatprep.subr.mxu0 0.0
    %5649 = vmatpush1.msra.mxu0 0.0
    %5650 = vmatprep.subr.mxu0 0.0
    %5651 = vmatpush1.msra.mxu0 0.0
    %5652 = vmatprep.subr.mxu0 0.0
    %5653 = vmatpush1.msra.mxu0 0.0
    %5654 = vmatprep.subr.mxu0 0.0
    %5655 = vmatpush1.msra.mxu0 0.0
    %5656 = vmatprep.subr.mxu0 0.0
    %5657 = vmatpush1.msra.mxu0 0.0
    %5658 = vmatprep.subr.mxu0 0.0
    %5659 = vmatpush1.msra.mxu0 0.0
    %5660 = vmatprep.subr.mxu0 0.0
    %5661 = vmatpush1.msra.mxu0 0.0
    %5662 = vmatprep.subr.mxu0 0.0
    %5663 = vmatpush1.msra.mxu0 0.0
    %5664 = vmatprep.subr.mxu0 0.0
    %5665 = vmatpush1.msra.mxu0 0.0
    %5666 = vmatprep.subr.mxu0 0.0
    %5667 = vmatpush1.msra.mxu0 0.0
    %5668 = vmatprep.mubr.f32.mxu0 0.0
    %5669 = vmatmul.mubr.f32.gmra.mrb[0].mxu0 %v5602
    %v5670 = vpop.f32.mrb[0].mxu0
    %v5671 = vadd.f32 %v5598, %v5670
    %v5672 = vpop.f32.mrb[0].mxu0
    %5673 = vdwg.mxu0
    %5674 = vst [vmem:[#allocation2] sm:$0x3] %v5671
    // Predicated region
    $region22: #{net22_3_forward.5} parent=1 // pred_check
      _
    $region23: #{net22_3_forward.5} parent=1 // pred_check_branch
      %5676 = sbr.rel (0) target = $region25
    $region24: #{net22_3_forward.5} parent=1 // pred_region
      %s5678 = ssub.s32 32, 32
      %5679 = vsyncadd [#allocation3], %s5678
      %s5681 = sshll.u32 [#allocation2], 4
      %s5682 = int_to_ptr.vmem [resolvable:$true] %s5681
      %5684 = dma.vmem_to_hbm [thread:$0]  %s5682, 32, %s5, [#allocation3]
    $region25: #{net22_3_forward.5} parent=1 // pred_fallthru
      _
    // Predicated region
    $region26: #{net22_3_forward.5} parent=1 // pred_check
      _
    $region27: #{net22_3_forward.5} parent=1 // pred_check_branch
      %5686 = sbr.rel (0) target = $region29
    $region28: #{net22_3_forward.5} parent=1 // pred_region
      %5687 = dma.done [#allocation3], 32
    $region29: #{net22_3_forward.5} parent=1 // pred_fallthru
      _
    %5688 = vsyncpa [#allocation3], 1

</llo_original>
